<compile_context>
chip_gen: v6e
topology: v6e:2x2x1
jax: 0.10.0
libtpu: 0.0.40
codegen_flags: <defaults>
</compile_context>

<pallas_src>
import jax
import jax.numpy as jnp
from jax import lax
from jax.experimental import pallas as pl
from jax.experimental.pallas import tpu as pltpu

# ---------------- model dimensions (small, consistent with the module) ------
B = 2            # batch
IN_C = 4         # input image channels
IN_HW = 16       # input spatial size
CL = 16          # local_in_channels   (stand-in for backbone channels[-2])
CG = 32          # global_in_channels  (stand-in for backbone channels[-1])
C = 128          # branch width        (stand-in for 1280)
HEADS = 8
HEAD_DIM = C // HEADS
EMB = 32         # embedding size      (stand-in for 128)
H = W = 8        # local feature map spatial size
HG = WG = 4      # global feature map spatial size
L = H * W        # attention sequence length (per batch element)
LG = HG * WG     # global branch spatial size (per batch element)
BL = B * L       # batch-folded local rows  (= 128 -> full sublane fill)
BLG = B * LG     # batch-folded global rows


# ============================ fused Pallas kernel ============================

def hoam_fused_kernel(x4_ref, x5_ref,
                      lw_ref, lb_ref, eg_ref,
                      wqkv_ref, bqkv_ref, abias_ref, wo_ref, bo_ref,
                      gw_ref, gb_ref,
                      w1a_ref, w1b_ref, b1_ref, w2_ref, b2_ref,
                      o_ref,
                      qkv_scr, attn_scr):
    f32 = jnp.float32
    bf16 = jnp.bfloat16

    # ---------- local branch: 1x1 conv (BN scale pre-folded) + bias + SiLU --
    # All B*L = 128 rows at once (batch folded into the sublane axis).
    y = jnp.dot(x4_ref[...], lw_ref[...], preferred_element_type=f32)   # [BL, C]
    y = y + lb_ref[...]
    lf = y * jax.nn.sigmoid(y)                                          # SiLU, f32

    # ---------- learnable edge layer (residual depthwise 3x3) ---------------
    # TODO(synk): LearnableEdgeLayer source unavailable; residual depthwise
    # 3x3 SAME conv stand-in.  Border masks * tap weights are precomputed
    # host-side (eg_ref), so each tap is one pltpu.roll (XLU) + one FMA (VPU).
    # Rolls over the folded 128 rows never mix batches: any row that would
    # cross an image (or batch) boundary has a zero gate.
    acc = lf * eg_ref[4]                                                # center tap
    tap = 0
    for dh in (-1, 0, 1):
        for dw in (-1, 0, 1):
            if not (dh == 0 and dw == 0):
                shift = (-(dh * W + dw)) % BL                           # out[i]=lf[i+dh*W+dw]
                acc = acc + pltpu.roll(lf, shift=shift, axis=0) * eg_ref[tap]
            tap += 1
    lf = lf + acc                                                       # residual

    # ---------- fused QKV projection (1/sqrt(dk) pre-folded into Q) ---------
    # Staged in VMEM so per-head slices are re-loaded instead of held in vregs.
    qkv_scr[...] = (jnp.dot(lf.astype(bf16), wqkv_ref[...],
                            preferred_element_type=f32) + bqkv_ref[...])

    # ---------- multi-head self-attention ------------------------------------
    # Both batch elements share each head's matmuls (M = 128); cross-batch
    # positions are masked with a large negative additive bias so the softmax
    # stays block-diagonal per batch element.
    for hd in range(HEADS):                                             # static head loop
        lo = hd * HEAD_DIM
        qh = qkv_scr[:, lo:lo + HEAD_DIM].astype(bf16)                  # [BL, 16]
        kh = qkv_scr[:, C + lo:C + lo + HEAD_DIM].astype(bf16)
        vh = qkv_scr[:, 2 * C + lo:2 * C + lo + HEAD_DIM].astype(bf16)
        s = lax.dot_general(qh, kh, (((1,), (1,)), ((), ())),
                            preferred_element_type=f32)                 # [BL, BL]
        s = s + abias_ref[...]                                          # block-diag mask
        s = s - jnp.max(s, axis=-1, keepdims=True)
        p = jnp.exp(s)
        p = p * pl.reciprocal(jnp.sum(p, axis=-1, keepdims=True), approx=True)
        oh = jnp.dot(p.astype(bf16), vh, preferred_element_type=f32)    # [BL, 16]
        attn_scr[:, lo:lo + HEAD_DIM] = oh                              # merge heads
    # single K=C output projection (instead of HEADS narrow K=16 matmuls)
    attn = (jnp.dot(attn_scr[...].astype(bf16), wo_ref[...],
                    preferred_element_type=f32) + bo_ref[...])          # [BL, C]

    # ---------- global branch: 1x1 conv (BN folded) + SiLU ------------------
    # TODO(synk): GlobalPooling source unavailable; global average pool.
    yg = jnp.dot(x5_ref[...], gw_ref[...], preferred_element_type=f32) + gb_ref[...]
    yg = yg * jax.nn.sigmoid(yg)                                        # [BLG, C]

    # ---------- orthogonal fusion + pooling (static per-batch loop) ---------
    g_rows, po_rows = [], []
    for b in range(B):
        g_b = jnp.mean(yg[b * LG:(b + 1) * LG], axis=0, keepdims=True)  # [1, C]
        a_b = attn[b * L:(b + 1) * L]                                   # [L, C]
        gn2 = jnp.sum(g_b * g_b, axis=-1, keepdims=True)                # [1, 1]
        coeff = jnp.sum(a_b * g_b, axis=-1, keepdims=True)              # [L, 1]
        orth = a_b - (coeff / (gn2 + 1e-12)) * g_b                      # exact divide
        po_rows.append(jnp.mean(orth, axis=0, keepdims=True))           # avg pool [1, C]
        g_rows.append(g_b)
    g_all = jnp.concatenate(g_rows, axis=0)                             # [B, C]
    po_all = jnp.concatenate(po_rows, axis=0)                           # [B, C]

    # ---------- head: Linear(2C, EMB) split + Linear(EMB, EMB) + BN1d -------
    # TODO(synk): assumes OrthogonalFusion concat order is [global, orthogonal].
    h1 = (jnp.dot(g_all.astype(bf16), w1a_ref[...], preferred_element_type=f32) +
          jnp.dot(po_all.astype(bf16), w1b_ref[...], preferred_element_type=f32) +
          b1_ref[...])                                                  # [B, EMB]
    # BatchNorm1d scale/bias pre-folded into w2/b2
    o_ref[...] = jnp.dot(h1.astype(bf16), w2_ref[...],
                         preferred_element_type=f32) + b2_ref[...]      # [B, EMB]


def _full(shape):
    # full-array block, constant index map (everything is DMA'd exactly once)
    rank = len(shape)
    return pl.BlockSpec(shape, lambda i, _r=rank: (0,) * _r)


def hoam_fused(x4, x5, kp):
    operands = (x4, x5,
                kp['lw'], kp['lb'], kp['edge_gate'],
                kp['wqkv'], kp['bqkv'], kp['abias'], kp['wo'], kp['bo'],
                kp['gw'], kp['gb'],
                kp['w1a'], kp['w1b'], kp['b1'], kp['w2'], kp['b2'])
    in_specs = [_full(op.shape) for op in operands]
    return pl.pallas_call(
        hoam_fused_kernel,
        out_shape=jax.ShapeDtypeStruct((B, EMB), jnp.float32),
        grid_spec=pltpu.PrefetchScalarGridSpec(
            num_scalar_prefetch=0,
            grid=(1,),                                   # single step, batch folded
            in_specs=in_specs,
            out_specs=pl.BlockSpec((B, EMB), lambda i: (0, 0)),
            scratch_shapes=[pltpu.VMEM((BL, 3 * C), jnp.float32),   # staged QKV
                            pltpu.VMEM((BL, C), jnp.float32)]),     # merged heads
        compiler_params=pltpu.CompilerParams(
            dimension_semantics=("arbitrary",),
            vmem_limit_bytes=32 * 1024 * 1024),
    )(*operands)


# ============================ host-side constant folding =====================

def prepare_kernel_operands(p):
    """Fold constants and pack kernel operands (cheap, runs under the same jit):
       * BN scales into the 1x1 conv weights; BatchNorm1d into w2/b2.
       * 1/sqrt(head_dim) into the Q third of the fused QKV projection.
       * 3x3 edge taps * border masks -> per-tap gates [9, B*L, C].
       * cross-batch additive attention mask (block-diagonal softmax).
       * matmul weights cast to bf16 (f32 accumulation in-kernel)."""
    f32, bf16 = jnp.float32, jnp.bfloat16
    qscale = 1.0 / (float(HEAD_DIM) ** 0.5)

    wqkv = p['w_qkv'].at[:, :C].multiply(qscale)
    bqkv = p['b_qkv'].at[:, :C].multiply(qscale)

    hh = jnp.arange(L) // W
    ww = jnp.arange(L) % W
    gates = []
    for dh in (-1, 0, 1):
        for dw in (-1, 0, 1):
            tap = (dh + 1) * 3 + (dw + 1)
            valid = ((hh + dh >= 0) & (hh + dh < H) &
                     (ww + dw >= 0) & (ww + dw < W)).astype(f32)          # [L]
            gates.append(jnp.tile(valid, (B,))[:, None] * p['edge_w'][tap][None, :])
    edge_gate = jnp.stack(gates, axis=0)                                  # [9, BL, C]

    bid = jnp.arange(BL) // L
    abias = jnp.where(bid[:, None] == bid[None, :], 0.0, -1e30).astype(f32)

    return {
        'lw': (p['local_w'] * p['local_scale']).astype(bf16),
        'lb': p['local_bias'].astype(f32),
        'edge_gate': edge_gate,
        'wqkv': wqkv.astype(bf16),
        'bqkv': bqkv.astype(f32),
        'abias': abias,
        'wo': p['wo'].astype(bf16),
        'bo': p['bo'].astype(f32),
        'gw': (p['global_w'] * p['global_scale']).astype(bf16),
        'gb': p['global_bias'].astype(f32),
        'w1a': p['w1a'].astype(bf16),
        'w1b': p['w1b'].astype(bf16),
        'b1': p['b1'].astype(f32),
        'w2': (p['w2'] * p['bn1d_scale']).astype(bf16),
        'b2': (p['b2'] * p['bn1d_scale'] + p['bn1d_bias']).astype(f32),
    }


# ============================ plain-JAX glue ================================

def _avg_pool2(x):
    b, h, w, c = x.shape
    return x.reshape(b, h // 2, 2, w // 2, 2, c).mean(axis=(2, 4))


def standin_backbone(x_nhwc, p):
    # TODO(synk): timm efficientnetv2 backbone cannot be reproduced in-script;
    # replaced by a deterministic downsampling stand-in producing two feature
    # maps with the same role as features[-2] and features[-1].
    f = _avg_pool2(x_nhwc)                                        # [B, 8, 8, IN_C]
    f4 = jax.nn.relu(jnp.einsum('bhwc,cd->bhwd', f, p['bb_w4']))  # [B, 8, 8, CL]
    f5 = jax.nn.relu(jnp.einsum('bhwc,cd->bhwd', _avg_pool2(f4), p['bb_w5']))
    return f4, f5                                                 # [B, 4, 4, CG]


def fold_bn(gamma, beta, mean, var, eps):
    scale = gamma / jnp.sqrt(var + eps)
    bias = beta - mean * scale
    return scale.reshape(1, -1), bias.reshape(1, -1)


# ============================ full forward ==================================

def hoam_v2_forward(x_nchw, p):
    x = jnp.transpose(x_nchw, (0, 2, 3, 1)).astype(jnp.float32)   # NCHW -> NHWC
    f4, f5 = standin_backbone(x, p)                               # [B,8,8,CL], [B,4,4,CG]
    x4 = f4.reshape(BL, CL).astype(jnp.bfloat16)                  # batch folded rows
    x5 = f5.reshape(BLG, CG).astype(jnp.bfloat16)
    return hoam_fused(x4, x5, prepare_kernel_operands(p))         # [B, EMB]


def make_params():
    key = jax.random.PRNGKey(0)
    ks = jax.random.split(key, 20)
    f32 = jnp.float32

    def n(k, shape, s=0.05):
        return (s * jax.random.normal(k, shape)).astype(f32)

    # BatchNorm2d(1280, eps=0.001), eval mode with running stats (0, 1)
    lg_, lb_ = 1.0 + n(ks[2], (C,), 0.01), n(ks[3], (C,), 0.01)
    gg_, gb_ = 1.0 + n(ks[6], (C,), 0.01), n(ks[7], (C,), 0.01)
    zeros_c, ones_c = jnp.zeros((C,), f32), jnp.ones((C,), f32)
    local_scale, local_bias = fold_bn(lg_, lb_, zeros_c, ones_c, 1e-3)
    global_scale, global_bias = fold_bn(gg_, gb_, zeros_c, ones_c, 1e-3)

    # BatchNorm1d(embedding_size), eval mode, default eps
    bn1d_scale, bn1d_bias = fold_bn(jnp.ones((EMB,), f32), jnp.zeros((EMB,), f32),
                                    jnp.zeros((EMB,), f32), jnp.ones((EMB,), f32),
                                    1e-5)

    w1 = n(ks[17], (2 * C, EMB))
    return {
        'bb_w4': n(ks[0], (IN_C, CL), 0.2),
        'bb_w5': n(ks[1], (CL, CG), 0.2),
        'local_w': n(ks[4], (CL, C), 0.1),
        'local_scale': local_scale, 'local_bias': local_bias,
        'edge_w': n(ks[5], (9, C), 0.1),              # 3x3 depthwise taps
        'global_w': n(ks[8], (CG, C), 0.1),
        'global_scale': global_scale, 'global_bias': global_bias,
        # fused QKV projection [C, 3C] + bias [1, 3C]
        'w_qkv': jnp.concatenate([n(ks[9], (C, C)), n(ks[10], (C, C)),
                                  n(ks[11], (C, C))], axis=1),
        'b_qkv': jnp.concatenate([n(ks[13], (1, C), 0.01), n(ks[14], (1, C), 0.01),
                                  n(ks[15], (1, C), 0.01)], axis=1),
        'wo': n(ks[12], (C, C)), 'bo': n(ks[16], (1, C), 0.01),
        # head Linear(2C, EMB) split into [0:C] / [C:2C]  (order: [g, pooled_orth])
        'w1a': w1[:C], 'w1b': w1[C:], 'b1': n(ks[18], (1, EMB), 0.01),
        'w2': n(ks[19], (EMB, EMB)), 'b2': jnp.zeros((1, EMB), f32),
        'bn1d_scale': bn1d_scale, 'bn1d_bias': bn1d_bias,
    }


if __name__ == "__main__":
    params = make_params()
    x = jax.random.normal(jax.random.PRNGKey(0), (B, IN_C, IN_HW, IN_HW),
                          dtype=jnp.float32)
    fwd = jax.jit(hoam_v2_forward)
    out = fwd(x, params)
    jax.block_until_ready(out)
    assert out.shape == (B, EMB) and out.dtype == jnp.float32
    assert bool(jnp.all(jnp.isfinite(out)))
    print("KERNEL_OK")
</pallas_src>

<mosaic_0001>
module attributes {stable_mosaic.version = 11 : i64} {
  func.func @hoam_fused_kernel(%arg0: i32, %arg1: memref<128x16xbf16, #tpu.memory_space<vmem>>, %arg2: memref<32x32xbf16, #tpu.memory_space<vmem>>, %arg3: memref<16x128xbf16, #tpu.memory_space<vmem>>, %arg4: memref<1x128xf32, #tpu.memory_space<vmem>>, %arg5: memref<9x128x128xf32, #tpu.memory_space<vmem>>, %arg6: memref<128x384xbf16, #tpu.memory_space<vmem>>, %arg7: memref<1x384xf32, #tpu.memory_space<vmem>>, %arg8: memref<128x128xf32, #tpu.memory_space<vmem>>, %arg9: memref<128x128xbf16, #tpu.memory_space<vmem>>, %arg10: memref<1x128xf32, #tpu.memory_space<vmem>>, %arg11: memref<32x128xbf16, #tpu.memory_space<vmem>>, %arg12: memref<1x128xf32, #tpu.memory_space<vmem>>, %arg13: memref<128x32xbf16, #tpu.memory_space<vmem>>, %arg14: memref<128x32xbf16, #tpu.memory_space<vmem>>, %arg15: memref<1x32xf32, #tpu.memory_space<vmem>>, %arg16: memref<32x32xbf16, #tpu.memory_space<vmem>>, %arg17: memref<1x32xf32, #tpu.memory_space<vmem>>, %arg18: memref<2x32xf32, #tpu.memory_space<vmem>>, %arg19: memref<128x384xf32, #tpu.memory_space<vmem>>, %arg20: memref<128x128xf32, #tpu.memory_space<vmem>>) attributes {dimension_semantics = [#tpu.dimension_semantics<arbitrary>], iteration_bounds = array<i64: 1>, scalar_prefetch = 0 : i64, scratch_operands = 2 : i64, tpu.core_type = #tpu.core_type<tc>, window_params = [{pipeline_mode = #tpu.pipeline_mode<synchronous>, transform_indices = @transform_0, window_bounds = array<i64: 128, 16>}, {pipeline_mode = #tpu.pipeline_mode<synchronous>, transform_indices = @transform_1, window_bounds = array<i64: 32, 32>}, {pipeline_mode = #tpu.pipeline_mode<synchronous>, transform_indices = @transform_2, window_bounds = array<i64: 16, 128>}, {pipeline_mode = #tpu.pipeline_mode<synchronous>, transform_indices = @transform_3, window_bounds = array<i64: 1, 128>}, {pipeline_mode = #tpu.pipeline_mode<synchronous>, transform_indices = @transform_4, window_bounds = array<i64: 9, 128, 128>}, {pipeline_mode = #tpu.pipeline_mode<synchronous>, transform_indices = @transform_5, window_bounds = array<i64: 128, 384>}, {pipeline_mode = #tpu.pipeline_mode<synchronous>, transform_indices = @transform_6, window_bounds = array<i64: 1, 384>}, {pipeline_mode = #tpu.pipeline_mode<synchronous>, transform_indices = @transform_7, window_bounds = array<i64: 128, 128>}, {pipeline_mode = #tpu.pipeline_mode<synchronous>, transform_indices = @transform_8, window_bounds = array<i64: 128, 128>}, {pipeline_mode = #tpu.pipeline_mode<synchronous>, transform_indices = @transform_9, window_bounds = array<i64: 1, 128>}, {pipeline_mode = #tpu.pipeline_mode<synchronous>, transform_indices = @transform_10, window_bounds = array<i64: 32, 128>}, {pipeline_mode = #tpu.pipeline_mode<synchronous>, transform_indices = @transform_11, window_bounds = array<i64: 1, 128>}, {pipeline_mode = #tpu.pipeline_mode<synchronous>, transform_indices = @transform_12, window_bounds = array<i64: 128, 32>}, {pipeline_mode = #tpu.pipeline_mode<synchronous>, transform_indices = @transform_13, window_bounds = array<i64: 128, 32>}, {pipeline_mode = #tpu.pipeline_mode<synchronous>, transform_indices = @transform_14, window_bounds = array<i64: 1, 32>}, {pipeline_mode = #tpu.pipeline_mode<synchronous>, transform_indices = @transform_15, window_bounds = array<i64: 32, 32>}, {pipeline_mode = #tpu.pipeline_mode<synchronous>, transform_indices = @transform_16, window_bounds = array<i64: 1, 32>}, {pipeline_mode = #tpu.pipeline_mode<synchronous>, transform_indices = @transform_17, window_bounds = array<i64: 2, 32>}]} {
    %c0 = arith.constant 0 : index
    %c0_0 = arith.constant 0 : index
    %0 = vector.load %arg1[%c0, %c0_0] : memref<128x16xbf16, #tpu.memory_space<vmem>>, vector<128x16xbf16>
    %c0_1 = arith.constant 0 : index
    %c0_2 = arith.constant 0 : index
    %1 = vector.load %arg3[%c0_1, %c0_2] : memref<16x128xbf16, #tpu.memory_space<vmem>>, vector<16x128xbf16>
    %cst = arith.constant dense<0.000000e+00> : vector<128x128xf32>
    %2 = tpu.matmul %0, %1, %cst {dimension_numbers = #tpu.dot_dimension_numbers<[1], [0], [0], [1], [0, 0, 1, 1], [], []>} : vector<128x16xbf16>, vector<16x128xbf16>, vector<128x128xf32> -> vector<128x128xf32>
    %c0_3 = arith.constant 0 : index
    %c0_4 = arith.constant 0 : index
    %3 = vector.load %arg4[%c0_3, %c0_4] : memref<1x128xf32, #tpu.memory_space<vmem>>, vector<1x128xf32>
    %4 = vector.broadcast %3 : vector<1x128xf32> to vector<128x128xf32>
    %5 = arith.addf %2, %4 : vector<128x128xf32>
    %6 = arith.negf %5 : vector<128x128xf32>
    %7 = math.exp %6 : vector<128x128xf32>
    %cst_5 = arith.constant 1.000000e+00 : f32
    %8 = vector.broadcast %cst_5 : f32 to vector<128x128xf32>
    %9 = arith.addf %8, %7 : vector<128x128xf32>
    %10 = arith.divf %8, %9 : vector<128x128xf32>
    %11 = arith.mulf %5, %10 : vector<128x128xf32>
    %c4 = arith.constant 4 : index
    %c0_6 = arith.constant 0 : index
    %c0_7 = arith.constant 0 : index
    %12 = vector.load %arg5[%c4, %c0_6, %c0_7] : memref<9x128x128xf32, #tpu.memory_space<vmem>>, vector<1x128x128xf32>
    %13 = vector.shape_cast %12 : vector<1x128x128xf32> to vector<128x128xf32>
    %14 = arith.mulf %11, %13 : vector<128x128xf32>
    %c9_i32 = arith.constant 9 : i32
    %15 = tpu.dynamic_rotate %11 by %c9_i32 dim 0 : vector<128x128xf32>, i32 -> vector<128x128xf32>
    %c0_8 = arith.constant 0 : index
    %c0_9 = arith.constant 0 : index
    %c0_10 = arith.constant 0 : index
    %16 = vector.load %arg5[%c0_8, %c0_9, %c0_10] : memref<9x128x128xf32, #tpu.memory_space<vmem>>, vector<1x128x128xf32>
    %17 = vector.shape_cast %16 : vector<1x128x128xf32> to vector<128x128xf32>
    %18 = arith.mulf %15, %17 : vector<128x128xf32>
    %19 = arith.addf %14, %18 : vector<128x128xf32>
    %c8_i32 = arith.constant 8 : i32
    %20 = tpu.dynamic_rotate %11 by %c8_i32 dim 0 : vector<128x128xf32>, i32 -> vector<128x128xf32>
    %c1 = arith.constant 1 : index
    %c0_11 = arith.constant 0 : index
    %c0_12 = arith.constant 0 : index
    %21 = vector.load %arg5[%c1, %c0_11, %c0_12] : memref<9x128x128xf32, #tpu.memory_space<vmem>>, vector<1x128x128xf32>
    %22 = vector.shape_cast %21 : vector<1x128x128xf32> to vector<128x128xf32>
    %23 = arith.mulf %20, %22 : vector<128x128xf32>
    %24 = arith.addf %19, %23 : vector<128x128xf32>
    %c7_i32 = arith.constant 7 : i32
    %25 = tpu.dynamic_rotate %11 by %c7_i32 dim 0 : vector<128x128xf32>, i32 -> vector<128x128xf32>
    %c2 = arith.constant 2 : index
    %c0_13 = arith.constant 0 : index
    %c0_14 = arith.constant 0 : index
    %26 = vector.load %arg5[%c2, %c0_13, %c0_14] : memref<9x128x128xf32, #tpu.memory_space<vmem>>, vector<1x128x128xf32>
    %27 = vector.shape_cast %26 : vector<1x128x128xf32> to vector<128x128xf32>
    %28 = arith.mulf %25, %27 : vector<128x128xf32>
    %29 = arith.addf %24, %28 : vector<128x128xf32>
    %c1_i32 = arith.constant 1 : i32
    %30 = tpu.dynamic_rotate %11 by %c1_i32 dim 0 : vector<128x128xf32>, i32 -> vector<128x128xf32>
    %c3 = arith.constant 3 : index
    %c0_15 = arith.constant 0 : index
    %c0_16 = arith.constant 0 : index
    %31 = vector.load %arg5[%c3, %c0_15, %c0_16] : memref<9x128x128xf32, #tpu.memory_space<vmem>>, vector<1x128x128xf32>
    %32 = vector.shape_cast %31 : vector<1x128x128xf32> to vector<128x128xf32>
    %33 = arith.mulf %30, %32 : vector<128x128xf32>
    %34 = arith.addf %29, %33 : vector<128x128xf32>
    %c127_i32 = arith.constant 127 : i32
    %35 = tpu.dynamic_rotate %11 by %c127_i32 dim 0 : vector<128x128xf32>, i32 -> vector<128x128xf32>
    %c5 = arith.constant 5 : index
    %c0_17 = arith.constant 0 : index
    %c0_18 = arith.constant 0 : index
    %36 = vector.load %arg5[%c5, %c0_17, %c0_18] : memref<9x128x128xf32, #tpu.memory_space<vmem>>, vector<1x128x128xf32>
    %37 = vector.shape_cast %36 : vector<1x128x128xf32> to vector<128x128xf32>
    %38 = arith.mulf %35, %37 : vector<128x128xf32>
    %39 = arith.addf %34, %38 : vector<128x128xf32>
    %c121_i32 = arith.constant 121 : i32
    %40 = tpu.dynamic_rotate %11 by %c121_i32 dim 0 : vector<128x128xf32>, i32 -> vector<128x128xf32>
    %c6 = arith.constant 6 : index
    %c0_19 = arith.constant 0 : index
    %c0_20 = arith.constant 0 : index
    %41 = vector.load %arg5[%c6, %c0_19, %c0_20] : memref<9x128x128xf32, #tpu.memory_space<vmem>>, vector<1x128x128xf32>
    %42 = vector.shape_cast %41 : vector<1x128x128xf32> to vector<128x128xf32>
    %43 = arith.mulf %40, %42 : vector<128x128xf32>
    %44 = arith.addf %39, %43 : vector<128x128xf32>
    %c120_i32 = arith.constant 120 : i32
    %45 = tpu.dynamic_rotate %11 by %c120_i32 dim 0 : vector<128x128xf32>, i32 -> vector<128x128xf32>
    %c7 = arith.constant 7 : index
    %c0_21 = arith.constant 0 : index
    %c0_22 = arith.constant 0 : index
    %46 = vector.load %arg5[%c7, %c0_21, %c0_22] : memref<9x128x128xf32, #tpu.memory_space<vmem>>, vector<1x128x128xf32>
    %47 = vector.shape_cast %46 : vector<1x128x128xf32> to vector<128x128xf32>
    %48 = arith.mulf %45, %47 : vector<128x128xf32>
    %49 = arith.addf %44, %48 : vector<128x128xf32>
    %c119_i32 = arith.constant 119 : i32
    %50 = tpu.dynamic_rotate %11 by %c119_i32 dim 0 : vector<128x128xf32>, i32 -> vector<128x128xf32>
    %c8 = arith.constant 8 : index
    %c0_23 = arith.constant 0 : index
    %c0_24 = arith.constant 0 : index
    %51 = vector.load %arg5[%c8, %c0_23, %c0_24] : memref<9x128x128xf32, #tpu.memory_space<vmem>>, vector<1x128x128xf32>
    %52 = vector.shape_cast %51 : vector<1x128x128xf32> to vector<128x128xf32>
    %53 = arith.mulf %50, %52 : vector<128x128xf32>
    %54 = arith.addf %49, %53 : vector<128x128xf32>
    %55 = arith.addf %11, %54 : vector<128x128xf32>
    %56 = arith.truncf %55 : vector<128x128xf32> to vector<128x128xbf16>
    %c0_25 = arith.constant 0 : index
    %c0_26 = arith.constant 0 : index
    %57 = vector.load %arg6[%c0_25, %c0_26] : memref<128x384xbf16, #tpu.memory_space<vmem>>, vector<128x384xbf16>
    %cst_27 = arith.constant dense<0.000000e+00> : vector<128x384xf32>
    %58 = tpu.matmul %56, %57, %cst_27 {dimension_numbers = #tpu.dot_dimension_numbers<[1], [0], [0], [1], [0, 0, 1, 1], [], []>} : vector<128x128xbf16>, vector<128x384xbf16>, vector<128x384xf32> -> vector<128x384xf32>
    %c0_28 = arith.constant 0 : index
    %c0_29 = arith.constant 0 : index
    %59 = vector.load %arg7[%c0_28, %c0_29] : memref<1x384xf32, #tpu.memory_space<vmem>>, vector<1x384xf32>
    %60 = vector.broadcast %59 : vector<1x384xf32> to vector<128x384xf32>
    %61 = arith.addf %58, %60 : vector<128x384xf32>
    %c0_30 = arith.constant 0 : index
    %c0_31 = arith.constant 0 : index
    %62 = vector.load %arg19[%c0_30, %c0_31] : memref<128x384xf32, #tpu.memory_space<vmem>>, vector<128x384xf32>
    tpu.vector_store %arg19[%c0_30, %c0_31], %61 {strides = array<i32>} : memref<128x384xf32, #tpu.memory_space<vmem>>, vector<128x384xf32>,
    %c0_32 = arith.constant 0 : index
    %c0_33 = arith.constant 0 : index
    %63 = vector.load %arg19[%c0_32, %c0_33] : memref<128x384xf32, #tpu.memory_space<vmem>>, vector<128x16xf32>
    %64 = arith.truncf %63 : vector<128x16xf32> to vector<128x16xbf16>
    %c0_34 = arith.constant 0 : index
    %c128 = arith.constant 128 : index
    %65 = vector.load %arg19[%c0_34, %c128] : memref<128x384xf32, #tpu.memory_space<vmem>>, vector<128x16xf32>
    %66 = arith.truncf %65 : vector<128x16xf32> to vector<128x16xbf16>
    %c0_35 = arith.constant 0 : index
    %c256 = arith.constant 256 : index
    %67 = vector.load %arg19[%c0_35, %c256] : memref<128x384xf32, #tpu.memory_space<vmem>>, vector<128x16xf32>
    %68 = arith.truncf %67 : vector<128x16xf32> to vector<128x16xbf16>
    %cst_36 = arith.constant dense<0.000000e+00> : vector<128x128xf32>
    %69 = tpu.matmul %64, %66, %cst_36 {dimension_numbers = #tpu.dot_dimension_numbers<[1], [1], [0], [0], [0, 0, 1, 0], [], []>} : vector<128x16xbf16>, vector<128x16xbf16>, vector<128x128xf32> -> vector<128x128xf32>
    %c0_37 = arith.constant 0 : index
    %c0_38 = arith.constant 0 : index
    %70 = vector.load %arg8[%c0_37, %c0_38] : memref<128x128xf32, #tpu.memory_space<vmem>>, vector<128x128xf32>
    %71 = arith.addf %69, %70 : vector<128x128xf32>
    %cst_39 = arith.constant dense<0xFF800000> : vector<128xf32>
    %72 = vector.multi_reduction <maximumf>, %71, %cst_39 [1] : vector<128x128xf32> to vector<128xf32>
    %73 = vector.shape_cast %72 : vector<128xf32> to vector<128x1xf32>
    %74 = vector.broadcast %73 : vector<128x1xf32> to vector<128x128xf32>
    %75 = arith.subf %71, %74 : vector<128x128xf32>
    %76 = math.exp %75 : vector<128x128xf32>
    %cst_40 = arith.constant dense<0.000000e+00> : vector<128xf32>
    %77 = vector.multi_reduction <add>, %76, %cst_40 [1] : vector<128x128xf32> to vector<128xf32>
    %78 = vector.shape_cast %77 : vector<128xf32> to vector<128x1xf32>
    %79 = tpu.reciprocal %78 {approx = true} : vector<128x1xf32> -> vector<128x1xf32>
    %80 = vector.broadcast %79 : vector<128x1xf32> to vector<128x128xf32>
    %81 = arith.mulf %76, %80 : vector<128x128xf32>
    %82 = arith.truncf %81 : vector<128x128xf32> to vector<128x128xbf16>
    %cst_41 = arith.constant dense<0.000000e+00> : vector<128x16xf32>
    %83 = tpu.matmul %82, %68, %cst_41 {dimension_numbers = #tpu.dot_dimension_numbers<[1], [0], [0], [1], [0, 0, 1, 1], [], []>} : vector<128x128xbf16>, vector<128x16xbf16>, vector<128x16xf32> -> vector<128x16xf32>
    %c0_42 = arith.constant 0 : index
    %c0_43 = arith.constant 0 : index
    %84 = vector.load %arg20[%c0_42, %c0_43] : memref<128x128xf32, #tpu.memory_space<vmem>>, vector<128x16xf32>
    tpu.vector_store %arg20[%c0_42, %c0_43], %83 {strides = array<i32>} : memref<128x128xf32, #tpu.memory_space<vmem>>, vector<128x16xf32>,
    %c0_44 = arith.constant 0 : index
    %c16 = arith.constant 16 : index
    %85 = vector.load %arg19[%c0_44, %c16] : memref<128x384xf32, #tpu.memory_space<vmem>>, vector<128x16xf32>
    %86 = arith.truncf %85 : vector<128x16xf32> to vector<128x16xbf16>
    %c0_45 = arith.constant 0 : index
    %c144 = arith.constant 144 : index
    %87 = vector.load %arg19[%c0_45, %c144] : memref<128x384xf32, #tpu.memory_space<vmem>>, vector<128x16xf32>
    %88 = arith.truncf %87 : vector<128x16xf32> to vector<128x16xbf16>
    %c0_46 = arith.constant 0 : index
    %c272 = arith.constant 272 : index
    %89 = vector.load %arg19[%c0_46, %c272] : memref<128x384xf32, #tpu.memory_space<vmem>>, vector<128x16xf32>
    %90 = arith.truncf %89 : vector<128x16xf32> to vector<128x16xbf16>
    %cst_47 = arith.constant dense<0.000000e+00> : vector<128x128xf32>
    %91 = tpu.matmul %86, %88, %cst_47 {dimension_numbers = #tpu.dot_dimension_numbers<[1], [1], [0], [0], [0, 0, 1, 0], [], []>} : vector<128x16xbf16>, vector<128x16xbf16>, vector<128x128xf32> -> vector<128x128xf32>
    %c0_48 = arith.constant 0 : index
    %c0_49 = arith.constant 0 : index
    %92 = vector.load %arg8[%c0_48, %c0_49] : memref<128x128xf32, #tpu.memory_space<vmem>>, vector<128x128xf32>
    %93 = arith.addf %91, %92 : vector<128x128xf32>
    %cst_50 = arith.constant dense<0xFF800000> : vector<128xf32>
    %94 = vector.multi_reduction <maximumf>, %93, %cst_50 [1] : vector<128x128xf32> to vector<128xf32>
    %95 = vector.shape_cast %94 : vector<128xf32> to vector<128x1xf32>
    %96 = vector.broadcast %95 : vector<128x1xf32> to vector<128x128xf32>
    %97 = arith.subf %93, %96 : vector<128x128xf32>
    %98 = math.exp %97 : vector<128x128xf32>
    %cst_51 = arith.constant dense<0.000000e+00> : vector<128xf32>
    %99 = vector.multi_reduction <add>, %98, %cst_51 [1] : vector<128x128xf32> to vector<128xf32>
    %100 = vector.shape_cast %99 : vector<128xf32> to vector<128x1xf32>
    %101 = tpu.reciprocal %100 {approx = true} : vector<128x1xf32> -> vector<128x1xf32>
    %102 = vector.broadcast %101 : vector<128x1xf32> to vector<128x128xf32>
    %103 = arith.mulf %98, %102 : vector<128x128xf32>
    %104 = arith.truncf %103 : vector<128x128xf32> to vector<128x128xbf16>
    %cst_52 = arith.constant dense<0.000000e+00> : vector<128x16xf32>
    %105 = tpu.matmul %104, %90, %cst_52 {dimension_numbers = #tpu.dot_dimension_numbers<[1], [0], [0], [1], [0, 0, 1, 1], [], []>} : vector<128x128xbf16>, vector<128x16xbf16>, vector<128x16xf32> -> vector<128x16xf32>
    %c0_53 = arith.constant 0 : index
    %c16_54 = arith.constant 16 : index
    %106 = vector.load %arg20[%c0_53, %c16_54] : memref<128x128xf32, #tpu.memory_space<vmem>>, vector<128x16xf32>
    tpu.vector_store %arg20[%c0_53, %c16_54], %105 {strides = array<i32>} : memref<128x128xf32, #tpu.memory_space<vmem>>, vector<128x16xf32>,
    %c0_55 = arith.constant 0 : index
    %c32 = arith.constant 32 : index
    %107 = vector.load %arg19[%c0_55, %c32] : memref<128x384xf32, #tpu.memory_space<vmem>>, vector<128x16xf32>
    %108 = arith.truncf %107 : vector<128x16xf32> to vector<128x16xbf16>
    %c0_56 = arith.constant 0 : index
    %c160 = arith.constant 160 : index
    %109 = vector.load %arg19[%c0_56, %c160] : memref<128x384xf32, #tpu.memory_space<vmem>>, vector<128x16xf32>
    %110 = arith.truncf %109 : vector<128x16xf32> to vector<128x16xbf16>
    %c0_57 = arith.constant 0 : index
    %c288 = arith.constant 288 : index
    %111 = vector.load %arg19[%c0_57, %c288] : memref<128x384xf32, #tpu.memory_space<vmem>>, vector<128x16xf32>
    %112 = arith.truncf %111 : vector<128x16xf32> to vector<128x16xbf16>
    %cst_58 = arith.constant dense<0.000000e+00> : vector<128x128xf32>
    %113 = tpu.matmul %108, %110, %cst_58 {dimension_numbers = #tpu.dot_dimension_numbers<[1], [1], [0], [0], [0, 0, 1, 0], [], []>} : vector<128x16xbf16>, vector<128x16xbf16>, vector<128x128xf32> -> vector<128x128xf32>
    %c0_59 = arith.constant 0 : index
    %c0_60 = arith.constant 0 : index
    %114 = vector.load %arg8[%c0_59, %c0_60] : memref<128x128xf32, #tpu.memory_space<vmem>>, vector<128x128xf32>
    %115 = arith.addf %113, %114 : vector<128x128xf32>
    %cst_61 = arith.constant dense<0xFF800000> : vector<128xf32>
    %116 = vector.multi_reduction <maximumf>, %115, %cst_61 [1] : vector<128x128xf32> to vector<128xf32>
    %117 = vector.shape_cast %116 : vector<128xf32> to vector<128x1xf32>
    %118 = vector.broadcast %117 : vector<128x1xf32> to vector<128x128xf32>
    %119 = arith.subf %115, %118 : vector<128x128xf32>
    %120 = math.exp %119 : vector<128x128xf32>
    %cst_62 = arith.constant dense<0.000000e+00> : vector<128xf32>
    %121 = vector.multi_reduction <add>, %120, %cst_62 [1] : vector<128x128xf32> to vector<128xf32>
    %122 = vector.shape_cast %121 : vector<128xf32> to vector<128x1xf32>
    %123 = tpu.reciprocal %122 {approx = true} : vector<128x1xf32> -> vector<128x1xf32>
    %124 = vector.broadcast %123 : vector<128x1xf32> to vector<128x128xf32>
    %125 = arith.mulf %120, %124 : vector<128x128xf32>
    %126 = arith.truncf %125 : vector<128x128xf32> to vector<128x128xbf16>
    %cst_63 = arith.constant dense<0.000000e+00> : vector<128x16xf32>
    %127 = tpu.matmul %126, %112, %cst_63 {dimension_numbers = #tpu.dot_dimension_numbers<[1], [0], [0], [1], [0, 0, 1, 1], [], []>} : vector<128x128xbf16>, vector<128x16xbf16>, vector<128x16xf32> -> vector<128x16xf32>
    %c0_64 = arith.constant 0 : index
    %c32_65 = arith.constant 32 : index
    %128 = vector.load %arg20[%c0_64, %c32_65] : memref<128x128xf32, #tpu.memory_space<vmem>>, vector<128x16xf32>
    tpu.vector_store %arg20[%c0_64, %c32_65], %127 {strides = array<i32>} : memref<128x128xf32, #tpu.memory_space<vmem>>, vector<128x16xf32>,
    %c0_66 = arith.constant 0 : index
    %c48 = arith.constant 48 : index
    %129 = vector.load %arg19[%c0_66, %c48] : memref<128x384xf32, #tpu.memory_space<vmem>>, vector<128x16xf32>
    %130 = arith.truncf %129 : vector<128x16xf32> to vector<128x16xbf16>
    %c0_67 = arith.constant 0 : index
    %c176 = arith.constant 176 : index
    %131 = vector.load %arg19[%c0_67, %c176] : memref<128x384xf32, #tpu.memory_space<vmem>>, vector<128x16xf32>
    %132 = arith.truncf %131 : vector<128x16xf32> to vector<128x16xbf16>
    %c0_68 = arith.constant 0 : index
    %c304 = arith.constant 304 : index
    %133 = vector.load %arg19[%c0_68, %c304] : memref<128x384xf32, #tpu.memory_space<vmem>>, vector<128x16xf32>
    %134 = arith.truncf %133 : vector<128x16xf32> to vector<128x16xbf16>
    %cst_69 = arith.constant dense<0.000000e+00> : vector<128x128xf32>
    %135 = tpu.matmul %130, %132, %cst_69 {dimension_numbers = #tpu.dot_dimension_numbers<[1], [1], [0], [0], [0, 0, 1, 0], [], []>} : vector<128x16xbf16>, vector<128x16xbf16>, vector<128x128xf32> -> vector<128x128xf32>
    %c0_70 = arith.constant 0 : index
    %c0_71 = arith.constant 0 : index
    %136 = vector.load %arg8[%c0_70, %c0_71] : memref<128x128xf32, #tpu.memory_space<vmem>>, vector<128x128xf32>
    %137 = arith.addf %135, %136 : vector<128x128xf32>
    %cst_72 = arith.constant dense<0xFF800000> : vector<128xf32>
    %138 = vector.multi_reduction <maximumf>, %137, %cst_72 [1] : vector<128x128xf32> to vector<128xf32>
    %139 = vector.shape_cast %138 : vector<128xf32> to vector<128x1xf32>
    %140 = vector.broadcast %139 : vector<128x1xf32> to vector<128x128xf32>
    %141 = arith.subf %137, %140 : vector<128x128xf32>
    %142 = math.exp %141 : vector<128x128xf32>
    %cst_73 = arith.constant dense<0.000000e+00> : vector<128xf32>
    %143 = vector.multi_reduction <add>, %142, %cst_73 [1] : vector<128x128xf32> to vector<128xf32>
    %144 = vector.shape_cast %143 : vector<128xf32> to vector<128x1xf32>
    %145 = tpu.reciprocal %144 {approx = true} : vector<128x1xf32> -> vector<128x1xf32>
    %146 = vector.broadcast %145 : vector<128x1xf32> to vector<128x128xf32>
    %147 = arith.mulf %142, %146 : vector<128x128xf32>
    %148 = arith.truncf %147 : vector<128x128xf32> to vector<128x128xbf16>
    %cst_74 = arith.constant dense<0.000000e+00> : vector<128x16xf32>
    %149 = tpu.matmul %148, %134, %cst_74 {dimension_numbers = #tpu.dot_dimension_numbers<[1], [0], [0], [1], [0, 0, 1, 1], [], []>} : vector<128x128xbf16>, vector<128x16xbf16>, vector<128x16xf32> -> vector<128x16xf32>
    %c0_75 = arith.constant 0 : index
    %c48_76 = arith.constant 48 : index
    %150 = vector.load %arg20[%c0_75, %c48_76] : memref<128x128xf32, #tpu.memory_space<vmem>>, vector<128x16xf32>
    tpu.vector_store %arg20[%c0_75, %c48_76], %149 {strides = array<i32>} : memref<128x128xf32, #tpu.memory_space<vmem>>, vector<128x16xf32>,
    %c0_77 = arith.constant 0 : index
    %c64 = arith.constant 64 : index
    %151 = vector.load %arg19[%c0_77, %c64] : memref<128x384xf32, #tpu.memory_space<vmem>>, vector<128x16xf32>
    %152 = arith.truncf %151 : vector<128x16xf32> to vector<128x16xbf16>
    %c0_78 = arith.constant 0 : index
    %c192 = arith.constant 192 : index
    %153 = vector.load %arg19[%c0_78, %c192] : memref<128x384xf32, #tpu.memory_space<vmem>>, vector<128x16xf32>
    %154 = arith.truncf %153 : vector<128x16xf32> to vector<128x16xbf16>
    %c0_79 = arith.constant 0 : index
    %c320 = arith.constant 320 : index
    %155 = vector.load %arg19[%c0_79, %c320] : memref<128x384xf32, #tpu.memory_space<vmem>>, vector<128x16xf32>
    %156 = arith.truncf %155 : vector<128x16xf32> to vector<128x16xbf16>
    %cst_80 = arith.constant dense<0.000000e+00> : vector<128x128xf32>
    %157 = tpu.matmul %152, %154, %cst_80 {dimension_numbers = #tpu.dot_dimension_numbers<[1], [1], [0], [0], [0, 0, 1, 0], [], []>} : vector<128x16xbf16>, vector<128x16xbf16>, vector<128x128xf32> -> vector<128x128xf32>
    %c0_81 = arith.constant 0 : index
    %c0_82 = arith.constant 0 : index
    %158 = vector.load %arg8[%c0_81, %c0_82] : memref<128x128xf32, #tpu.memory_space<vmem>>, vector<128x128xf32>
    %159 = arith.addf %157, %158 : vector<128x128xf32>
    %cst_83 = arith.constant dense<0xFF800000> : vector<128xf32>
    %160 = vector.multi_reduction <maximumf>, %159, %cst_83 [1] : vector<128x128xf32> to vector<128xf32>
    %161 = vector.shape_cast %160 : vector<128xf32> to vector<128x1xf32>
    %162 = vector.broadcast %161 : vector<128x1xf32> to vector<128x128xf32>
    %163 = arith.subf %159, %162 : vector<128x128xf32>
    %164 = math.exp %163 : vector<128x128xf32>
    %cst_84 = arith.constant dense<0.000000e+00> : vector<128xf32>
    %165 = vector.multi_reduction <add>, %164, %cst_84 [1] : vector<128x128xf32> to vector<128xf32>
    %166 = vector.shape_cast %165 : vector<128xf32> to vector<128x1xf32>
    %167 = tpu.reciprocal %166 {approx = true} : vector<128x1xf32> -> vector<128x1xf32>
    %168 = vector.broadcast %167 : vector<128x1xf32> to vector<128x128xf32>
    %169 = arith.mulf %164, %168 : vector<128x128xf32>
    %170 = arith.truncf %169 : vector<128x128xf32> to vector<128x128xbf16>
    %cst_85 = arith.constant dense<0.000000e+00> : vector<128x16xf32>
    %171 = tpu.matmul %170, %156, %cst_85 {dimension_numbers = #tpu.dot_dimension_numbers<[1], [0], [0], [1], [0, 0, 1, 1], [], []>} : vector<128x128xbf16>, vector<128x16xbf16>, vector<128x16xf32> -> vector<128x16xf32>
    %c0_86 = arith.constant 0 : index
    %c64_87 = arith.constant 64 : index
    %172 = vector.load %arg20[%c0_86, %c64_87] : memref<128x128xf32, #tpu.memory_space<vmem>>, vector<128x16xf32>
    tpu.vector_store %arg20[%c0_86, %c64_87], %171 {strides = array<i32>} : memref<128x128xf32, #tpu.memory_space<vmem>>, vector<128x16xf32>,
    %c0_88 = arith.constant 0 : index
    %c80 = arith.constant 80 : index
    %173 = vector.load %arg19[%c0_88, %c80] : memref<128x384xf32, #tpu.memory_space<vmem>>, vector<128x16xf32>
    %174 = arith.truncf %173 : vector<128x16xf32> to vector<128x16xbf16>
    %c0_89 = arith.constant 0 : index
    %c208 = arith.constant 208 : index
    %175 = vector.load %arg19[%c0_89, %c208] : memref<128x384xf32, #tpu.memory_space<vmem>>, vector<128x16xf32>
    %176 = arith.truncf %175 : vector<128x16xf32> to vector<128x16xbf16>
    %c0_90 = arith.constant 0 : index
    %c336 = arith.constant 336 : index
    %177 = vector.load %arg19[%c0_90, %c336] : memref<128x384xf32, #tpu.memory_space<vmem>>, vector<128x16xf32>
    %178 = arith.truncf %177 : vector<128x16xf32> to vector<128x16xbf16>
    %cst_91 = arith.constant dense<0.000000e+00> : vector<128x128xf32>
    %179 = tpu.matmul %174, %176, %cst_91 {dimension_numbers = #tpu.dot_dimension_numbers<[1], [1], [0], [0], [0, 0, 1, 0], [], []>} : vector<128x16xbf16>, vector<128x16xbf16>, vector<128x128xf32> -> vector<128x128xf32>
    %c0_92 = arith.constant 0 : index
    %c0_93 = arith.constant 0 : index
    %180 = vector.load %arg8[%c0_92, %c0_93] : memref<128x128xf32, #tpu.memory_space<vmem>>, vector<128x128xf32>
    %181 = arith.addf %179, %180 : vector<128x128xf32>
    %cst_94 = arith.constant dense<0xFF800000> : vector<128xf32>
    %182 = vector.multi_reduction <maximumf>, %181, %cst_94 [1] : vector<128x128xf32> to vector<128xf32>
    %183 = vector.shape_cast %182 : vector<128xf32> to vector<128x1xf32>
    %184 = vector.broadcast %183 : vector<128x1xf32> to vector<128x128xf32>
    %185 = arith.subf %181, %184 : vector<128x128xf32>
    %186 = math.exp %185 : vector<128x128xf32>
    %cst_95 = arith.constant dense<0.000000e+00> : vector<128xf32>
    %187 = vector.multi_reduction <add>, %186, %cst_95 [1] : vector<128x128xf32> to vector<128xf32>
    %188 = vector.shape_cast %187 : vector<128xf32> to vector<128x1xf32>
    %189 = tpu.reciprocal %188 {approx = true} : vector<128x1xf32> -> vector<128x1xf32>
    %190 = vector.broadcast %189 : vector<128x1xf32> to vector<128x128xf32>
    %191 = arith.mulf %186, %190 : vector<128x128xf32>
    %192 = arith.truncf %191 : vector<128x128xf32> to vector<128x128xbf16>
    %cst_96 = arith.constant dense<0.000000e+00> : vector<128x16xf32>
    %193 = tpu.matmul %192, %178, %cst_96 {dimension_numbers = #tpu.dot_dimension_numbers<[1], [0], [0], [1], [0, 0, 1, 1], [], []>} : vector<128x128xbf16>, vector<128x16xbf16>, vector<128x16xf32> -> vector<128x16xf32>
    %c0_97 = arith.constant 0 : index
    %c80_98 = arith.constant 80 : index
    %194 = vector.load %arg20[%c0_97, %c80_98] : memref<128x128xf32, #tpu.memory_space<vmem>>, vector<128x16xf32>
    tpu.vector_store %arg20[%c0_97, %c80_98], %193 {strides = array<i32>} : memref<128x128xf32, #tpu.memory_space<vmem>>, vector<128x16xf32>,
    %c0_99 = arith.constant 0 : index
    %c96 = arith.constant 96 : index
    %195 = vector.load %arg19[%c0_99, %c96] : memref<128x384xf32, #tpu.memory_space<vmem>>, vector<128x16xf32>
    %196 = arith.truncf %195 : vector<128x16xf32> to vector<128x16xbf16>
    %c0_100 = arith.constant 0 : index
    %c224 = arith.constant 224 : index
    %197 = vector.load %arg19[%c0_100, %c224] : memref<128x384xf32, #tpu.memory_space<vmem>>, vector<128x16xf32>
    %198 = arith.truncf %197 : vector<128x16xf32> to vector<128x16xbf16>
    %c0_101 = arith.constant 0 : index
    %c352 = arith.constant 352 : index
    %199 = vector.load %arg19[%c0_101, %c352] : memref<128x384xf32, #tpu.memory_space<vmem>>, vector<128x16xf32>
    %200 = arith.truncf %199 : vector<128x16xf32> to vector<128x16xbf16>
    %cst_102 = arith.constant dense<0.000000e+00> : vector<128x128xf32>
    %201 = tpu.matmul %196, %198, %cst_102 {dimension_numbers = #tpu.dot_dimension_numbers<[1], [1], [0], [0], [0, 0, 1, 0], [], []>} : vector<128x16xbf16>, vector<128x16xbf16>, vector<128x128xf32> -> vector<128x128xf32>
    %c0_103 = arith.constant 0 : index
    %c0_104 = arith.constant 0 : index
    %202 = vector.load %arg8[%c0_103, %c0_104] : memref<128x128xf32, #tpu.memory_space<vmem>>, vector<128x128xf32>
    %203 = arith.addf %201, %202 : vector<128x128xf32>
    %cst_105 = arith.constant dense<0xFF800000> : vector<128xf32>
    %204 = vector.multi_reduction <maximumf>, %203, %cst_105 [1] : vector<128x128xf32> to vector<128xf32>
    %205 = vector.shape_cast %204 : vector<128xf32> to vector<128x1xf32>
    %206 = vector.broadcast %205 : vector<128x1xf32> to vector<128x128xf32>
    %207 = arith.subf %203, %206 : vector<128x128xf32>
    %208 = math.exp %207 : vector<128x128xf32>
    %cst_106 = arith.constant dense<0.000000e+00> : vector<128xf32>
    %209 = vector.multi_reduction <add>, %208, %cst_106 [1] : vector<128x128xf32> to vector<128xf32>
    %210 = vector.shape_cast %209 : vector<128xf32> to vector<128x1xf32>
    %211 = tpu.reciprocal %210 {approx = true} : vector<128x1xf32> -> vector<128x1xf32>
    %212 = vector.broadcast %211 : vector<128x1xf32> to vector<128x128xf32>
    %213 = arith.mulf %208, %212 : vector<128x128xf32>
    %214 = arith.truncf %213 : vector<128x128xf32> to vector<128x128xbf16>
    %cst_107 = arith.constant dense<0.000000e+00> : vector<128x16xf32>
    %215 = tpu.matmul %214, %200, %cst_107 {dimension_numbers = #tpu.dot_dimension_numbers<[1], [0], [0], [1], [0, 0, 1, 1], [], []>} : vector<128x128xbf16>, vector<128x16xbf16>, vector<128x16xf32> -> vector<128x16xf32>
    %c0_108 = arith.constant 0 : index
    %c96_109 = arith.constant 96 : index
    %216 = vector.load %arg20[%c0_108, %c96_109] : memref<128x128xf32, #tpu.memory_space<vmem>>, vector<128x16xf32>
    tpu.vector_store %arg20[%c0_108, %c96_109], %215 {strides = array<i32>} : memref<128x128xf32, #tpu.memory_space<vmem>>, vector<128x16xf32>,
    %c0_110 = arith.constant 0 : index
    %c112 = arith.constant 112 : index
    %217 = vector.load %arg19[%c0_110, %c112] : memref<128x384xf32, #tpu.memory_space<vmem>>, vector<128x16xf32>
    %218 = arith.truncf %217 : vector<128x16xf32> to vector<128x16xbf16>
    %c0_111 = arith.constant 0 : index
    %c240 = arith.constant 240 : index
    %219 = vector.load %arg19[%c0_111, %c240] : memref<128x384xf32, #tpu.memory_space<vmem>>, vector<128x16xf32>
    %220 = arith.truncf %219 : vector<128x16xf32> to vector<128x16xbf16>
    %c0_112 = arith.constant 0 : index
    %c368 = arith.constant 368 : index
    %221 = vector.load %arg19[%c0_112, %c368] : memref<128x384xf32, #tpu.memory_space<vmem>>, vector<128x16xf32>
    %222 = arith.truncf %221 : vector<128x16xf32> to vector<128x16xbf16>
    %cst_113 = arith.constant dense<0.000000e+00> : vector<128x128xf32>
    %223 = tpu.matmul %218, %220, %cst_113 {dimension_numbers = #tpu.dot_dimension_numbers<[1], [1], [0], [0], [0, 0, 1, 0], [], []>} : vector<128x16xbf16>, vector<128x16xbf16>, vector<128x128xf32> -> vector<128x128xf32>
    %c0_114 = arith.constant 0 : index
    %c0_115 = arith.constant 0 : index
    %224 = vector.load %arg8[%c0_114, %c0_115] : memref<128x128xf32, #tpu.memory_space<vmem>>, vector<128x128xf32>
    %225 = arith.addf %223, %224 : vector<128x128xf32>
    %cst_116 = arith.constant dense<0xFF800000> : vector<128xf32>
    %226 = vector.multi_reduction <maximumf>, %225, %cst_116 [1] : vector<128x128xf32> to vector<128xf32>
    %227 = vector.shape_cast %226 : vector<128xf32> to vector<128x1xf32>
    %228 = vector.broadcast %227 : vector<128x1xf32> to vector<128x128xf32>
    %229 = arith.subf %225, %228 : vector<128x128xf32>
    %230 = math.exp %229 : vector<128x128xf32>
    %cst_117 = arith.constant dense<0.000000e+00> : vector<128xf32>
    %231 = vector.multi_reduction <add>, %230, %cst_117 [1] : vector<128x128xf32> to vector<128xf32>
    %232 = vector.shape_cast %231 : vector<128xf32> to vector<128x1xf32>
    %233 = tpu.reciprocal %232 {approx = true} : vector<128x1xf32> -> vector<128x1xf32>
    %234 = vector.broadcast %233 : vector<128x1xf32> to vector<128x128xf32>
    %235 = arith.mulf %230, %234 : vector<128x128xf32>
    %236 = arith.truncf %235 : vector<128x128xf32> to vector<128x128xbf16>
    %cst_118 = arith.constant dense<0.000000e+00> : vector<128x16xf32>
    %237 = tpu.matmul %236, %222, %cst_118 {dimension_numbers = #tpu.dot_dimension_numbers<[1], [0], [0], [1], [0, 0, 1, 1], [], []>} : vector<128x128xbf16>, vector<128x16xbf16>, vector<128x16xf32> -> vector<128x16xf32>
    %c0_119 = arith.constant 0 : index
    %c112_120 = arith.constant 112 : index
    %238 = vector.load %arg20[%c0_119, %c112_120] : memref<128x128xf32, #tpu.memory_space<vmem>>, vector<128x16xf32>
    tpu.vector_store %arg20[%c0_119, %c112_120], %237 {strides = array<i32>} : memref<128x128xf32, #tpu.memory_space<vmem>>, vector<128x16xf32>,
    %c0_121 = arith.constant 0 : index
    %c0_122 = arith.constant 0 : index
    %239 = vector.load %arg20[%c0_121, %c0_122] : memref<128x128xf32, #tpu.memory_space<vmem>>, vector<128x128xf32>
    %240 = arith.truncf %239 : vector<128x128xf32> to vector<128x128xbf16>
    %c0_123 = arith.constant 0 : index
    %c0_124 = arith.constant 0 : index
    %241 = vector.load %arg9[%c0_123, %c0_124] : memref<128x128xbf16, #tpu.memory_space<vmem>>, vector<128x128xbf16>
    %cst_125 = arith.constant dense<0.000000e+00> : vector<128x128xf32>
    %242 = tpu.matmul %240, %241, %cst_125 {dimension_numbers = #tpu.dot_dimension_numbers<[1], [0], [0], [1], [0, 0, 1, 1], [], []>} : vector<128x128xbf16>, vector<128x128xbf16>, vector<128x128xf32> -> vector<128x128xf32>
    %c0_126 = arith.constant 0 : index
    %c0_127 = arith.constant 0 : index
    %243 = vector.load %arg10[%c0_126, %c0_127] : memref<1x128xf32, #tpu.memory_space<vmem>>, vector<1x128xf32>
    %244 = vector.broadcast %243 : vector<1x128xf32> to vector<128x128xf32>
    %245 = arith.addf %242, %244 : vector<128x128xf32>
    %c0_128 = arith.constant 0 : index
    %c0_129 = arith.constant 0 : index
    %246 = vector.load %arg2[%c0_128, %c0_129] : memref<32x32xbf16, #tpu.memory_space<vmem>>, vector<32x32xbf16>
    %c0_130 = arith.constant 0 : index
    %c0_131 = arith.constant 0 : index
    %247 = vector.load %arg11[%c0_130, %c0_131] : memref<32x128xbf16, #tpu.memory_space<vmem>>, vector<32x128xbf16>
    %cst_132 = arith.constant dense<0.000000e+00> : vector<32x128xf32>
    %248 = tpu.matmul %246, %247, %cst_132 {dimension_numbers = #tpu.dot_dimension_numbers<[1], [0], [0], [1], [0, 0, 1, 1], [], []>} : vector<32x32xbf16>, vector<32x128xbf16>, vector<32x128xf32> -> vector<32x128xf32>
    %c0_133 = arith.constant 0 : index
    %c0_134 = arith.constant 0 : index
    %249 = vector.load %arg12[%c0_133, %c0_134] : memref<1x128xf32, #tpu.memory_space<vmem>>, vector<1x128xf32>
    %250 = vector.broadcast %249 : vector<1x128xf32> to vector<32x128xf32>
    %251 = arith.addf %248, %250 : vector<32x128xf32>
    %252 = arith.negf %251 : vector<32x128xf32>
    %253 = math.exp %252 : vector<32x128xf32>
    %cst_135 = arith.constant 1.000000e+00 : f32
    %254 = vector.broadcast %cst_135 : f32 to vector<32x128xf32>
    %255 = arith.addf %254, %253 : vector<32x128xf32>
    %256 = arith.divf %254, %255 : vector<32x128xf32>
    %257 = arith.mulf %251, %256 : vector<32x128xf32>
    %258 = vector.extract_strided_slice %257 {offsets = [0, 0], sizes = [16, 128], strides = [1, 1]} : vector<32x128xf32> to vector<16x128xf32>
    %cst_136 = arith.constant dense<0.000000e+00> : vector<128xf32>
    %259 = vector.multi_reduction <add>, %258, %cst_136 [0] : vector<16x128xf32> to vector<128xf32>
    %260 = vector.shape_cast %259 : vector<128xf32> to vector<1x128xf32>
    %cst_137 = arith.constant 1.600000e+01 : f32
    %261 = vector.broadcast %cst_137 : f32 to vector<1x128xf32>
    %262 = arith.divf %260, %261 : vector<1x128xf32>
    %263 = vector.extract_strided_slice %245 {offsets = [0, 0], sizes = [64, 128], strides = [1, 1]} : vector<128x128xf32> to vector<64x128xf32>
    %264 = arith.mulf %262, %262 : vector<1x128xf32>
    %cst_138 = arith.constant dense<0.000000e+00> : vector<1xf32>
    %265 = vector.multi_reduction <add>, %264, %cst_138 [1] : vector<1x128xf32> to vector<1xf32>
    %266 = vector.shape_cast %265 : vector<1xf32> to vector<1x1xf32>
    %267 = vector.broadcast %262 : vector<1x128xf32> to vector<64x128xf32>
    %268 = arith.mulf %263, %267 : vector<64x128xf32>
    %cst_139 = arith.constant dense<0.000000e+00> : vector<64xf32>
    %269 = vector.multi_reduction <add>, %268, %cst_139 [1] : vector<64x128xf32> to vector<64xf32>
    %270 = vector.shape_cast %269 : vector<64xf32> to vector<64x1xf32>
    %cst_140 = arith.constant 9.99999996E-13 : f32
    %271 = vector.broadcast %cst_140 : f32 to vector<1x1xf32>
    %272 = arith.addf %266, %271 : vector<1x1xf32>
    %273 = vector.broadcast %272 : vector<1x1xf32> to vector<64x1xf32>
    %274 = arith.divf %270, %273 : vector<64x1xf32>
    %275 = vector.broadcast %274 : vector<64x1xf32> to vector<64x128xf32>
    %276 = vector.broadcast %262 : vector<1x128xf32> to vector<64x128xf32>
    %277 = arith.mulf %275, %276 : vector<64x128xf32>
    %278 = arith.subf %263, %277 : vector<64x128xf32>
    %cst_141 = arith.constant dense<0.000000e+00> : vector<128xf32>
    %279 = vector.multi_reduction <add>, %278, %cst_141 [0] : vector<64x128xf32> to vector<128xf32>
    %280 = vector.shape_cast %279 : vector<128xf32> to vector<1x128xf32>
    %cst_142 = arith.constant 6.400000e+01 : f32
    %281 = vector.broadcast %cst_142 : f32 to vector<1x128xf32>
    %282 = arith.divf %280, %281 : vector<1x128xf32>
    %283 = vector.extract_strided_slice %257 {offsets = [16, 0], sizes = [16, 128], strides = [1, 1]} : vector<32x128xf32> to vector<16x128xf32>
    %cst_143 = arith.constant dense<0.000000e+00> : vector<128xf32>
    %284 = vector.multi_reduction <add>, %283, %cst_143 [0] : vector<16x128xf32> to vector<128xf32>
    %285 = vector.shape_cast %284 : vector<128xf32> to vector<1x128xf32>
    %cst_144 = arith.constant 1.600000e+01 : f32
    %286 = vector.broadcast %cst_144 : f32 to vector<1x128xf32>
    %287 = arith.divf %285, %286 : vector<1x128xf32>
    %288 = vector.extract_strided_slice %245 {offsets = [64, 0], sizes = [64, 128], strides = [1, 1]} : vector<128x128xf32> to vector<64x128xf32>
    %289 = arith.mulf %287, %287 : vector<1x128xf32>
    %cst_145 = arith.constant dense<0.000000e+00> : vector<1xf32>
    %290 = vector.multi_reduction <add>, %289, %cst_145 [1] : vector<1x128xf32> to vector<1xf32>
    %291 = vector.shape_cast %290 : vector<1xf32> to vector<1x1xf32>
    %292 = vector.broadcast %287 : vector<1x128xf32> to vector<64x128xf32>
    %293 = arith.mulf %288, %292 : vector<64x128xf32>
    %cst_146 = arith.constant dense<0.000000e+00> : vector<64xf32>
    %294 = vector.multi_reduction <add>, %293, %cst_146 [1] : vector<64x128xf32> to vector<64xf32>
    %295 = vector.shape_cast %294 : vector<64xf32> to vector<64x1xf32>
    %cst_147 = arith.constant 9.99999996E-13 : f32
    %296 = vector.broadcast %cst_147 : f32 to vector<1x1xf32>
    %297 = arith.addf %291, %296 : vector<1x1xf32>
    %298 = vector.broadcast %297 : vector<1x1xf32> to vector<64x1xf32>
    %299 = arith.divf %295, %298 : vector<64x1xf32>
    %300 = vector.broadcast %299 : vector<64x1xf32> to vector<64x128xf32>
    %301 = vector.broadcast %287 : vector<1x128xf32> to vector<64x128xf32>
    %302 = arith.mulf %300, %301 : vector<64x128xf32>
    %303 = arith.subf %288, %302 : vector<64x128xf32>
    %cst_148 = arith.constant dense<0.000000e+00> : vector<128xf32>
    %304 = vector.multi_reduction <add>, %303, %cst_148 [0] : vector<64x128xf32> to vector<128xf32>
    %305 = vector.shape_cast %304 : vector<128xf32> to vector<1x128xf32>
    %cst_149 = arith.constant 6.400000e+01 : f32
    %306 = vector.broadcast %cst_149 : f32 to vector<1x128xf32>
    %307 = arith.divf %305, %306 : vector<1x128xf32>
    %308 = tpu.concatenate %262, %287 in 0 : vector<1x128xf32>, vector<1x128xf32> -> vector<2x128xf32>
    %309 = tpu.concatenate %282, %307 in 0 : vector<1x128xf32>, vector<1x128xf32> -> vector<2x128xf32>
    %310 = arith.truncf %308 : vector<2x128xf32> to vector<2x128xbf16>
    %c0_150 = arith.constant 0 : index
    %c0_151 = arith.constant 0 : index
    %311 = vector.load %arg13[%c0_150, %c0_151] : memref<128x32xbf16, #tpu.memory_space<vmem>>, vector<128x32xbf16>
    %cst_152 = arith.constant dense<0.000000e+00> : vector<2x32xf32>
    %312 = tpu.matmul %310, %311, %cst_152 {dimension_numbers = #tpu.dot_dimension_numbers<[1], [0], [0], [1], [0, 0, 1, 1], [], []>} : vector<2x128xbf16>, vector<128x32xbf16>, vector<2x32xf32> -> vector<2x32xf32>
    %313 = arith.truncf %309 : vector<2x128xf32> to vector<2x128xbf16>
    %c0_153 = arith.constant 0 : index
    %c0_154 = arith.constant 0 : index
    %314 = vector.load %arg14[%c0_153, %c0_154] : memref<128x32xbf16, #tpu.memory_space<vmem>>, vector<128x32xbf16>
    %cst_155 = arith.constant dense<0.000000e+00> : vector<2x32xf32>
    %315 = tpu.matmul %313, %314, %cst_155 {dimension_numbers = #tpu.dot_dimension_numbers<[1], [0], [0], [1], [0, 0, 1, 1], [], []>} : vector<2x128xbf16>, vector<128x32xbf16>, vector<2x32xf32> -> vector<2x32xf32>
    %316 = arith.addf %312, %315 : vector<2x32xf32>
    %c0_156 = arith.constant 0 : index
    %c0_157 = arith.constant 0 : index
    %317 = vector.load %arg15[%c0_156, %c0_157] : memref<1x32xf32, #tpu.memory_space<vmem>>, vector<1x32xf32>
    %318 = vector.broadcast %317 : vector<1x32xf32> to vector<2x32xf32>
    %319 = arith.addf %316, %318 : vector<2x32xf32>
    %320 = arith.truncf %319 : vector<2x32xf32> to vector<2x32xbf16>
    %c0_158 = arith.constant 0 : index
    %c0_159 = arith.constant 0 : index
    %321 = vector.load %arg16[%c0_158, %c0_159] : memref<32x32xbf16, #tpu.memory_space<vmem>>, vector<32x32xbf16>
    %cst_160 = arith.constant dense<0.000000e+00> : vector<2x32xf32>
    %322 = tpu.matmul %320, %321, %cst_160 {dimension_numbers = #tpu.dot_dimension_numbers<[1], [0], [0], [1], [0, 0, 1, 1], [], []>} : vector<2x32xbf16>, vector<32x32xbf16>, vector<2x32xf32> -> vector<2x32xf32>
    %c0_161 = arith.constant 0 : index
    %c0_162 = arith.constant 0 : index
    %323 = vector.load %arg17[%c0_161, %c0_162] : memref<1x32xf32, #tpu.memory_space<vmem>>, vector<1x32xf32>
    %324 = vector.broadcast %323 : vector<1x32xf32> to vector<2x32xf32>
    %325 = arith.addf %322, %324 : vector<2x32xf32>
    %c0_163 = arith.constant 0 : index
    %c0_164 = arith.constant 0 : index
    %326 = vector.load %arg18[%c0_163, %c0_164] : memref<2x32xf32, #tpu.memory_space<vmem>>, vector<2x32xf32>
    tpu.vector_store %arg18[%c0_163, %c0_164], %325 {strides = array<i32>} : memref<2x32xf32, #tpu.memory_space<vmem>>, vector<2x32xf32>,
    return
  }
  func.func @transform_0(%arg0: i32) -> (i32, i32) {
    %c0_i32 = arith.constant 0 : i32
    %c0_i32_0 = arith.constant 0 : i32
    %c0_i32_1 = arith.constant 0 : i32
    return %c0_i32, %c0_i32_0 : i32, i32
  }
  func.func @transform_1(%arg0: i32) -> (i32, i32) {
    %c0_i32 = arith.constant 0 : i32
    %c0_i32_0 = arith.constant 0 : i32
    %c0_i32_1 = arith.constant 0 : i32
    return %c0_i32, %c0_i32_0 : i32, i32
  }
  func.func @transform_2(%arg0: i32) -> (i32, i32) {
    %c0_i32 = arith.constant 0 : i32
    %c0_i32_0 = arith.constant 0 : i32
    %c0_i32_1 = arith.constant 0 : i32
    return %c0_i32, %c0_i32_0 : i32, i32
  }
  func.func @transform_3(%arg0: i32) -> (i32, i32) {
    %c0_i32 = arith.constant 0 : i32
    %c0_i32_0 = arith.constant 0 : i32
    %c0_i32_1 = arith.constant 0 : i32
    return %c0_i32, %c0_i32_0 : i32, i32
  }
  func.func @transform_4(%arg0: i32) -> (i32, i32, i32) {
    %c0_i32 = arith.constant 0 : i32
    %c0_i32_0 = arith.constant 0 : i32
    %c0_i32_1 = arith.constant 0 : i32
    %c0_i32_2 = arith.constant 0 : i32
    return %c0_i32, %c0_i32_0, %c0_i32_1 : i32, i32, i32
  }
  func.func @transform_5(%arg0: i32) -> (i32, i32) {
    %c0_i32 = arith.constant 0 : i32
    %c0_i32_0 = arith.constant 0 : i32
    %c0_i32_1 = arith.constant 0 : i32
    return %c0_i32, %c0_i32_0 : i32, i32
  }
  func.func @transform_6(%arg0: i32) -> (i32, i32) {
    %c0_i32 = arith.constant 0 : i32
    %c0_i32_0 = arith.constant 0 : i32
    %c0_i32_1 = arith.constant 0 : i32
    return %c0_i32, %c0_i32_0 : i32, i32
  }
  func.func @transform_7(%arg0: i32) -> (i32, i32) {
    %c0_i32 = arith.constant 0 : i32
    %c0_i32_0 = arith.constant 0 : i32
    %c0_i32_1 = arith.constant 0 : i32
    return %c0_i32, %c0_i32_0 : i32, i32
  }
  func.func @transform_8(%arg0: i32) -> (i32, i32) {
    %c0_i32 = arith.constant 0 : i32
    %c0_i32_0 = arith.constant 0 : i32
    %c0_i32_1 = arith.constant 0 : i32
    return %c0_i32, %c0_i32_0 : i32, i32
  }
  func.func @transform_9(%arg0: i32) -> (i32, i32) {
    %c0_i32 = arith.constant 0 : i32
    %c0_i32_0 = arith.constant 0 : i32
    %c0_i32_1 = arith.constant 0 : i32
    return %c0_i32, %c0_i32_0 : i32, i32
  }
  func.func @transform_10(%arg0: i32) -> (i32, i32) {
    %c0_i32 = arith.constant 0 : i32
    %c0_i32_0 = arith.constant 0 : i32
    %c0_i32_1 = arith.constant 0 : i32
    return %c0_i32, %c0_i32_0 : i32, i32
  }
  func.func @transform_11(%arg0: i32) -> (i32, i32) {
    %c0_i32 = arith.constant 0 : i32
    %c0_i32_0 = arith.constant 0 : i32
    %c0_i32_1 = arith.constant 0 : i32
    return %c0_i32, %c0_i32_0 : i32, i32
  }
  func.func @transform_12(%arg0: i32) -> (i32, i32) {
    %c0_i32 = arith.constant 0 : i32
    %c0_i32_0 = arith.constant 0 : i32
    %c0_i32_1 = arith.constant 0 : i32
    return %c0_i32, %c0_i32_0 : i32, i32
  }
  func.func @transform_13(%arg0: i32) -> (i32, i32) {
    %c0_i32 = arith.constant 0 : i32
    %c0_i32_0 = arith.constant 0 : i32
    %c0_i32_1 = arith.constant 0 : i32
    return %c0_i32, %c0_i32_0 : i32, i32
  }
  func.func @transform_14(%arg0: i32) -> (i32, i32) {
    %c0_i32 = arith.constant 0 : i32
    %c0_i32_0 = arith.constant 0 : i32
    %c0_i32_1 = arith.constant 0 : i32
    return %c0_i32, %c0_i32_0 : i32, i32
  }
  func.func @transform_15(%arg0: i32) -> (i32, i32) {
    %c0_i32 = arith.constant 0 : i32
    %c0_i32_0 = arith.constant 0 : i32
    %c0_i32_1 = arith.constant 0 : i32
    return %c0_i32, %c0_i32_0 : i32, i32
  }
  func.func @transform_16(%arg0: i32) -> (i32, i32) {
    %c0_i32 = arith.constant 0 : i32
    %c0_i32_0 = arith.constant 0 : i32
    %c0_i32_1 = arith.constant 0 : i32
    return %c0_i32, %c0_i32_0 : i32, i32
  }
  func.func @transform_17(%arg0: i32) -> (i32, i32) {
    %c0_i32 = arith.constant 0 : i32
    %c0_i32_0 = arith.constant 0 : i32
    %c0_i32_1 = arith.constant 0 : i32
    return %c0_i32, %c0_i32_0 : i32, i32
  }
}

</mosaic_0001>

<llo_original>
// kernel: tile.48
$region0: #{tile.48}
  #allocation0 [shape = 's32[1]{0}', space=sflag, size = 0x4, scoped, tag = 'scoped memory for tile.48']
  %s0 = inlined_call_operand.vmem [shape: f32[64], index: 0, kind: input, shape index: {}]
  %s1 = inlined_call_operand.vmem [shape: f32[2,64], index: 1, kind: output, shape index: {}]
  // Predicated region
  $region2: #{tile.48} parent=0 // pred_check
    _
  $region3: #{tile.48} parent=0 // pred_check_branch
    %3 = sbr.rel (0) target = $region5
  $region4: #{tile.48} parent=0 // pred_region
    _
  $region5: #{tile.48} parent=0 // pred_fallthru
    _
  %v4 = vld [vmem:[%s0] ss:$0 sm:$0xff]
  %5 = vst [vmem:[%s1] sm:$0x3] %v4

// kernel: hoam_v2_forward.1
$region0: #{hoam_v2_forward.1}
  #allocation0 [shape = 'u32[]', space=smem, size = 0x4, offset = 0x4, fixed_abs, tag = 'smem constant byte address 0x4 - core index']
  #allocation1 [shape = 'u32[144,128]{1,0:T(1,128)}', space=vmem, size = 0x12000, scoped, tag = 'internal scratch']
  #allocation2 [shape = 'f32[128,384]{1,0:T(8,128)}', space=vmem, size = 0x30000, scoped, tag = 'scratch operand']
  #allocation3 [shape = 'f32[128,128]{1,0:T(8,128)}', space=vmem, size = 0x10000, scoped, tag = 'scratch operand']
  %s0 = inlined_call_operand.vmem [shape: bf16[128,16], index: 0, kind: input, shape index: {}]
  %s1 = inlined_call_operand.vmem [shape: bf16[32,32], index: 1, kind: input, shape index: {}]
  %s2 = inlined_call_operand.vmem [shape: bf16[16,128], index: 2, kind: input, shape index: {}]
  %s3 = inlined_call_operand.vmem [shape: f32[1,128], index: 3, kind: input, shape index: {}]
  %s4 = inlined_call_operand.vmem [shape: f32[9,128,128], index: 4, kind: input, shape index: {}]
  %s5 = inlined_call_operand.vmem [shape: bf16[128,384], index: 5, kind: input, shape index: {}]
  %s6 = inlined_call_operand.vmem [shape: f32[1,384], index: 6, kind: input, shape index: {}]
  %s7 = inlined_call_operand.vmem [shape: f32[128,128], index: 7, kind: input, shape index: {}]
  %s8 = inlined_call_operand.vmem [shape: bf16[128,128], index: 8, kind: input, shape index: {}]
  %s9 = inlined_call_operand.vmem [shape: f32[1,128], index: 9, kind: input, shape index: {}]
  %s10 = inlined_call_operand.vmem [shape: bf16[32,128], index: 10, kind: input, shape index: {}]
  %s11 = inlined_call_operand.vmem [shape: f32[1,128], index: 11, kind: input, shape index: {}]
  %s12 = inlined_call_operand.vmem [shape: bf16[128,32], index: 12, kind: input, shape index: {}]
  %s13 = inlined_call_operand.vmem [shape: bf16[128,32], index: 13, kind: input, shape index: {}]
  %s14 = inlined_call_operand.vmem [shape: f32[1,32], index: 14, kind: input, shape index: {}]
  %s15 = inlined_call_operand.vmem [shape: bf16[32,32], index: 15, kind: input, shape index: {}]
  %s16 = inlined_call_operand.vmem [shape: f32[1,32], index: 16, kind: input, shape index: {}]
  %s17 = inlined_call_operand.hbm [shape: f32[2,32], index: 17, kind: output, shape index: {}]
  %s18 = sld [smem:[#allocation0]]
  $region78: #{hoam_v2_forward.1} parent=0
    _
  %s20 = ssub.s32 1, %s18
  %s21 = scalar_select 0, %s20, %s18
  $region1: #{hoam_v2_forward.1} parent=0
    #allocation4 [shape = 'u8[1024]{0}', space=vmem, size = 0x400, scoped, tag = 'output window, operand 0, single buffered']
    #allocation5 [shape = 's32[1]{0}', space=sflag, size = 0x4, scoped, tag = 'scoped memory for hoam_v2_forward.1']
    %22 = vsyncpa [#allocation5], 0
    // Predicated region
    $region2: #{hoam_v2_forward.1} parent=1 // pred_check
      _
    $region3: #{hoam_v2_forward.1} parent=1 // pred_check_branch
      %24 = sbr.rel (0) target = $region5
    $region4: #{hoam_v2_forward.1} parent=1 // pred_region
      _
    $region5: #{hoam_v2_forward.1} parent=1 // pred_fallthru
      _
    // Predicated region
    $region6: #{hoam_v2_forward.1} parent=1 // pred_check
      _
    $region7: #{hoam_v2_forward.1} parent=1 // pred_check_branch
      %26 = sbr.rel (0) target = $region9
    $region8: #{hoam_v2_forward.1} parent=1 // pred_region
      _
    $region9: #{hoam_v2_forward.1} parent=1 // pred_fallthru
      _
    // Predicated region
    $region10: #{hoam_v2_forward.1} parent=1 // pred_check
      _
    $region11: #{hoam_v2_forward.1} parent=1 // pred_check_branch
      %28 = sbr.rel (0) target = $region13
    $region12: #{hoam_v2_forward.1} parent=1 // pred_region
      _
    $region13: #{hoam_v2_forward.1} parent=1 // pred_fallthru
      _
    // Predicated region
    $region14: #{hoam_v2_forward.1} parent=1 // pred_check
      _
    $region15: #{hoam_v2_forward.1} parent=1 // pred_check_branch
      %30 = sbr.rel (0) target = $region17
    $region16: #{hoam_v2_forward.1} parent=1 // pred_region
      _
    $region17: #{hoam_v2_forward.1} parent=1 // pred_fallthru
      _
    // Predicated region
    $region18: #{hoam_v2_forward.1} parent=1 // pred_check
      _
    $region19: #{hoam_v2_forward.1} parent=1 // pred_check_branch
      %32 = sbr.rel (0) target = $region21
    $region20: #{hoam_v2_forward.1} parent=1 // pred_region
      _
    $region21: #{hoam_v2_forward.1} parent=1 // pred_fallthru
      _
    // Predicated region
    $region22: #{hoam_v2_forward.1} parent=1 // pred_check
      _
    $region23: #{hoam_v2_forward.1} parent=1 // pred_check_branch
      %34 = sbr.rel (0) target = $region25
    $region24: #{hoam_v2_forward.1} parent=1 // pred_region
      _
    $region25: #{hoam_v2_forward.1} parent=1 // pred_fallthru
      _
    // Predicated region
    $region26: #{hoam_v2_forward.1} parent=1 // pred_check
      _
    $region27: #{hoam_v2_forward.1} parent=1 // pred_check_branch
      %36 = sbr.rel (0) target = $region29
    $region28: #{hoam_v2_forward.1} parent=1 // pred_region
      _
    $region29: #{hoam_v2_forward.1} parent=1 // pred_fallthru
      _
    // Predicated region
    $region30: #{hoam_v2_forward.1} parent=1 // pred_check
      _
    $region31: #{hoam_v2_forward.1} parent=1 // pred_check_branch
      %38 = sbr.rel (0) target = $region33
    $region32: #{hoam_v2_forward.1} parent=1 // pred_region
      _
    $region33: #{hoam_v2_forward.1} parent=1 // pred_fallthru
      _
    // Predicated region
    $region34: #{hoam_v2_forward.1} parent=1 // pred_check
      _
    $region35: #{hoam_v2_forward.1} parent=1 // pred_check_branch
      %40 = sbr.rel (0) target = $region37
    $region36: #{hoam_v2_forward.1} parent=1 // pred_region
      _
    $region37: #{hoam_v2_forward.1} parent=1 // pred_fallthru
      _
    // Predicated region
    $region38: #{hoam_v2_forward.1} parent=1 // pred_check
      _
    $region39: #{hoam_v2_forward.1} parent=1 // pred_check_branch
      %42 = sbr.rel (0) target = $region41
    $region40: #{hoam_v2_forward.1} parent=1 // pred_region
      _
    $region41: #{hoam_v2_forward.1} parent=1 // pred_fallthru
      _
    // Predicated region
    $region42: #{hoam_v2_forward.1} parent=1 // pred_check
      _
    $region43: #{hoam_v2_forward.1} parent=1 // pred_check_branch
      %44 = sbr.rel (0) target = $region45
    $region44: #{hoam_v2_forward.1} parent=1 // pred_region
      _
    $region45: #{hoam_v2_forward.1} parent=1 // pred_fallthru
      _
    // Predicated region
    $region46: #{hoam_v2_forward.1} parent=1 // pred_check
      _
    $region47: #{hoam_v2_forward.1} parent=1 // pred_check_branch
      %46 = sbr.rel (0) target = $region49
    $region48: #{hoam_v2_forward.1} parent=1 // pred_region
      _
    $region49: #{hoam_v2_forward.1} parent=1 // pred_fallthru
      _
    // Predicated region
    $region50: #{hoam_v2_forward.1} parent=1 // pred_check
      _
    $region51: #{hoam_v2_forward.1} parent=1 // pred_check_branch
      %48 = sbr.rel (0) target = $region53
    $region52: #{hoam_v2_forward.1} parent=1 // pred_region
      _
    $region53: #{hoam_v2_forward.1} parent=1 // pred_fallthru
      _
    // Predicated region
    $region54: #{hoam_v2_forward.1} parent=1 // pred_check
      _
    $region55: #{hoam_v2_forward.1} parent=1 // pred_check_branch
      %50 = sbr.rel (0) target = $region57
    $region56: #{hoam_v2_forward.1} parent=1 // pred_region
      _
    $region57: #{hoam_v2_forward.1} parent=1 // pred_fallthru
      _
    // Predicated region
    $region58: #{hoam_v2_forward.1} parent=1 // pred_check
      _
    $region59: #{hoam_v2_forward.1} parent=1 // pred_check_branch
      %52 = sbr.rel (0) target = $region61
    $region60: #{hoam_v2_forward.1} parent=1 // pred_region
      _
    $region61: #{hoam_v2_forward.1} parent=1 // pred_fallthru
      _
    // Predicated region
    $region62: #{hoam_v2_forward.1} parent=1 // pred_check
      _
    $region63: #{hoam_v2_forward.1} parent=1 // pred_check_branch
      %54 = sbr.rel (0) target = $region65
    $region64: #{hoam_v2_forward.1} parent=1 // pred_region
      _
    $region65: #{hoam_v2_forward.1} parent=1 // pred_fallthru
      _
    // Predicated region
    $region66: #{hoam_v2_forward.1} parent=1 // pred_check
      _
    $region67: #{hoam_v2_forward.1} parent=1 // pred_check_branch
      %56 = sbr.rel (0) target = $region69
    $region68: #{hoam_v2_forward.1} parent=1 // pred_region
      _
    $region69: #{hoam_v2_forward.1} parent=1 // pred_fallthru
      _
    %v58 = vld [vmem:[%s0] sm:$0xf]
    %v59 = vld [vmem:[%s0 + $0x4] sm:$0xf]
    %v60 = vld [vmem:[%s0 + $0x8] sm:$0xf]
    %v61 = vld [vmem:[%s0 + $0xc] sm:$0xf]
    %v62 = vld [vmem:[%s0 + $0x10] sm:$0xf]
    %v63 = vld [vmem:[%s0 + $0x14] sm:$0xf]
    %v64 = vld [vmem:[%s0 + $0x18] sm:$0xf]
    %v65 = vld [vmem:[%s0 + $0x1c] sm:$0xf]
    %v66 = vld [vmem:[%s0 + $0x20] sm:$0xf]
    %v67 = vld [vmem:[%s0 + $0x24] sm:$0xf]
    %v68 = vld [vmem:[%s0 + $0x28] sm:$0xf]
    %v69 = vld [vmem:[%s0 + $0x2c] sm:$0xf]
    %v70 = vld [vmem:[%s0 + $0x30] sm:$0xf]
    %v71 = vld [vmem:[%s0 + $0x34] sm:$0xf]
    %v72 = vld [vmem:[%s0 + $0x38] sm:$0xf]
    %v73 = vld [vmem:[%s0 + $0x3c] sm:$0xf]
    %v74 = vld [vmem:[%s2] sm:$0xf]
    %v75 = vld [vmem:[%s2 + $0x4] sm:$0xf]
    %v76 = vld [vmem:[%s3] sm:$0x1]
    %v78 = vlaneseq
    %v79 = vshrl.u32 %v78, 7
    %v80 = vsub.s32 0, %v79
    %v81 = vrot.slane %v76, %v80
    %v99 = vunpack.c.l.b16 %v58
    %v100 = vunpack.c.l.b16 %v59
    %v101 = vunpack.c.l.b16 %v60
    %v102 = vunpack.c.l.b16 %v61
    %v103 = vunpack.c.l.b16 %v62
    %v104 = vunpack.c.l.b16 %v63
    %v105 = vunpack.c.l.b16 %v64
    %v106 = vunpack.c.l.b16 %v65
    %v107 = vunpack.c.l.b16 %v66
    %v108 = vunpack.c.l.b16 %v67
    %v109 = vunpack.c.l.b16 %v68
    %v110 = vunpack.c.l.b16 %v69
    %v111 = vunpack.c.l.b16 %v70
    %v112 = vunpack.c.l.b16 %v71
    %v113 = vunpack.c.l.b16 %v72
    %v114 = vunpack.c.l.b16 %v73
    %v115 = vpack.c.b16 %v100, %v99
    %v116 = vpack.c.b16 %v102, %v101
    %v117 = vpack.c.b16 %v104, %v103
    %v118 = vpack.c.b16 %v106, %v105
    %v119 = vpack.c.b16 %v108, %v107
    %v120 = vpack.c.b16 %v110, %v109
    %v121 = vpack.c.b16 %v112, %v111
    %v122 = vpack.c.b16 %v114, %v113
    %v125 = vunpack.c.l.b16 %v74
    %v126 = vunpack.c.l.b16 %v75
    %v127 = vpack.c.b16 %v126, %v125
    %vm129 = vcmask 130048
    %v131 = vsel %vm129, %v115, 0
    %v134 = vsel %vm129, %v116, 0
    %v137 = vsel %vm129, %v117, 0
    %v140 = vsel %vm129, %v118, 0
    %v143 = vsel %vm129, %v119, 0
    %v146 = vsel %vm129, %v120, 0
    %v149 = vsel %vm129, %v121, 0
    %v152 = vsel %vm129, %v122, 0
    %154 = vmatprep.subr.bf16.mxu0 0
    %155 = vmatpush1.bf16.msra.mxu0 0
    %156 = vmatprep.subr.bf16.mxu0 0
    %157 = vmatpush1.bf16.msra.mxu0 0
    %158 = vmatprep.subr.bf16.mxu0 0
    %159 = vmatpush1.bf16.msra.mxu0 0
    %160 = vmatprep.subr.bf16.mxu0 0
    %161 = vmatpush1.bf16.msra.mxu0 0
    %162 = vmatprep.subr.bf16.mxu0 0
    %163 = vmatpush1.bf16.msra.mxu0 0
    %164 = vmatprep.subr.bf16.mxu0 0
    %165 = vmatpush1.bf16.msra.mxu0 0
    %166 = vmatprep.subr.bf16.mxu0 0
    %167 = vmatpush1.bf16.msra.mxu0 0
    %168 = vmatprep.subr.bf16.mxu0 0
    %169 = vmatpush1.bf16.msra.mxu0 %v127
    %170 = vmatprep.subr.bf16.mxu0 0
    %171 = vmatpush2.bf16.msra.mxu0 0
    %172 = vmatprep.subr.bf16.mxu0 0
    %173 = vmatpush2.bf16.msra.mxu0 0
    %174 = vmatprep.subr.bf16.mxu0 0
    %175 = vmatpush2.bf16.msra.mxu0 0
    %176 = vmatprep.subr.bf16.mxu0 0
    %177 = vmatpush2.bf16.msra.mxu0 0
    %178 = vmatprep.subr.bf16.mxu0 0
    %179 = vmatpush2.bf16.msra.mxu0 0
    %180 = vmatprep.subr.bf16.mxu0 0
    %181 = vmatpush2.bf16.msra.mxu0 0
    %182 = vmatprep.subr.bf16.mxu0 0
    %183 = vmatpush2.bf16.msra.mxu0 0
    %184 = vmatprep.subr.bf16.mxu0 0
    %185 = vmatpush2.bf16.msra.mxu0 0
    %186 = vmatprep.mubr.bf16.mxu0 0
    %187 = vmatmul.mubr.bf16.gmra.mxu0 %v131
    %v188 = vpop.f32.mrf.mxu0
    %v189 = vadd.f32 %v81, %v188
    %v190 = vpop.f32.mrf.mxu0
    %v191 = vpop.f32.mrf.mxu0
    %v192 = vadd.f32 %v81, %v191
    %v193 = vpop.f32.mrf.mxu0
    %194 = vmatprep.mubr.bf16.mxu0 0
    %195 = vmatmul.mubr.bf16.gmra.mxu0 %v134
    %v196 = vpop.f32.mrf.mxu0
    %v197 = vadd.f32 %v81, %v196
    %v198 = vpop.f32.mrf.mxu0
    %v199 = vpop.f32.mrf.mxu0
    %v200 = vadd.f32 %v81, %v199
    %v201 = vpop.f32.mrf.mxu0
    %202 = vmatprep.mubr.bf16.mxu0 0
    %203 = vmatmul.mubr.bf16.gmra.mxu0 %v137
    %v204 = vpop.f32.mrf.mxu0
    %v205 = vadd.f32 %v81, %v204
    %v206 = vpop.f32.mrf.mxu0
    %v207 = vpop.f32.mrf.mxu0
    %v208 = vadd.f32 %v81, %v207
    %v209 = vpop.f32.mrf.mxu0
    %210 = vmatprep.mubr.bf16.mxu0 0
    %211 = vmatmul.mubr.bf16.gmra.mxu0 %v140
    %v212 = vpop.f32.mrf.mxu0
    %v213 = vadd.f32 %v81, %v212
    %v214 = vpop.f32.mrf.mxu0
    %v215 = vpop.f32.mrf.mxu0
    %v216 = vadd.f32 %v81, %v215
    %v217 = vpop.f32.mrf.mxu0
    %218 = vmatprep.mubr.bf16.mxu0 0
    %219 = vmatmul.mubr.bf16.gmra.mxu0 %v143
    %v220 = vpop.f32.mrf.mxu0
    %v221 = vadd.f32 %v81, %v220
    %v222 = vpop.f32.mrf.mxu0
    %v223 = vpop.f32.mrf.mxu0
    %v224 = vadd.f32 %v81, %v223
    %v225 = vpop.f32.mrf.mxu0
    %226 = vmatprep.mubr.bf16.mxu0 0
    %227 = vmatmul.mubr.bf16.gmra.mxu0 %v146
    %v228 = vpop.f32.mrf.mxu0
    %v229 = vadd.f32 %v81, %v228
    %v230 = vpop.f32.mrf.mxu0
    %v231 = vpop.f32.mrf.mxu0
    %v232 = vadd.f32 %v81, %v231
    %v233 = vpop.f32.mrf.mxu0
    %234 = vmatprep.mubr.bf16.mxu0 0
    %235 = vmatmul.mubr.bf16.gmra.mxu0 %v149
    %v236 = vpop.f32.mrf.mxu0
    %v237 = vadd.f32 %v81, %v236
    %v238 = vpop.f32.mrf.mxu0
    %v239 = vpop.f32.mrf.mxu0
    %v240 = vadd.f32 %v81, %v239
    %v241 = vpop.f32.mrf.mxu0
    %242 = vmatprep.mubr.bf16.mxu0 0
    %243 = vmatmul.mubr.bf16.gmra.mxu0 %v152
    %v244 = vpop.f32.mrf.mxu0
    %v245 = vadd.f32 %v81, %v244
    %v246 = vpop.f32.mrf.mxu0
    %v247 = vpop.f32.mrf.mxu0
    %v248 = vadd.f32 %v81, %v247
    %v249 = vpop.f32.mrf.mxu0
    %250 = vdwg.mxu0
    %v251 = vxor.u32 %v189, 2147483648
    %v252 = vxor.u32 %v192, 2147483648
    %v253 = vxor.u32 %v197, 2147483648
    %v254 = vxor.u32 %v200, 2147483648
    %v255 = vxor.u32 %v205, 2147483648
    %v256 = vxor.u32 %v208, 2147483648
    %v257 = vxor.u32 %v213, 2147483648
    %v258 = vxor.u32 %v216, 2147483648
    %v259 = vxor.u32 %v221, 2147483648
    %v260 = vxor.u32 %v224, 2147483648
    %v261 = vxor.u32 %v229, 2147483648
    %v262 = vxor.u32 %v232, 2147483648
    %v263 = vxor.u32 %v237, 2147483648
    %v264 = vxor.u32 %v240, 2147483648
    %v265 = vxor.u32 %v245, 2147483648
    %v266 = vxor.u32 %v248, 2147483648
    %v267 = vmul.f32 %v251, 1.442695
    %v268 = vpow.pop %v267
    %v269 = vmul.f32 %v252, 1.442695
    %v270 = vpow.pop %v269
    %v271 = vmul.f32 %v253, 1.442695
    %v272 = vpow.pop %v271
    %v273 = vmul.f32 %v254, 1.442695
    %v274 = vpow.pop %v273
    %v275 = vmul.f32 %v255, 1.442695
    %v276 = vpow.pop %v275
    %v277 = vmul.f32 %v256, 1.442695
    %v278 = vpow.pop %v277
    %v279 = vmul.f32 %v257, 1.442695
    %v280 = vpow.pop %v279
    %v281 = vmul.f32 %v258, 1.442695
    %v282 = vpow.pop %v281
    %v283 = vmul.f32 %v259, 1.442695
    %v284 = vpow.pop %v283
    %v285 = vmul.f32 %v260, 1.442695
    %v286 = vpow.pop %v285
    %v287 = vmul.f32 %v261, 1.442695
    %v288 = vpow.pop %v287
    %v289 = vmul.f32 %v262, 1.442695
    %v290 = vpow.pop %v289
    %v291 = vmul.f32 %v263, 1.442695
    %v292 = vpow.pop %v291
    %v293 = vmul.f32 %v264, 1.442695
    %v294 = vpow.pop %v293
    %v295 = vmul.f32 %v265, 1.442695
    %v296 = vpow.pop %v295
    %v297 = vmul.f32 %v266, 1.442695
    %v298 = vpow.pop %v297
    %v299 = vadd.f32 %v268, 1.0
    %v300 = vadd.f32 %v270, 1.0
    %v301 = vadd.f32 %v272, 1.0
    %v302 = vadd.f32 %v274, 1.0
    %v303 = vadd.f32 %v276, 1.0
    %v304 = vadd.f32 %v278, 1.0
    %v305 = vadd.f32 %v280, 1.0
    %v306 = vadd.f32 %v282, 1.0
    %v307 = vadd.f32 %v284, 1.0
    %v308 = vadd.f32 %v286, 1.0
    %v309 = vadd.f32 %v288, 1.0
    %v310 = vadd.f32 %v290, 1.0
    %v311 = vadd.f32 %v292, 1.0
    %v312 = vadd.f32 %v294, 1.0
    %v313 = vadd.f32 %v296, 1.0
    %v314 = vadd.f32 %v298, 1.0
    %v315 = vrcp.pop %v299
    %v316 = vmul.f32 1.0, %v315
    %v317 = vrcp.pop %v300
    %v318 = vmul.f32 1.0, %v317
    %v319 = vrcp.pop %v301
    %v320 = vmul.f32 1.0, %v319
    %v321 = vrcp.pop %v302
    %v322 = vmul.f32 1.0, %v321
    %v323 = vrcp.pop %v303
    %v324 = vmul.f32 1.0, %v323
    %v325 = vrcp.pop %v304
    %v326 = vmul.f32 1.0, %v325
    %v327 = vrcp.pop %v305
    %v328 = vmul.f32 1.0, %v327
    %v329 = vrcp.pop %v306
    %v330 = vmul.f32 1.0, %v329
    %v331 = vrcp.pop %v307
    %v332 = vmul.f32 1.0, %v331
    %v333 = vrcp.pop %v308
    %v334 = vmul.f32 1.0, %v333
    %v335 = vrcp.pop %v309
    %v336 = vmul.f32 1.0, %v335
    %v337 = vrcp.pop %v310
    %v338 = vmul.f32 1.0, %v337
    %v339 = vrcp.pop %v311
    %v340 = vmul.f32 1.0, %v339
    %v341 = vrcp.pop %v312
    %v342 = vmul.f32 1.0, %v341
    %v343 = vrcp.pop %v313
    %v344 = vmul.f32 1.0, %v343
    %v345 = vrcp.pop %v314
    %v346 = vmul.f32 1.0, %v345
    %v347 = vmul.f32 %v189, %v316
    %v348 = vmul.f32 %v192, %v318
    %v349 = vmul.f32 %v197, %v320
    %v350 = vmul.f32 %v200, %v322
    %v351 = vmul.f32 %v205, %v324
    %v352 = vmul.f32 %v208, %v326
    %v353 = vmul.f32 %v213, %v328
    %v354 = vmul.f32 %v216, %v330
    %v355 = vmul.f32 %v221, %v332
    %v356 = vmul.f32 %v224, %v334
    %v357 = vmul.f32 %v229, %v336
    %v358 = vmul.f32 %v232, %v338
    %v359 = vmul.f32 %v237, %v340
    %v360 = vmul.f32 %v240, %v342
    %v361 = vmul.f32 %v245, %v344
    %v362 = vmul.f32 %v248, %v346
    %s363 = scalar_lea.vmem %s4, 512
    %v364 = vld [vmem:[%s363] sm:$0xff]
    %v365 = vld [vmem:[%s363 + $0x8] sm:$0xff]
    %v366 = vld [vmem:[%s363 + $0x10] sm:$0xff]
    %v367 = vld [vmem:[%s363 + $0x18] sm:$0xff]
    %v368 = vld [vmem:[%s363 + $0x20] sm:$0xff]
    %v369 = vld [vmem:[%s363 + $0x28] sm:$0xff]
    %v370 = vld [vmem:[%s363 + $0x30] sm:$0xff]
    %v371 = vld [vmem:[%s363 + $0x38] sm:$0xff]
    %v372 = vld [vmem:[%s363 + $0x40] sm:$0xff]
    %v373 = vld [vmem:[%s363 + $0x48] sm:$0xff]
    %v374 = vld [vmem:[%s363 + $0x50] sm:$0xff]
    %v375 = vld [vmem:[%s363 + $0x58] sm:$0xff]
    %v376 = vld [vmem:[%s363 + $0x60] sm:$0xff]
    %v377 = vld [vmem:[%s363 + $0x68] sm:$0xff]
    %v378 = vld [vmem:[%s363 + $0x70] sm:$0xff]
    %v379 = vld [vmem:[%s363 + $0x78] sm:$0xff]
    %v380 = vmul.f32 %v347, %v364
    %v381 = vmul.f32 %v348, %v365
    %v382 = vmul.f32 %v349, %v366
    %v383 = vmul.f32 %v350, %v367
    %v384 = vmul.f32 %v351, %v368
    %v385 = vmul.f32 %v352, %v369
    %v386 = vmul.f32 %v353, %v370
    %v387 = vmul.f32 %v354, %v371
    %v388 = vmul.f32 %v355, %v372
    %v389 = vmul.f32 %v356, %v373
    %v390 = vmul.f32 %v357, %v374
    %v391 = vmul.f32 %v358, %v375
    %v392 = vmul.f32 %v359, %v376
    %v393 = vmul.f32 %v360, %v377
    %v394 = vmul.f32 %v361, %v378
    %v395 = vmul.f32 %v362, %v379
    %v396 = vrot.slane %v347, 7
    %v397 = vrot.slane %v348, 7
    %v398 = vrot.slane %v349, 7
    %v399 = vrot.slane %v350, 7
    %v400 = vrot.slane %v351, 7
    %v401 = vrot.slane %v352, 7
    %v402 = vrot.slane %v353, 7
    %v403 = vrot.slane %v354, 7
    %v404 = vrot.slane %v355, 7
    %v405 = vrot.slane %v356, 7
    %v406 = vrot.slane %v357, 7
    %v407 = vrot.slane %v358, 7
    %v408 = vrot.slane %v359, 7
    %v409 = vrot.slane %v360, 7
    %v410 = vrot.slane %v361, 7
    %v411 = vrot.slane %v362, 7
    %v412 = vlaneseq
    %v413 = vshrl.u32 %v412, 7
    %vm414 = vcmp.lt.s32.totalorder %v413, 1
    %v415 = vsel %vm414, %v410, %v411
    %v416 = vsel %vm414, %v409, %v410
    %v417 = vsel %vm414, %v408, %v409
    %v418 = vsel %vm414, %v407, %v408
    %v419 = vsel %vm414, %v406, %v407
    %v420 = vsel %vm414, %v405, %v406
    %v421 = vsel %vm414, %v404, %v405
    %v422 = vsel %vm414, %v403, %v404
    %v423 = vsel %vm414, %v402, %v403
    %v424 = vsel %vm414, %v401, %v402
    %v425 = vsel %vm414, %v400, %v401
    %v426 = vsel %vm414, %v399, %v400
    %v427 = vsel %vm414, %v398, %v399
    %v428 = vsel %vm414, %v397, %v398
    %v429 = vsel %vm414, %v396, %v397
    %v430 = vsel %vm414, %v411, %v396
    %v431 = vld [vmem:[%s4] sm:$0xff]
    %v432 = vld [vmem:[%s4 + $0x8] sm:$0xff]
    %v433 = vld [vmem:[%s4 + $0x10] sm:$0xff]
    %v434 = vld [vmem:[%s4 + $0x18] sm:$0xff]
    %v435 = vld [vmem:[%s4 + $0x20] sm:$0xff]
    %v436 = vld [vmem:[%s4 + $0x28] sm:$0xff]
    %v437 = vld [vmem:[%s4 + $0x30] sm:$0xff]
    %v438 = vld [vmem:[%s4 + $0x38] sm:$0xff]
    %v439 = vld [vmem:[%s4 + $0x40] sm:$0xff]
    %v440 = vld [vmem:[%s4 + $0x48] sm:$0xff]
    %v441 = vld [vmem:[%s4 + $0x50] sm:$0xff]
    %v442 = vld [vmem:[%s4 + $0x58] sm:$0xff]
    %v443 = vld [vmem:[%s4 + $0x60] sm:$0xff]
    %v444 = vld [vmem:[%s4 + $0x68] sm:$0xff]
    %v445 = vld [vmem:[%s4 + $0x70] sm:$0xff]
    %v446 = vld [vmem:[%s4 + $0x78] sm:$0xff]
    %v447 = vmul.f32 %v415, %v431
    %v448 = vmul.f32 %v430, %v432
    %v449 = vmul.f32 %v429, %v433
    %v450 = vmul.f32 %v428, %v434
    %v451 = vmul.f32 %v427, %v435
    %v452 = vmul.f32 %v426, %v436
    %v453 = vmul.f32 %v425, %v437
    %v454 = vmul.f32 %v424, %v438
    %v455 = vmul.f32 %v423, %v439
    %v456 = vmul.f32 %v422, %v440
    %v457 = vmul.f32 %v421, %v441
    %v458 = vmul.f32 %v420, %v442
    %v459 = vmul.f32 %v419, %v443
    %v460 = vmul.f32 %v418, %v444
    %v461 = vmul.f32 %v417, %v445
    %v462 = vmul.f32 %v416, %v446
    %v463 = vadd.f32 %v380, %v447
    %v464 = vadd.f32 %v381, %v448
    %v465 = vadd.f32 %v382, %v449
    %v466 = vadd.f32 %v383, %v450
    %v467 = vadd.f32 %v384, %v451
    %v468 = vadd.f32 %v385, %v452
    %v469 = vadd.f32 %v386, %v453
    %v470 = vadd.f32 %v387, %v454
    %v471 = vadd.f32 %v388, %v455
    %v472 = vadd.f32 %v389, %v456
    %v473 = vadd.f32 %v390, %v457
    %v474 = vadd.f32 %v391, %v458
    %v475 = vadd.f32 %v392, %v459
    %v476 = vadd.f32 %v393, %v460
    %v477 = vadd.f32 %v394, %v461
    %v478 = vadd.f32 %v395, %v462
    %s479 = scalar_lea.vmem %s4, 128
    %v480 = vld [vmem:[%s479] sm:$0xff]
    %v481 = vld [vmem:[%s479 + $0x8] sm:$0xff]
    %v482 = vld [vmem:[%s479 + $0x10] sm:$0xff]
    %v483 = vld [vmem:[%s479 + $0x18] sm:$0xff]
    %v484 = vld [vmem:[%s479 + $0x20] sm:$0xff]
    %v485 = vld [vmem:[%s479 + $0x28] sm:$0xff]
    %v486 = vld [vmem:[%s479 + $0x30] sm:$0xff]
    %v487 = vld [vmem:[%s479 + $0x38] sm:$0xff]
    %v488 = vld [vmem:[%s479 + $0x40] sm:$0xff]
    %v489 = vld [vmem:[%s479 + $0x48] sm:$0xff]
    %v490 = vld [vmem:[%s479 + $0x50] sm:$0xff]
    %v491 = vld [vmem:[%s479 + $0x58] sm:$0xff]
    %v492 = vld [vmem:[%s479 + $0x60] sm:$0xff]
    %v493 = vld [vmem:[%s479 + $0x68] sm:$0xff]
    %v494 = vld [vmem:[%s479 + $0x70] sm:$0xff]
    %v495 = vld [vmem:[%s479 + $0x78] sm:$0xff]
    %v496 = vmul.f32 %v362, %v480
    %v497 = vmul.f32 %v347, %v481
    %v498 = vmul.f32 %v348, %v482
    %v499 = vmul.f32 %v349, %v483
    %v500 = vmul.f32 %v350, %v484
    %v501 = vmul.f32 %v351, %v485
    %v502 = vmul.f32 %v352, %v486
    %v503 = vmul.f32 %v353, %v487
    %v504 = vmul.f32 %v354, %v488
    %v505 = vmul.f32 %v355, %v489
    %v506 = vmul.f32 %v356, %v490
    %v507 = vmul.f32 %v357, %v491
    %v508 = vmul.f32 %v358, %v492
    %v509 = vmul.f32 %v359, %v493
    %v510 = vmul.f32 %v360, %v494
    %v511 = vmul.f32 %v361, %v495
    %v512 = vadd.f32 %v463, %v496
    %v513 = vadd.f32 %v464, %v497
    %v514 = vadd.f32 %v465, %v498
    %v515 = vadd.f32 %v466, %v499
    %v516 = vadd.f32 %v467, %v500
    %v517 = vadd.f32 %v468, %v501
    %v518 = vadd.f32 %v469, %v502
    %v519 = vadd.f32 %v470, %v503
    %v520 = vadd.f32 %v471, %v504
    %v521 = vadd.f32 %v472, %v505
    %v522 = vadd.f32 %v473, %v506
    %v523 = vadd.f32 %v474, %v507
    %v524 = vadd.f32 %v475, %v508
    %v525 = vadd.f32 %v476, %v509
    %v526 = vadd.f32 %v477, %v510
    %v527 = vadd.f32 %v478, %v511
    %v528 = vrot.slane %v347, 1
    %v529 = vrot.slane %v348, 1
    %v530 = vrot.slane %v349, 1
    %v531 = vrot.slane %v350, 1
    %v532 = vrot.slane %v351, 1
    %v533 = vrot.slane %v352, 1
    %v534 = vrot.slane %v353, 1
    %v535 = vrot.slane %v354, 1
    %v536 = vrot.slane %v355, 1
    %v537 = vrot.slane %v356, 1
    %v538 = vrot.slane %v357, 1
    %v539 = vrot.slane %v358, 1
    %v540 = vrot.slane %v359, 1
    %v541 = vrot.slane %v360, 1
    %v542 = vrot.slane %v361, 1
    %v543 = vrot.slane %v362, 1
    %vm544 = vcmp.lt.s32.totalorder %v413, 7
    %v545 = vsel %vm544, %v542, %v543
    %v546 = vsel %vm544, %v541, %v542
    %v547 = vsel %vm544, %v540, %v541
    %v548 = vsel %vm544, %v539, %v540
    %v549 = vsel %vm544, %v538, %v539
    %v550 = vsel %vm544, %v537, %v538
    %v551 = vsel %vm544, %v536, %v537
    %v552 = vsel %vm544, %v535, %v536
    %v553 = vsel %vm544, %v534, %v535
    %v554 = vsel %vm544, %v533, %v534
    %v555 = vsel %vm544, %v532, %v533
    %v556 = vsel %vm544, %v531, %v532
    %v557 = vsel %vm544, %v530, %v531
    %v558 = vsel %vm544, %v529, %v530
    %v559 = vsel %vm544, %v528, %v529
    %v560 = vsel %vm544, %v543, %v528
    %s561 = scalar_lea.vmem %s4, 256
    %v562 = vld [vmem:[%s561] sm:$0xff]
    %v563 = vld [vmem:[%s561 + $0x8] sm:$0xff]
    %v564 = vld [vmem:[%s561 + $0x10] sm:$0xff]
    %v565 = vld [vmem:[%s561 + $0x18] sm:$0xff]
    %v566 = vld [vmem:[%s561 + $0x20] sm:$0xff]
    %v567 = vld [vmem:[%s561 + $0x28] sm:$0xff]
    %v568 = vld [vmem:[%s561 + $0x30] sm:$0xff]
    %v569 = vld [vmem:[%s561 + $0x38] sm:$0xff]
    %v570 = vld [vmem:[%s561 + $0x40] sm:$0xff]
    %v571 = vld [vmem:[%s561 + $0x48] sm:$0xff]
    %v572 = vld [vmem:[%s561 + $0x50] sm:$0xff]
    %v573 = vld [vmem:[%s561 + $0x58] sm:$0xff]
    %v574 = vld [vmem:[%s561 + $0x60] sm:$0xff]
    %v575 = vld [vmem:[%s561 + $0x68] sm:$0xff]
    %v576 = vld [vmem:[%s561 + $0x70] sm:$0xff]
    %v577 = vld [vmem:[%s561 + $0x78] sm:$0xff]
    %v578 = vmul.f32 %v560, %v562
    %v579 = vmul.f32 %v559, %v563
    %v580 = vmul.f32 %v558, %v564
    %v581 = vmul.f32 %v557, %v565
    %v582 = vmul.f32 %v556, %v566
    %v583 = vmul.f32 %v555, %v567
    %v584 = vmul.f32 %v554, %v568
    %v585 = vmul.f32 %v553, %v569
    %v586 = vmul.f32 %v552, %v570
    %v587 = vmul.f32 %v551, %v571
    %v588 = vmul.f32 %v550, %v572
    %v589 = vmul.f32 %v549, %v573
    %v590 = vmul.f32 %v548, %v574
    %v591 = vmul.f32 %v547, %v575
    %v592 = vmul.f32 %v546, %v576
    %v593 = vmul.f32 %v545, %v577
    %v594 = vadd.f32 %v512, %v578
    %v595 = vadd.f32 %v513, %v579
    %v596 = vadd.f32 %v514, %v580
    %v597 = vadd.f32 %v515, %v581
    %v598 = vadd.f32 %v516, %v582
    %v599 = vadd.f32 %v517, %v583
    %v600 = vadd.f32 %v518, %v584
    %v601 = vadd.f32 %v519, %v585
    %v602 = vadd.f32 %v520, %v586
    %v603 = vadd.f32 %v521, %v587
    %v604 = vadd.f32 %v522, %v588
    %v605 = vadd.f32 %v523, %v589
    %v606 = vadd.f32 %v524, %v590
    %v607 = vadd.f32 %v525, %v591
    %v608 = vadd.f32 %v526, %v592
    %v609 = vadd.f32 %v527, %v593
    %s610 = scalar_lea.vmem %s4, 384
    %v611 = vld [vmem:[%s610] sm:$0xff]
    %v612 = vld [vmem:[%s610 + $0x8] sm:$0xff]
    %v613 = vld [vmem:[%s610 + $0x10] sm:$0xff]
    %v614 = vld [vmem:[%s610 + $0x18] sm:$0xff]
    %v615 = vld [vmem:[%s610 + $0x20] sm:$0xff]
    %v616 = vld [vmem:[%s610 + $0x28] sm:$0xff]
    %v617 = vld [vmem:[%s610 + $0x30] sm:$0xff]
    %v618 = vld [vmem:[%s610 + $0x38] sm:$0xff]
    %v619 = vld [vmem:[%s610 + $0x40] sm:$0xff]
    %v620 = vld [vmem:[%s610 + $0x48] sm:$0xff]
    %v621 = vld [vmem:[%s610 + $0x50] sm:$0xff]
    %v622 = vld [vmem:[%s610 + $0x58] sm:$0xff]
    %v623 = vld [vmem:[%s610 + $0x60] sm:$0xff]
    %v624 = vld [vmem:[%s610 + $0x68] sm:$0xff]
    %v625 = vld [vmem:[%s610 + $0x70] sm:$0xff]
    %v626 = vld [vmem:[%s610 + $0x78] sm:$0xff]
    %v627 = vmul.f32 %v430, %v611
    %v628 = vmul.f32 %v429, %v612
    %v629 = vmul.f32 %v428, %v613
    %v630 = vmul.f32 %v427, %v614
    %v631 = vmul.f32 %v426, %v615
    %v632 = vmul.f32 %v425, %v616
    %v633 = vmul.f32 %v424, %v617
    %v634 = vmul.f32 %v423, %v618
    %v635 = vmul.f32 %v422, %v619
    %v636 = vmul.f32 %v421, %v620
    %v637 = vmul.f32 %v420, %v621
    %v638 = vmul.f32 %v419, %v622
    %v639 = vmul.f32 %v418, %v623
    %v640 = vmul.f32 %v417, %v624
    %v641 = vmul.f32 %v416, %v625
    %v642 = vmul.f32 %v415, %v626
    %v643 = vadd.f32 %v594, %v627
    %v644 = vadd.f32 %v595, %v628
    %v645 = vadd.f32 %v596, %v629
    %v646 = vadd.f32 %v597, %v630
    %v647 = vadd.f32 %v598, %v631
    %v648 = vadd.f32 %v599, %v632
    %v649 = vadd.f32 %v600, %v633
    %v650 = vadd.f32 %v601, %v634
    %v651 = vadd.f32 %v602, %v635
    %v652 = vadd.f32 %v603, %v636
    %v653 = vadd.f32 %v604, %v637
    %v654 = vadd.f32 %v605, %v638
    %v655 = vadd.f32 %v606, %v639
    %v656 = vadd.f32 %v607, %v640
    %v657 = vadd.f32 %v608, %v641
    %v658 = vadd.f32 %v609, %v642
    %s659 = scalar_lea.vmem %s4, 640
    %v660 = vld [vmem:[%s659] sm:$0xff]
    %v661 = vld [vmem:[%s659 + $0x8] sm:$0xff]
    %v662 = vld [vmem:[%s659 + $0x10] sm:$0xff]
    %v663 = vld [vmem:[%s659 + $0x18] sm:$0xff]
    %v664 = vld [vmem:[%s659 + $0x20] sm:$0xff]
    %v665 = vld [vmem:[%s659 + $0x28] sm:$0xff]
    %v666 = vld [vmem:[%s659 + $0x30] sm:$0xff]
    %v667 = vld [vmem:[%s659 + $0x38] sm:$0xff]
    %v668 = vld [vmem:[%s659 + $0x40] sm:$0xff]
    %v669 = vld [vmem:[%s659 + $0x48] sm:$0xff]
    %v670 = vld [vmem:[%s659 + $0x50] sm:$0xff]
    %v671 = vld [vmem:[%s659 + $0x58] sm:$0xff]
    %v672 = vld [vmem:[%s659 + $0x60] sm:$0xff]
    %v673 = vld [vmem:[%s659 + $0x68] sm:$0xff]
    %v674 = vld [vmem:[%s659 + $0x70] sm:$0xff]
    %v675 = vld [vmem:[%s659 + $0x78] sm:$0xff]
    %v676 = vmul.f32 %v559, %v660
    %v677 = vmul.f32 %v558, %v661
    %v678 = vmul.f32 %v557, %v662
    %v679 = vmul.f32 %v556, %v663
    %v680 = vmul.f32 %v555, %v664
    %v681 = vmul.f32 %v554, %v665
    %v682 = vmul.f32 %v553, %v666
    %v683 = vmul.f32 %v552, %v667
    %v684 = vmul.f32 %v551, %v668
    %v685 = vmul.f32 %v550, %v669
    %v686 = vmul.f32 %v549, %v670
    %v687 = vmul.f32 %v548, %v671
    %v688 = vmul.f32 %v547, %v672
    %v689 = vmul.f32 %v546, %v673
    %v690 = vmul.f32 %v545, %v674
    %v691 = vmul.f32 %v560, %v675
    %v692 = vadd.f32 %v643, %v676
    %v693 = vadd.f32 %v644, %v677
    %v694 = vadd.f32 %v645, %v678
    %v695 = vadd.f32 %v646, %v679
    %v696 = vadd.f32 %v647, %v680
    %v697 = vadd.f32 %v648, %v681
    %v698 = vadd.f32 %v649, %v682
    %v699 = vadd.f32 %v650, %v683
    %v700 = vadd.f32 %v651, %v684
    %v701 = vadd.f32 %v652, %v685
    %v702 = vadd.f32 %v653, %v686
    %v703 = vadd.f32 %v654, %v687
    %v704 = vadd.f32 %v655, %v688
    %v705 = vadd.f32 %v656, %v689
    %v706 = vadd.f32 %v657, %v690
    %v707 = vadd.f32 %v658, %v691
    %s708 = scalar_lea.vmem %s4, 768
    %v709 = vld [vmem:[%s708] sm:$0xff]
    %v710 = vld [vmem:[%s708 + $0x8] sm:$0xff]
    %v711 = vld [vmem:[%s708 + $0x10] sm:$0xff]
    %v712 = vld [vmem:[%s708 + $0x18] sm:$0xff]
    %v713 = vld [vmem:[%s708 + $0x20] sm:$0xff]
    %v714 = vld [vmem:[%s708 + $0x28] sm:$0xff]
    %v715 = vld [vmem:[%s708 + $0x30] sm:$0xff]
    %v716 = vld [vmem:[%s708 + $0x38] sm:$0xff]
    %v717 = vld [vmem:[%s708 + $0x40] sm:$0xff]
    %v718 = vld [vmem:[%s708 + $0x48] sm:$0xff]
    %v719 = vld [vmem:[%s708 + $0x50] sm:$0xff]
    %v720 = vld [vmem:[%s708 + $0x58] sm:$0xff]
    %v721 = vld [vmem:[%s708 + $0x60] sm:$0xff]
    %v722 = vld [vmem:[%s708 + $0x68] sm:$0xff]
    %v723 = vld [vmem:[%s708 + $0x70] sm:$0xff]
    %v724 = vld [vmem:[%s708 + $0x78] sm:$0xff]
    %v725 = vmul.f32 %v429, %v709
    %v726 = vmul.f32 %v428, %v710
    %v727 = vmul.f32 %v427, %v711
    %v728 = vmul.f32 %v426, %v712
    %v729 = vmul.f32 %v425, %v713
    %v730 = vmul.f32 %v424, %v714
    %v731 = vmul.f32 %v423, %v715
    %v732 = vmul.f32 %v422, %v716
    %v733 = vmul.f32 %v421, %v717
    %v734 = vmul.f32 %v420, %v718
    %v735 = vmul.f32 %v419, %v719
    %v736 = vmul.f32 %v418, %v720
    %v737 = vmul.f32 %v417, %v721
    %v738 = vmul.f32 %v416, %v722
    %v739 = vmul.f32 %v415, %v723
    %v740 = vmul.f32 %v430, %v724
    %v741 = vadd.f32 %v692, %v725
    %v742 = vadd.f32 %v693, %v726
    %v743 = vadd.f32 %v694, %v727
    %v744 = vadd.f32 %v695, %v728
    %v745 = vadd.f32 %v696, %v729
    %v746 = vadd.f32 %v697, %v730
    %v747 = vadd.f32 %v698, %v731
    %v748 = vadd.f32 %v699, %v732
    %v749 = vadd.f32 %v700, %v733
    %v750 = vadd.f32 %v701, %v734
    %v751 = vadd.f32 %v702, %v735
    %v752 = vadd.f32 %v703, %v736
    %v753 = vadd.f32 %v704, %v737
    %v754 = vadd.f32 %v705, %v738
    %v755 = vadd.f32 %v706, %v739
    %v756 = vadd.f32 %v707, %v740
    %s757 = scalar_lea.vmem %s4, 896
    %v758 = vld [vmem:[%s757] sm:$0xff]
    %v759 = vld [vmem:[%s757 + $0x8] sm:$0xff]
    %v760 = vld [vmem:[%s757 + $0x10] sm:$0xff]
    %v761 = vld [vmem:[%s757 + $0x18] sm:$0xff]
    %v762 = vld [vmem:[%s757 + $0x20] sm:$0xff]
    %v763 = vld [vmem:[%s757 + $0x28] sm:$0xff]
    %v764 = vld [vmem:[%s757 + $0x30] sm:$0xff]
    %v765 = vld [vmem:[%s757 + $0x38] sm:$0xff]
    %v766 = vld [vmem:[%s757 + $0x40] sm:$0xff]
    %v767 = vld [vmem:[%s757 + $0x48] sm:$0xff]
    %v768 = vld [vmem:[%s757 + $0x50] sm:$0xff]
    %v769 = vld [vmem:[%s757 + $0x58] sm:$0xff]
    %v770 = vld [vmem:[%s757 + $0x60] sm:$0xff]
    %v771 = vld [vmem:[%s757 + $0x68] sm:$0xff]
    %v772 = vld [vmem:[%s757 + $0x70] sm:$0xff]
    %v773 = vld [vmem:[%s757 + $0x78] sm:$0xff]
    %v774 = vmul.f32 %v348, %v758
    %v775 = vmul.f32 %v349, %v759
    %v776 = vmul.f32 %v350, %v760
    %v777 = vmul.f32 %v351, %v761
    %v778 = vmul.f32 %v352, %v762
    %v779 = vmul.f32 %v353, %v763
    %v780 = vmul.f32 %v354, %v764
    %v781 = vmul.f32 %v355, %v765
    %v782 = vmul.f32 %v356, %v766
    %v783 = vmul.f32 %v357, %v767
    %v784 = vmul.f32 %v358, %v768
    %v785 = vmul.f32 %v359, %v769
    %v786 = vmul.f32 %v360, %v770
    %v787 = vmul.f32 %v361, %v771
    %v788 = vmul.f32 %v362, %v772
    %v789 = vmul.f32 %v347, %v773
    %v790 = vadd.f32 %v741, %v774
    %v791 = vadd.f32 %v742, %v775
    %v792 = vadd.f32 %v743, %v776
    %v793 = vadd.f32 %v744, %v777
    %v794 = vadd.f32 %v745, %v778
    %v795 = vadd.f32 %v746, %v779
    %v796 = vadd.f32 %v747, %v780
    %v797 = vadd.f32 %v748, %v781
    %v798 = vadd.f32 %v749, %v782
    %v799 = vadd.f32 %v750, %v783
    %v800 = vadd.f32 %v751, %v784
    %v801 = vadd.f32 %v752, %v785
    %v802 = vadd.f32 %v753, %v786
    %v803 = vadd.f32 %v754, %v787
    %v804 = vadd.f32 %v755, %v788
    %v805 = vadd.f32 %v756, %v789
    %s806 = scalar_lea.vmem %s4, 1024
    %v807 = vld [vmem:[%s806] sm:$0xff]
    %v808 = vld [vmem:[%s806 + $0x8] sm:$0xff]
    %v809 = vld [vmem:[%s806 + $0x10] sm:$0xff]
    %v810 = vld [vmem:[%s806 + $0x18] sm:$0xff]
    %v811 = vld [vmem:[%s806 + $0x20] sm:$0xff]
    %v812 = vld [vmem:[%s806 + $0x28] sm:$0xff]
    %v813 = vld [vmem:[%s806 + $0x30] sm:$0xff]
    %v814 = vld [vmem:[%s806 + $0x38] sm:$0xff]
    %v815 = vld [vmem:[%s806 + $0x40] sm:$0xff]
    %v816 = vld [vmem:[%s806 + $0x48] sm:$0xff]
    %v817 = vld [vmem:[%s806 + $0x50] sm:$0xff]
    %v818 = vld [vmem:[%s806 + $0x58] sm:$0xff]
    %v819 = vld [vmem:[%s806 + $0x60] sm:$0xff]
    %v820 = vld [vmem:[%s806 + $0x68] sm:$0xff]
    %v821 = vld [vmem:[%s806 + $0x70] sm:$0xff]
    %v822 = vld [vmem:[%s806 + $0x78] sm:$0xff]
    %v823 = vmul.f32 %v558, %v807
    %v824 = vmul.f32 %v557, %v808
    %v825 = vmul.f32 %v556, %v809
    %v826 = vmul.f32 %v555, %v810
    %v827 = vmul.f32 %v554, %v811
    %v828 = vmul.f32 %v553, %v812
    %v829 = vmul.f32 %v552, %v813
    %v830 = vmul.f32 %v551, %v814
    %v831 = vmul.f32 %v550, %v815
    %v832 = vmul.f32 %v549, %v816
    %v833 = vmul.f32 %v548, %v817
    %v834 = vmul.f32 %v547, %v818
    %v835 = vmul.f32 %v546, %v819
    %v836 = vmul.f32 %v545, %v820
    %v837 = vmul.f32 %v560, %v821
    %v838 = vmul.f32 %v559, %v822
    %v839 = vadd.f32 %v790, %v823
    %v840 = vadd.f32 %v791, %v824
    %v841 = vadd.f32 %v792, %v825
    %v842 = vadd.f32 %v793, %v826
    %v843 = vadd.f32 %v794, %v827
    %v844 = vadd.f32 %v795, %v828
    %v845 = vadd.f32 %v796, %v829
    %v846 = vadd.f32 %v797, %v830
    %v847 = vadd.f32 %v798, %v831
    %v848 = vadd.f32 %v799, %v832
    %v849 = vadd.f32 %v800, %v833
    %v850 = vadd.f32 %v801, %v834
    %v851 = vadd.f32 %v802, %v835
    %v852 = vadd.f32 %v803, %v836
    %v853 = vadd.f32 %v804, %v837
    %v854 = vadd.f32 %v805, %v838
    %v855 = vadd.f32 %v347, %v839
    %v856 = vadd.f32 %v348, %v840
    %v857 = vadd.f32 %v349, %v841
    %v858 = vadd.f32 %v350, %v842
    %v859 = vadd.f32 %v351, %v843
    %v860 = vadd.f32 %v352, %v844
    %v861 = vadd.f32 %v353, %v845
    %v862 = vadd.f32 %v354, %v846
    %v863 = vadd.f32 %v355, %v847
    %v864 = vadd.f32 %v356, %v848
    %v865 = vadd.f32 %v357, %v849
    %v866 = vadd.f32 %v358, %v850
    %v867 = vadd.f32 %v359, %v851
    %v868 = vadd.f32 %v360, %v852
    %v869 = vadd.f32 %v361, %v853
    %v870 = vadd.f32 %v362, %v854
    %v871 = vpack.c.bf16 %v856, %v855
    %v872 = vpack.c.bf16 %v858, %v857
    %v873 = vpack.c.bf16 %v860, %v859
    %v874 = vpack.c.bf16 %v862, %v861
    %v875 = vpack.c.bf16 %v864, %v863
    %v876 = vpack.c.bf16 %v866, %v865
    %v877 = vpack.c.bf16 %v868, %v867
    %v878 = vpack.c.bf16 %v870, %v869
    %v879 = vld [vmem:[%s5] sm:$0xff]
    %v880 = vld [vmem:[%s5 + $0x8] sm:$0xf]
    %v881 = vld [vmem:[%s5 + $0xc] sm:$0xff]
    %v882 = vld [vmem:[%s5 + $0x14] sm:$0xf]
    %v883 = vld [vmem:[%s5 + $0x18] sm:$0xff]
    %v884 = vld [vmem:[%s5 + $0x20] sm:$0xf]
    %v885 = vld [vmem:[%s5 + $0x24] sm:$0xff]
    %v886 = vld [vmem:[%s5 + $0x2c] sm:$0xf]
    %v887 = vld [vmem:[%s5 + $0x30] sm:$0xff]
    %v888 = vld [vmem:[%s5 + $0x38] sm:$0xf]
    %v889 = vld [vmem:[%s5 + $0x3c] sm:$0xff]
    %v890 = vld [vmem:[%s5 + $0x44] sm:$0xf]
    %v891 = vld [vmem:[%s5 + $0x48] sm:$0xff]
    %v892 = vld [vmem:[%s5 + $0x50] sm:$0xf]
    %v893 = vld [vmem:[%s5 + $0x54] sm:$0xff]
    %v894 = vld [vmem:[%s5 + $0x5c] sm:$0xf]
    %v895 = vld [vmem:[%s5 + $0x60] sm:$0xff]
    %v896 = vld [vmem:[%s5 + $0x68] sm:$0xf]
    %v897 = vld [vmem:[%s5 + $0x6c] sm:$0xff]
    %v898 = vld [vmem:[%s5 + $0x74] sm:$0xf]
    %v899 = vld [vmem:[%s5 + $0x78] sm:$0xff]
    %v900 = vld [vmem:[%s5 + $0x80] sm:$0xf]
    %v901 = vld [vmem:[%s5 + $0x84] sm:$0xff]
    %v902 = vld [vmem:[%s5 + $0x8c] sm:$0xf]
    %v903 = vld [vmem:[%s5 + $0x90] sm:$0xff]
    %v904 = vld [vmem:[%s5 + $0x98] sm:$0xf]
    %v905 = vld [vmem:[%s5 + $0x9c] sm:$0xff]
    %v906 = vld [vmem:[%s5 + $0xa4] sm:$0xf]
    %v907 = vld [vmem:[%s5 + $0xa8] sm:$0xff]
    %v908 = vld [vmem:[%s5 + $0xb0] sm:$0xf]
    %v909 = vld [vmem:[%s5 + $0xb4] sm:$0xff]
    %v910 = vld [vmem:[%s5 + $0xbc] sm:$0xf]
    %v911 = vld [vmem:[%s6] sm:$0x7]
    %v913 = vlaneseq
    %v914 = vshrl.u32 %v913, 7
    %v915 = vsub.s32 0, %v914
    %v916 = vrot.slane %v911, %v915
    %v917 = vlaneseq
    %v918 = vshrl.u32 %v917, 7
    %v919 = vsub.s32 1, %v918
    %v920 = vrot.slane %v911, %v919
    %v921 = vlaneseq
    %v922 = vshrl.u32 %v921, 7
    %v923 = vsub.s32 2, %v922
    %v924 = vrot.slane %v911, %v923
    %v960 = vunpack.c.l.b16 %v879
    %v961 = vunpack.c.h.b16 %v879
    %v962 = vunpack.c.l.b16 %v880
    %v963 = vunpack.c.l.b16 %v881
    %v964 = vunpack.c.h.b16 %v881
    %v965 = vunpack.c.l.b16 %v882
    %v966 = vunpack.c.l.b16 %v883
    %v967 = vunpack.c.h.b16 %v883
    %v968 = vunpack.c.l.b16 %v884
    %v969 = vunpack.c.l.b16 %v885
    %v970 = vunpack.c.h.b16 %v885
    %v971 = vunpack.c.l.b16 %v886
    %v972 = vunpack.c.l.b16 %v887
    %v973 = vunpack.c.h.b16 %v887
    %v974 = vunpack.c.l.b16 %v888
    %v975 = vunpack.c.l.b16 %v889
    %v976 = vunpack.c.h.b16 %v889
    %v977 = vunpack.c.l.b16 %v890
    %v978 = vunpack.c.l.b16 %v891
    %v979 = vunpack.c.h.b16 %v891
    %v980 = vunpack.c.l.b16 %v892
    %v981 = vunpack.c.l.b16 %v893
    %v982 = vunpack.c.h.b16 %v893
    %v983 = vunpack.c.l.b16 %v894
    %v984 = vunpack.c.l.b16 %v895
    %v985 = vunpack.c.h.b16 %v895
    %v986 = vunpack.c.l.b16 %v896
    %v987 = vunpack.c.l.b16 %v897
    %v988 = vunpack.c.h.b16 %v897
    %v989 = vunpack.c.l.b16 %v898
    %v990 = vunpack.c.l.b16 %v899
    %v991 = vunpack.c.h.b16 %v899
    %v992 = vunpack.c.l.b16 %v900
    %v993 = vunpack.c.l.b16 %v901
    %v994 = vunpack.c.h.b16 %v901
    %v995 = vunpack.c.l.b16 %v902
    %v996 = vunpack.c.l.b16 %v903
    %v997 = vunpack.c.h.b16 %v903
    %v998 = vunpack.c.l.b16 %v904
    %v999 = vunpack.c.l.b16 %v905
    %v1000 = vunpack.c.h.b16 %v905
    %v1001 = vunpack.c.l.b16 %v906
    %v1002 = vunpack.c.l.b16 %v907
    %v1003 = vunpack.c.h.b16 %v907
    %v1004 = vunpack.c.l.b16 %v908
    %v1005 = vunpack.c.l.b16 %v909
    %v1006 = vunpack.c.h.b16 %v909
    %v1007 = vunpack.c.l.b16 %v910
    %v1008 = vpack.c.b16 %v963, %v960
    %v1009 = vpack.c.b16 %v964, %v961
    %v1010 = vpack.c.b16 %v965, %v962
    %v1011 = vpack.c.b16 %v969, %v966
    %v1012 = vpack.c.b16 %v970, %v967
    %v1013 = vpack.c.b16 %v971, %v968
    %v1014 = vpack.c.b16 %v975, %v972
    %v1015 = vpack.c.b16 %v976, %v973
    %v1016 = vpack.c.b16 %v977, %v974
    %v1017 = vpack.c.b16 %v981, %v978
    %v1018 = vpack.c.b16 %v982, %v979
    %v1019 = vpack.c.b16 %v983, %v980
    %v1020 = vpack.c.b16 %v987, %v984
    %v1021 = vpack.c.b16 %v988, %v985
    %v1022 = vpack.c.b16 %v989, %v986
    %v1023 = vpack.c.b16 %v993, %v990
    %v1024 = vpack.c.b16 %v994, %v991
    %v1025 = vpack.c.b16 %v995, %v992
    %v1026 = vpack.c.b16 %v999, %v996
    %v1027 = vpack.c.b16 %v1000, %v997
    %v1028 = vpack.c.b16 %v1001, %v998
    %v1029 = vpack.c.b16 %v1005, %v1002
    %v1030 = vpack.c.b16 %v1006, %v1003
    %v1031 = vpack.c.b16 %v1007, %v1004
    %1056 = vmatprep.subr.bf16.mxu0 %v1030
    %1057 = vmatpush1.bf16.msra.mxu0 %v1029
    %1058 = vmatprep.subr.bf16.mxu0 %v1027
    %1059 = vmatpush1.bf16.msra.mxu0 %v1026
    %1060 = vmatprep.subr.bf16.mxu0 %v1024
    %1061 = vmatpush1.bf16.msra.mxu0 %v1023
    %1062 = vmatprep.subr.bf16.mxu0 %v1021
    %1063 = vmatpush1.bf16.msra.mxu0 %v1020
    %1064 = vmatprep.subr.bf16.mxu0 %v1018
    %1065 = vmatpush1.bf16.msra.mxu0 %v1017
    %1066 = vmatprep.subr.bf16.mxu0 %v1015
    %1067 = vmatpush1.bf16.msra.mxu0 %v1014
    %1068 = vmatprep.subr.bf16.mxu0 %v1012
    %1069 = vmatpush1.bf16.msra.mxu0 %v1011
    %1070 = vmatprep.subr.bf16.mxu0 %v1009
    %1071 = vmatpush1.bf16.msra.mxu0 %v1008
    %1072 = vmatprep.subr.bf16.mxu0 0
    %1073 = vmatpush2.bf16.msra.mxu0 0
    %1074 = vmatprep.subr.bf16.mxu0 0
    %1075 = vmatpush2.bf16.msra.mxu0 0
    %1076 = vmatprep.subr.bf16.mxu0 0
    %1077 = vmatpush2.bf16.msra.mxu0 0
    %1078 = vmatprep.subr.bf16.mxu0 0
    %1079 = vmatpush2.bf16.msra.mxu0 0
    %1080 = vmatprep.subr.bf16.mxu0 0
    %1081 = vmatpush2.bf16.msra.mxu0 0
    %1082 = vmatprep.subr.bf16.mxu0 0
    %1083 = vmatpush2.bf16.msra.mxu0 0
    %1084 = vmatprep.subr.bf16.mxu0 0
    %1085 = vmatpush2.bf16.msra.mxu0 0
    %1086 = vmatprep.subr.bf16.mxu0 0
    %1087 = vmatpush2.bf16.msra.mxu0 0
    %1088 = vmatprep.mubr.bf16.mxu0 0
    %1089 = vmatmul.mubr.bf16.gmra.mxu0 %v871
    %v1090 = vpop.f32.mrf.mxu0
    %v1091 = vadd.f32 %v916, %v1090
    %v1092 = vpop.f32.mrf.mxu0
    %v1093 = vadd.f32 %v920, %v1092
    %v1094 = vpop.f32.mrf.mxu0
    %v1095 = vadd.f32 %v916, %v1094
    %v1096 = vpop.f32.mrf.mxu0
    %v1097 = vadd.f32 %v920, %v1096
    %1098 = vmatprep.mubr.bf16.mxu0 0
    %1099 = vmatmul.mubr.bf16.gmra.mxu0 %v872
    %v1100 = vpop.f32.mrf.mxu0
    %v1101 = vadd.f32 %v916, %v1100
    %v1102 = vpop.f32.mrf.mxu0
    %v1103 = vadd.f32 %v920, %v1102
    %v1104 = vpop.f32.mrf.mxu0
    %v1105 = vadd.f32 %v916, %v1104
    %v1106 = vpop.f32.mrf.mxu0
    %v1107 = vadd.f32 %v920, %v1106
    %1108 = vmatprep.mubr.bf16.mxu0 0
    %1109 = vmatmul.mubr.bf16.gmra.mxu0 %v873
    %v1110 = vpop.f32.mrf.mxu0
    %v1111 = vadd.f32 %v916, %v1110
    %v1112 = vpop.f32.mrf.mxu0
    %v1113 = vadd.f32 %v920, %v1112
    %v1114 = vpop.f32.mrf.mxu0
    %v1115 = vadd.f32 %v916, %v1114
    %v1116 = vpop.f32.mrf.mxu0
    %v1117 = vadd.f32 %v920, %v1116
    %1118 = vmatprep.mubr.bf16.mxu0 0
    %1119 = vmatmul.mubr.bf16.gmra.mxu0 %v874
    %v1120 = vpop.f32.mrf.mxu0
    %v1121 = vadd.f32 %v916, %v1120
    %v1122 = vpop.f32.mrf.mxu0
    %v1123 = vadd.f32 %v920, %v1122
    %v1124 = vpop.f32.mrf.mxu0
    %v1125 = vadd.f32 %v916, %v1124
    %v1126 = vpop.f32.mrf.mxu0
    %v1127 = vadd.f32 %v920, %v1126
    %1128 = vmatprep.mubr.bf16.mxu0 0
    %1129 = vmatmul.mubr.bf16.gmra.mxu0 %v875
    %v1130 = vpop.f32.mrf.mxu0
    %v1131 = vadd.f32 %v916, %v1130
    %v1132 = vpop.f32.mrf.mxu0
    %v1133 = vadd.f32 %v920, %v1132
    %v1134 = vpop.f32.mrf.mxu0
    %v1135 = vadd.f32 %v916, %v1134
    %v1136 = vpop.f32.mrf.mxu0
    %v1137 = vadd.f32 %v920, %v1136
    %1138 = vmatprep.mubr.bf16.mxu0 0
    %1139 = vmatmul.mubr.bf16.gmra.mxu0 %v876
    %v1140 = vpop.f32.mrf.mxu0
    %v1141 = vadd.f32 %v916, %v1140
    %v1142 = vpop.f32.mrf.mxu0
    %v1143 = vadd.f32 %v920, %v1142
    %v1144 = vpop.f32.mrf.mxu0
    %v1145 = vadd.f32 %v916, %v1144
    %v1146 = vpop.f32.mrf.mxu0
    %v1147 = vadd.f32 %v920, %v1146
    %1148 = vmatprep.mubr.bf16.mxu0 0
    %1149 = vmatmul.mubr.bf16.gmra.mxu0 %v877
    %v1150 = vpop.f32.mrf.mxu0
    %v1151 = vadd.f32 %v916, %v1150
    %v1152 = vpop.f32.mrf.mxu0
    %v1153 = vadd.f32 %v920, %v1152
    %v1154 = vpop.f32.mrf.mxu0
    %v1155 = vadd.f32 %v916, %v1154
    %v1156 = vpop.f32.mrf.mxu0
    %v1157 = vadd.f32 %v920, %v1156
    %1158 = vmatprep.mubr.bf16.mxu0 0
    %1159 = vmatmul.mubr.bf16.gmra.mxu0 %v878
    %v1160 = vpop.f32.mrf.mxu0
    %v1161 = vadd.f32 %v916, %v1160
    %v1162 = vpop.f32.mrf.mxu0
    %v1163 = vadd.f32 %v920, %v1162
    %v1164 = vpop.f32.mrf.mxu0
    %v1165 = vadd.f32 %v916, %v1164
    %v1166 = vpop.f32.mrf.mxu0
    %v1167 = vadd.f32 %v920, %v1166
    %1168 = vdwg.mxu0
    %1169 = vmatprep.subr.bf16.mxu0 0
    %1170 = vmatpush1.bf16.msra.mxu0 %v1031
    %1171 = vmatprep.subr.bf16.mxu0 0
    %1172 = vmatpush1.bf16.msra.mxu0 %v1028
    %1173 = vmatprep.subr.bf16.mxu0 0
    %1174 = vmatpush1.bf16.msra.mxu0 %v1025
    %1175 = vmatprep.subr.bf16.mxu0 0
    %1176 = vmatpush1.bf16.msra.mxu0 %v1022
    %1177 = vmatprep.subr.bf16.mxu0 0
    %1178 = vmatpush1.bf16.msra.mxu0 %v1019
    %1179 = vmatprep.subr.bf16.mxu0 0
    %1180 = vmatpush1.bf16.msra.mxu0 %v1016
    %1181 = vmatprep.subr.bf16.mxu0 0
    %1182 = vmatpush1.bf16.msra.mxu0 %v1013
    %1183 = vmatprep.subr.bf16.mxu0 0
    %1184 = vmatpush1.bf16.msra.mxu0 %v1010
    %1185 = vmatprep.subr.bf16.mxu0 0
    %1186 = vmatpush2.bf16.msra.mxu0 0
    %1187 = vmatprep.subr.bf16.mxu0 0
    %1188 = vmatpush2.bf16.msra.mxu0 0
    %1189 = vmatprep.subr.bf16.mxu0 0
    %1190 = vmatpush2.bf16.msra.mxu0 0
    %1191 = vmatprep.subr.bf16.mxu0 0
    %1192 = vmatpush2.bf16.msra.mxu0 0
    %1193 = vmatprep.subr.bf16.mxu0 0
    %1194 = vmatpush2.bf16.msra.mxu0 0
    %1195 = vmatprep.subr.bf16.mxu0 0
    %1196 = vmatpush2.bf16.msra.mxu0 0
    %1197 = vmatprep.subr.bf16.mxu0 0
    %1198 = vmatpush2.bf16.msra.mxu0 0
    %1199 = vmatprep.subr.bf16.mxu0 0
    %1200 = vmatpush2.bf16.msra.mxu0 0
    %1201 = vmatprep.mubr.bf16.mxu0 0
    %1202 = vmatmul.mubr.bf16.gmra.mxu0 %v871
    %v1203 = vpop.f32.mrf.mxu0
    %v1204 = vadd.f32 %v924, %v1203
    %v1205 = vpop.f32.mrf.mxu0
    %v1206 = vpop.f32.mrf.mxu0
    %v1207 = vadd.f32 %v924, %v1206
    %v1208 = vpop.f32.mrf.mxu0
    %1209 = vmatprep.mubr.bf16.mxu0 0
    %1210 = vmatmul.mubr.bf16.gmra.mxu0 %v872
    %v1211 = vpop.f32.mrf.mxu0
    %v1212 = vadd.f32 %v924, %v1211
    %v1213 = vpop.f32.mrf.mxu0
    %v1214 = vpop.f32.mrf.mxu0
    %v1215 = vadd.f32 %v924, %v1214
    %v1216 = vpop.f32.mrf.mxu0
    %1217 = vmatprep.mubr.bf16.mxu0 0
    %1218 = vmatmul.mubr.bf16.gmra.mxu0 %v873
    %v1219 = vpop.f32.mrf.mxu0
    %v1220 = vadd.f32 %v924, %v1219
    %v1221 = vpop.f32.mrf.mxu0
    %v1222 = vpop.f32.mrf.mxu0
    %v1223 = vadd.f32 %v924, %v1222
    %v1224 = vpop.f32.mrf.mxu0
    %1225 = vmatprep.mubr.bf16.mxu0 0
    %1226 = vmatmul.mubr.bf16.gmra.mxu0 %v874
    %v1227 = vpop.f32.mrf.mxu0
    %v1228 = vadd.f32 %v924, %v1227
    %v1229 = vpop.f32.mrf.mxu0
    %v1230 = vpop.f32.mrf.mxu0
    %v1231 = vadd.f32 %v924, %v1230
    %v1232 = vpop.f32.mrf.mxu0
    %1233 = vmatprep.mubr.bf16.mxu0 0
    %1234 = vmatmul.mubr.bf16.gmra.mxu0 %v875
    %v1235 = vpop.f32.mrf.mxu0
    %v1236 = vadd.f32 %v924, %v1235
    %v1237 = vpop.f32.mrf.mxu0
    %v1238 = vpop.f32.mrf.mxu0
    %v1239 = vadd.f32 %v924, %v1238
    %v1240 = vpop.f32.mrf.mxu0
    %1241 = vmatprep.mubr.bf16.mxu0 0
    %1242 = vmatmul.mubr.bf16.gmra.mxu0 %v876
    %v1243 = vpop.f32.mrf.mxu0
    %v1244 = vadd.f32 %v924, %v1243
    %v1245 = vpop.f32.mrf.mxu0
    %v1246 = vpop.f32.mrf.mxu0
    %v1247 = vadd.f32 %v924, %v1246
    %v1248 = vpop.f32.mrf.mxu0
    %1249 = vmatprep.mubr.bf16.mxu0 0
    %1250 = vmatmul.mubr.bf16.gmra.mxu0 %v877
    %v1251 = vpop.f32.mrf.mxu0
    %v1252 = vadd.f32 %v924, %v1251
    %v1253 = vpop.f32.mrf.mxu0
    %v1254 = vpop.f32.mrf.mxu0
    %v1255 = vadd.f32 %v924, %v1254
    %v1256 = vpop.f32.mrf.mxu0
    %1257 = vmatprep.mubr.bf16.mxu0 0
    %1258 = vmatmul.mubr.bf16.gmra.mxu0 %v878
    %v1259 = vpop.f32.mrf.mxu0
    %v1260 = vadd.f32 %v924, %v1259
    %v1261 = vpop.f32.mrf.mxu0
    %v1262 = vpop.f32.mrf.mxu0
    %v1263 = vadd.f32 %v924, %v1262
    %v1264 = vpop.f32.mrf.mxu0
    %1265 = vdwg.mxu0
    %1266 = vst [vmem:[#allocation2] sm:$0xff] %v1091
    %1267 = vst [vmem:[#allocation2 + $0x8] sm:$0xff] %v1093
    %1268 = vst [vmem:[#allocation2 + $0x10] sm:$0xff] %v1204
    %1269 = vst [vmem:[#allocation2 + $0x18] sm:$0xff] %v1095
    %1270 = vst [vmem:[#allocation2 + $0x20] sm:$0xff] %v1097
    %1271 = vst [vmem:[#allocation2 + $0x28] sm:$0xff] %v1207
    %1272 = vst [vmem:[#allocation2 + $0x30] sm:$0xff] %v1101
    %1273 = vst [vmem:[#allocation2 + $0x38] sm:$0xff] %v1103
    %1274 = vst [vmem:[#allocation2 + $0x40] sm:$0xff] %v1212
    %1275 = vst [vmem:[#allocation2 + $0x48] sm:$0xff] %v1105
    %1276 = vst [vmem:[#allocation2 + $0x50] sm:$0xff] %v1107
    %1277 = vst [vmem:[#allocation2 + $0x58] sm:$0xff] %v1215
    %1278 = vst [vmem:[#allocation2 + $0x60] sm:$0xff] %v1111
    %1279 = vst [vmem:[#allocation2 + $0x68] sm:$0xff] %v1113
    %1280 = vst [vmem:[#allocation2 + $0x70] sm:$0xff] %v1220
    %1281 = vst [vmem:[#allocation2 + $0x78] sm:$0xff] %v1115
    %1282 = vst [vmem:[#allocation2 + $0x80] sm:$0xff] %v1117
    %1283 = vst [vmem:[#allocation2 + $0x88] sm:$0xff] %v1223
    %1284 = vst [vmem:[#allocation2 + $0x90] sm:$0xff] %v1121
    %1285 = vst [vmem:[#allocation2 + $0x98] sm:$0xff] %v1123
    %1286 = vst [vmem:[#allocation2 + $0xa0] sm:$0xff] %v1228
    %1287 = vst [vmem:[#allocation2 + $0xa8] sm:$0xff] %v1125
    %1288 = vst [vmem:[#allocation2 + $0xb0] sm:$0xff] %v1127
    %1289 = vst [vmem:[#allocation2 + $0xb8] sm:$0xff] %v1231
    %1290 = vst [vmem:[#allocation2 + $0xc0] sm:$0xff] %v1131
    %1291 = vst [vmem:[#allocation2 + $0xc8] sm:$0xff] %v1133
    %1292 = vst [vmem:[#allocation2 + $0xd0] sm:$0xff] %v1236
    %1293 = vst [vmem:[#allocation2 + $0xd8] sm:$0xff] %v1135
    %1294 = vst [vmem:[#allocation2 + $0xe0] sm:$0xff] %v1137
    %1295 = vst [vmem:[#allocation2 + $0xe8] sm:$0xff] %v1239
    %1296 = vst [vmem:[#allocation2 + $0xf0] sm:$0xff] %v1141
    %1297 = vst [vmem:[#allocation2 + $0xf8] sm:$0xff] %v1143
    %1298 = vst [vmem:[#allocation2 + $0x100] sm:$0xff] %v1244
    %1299 = vst [vmem:[#allocation2 + $0x108] sm:$0xff] %v1145
    %1300 = vst [vmem:[#allocation2 + $0x110] sm:$0xff] %v1147
    %1301 = vst [vmem:[#allocation2 + $0x118] sm:$0xff] %v1247
    %1302 = vst [vmem:[#allocation2 + $0x120] sm:$0xff] %v1151
    %1303 = vst [vmem:[#allocation2 + $0x128] sm:$0xff] %v1153
    %1304 = vst [vmem:[#allocation2 + $0x130] sm:$0xff] %v1252
    %1305 = vst [vmem:[#allocation2 + $0x138] sm:$0xff] %v1155
    %1306 = vst [vmem:[#allocation2 + $0x140] sm:$0xff] %v1157
    %1307 = vst [vmem:[#allocation2 + $0x148] sm:$0xff] %v1255
    %1308 = vst [vmem:[#allocation2 + $0x150] sm:$0xff] %v1161
    %1309 = vst [vmem:[#allocation2 + $0x158] sm:$0xff] %v1163
    %1310 = vst [vmem:[#allocation2 + $0x160] sm:$0xff] %v1260
    %1311 = vst [vmem:[#allocation2 + $0x168] sm:$0xff] %v1165
    %1312 = vst [vmem:[#allocation2 + $0x170] sm:$0xff] %v1167
    %1313 = vst [vmem:[#allocation2 + $0x178] sm:$0xff] %v1263
    %v1314 = vld [vmem:[#allocation2] sm:$0xff]
    %v1315 = vld [vmem:[#allocation2 + $0x18] sm:$0xff]
    %v1316 = vld [vmem:[#allocation2 + $0x30] sm:$0xff]
    %v1317 = vld [vmem:[#allocation2 + $0x48] sm:$0xff]
    %v1318 = vld [vmem:[#allocation2 + $0x60] sm:$0xff]
    %v1319 = vld [vmem:[#allocation2 + $0x78] sm:$0xff]
    %v1320 = vld [vmem:[#allocation2 + $0x90] sm:$0xff]
    %v1321 = vld [vmem:[#allocation2 + $0xa8] sm:$0xff]
    %v1322 = vld [vmem:[#allocation2 + $0xc0] sm:$0xff]
    %v1323 = vld [vmem:[#allocation2 + $0xd8] sm:$0xff]
    %v1324 = vld [vmem:[#allocation2 + $0xf0] sm:$0xff]
    %v1325 = vld [vmem:[#allocation2 + $0x108] sm:$0xff]
    %v1326 = vld [vmem:[#allocation2 + $0x120] sm:$0xff]
    %v1327 = vld [vmem:[#allocation2 + $0x138] sm:$0xff]
    %v1328 = vld [vmem:[#allocation2 + $0x150] sm:$0xff]
    %v1329 = vld [vmem:[#allocation2 + $0x168] sm:$0xff]
    %v1330 = vpack.c.bf16 %v1315, %v1314
    %v1331 = vpack.c.bf16 %v1317, %v1316
    %v1332 = vpack.c.bf16 %v1319, %v1318
    %v1333 = vpack.c.bf16 %v1321, %v1320
    %v1334 = vpack.c.bf16 %v1323, %v1322
    %v1335 = vpack.c.bf16 %v1325, %v1324
    %v1336 = vpack.c.bf16 %v1327, %v1326
    %v1337 = vpack.c.bf16 %v1329, %v1328
    %v1338 = vld [vmem:[#allocation2 + $0x8] sm:$0xff]
    %v1339 = vld [vmem:[#allocation2 + $0x20] sm:$0xff]
    %v1340 = vld [vmem:[#allocation2 + $0x38] sm:$0xff]
    %v1341 = vld [vmem:[#allocation2 + $0x50] sm:$0xff]
    %v1342 = vld [vmem:[#allocation2 + $0x68] sm:$0xff]
    %v1343 = vld [vmem:[#allocation2 + $0x80] sm:$0xff]
    %v1344 = vld [vmem:[#allocation2 + $0x98] sm:$0xff]
    %v1345 = vld [vmem:[#allocation2 + $0xb0] sm:$0xff]
    %v1346 = vld [vmem:[#allocation2 + $0xc8] sm:$0xff]
    %v1347 = vld [vmem:[#allocation2 + $0xe0] sm:$0xff]
    %v1348 = vld [vmem:[#allocation2 + $0xf8] sm:$0xff]
    %v1349 = vld [vmem:[#allocation2 + $0x110] sm:$0xff]
    %v1350 = vld [vmem:[#allocation2 + $0x128] sm:$0xff]
    %v1351 = vld [vmem:[#allocation2 + $0x140] sm:$0xff]
    %v1352 = vld [vmem:[#allocation2 + $0x158] sm:$0xff]
    %v1353 = vld [vmem:[#allocation2 + $0x170] sm:$0xff]
    %v1354 = vpack.c.bf16 %v1339, %v1338
    %v1355 = vpack.c.bf16 %v1341, %v1340
    %v1356 = vpack.c.bf16 %v1343, %v1342
    %v1357 = vpack.c.bf16 %v1345, %v1344
    %v1358 = vpack.c.bf16 %v1347, %v1346
    %v1359 = vpack.c.bf16 %v1349, %v1348
    %v1360 = vpack.c.bf16 %v1351, %v1350
    %v1361 = vpack.c.bf16 %v1353, %v1352
    %v1362 = vld [vmem:[#allocation2 + $0x10] sm:$0xff]
    %v1363 = vld [vmem:[#allocation2 + $0x28] sm:$0xff]
    %v1364 = vld [vmem:[#allocation2 + $0x40] sm:$0xff]
    %v1365 = vld [vmem:[#allocation2 + $0x58] sm:$0xff]
    %v1366 = vld [vmem:[#allocation2 + $0x70] sm:$0xff]
    %v1367 = vld [vmem:[#allocation2 + $0x88] sm:$0xff]
    %v1368 = vld [vmem:[#allocation2 + $0xa0] sm:$0xff]
    %v1369 = vld [vmem:[#allocation2 + $0xb8] sm:$0xff]
    %v1370 = vld [vmem:[#allocation2 + $0xd0] sm:$0xff]
    %v1371 = vld [vmem:[#allocation2 + $0xe8] sm:$0xff]
    %v1372 = vld [vmem:[#allocation2 + $0x100] sm:$0xff]
    %v1373 = vld [vmem:[#allocation2 + $0x118] sm:$0xff]
    %v1374 = vld [vmem:[#allocation2 + $0x130] sm:$0xff]
    %v1375 = vld [vmem:[#allocation2 + $0x148] sm:$0xff]
    %v1376 = vld [vmem:[#allocation2 + $0x160] sm:$0xff]
    %v1377 = vld [vmem:[#allocation2 + $0x178] sm:$0xff]
    %v1378 = vpack.c.bf16 %v1363, %v1362
    %v1379 = vpack.c.bf16 %v1365, %v1364
    %v1380 = vpack.c.bf16 %v1367, %v1366
    %v1381 = vpack.c.bf16 %v1369, %v1368
    %v1382 = vpack.c.bf16 %v1371, %v1370
    %v1383 = vpack.c.bf16 %v1373, %v1372
    %v1384 = vpack.c.bf16 %v1375, %v1374
    %v1385 = vpack.c.bf16 %v1377, %v1376
    %v1386 = vld [vmem:[%s7] sm:$0xff]
    %v1387 = vld [vmem:[%s7 + $0x8] sm:$0xff]
    %v1388 = vld [vmem:[%s7 + $0x10] sm:$0xff]
    %v1389 = vld [vmem:[%s7 + $0x18] sm:$0xff]
    %v1390 = vld [vmem:[%s7 + $0x20] sm:$0xff]
    %v1391 = vld [vmem:[%s7 + $0x28] sm:$0xff]
    %v1392 = vld [vmem:[%s7 + $0x30] sm:$0xff]
    %v1393 = vld [vmem:[%s7 + $0x38] sm:$0xff]
    %v1394 = vld [vmem:[%s7 + $0x40] sm:$0xff]
    %v1395 = vld [vmem:[%s7 + $0x48] sm:$0xff]
    %v1396 = vld [vmem:[%s7 + $0x50] sm:$0xff]
    %v1397 = vld [vmem:[%s7 + $0x58] sm:$0xff]
    %v1398 = vld [vmem:[%s7 + $0x60] sm:$0xff]
    %v1399 = vld [vmem:[%s7 + $0x68] sm:$0xff]
    %v1400 = vld [vmem:[%s7 + $0x70] sm:$0xff]
    %v1401 = vld [vmem:[%s7 + $0x78] sm:$0xff]
    %v1403 = vsel %vm129, %v1330, 0
    %v1406 = vsel %vm129, %v1331, 0
    %v1409 = vsel %vm129, %v1332, 0
    %v1412 = vsel %vm129, %v1333, 0
    %v1415 = vsel %vm129, %v1334, 0
    %v1418 = vsel %vm129, %v1335, 0
    %v1421 = vsel %vm129, %v1336, 0
    %v1424 = vsel %vm129, %v1337, 0
    %v1427 = vsel %vm129, %v1354, 0
    %v1430 = vsel %vm129, %v1355, 0
    %v1433 = vsel %vm129, %v1356, 0
    %v1436 = vsel %vm129, %v1357, 0
    %v1439 = vsel %vm129, %v1358, 0
    %v1442 = vsel %vm129, %v1359, 0
    %v1445 = vsel %vm129, %v1360, 0
    %v1448 = vsel %vm129, %v1361, 0
    %1450 = vmatprep.subr.bf16.mxu0 0
    %1451 = vmatpush1.bf16.xpose.msra.mxu0 %v1448
    %1452 = vmatprep.subr.bf16.mxu0 0
    %1453 = vmatpush1.bf16.xpose.msra.mxu0 %v1445
    %1454 = vmatprep.subr.bf16.mxu0 0
    %1455 = vmatpush1.bf16.xpose.msra.mxu0 %v1442
    %1456 = vmatprep.subr.bf16.mxu0 0
    %1457 = vmatpush1.bf16.xpose.msra.mxu0 %v1439
    %1458 = vmatprep.subr.bf16.mxu0 0
    %1459 = vmatpush1.bf16.xpose.msra.mxu0 %v1436
    %1460 = vmatprep.subr.bf16.mxu0 0
    %1461 = vmatpush1.bf16.xpose.msra.mxu0 %v1433
    %1462 = vmatprep.subr.bf16.mxu0 0
    %1463 = vmatpush1.bf16.xpose.msra.mxu0 %v1430
    %1464 = vmatprep.subr.bf16.mxu0 0
    %1465 = vmatpush1.bf16.xpose.msra.mxu0 %v1427
    %1466 = vmatprep.subr.bf16.mxu0 0
    %1467 = vmatpush2.bf16.xpose.msra.mxu0 0
    %1468 = vmatprep.subr.bf16.mxu0 0
    %1469 = vmatpush2.bf16.xpose.msra.mxu0 0
    %1470 = vmatprep.subr.bf16.mxu0 0
    %1471 = vmatpush2.bf16.xpose.msra.mxu0 0
    %1472 = vmatprep.subr.bf16.mxu0 0
    %1473 = vmatpush2.bf16.xpose.msra.mxu0 0
    %1474 = vmatprep.subr.bf16.mxu0 0
    %1475 = vmatpush2.bf16.xpose.msra.mxu0 0
    %1476 = vmatprep.subr.bf16.mxu0 0
    %1477 = vmatpush2.bf16.xpose.msra.mxu0 0
    %1478 = vmatprep.subr.bf16.mxu0 0
    %1479 = vmatpush2.bf16.xpose.msra.mxu0 0
    %1480 = vmatprep.subr.bf16.mxu0 0
    %1481 = vmatpush2.bf16.xpose.msra.mxu0 0
    %1482 = vmatprep.mubr.bf16.mxu0 0
    %1483 = vmatmul.mubr.bf16.gmra.mxu0 %v1403
    %v1484 = vpop.f32.mrf.mxu0
    %v1485 = vadd.f32 %v1386, %v1484
    %v1486 = vpop.f32.mrf.mxu0
    %v1487 = vpop.f32.mrf.mxu0
    %v1488 = vadd.f32 %v1387, %v1487
    %v1489 = vpop.f32.mrf.mxu0
    %1490 = vmatprep.mubr.bf16.mxu0 0
    %1491 = vmatmul.mubr.bf16.gmra.mxu0 %v1406
    %v1492 = vpop.f32.mrf.mxu0
    %v1493 = vadd.f32 %v1388, %v1492
    %v1494 = vpop.f32.mrf.mxu0
    %v1495 = vpop.f32.mrf.mxu0
    %v1496 = vadd.f32 %v1389, %v1495
    %v1497 = vpop.f32.mrf.mxu0
    %1498 = vmatprep.mubr.bf16.mxu0 0
    %1499 = vmatmul.mubr.bf16.gmra.mxu0 %v1409
    %v1500 = vpop.f32.mrf.mxu0
    %v1501 = vadd.f32 %v1390, %v1500
    %v1502 = vpop.f32.mrf.mxu0
    %v1503 = vpop.f32.mrf.mxu0
    %v1504 = vadd.f32 %v1391, %v1503
    %v1505 = vpop.f32.mrf.mxu0
    %1506 = vmatprep.mubr.bf16.mxu0 0
    %1507 = vmatmul.mubr.bf16.gmra.mxu0 %v1412
    %v1508 = vpop.f32.mrf.mxu0
    %v1509 = vadd.f32 %v1392, %v1508
    %v1510 = vpop.f32.mrf.mxu0
    %v1511 = vpop.f32.mrf.mxu0
    %v1512 = vadd.f32 %v1393, %v1511
    %v1513 = vpop.f32.mrf.mxu0
    %1514 = vmatprep.mubr.bf16.mxu0 0
    %1515 = vmatmul.mubr.bf16.gmra.mxu0 %v1415
    %v1516 = vpop.f32.mrf.mxu0
    %v1517 = vadd.f32 %v1394, %v1516
    %v1518 = vpop.f32.mrf.mxu0
    %v1519 = vpop.f32.mrf.mxu0
    %v1520 = vadd.f32 %v1395, %v1519
    %v1521 = vpop.f32.mrf.mxu0
    %1522 = vmatprep.mubr.bf16.mxu0 0
    %1523 = vmatmul.mubr.bf16.gmra.mxu0 %v1418
    %v1524 = vpop.f32.mrf.mxu0
    %v1525 = vadd.f32 %v1396, %v1524
    %v1526 = vpop.f32.mrf.mxu0
    %v1527 = vpop.f32.mrf.mxu0
    %v1528 = vadd.f32 %v1397, %v1527
    %v1529 = vpop.f32.mrf.mxu0
    %1530 = vmatprep.mubr.bf16.mxu0 0
    %1531 = vmatmul.mubr.bf16.gmra.mxu0 %v1421
    %v1532 = vpop.f32.mrf.mxu0
    %v1533 = vadd.f32 %v1398, %v1532
    %v1534 = vpop.f32.mrf.mxu0
    %v1535 = vpop.f32.mrf.mxu0
    %v1536 = vadd.f32 %v1399, %v1535
    %v1537 = vpop.f32.mrf.mxu0
    %1538 = vmatprep.mubr.bf16.mxu0 0
    %1539 = vmatmul.mubr.bf16.gmra.mxu0 %v1424
    %v1540 = vpop.f32.mrf.mxu0
    %v1541 = vadd.f32 %v1400, %v1540
    %v1542 = vpop.f32.mrf.mxu0
    %v1543 = vpop.f32.mrf.mxu0
    %v1544 = vadd.f32 %v1401, %v1543
    %v1545 = vpop.f32.mrf.mxu0
    %1546 = vdwg.mxu0
    %1547 = vmax.xlane.f32.xlu0 %v1485
    %v1548 = vpop.xlane.xlu0 %1547
    %1549 = vmax.xlane.f32.xlu0 %v1488
    %v1550 = vpop.xlane.xlu0 %1549
    %1551 = vmax.xlane.f32.xlu0 %v1493
    %v1552 = vpop.xlane.xlu0 %1551
    %1553 = vmax.xlane.f32.xlu0 %v1496
    %v1554 = vpop.xlane.xlu0 %1553
    %1555 = vmax.xlane.f32.xlu0 %v1501
    %v1556 = vpop.xlane.xlu0 %1555
    %1557 = vmax.xlane.f32.xlu0 %v1504
    %v1558 = vpop.xlane.xlu0 %1557
    %1559 = vmax.xlane.f32.xlu0 %v1509
    %v1560 = vpop.xlane.xlu0 %1559
    %1561 = vmax.xlane.f32.xlu0 %v1512
    %v1562 = vpop.xlane.xlu0 %1561
    %1563 = vmax.xlane.f32.xlu0 %v1517
    %v1564 = vpop.xlane.xlu0 %1563
    %1565 = vmax.xlane.f32.xlu0 %v1520
    %v1566 = vpop.xlane.xlu0 %1565
    %1567 = vmax.xlane.f32.xlu0 %v1525
    %v1568 = vpop.xlane.xlu0 %1567
    %1569 = vmax.xlane.f32.xlu0 %v1528
    %v1570 = vpop.xlane.xlu0 %1569
    %1571 = vmax.xlane.f32.xlu0 %v1533
    %v1572 = vpop.xlane.xlu0 %1571
    %1573 = vmax.xlane.f32.xlu0 %v1536
    %v1574 = vpop.xlane.xlu0 %1573
    %1575 = vmax.xlane.f32.xlu0 %v1541
    %v1576 = vpop.xlane.xlu0 %1575
    %1577 = vmax.xlane.f32.xlu0 %v1544
    %v1578 = vpop.xlane.xlu0 %1577
    %v1579 = vsub.f32 %v1485, %v1548
    %v1580 = vsub.f32 %v1488, %v1550
    %v1581 = vsub.f32 %v1493, %v1552
    %v1582 = vsub.f32 %v1496, %v1554
    %v1583 = vsub.f32 %v1501, %v1556
    %v1584 = vsub.f32 %v1504, %v1558
    %v1585 = vsub.f32 %v1509, %v1560
    %v1586 = vsub.f32 %v1512, %v1562
    %v1587 = vsub.f32 %v1517, %v1564
    %v1588 = vsub.f32 %v1520, %v1566
    %v1589 = vsub.f32 %v1525, %v1568
    %v1590 = vsub.f32 %v1528, %v1570
    %v1591 = vsub.f32 %v1533, %v1572
    %v1592 = vsub.f32 %v1536, %v1574
    %v1593 = vsub.f32 %v1541, %v1576
    %v1594 = vsub.f32 %v1544, %v1578
    %v1595 = vmul.f32 %v1579, 1.442695
    %v1596 = vpow.pop %v1595
    %v1597 = vmul.f32 %v1580, 1.442695
    %v1598 = vpow.pop %v1597
    %v1599 = vmul.f32 %v1581, 1.442695
    %v1600 = vpow.pop %v1599
    %v1601 = vmul.f32 %v1582, 1.442695
    %v1602 = vpow.pop %v1601
    %v1603 = vmul.f32 %v1583, 1.442695
    %v1604 = vpow.pop %v1603
    %v1605 = vmul.f32 %v1584, 1.442695
    %v1606 = vpow.pop %v1605
    %v1607 = vmul.f32 %v1585, 1.442695
    %v1608 = vpow.pop %v1607
    %v1609 = vmul.f32 %v1586, 1.442695
    %v1610 = vpow.pop %v1609
    %v1611 = vmul.f32 %v1587, 1.442695
    %v1612 = vpow.pop %v1611
    %v1613 = vmul.f32 %v1588, 1.442695
    %v1614 = vpow.pop %v1613
    %v1615 = vmul.f32 %v1589, 1.442695
    %v1616 = vpow.pop %v1615
    %v1617 = vmul.f32 %v1590, 1.442695
    %v1618 = vpow.pop %v1617
    %v1619 = vmul.f32 %v1591, 1.442695
    %v1620 = vpow.pop %v1619
    %v1621 = vmul.f32 %v1592, 1.442695
    %v1622 = vpow.pop %v1621
    %v1623 = vmul.f32 %v1593, 1.442695
    %v1624 = vpow.pop %v1623
    %v1625 = vmul.f32 %v1594, 1.442695
    %v1626 = vpow.pop %v1625
    %1627 = vadd.xlane.f32.xlu0 %v1596
    %v1628 = vpop.xlane.xlu0 %1627
    %1629 = vadd.xlane.f32.xlu0 %v1598
    %v1630 = vpop.xlane.xlu0 %1629
    %1631 = vadd.xlane.f32.xlu0 %v1600
    %v1632 = vpop.xlane.xlu0 %1631
    %1633 = vadd.xlane.f32.xlu0 %v1602
    %v1634 = vpop.xlane.xlu0 %1633
    %1635 = vadd.xlane.f32.xlu0 %v1604
    %v1636 = vpop.xlane.xlu0 %1635
    %1637 = vadd.xlane.f32.xlu0 %v1606
    %v1638 = vpop.xlane.xlu0 %1637
    %1639 = vadd.xlane.f32.xlu0 %v1608
    %v1640 = vpop.xlane.xlu0 %1639
    %1641 = vadd.xlane.f32.xlu0 %v1610
    %v1642 = vpop.xlane.xlu0 %1641
    %1643 = vadd.xlane.f32.xlu0 %v1612
    %v1644 = vpop.xlane.xlu0 %1643
    %1645 = vadd.xlane.f32.xlu0 %v1614
    %v1646 = vpop.xlane.xlu0 %1645
    %1647 = vadd.xlane.f32.xlu0 %v1616
    %v1648 = vpop.xlane.xlu0 %1647
    %1649 = vadd.xlane.f32.xlu0 %v1618
    %v1650 = vpop.xlane.xlu0 %1649
    %1651 = vadd.xlane.f32.xlu0 %v1620
    %v1652 = vpop.xlane.xlu0 %1651
    %1653 = vadd.xlane.f32.xlu0 %v1622
    %v1654 = vpop.xlane.xlu0 %1653
    %1655 = vadd.xlane.f32.xlu0 %v1624
    %v1656 = vpop.xlane.xlu0 %1655
    %1657 = vadd.xlane.f32.xlu0 %v1626
    %v1658 = vpop.xlane.xlu0 %1657
    %v1659 = vrcp.pop %v1628
    %v1660 = vrcp.pop %v1630
    %v1661 = vrcp.pop %v1632
    %v1662 = vrcp.pop %v1634
    %v1663 = vrcp.pop %v1636
    %v1664 = vrcp.pop %v1638
    %v1665 = vrcp.pop %v1640
    %v1666 = vrcp.pop %v1642
    %v1667 = vrcp.pop %v1644
    %v1668 = vrcp.pop %v1646
    %v1669 = vrcp.pop %v1648
    %v1670 = vrcp.pop %v1650
    %v1671 = vrcp.pop %v1652
    %v1672 = vrcp.pop %v1654
    %v1673 = vrcp.pop %v1656
    %v1674 = vrcp.pop %v1658
    %v1675 = vmul.f32 %v1596, %v1659
    %v1676 = vmul.f32 %v1598, %v1660
    %v1677 = vmul.f32 %v1600, %v1661
    %v1678 = vmul.f32 %v1602, %v1662
    %v1679 = vmul.f32 %v1604, %v1663
    %v1680 = vmul.f32 %v1606, %v1664
    %v1681 = vmul.f32 %v1608, %v1665
    %v1682 = vmul.f32 %v1610, %v1666
    %v1683 = vmul.f32 %v1612, %v1667
    %v1684 = vmul.f32 %v1614, %v1668
    %v1685 = vmul.f32 %v1616, %v1669
    %v1686 = vmul.f32 %v1618, %v1670
    %v1687 = vmul.f32 %v1620, %v1671
    %v1688 = vmul.f32 %v1622, %v1672
    %v1689 = vmul.f32 %v1624, %v1673
    %v1690 = vmul.f32 %v1626, %v1674
    %v1691 = vpack.c.bf16 %v1676, %v1675
    %v1692 = vpack.c.bf16 %v1678, %v1677
    %v1693 = vpack.c.bf16 %v1680, %v1679
    %v1694 = vpack.c.bf16 %v1682, %v1681
    %v1695 = vpack.c.bf16 %v1684, %v1683
    %v1696 = vpack.c.bf16 %v1686, %v1685
    %v1697 = vpack.c.bf16 %v1688, %v1687
    %v1698 = vpack.c.bf16 %v1690, %v1689
    %1699 = vmatprep.subr.bf16.mxu0 0
    %1700 = vmatpush1.bf16.msra.mxu0 %v1385
    %1701 = vmatprep.subr.bf16.mxu0 0
    %1702 = vmatpush1.bf16.msra.mxu0 %v1384
    %1703 = vmatprep.subr.bf16.mxu0 0
    %1704 = vmatpush1.bf16.msra.mxu0 %v1383
    %1705 = vmatprep.subr.bf16.mxu0 0
    %1706 = vmatpush1.bf16.msra.mxu0 %v1382
    %1707 = vmatprep.subr.bf16.mxu0 0
    %1708 = vmatpush1.bf16.msra.mxu0 %v1381
    %1709 = vmatprep.subr.bf16.mxu0 0
    %1710 = vmatpush1.bf16.msra.mxu0 %v1380
    %1711 = vmatprep.subr.bf16.mxu0 0
    %1712 = vmatpush1.bf16.msra.mxu0 %v1379
    %1713 = vmatprep.subr.bf16.mxu0 0
    %1714 = vmatpush1.bf16.msra.mxu0 %v1378
    %1715 = vmatprep.subr.bf16.mxu0 0
    %1716 = vmatpush2.bf16.msra.mxu0 0
    %1717 = vmatprep.subr.bf16.mxu0 0
    %1718 = vmatpush2.bf16.msra.mxu0 0
    %1719 = vmatprep.subr.bf16.mxu0 0
    %1720 = vmatpush2.bf16.msra.mxu0 0
    %1721 = vmatprep.subr.bf16.mxu0 0
    %1722 = vmatpush2.bf16.msra.mxu0 0
    %1723 = vmatprep.subr.bf16.mxu0 0
    %1724 = vmatpush2.bf16.msra.mxu0 0
    %1725 = vmatprep.subr.bf16.mxu0 0
    %1726 = vmatpush2.bf16.msra.mxu0 0
    %1727 = vmatprep.subr.bf16.mxu0 0
    %1728 = vmatpush2.bf16.msra.mxu0 0
    %1729 = vmatprep.subr.bf16.mxu0 0
    %1730 = vmatpush2.bf16.msra.mxu0 0
    %1731 = vmatprep.mubr.bf16.mxu0 0
    %1732 = vmatmul.mubr.bf16.gmra.mxu0 %v1691
    %v1733 = vpop.f32.mrf.mxu0
    %v1734 = vadd.f32 0.0, %v1733
    %v1735 = vpop.f32.mrf.mxu0
    %v1736 = vpop.f32.mrf.mxu0
    %v1737 = vadd.f32 0.0, %v1736
    %v1738 = vpop.f32.mrf.mxu0
    %1739 = vmatprep.mubr.bf16.mxu0 0
    %1740 = vmatmul.mubr.bf16.gmra.mxu0 %v1692
    %v1741 = vpop.f32.mrf.mxu0
    %v1742 = vadd.f32 0.0, %v1741
    %v1743 = vpop.f32.mrf.mxu0
    %v1744 = vpop.f32.mrf.mxu0
    %v1745 = vadd.f32 0.0, %v1744
    %v1746 = vpop.f32.mrf.mxu0
    %1747 = vmatprep.mubr.bf16.mxu0 0
    %1748 = vmatmul.mubr.bf16.gmra.mxu0 %v1693
    %v1749 = vpop.f32.mrf.mxu0
    %v1750 = vadd.f32 0.0, %v1749
    %v1751 = vpop.f32.mrf.mxu0
    %v1752 = vpop.f32.mrf.mxu0
    %v1753 = vadd.f32 0.0, %v1752
    %v1754 = vpop.f32.mrf.mxu0
    %1755 = vmatprep.mubr.bf16.mxu0 0
    %1756 = vmatmul.mubr.bf16.gmra.mxu0 %v1694
    %v1757 = vpop.f32.mrf.mxu0
    %v1758 = vadd.f32 0.0, %v1757
    %v1759 = vpop.f32.mrf.mxu0
    %v1760 = vpop.f32.mrf.mxu0
    %v1761 = vadd.f32 0.0, %v1760
    %v1762 = vpop.f32.mrf.mxu0
    %1763 = vmatprep.mubr.bf16.mxu0 0
    %1764 = vmatmul.mubr.bf16.gmra.mxu0 %v1695
    %v1765 = vpop.f32.mrf.mxu0
    %v1766 = vadd.f32 0.0, %v1765
    %v1767 = vpop.f32.mrf.mxu0
    %v1768 = vpop.f32.mrf.mxu0
    %v1769 = vadd.f32 0.0, %v1768
    %v1770 = vpop.f32.mrf.mxu0
    %1771 = vmatprep.mubr.bf16.mxu0 0
    %1772 = vmatmul.mubr.bf16.gmra.mxu0 %v1696
    %v1773 = vpop.f32.mrf.mxu0
    %v1774 = vadd.f32 0.0, %v1773
    %v1775 = vpop.f32.mrf.mxu0
    %v1776 = vpop.f32.mrf.mxu0
    %v1777 = vadd.f32 0.0, %v1776
    %v1778 = vpop.f32.mrf.mxu0
    %1779 = vmatprep.mubr.bf16.mxu0 0
    %1780 = vmatmul.mubr.bf16.gmra.mxu0 %v1697
    %v1781 = vpop.f32.mrf.mxu0
    %v1782 = vadd.f32 0.0, %v1781
    %v1783 = vpop.f32.mrf.mxu0
    %v1784 = vpop.f32.mrf.mxu0
    %v1785 = vadd.f32 0.0, %v1784
    %v1786 = vpop.f32.mrf.mxu0
    %1787 = vmatprep.mubr.bf16.mxu0 0
    %1788 = vmatmul.mubr.bf16.gmra.mxu0 %v1698
    %v1789 = vpop.f32.mrf.mxu0
    %v1790 = vadd.f32 0.0, %v1789
    %v1791 = vpop.f32.mrf.mxu0
    %v1792 = vpop.f32.mrf.mxu0
    %v1793 = vadd.f32 0.0, %v1792
    %v1794 = vpop.f32.mrf.mxu0
    %1795 = vdwg.mxu0
    %1796 = vst.msk [vmem:[#allocation3] sm:$0xff] %vm129, %v1734
    %1797 = vst.msk [vmem:[#allocation3 + $0x8] sm:$0xff] %vm129, %v1737
    %1798 = vst.msk [vmem:[#allocation3 + $0x10] sm:$0xff] %vm129, %v1742
    %1799 = vst.msk [vmem:[#allocation3 + $0x18] sm:$0xff] %vm129, %v1745
    %1800 = vst.msk [vmem:[#allocation3 + $0x20] sm:$0xff] %vm129, %v1750
    %1801 = vst.msk [vmem:[#allocation3 + $0x28] sm:$0xff] %vm129, %v1753
    %1802 = vst.msk [vmem:[#allocation3 + $0x30] sm:$0xff] %vm129, %v1758
    %1803 = vst.msk [vmem:[#allocation3 + $0x38] sm:$0xff] %vm129, %v1761
    %1804 = vst.msk [vmem:[#allocation3 + $0x40] sm:$0xff] %vm129, %v1766
    %1805 = vst.msk [vmem:[#allocation3 + $0x48] sm:$0xff] %vm129, %v1769
    %1806 = vst.msk [vmem:[#allocation3 + $0x50] sm:$0xff] %vm129, %v1774
    %1807 = vst.msk [vmem:[#allocation3 + $0x58] sm:$0xff] %vm129, %v1777
    %1808 = vst.msk [vmem:[#allocation3 + $0x60] sm:$0xff] %vm129, %v1782
    %1809 = vst.msk [vmem:[#allocation3 + $0x68] sm:$0xff] %vm129, %v1785
    %1810 = vst.msk [vmem:[#allocation3 + $0x70] sm:$0xff] %vm129, %v1790
    %1811 = vst.msk [vmem:[#allocation3 + $0x78] sm:$0xff] %vm129, %v1793
    %v1812 = vld [vmem:[#allocation2] sm:$0xff]
    %v1813 = vld [vmem:[#allocation2 + $0x18] sm:$0xff]
    %v1814 = vld [vmem:[#allocation2 + $0x30] sm:$0xff]
    %v1815 = vld [vmem:[#allocation2 + $0x48] sm:$0xff]
    %v1816 = vld [vmem:[#allocation2 + $0x60] sm:$0xff]
    %v1817 = vld [vmem:[#allocation2 + $0x78] sm:$0xff]
    %v1818 = vld [vmem:[#allocation2 + $0x90] sm:$0xff]
    %v1819 = vld [vmem:[#allocation2 + $0xa8] sm:$0xff]
    %v1820 = vld [vmem:[#allocation2 + $0xc0] sm:$0xff]
    %v1821 = vld [vmem:[#allocation2 + $0xd8] sm:$0xff]
    %v1822 = vld [vmem:[#allocation2 + $0xf0] sm:$0xff]
    %v1823 = vld [vmem:[#allocation2 + $0x108] sm:$0xff]
    %v1824 = vld [vmem:[#allocation2 + $0x120] sm:$0xff]
    %v1825 = vld [vmem:[#allocation2 + $0x138] sm:$0xff]
    %v1826 = vld [vmem:[#allocation2 + $0x150] sm:$0xff]
    %v1827 = vld [vmem:[#allocation2 + $0x168] sm:$0xff]
    %v1828 = vpack.c.bf16 %v1813, %v1812
    %v1829 = vpack.c.bf16 %v1815, %v1814
    %v1830 = vpack.c.bf16 %v1817, %v1816
    %v1831 = vpack.c.bf16 %v1819, %v1818
    %v1832 = vpack.c.bf16 %v1821, %v1820
    %v1833 = vpack.c.bf16 %v1823, %v1822
    %v1834 = vpack.c.bf16 %v1825, %v1824
    %v1835 = vpack.c.bf16 %v1827, %v1826
    %v1836 = vld [vmem:[#allocation2 + $0x8] sm:$0xff]
    %v1837 = vld [vmem:[#allocation2 + $0x20] sm:$0xff]
    %v1838 = vld [vmem:[#allocation2 + $0x38] sm:$0xff]
    %v1839 = vld [vmem:[#allocation2 + $0x50] sm:$0xff]
    %v1840 = vld [vmem:[#allocation2 + $0x68] sm:$0xff]
    %v1841 = vld [vmem:[#allocation2 + $0x80] sm:$0xff]
    %v1842 = vld [vmem:[#allocation2 + $0x98] sm:$0xff]
    %v1843 = vld [vmem:[#allocation2 + $0xb0] sm:$0xff]
    %v1844 = vld [vmem:[#allocation2 + $0xc8] sm:$0xff]
    %v1845 = vld [vmem:[#allocation2 + $0xe0] sm:$0xff]
    %v1846 = vld [vmem:[#allocation2 + $0xf8] sm:$0xff]
    %v1847 = vld [vmem:[#allocation2 + $0x110] sm:$0xff]
    %v1848 = vld [vmem:[#allocation2 + $0x128] sm:$0xff]
    %v1849 = vld [vmem:[#allocation2 + $0x140] sm:$0xff]
    %v1850 = vld [vmem:[#allocation2 + $0x158] sm:$0xff]
    %v1851 = vld [vmem:[#allocation2 + $0x170] sm:$0xff]
    %v1852 = vpack.c.bf16 %v1837, %v1836
    %v1853 = vpack.c.bf16 %v1839, %v1838
    %v1854 = vpack.c.bf16 %v1841, %v1840
    %v1855 = vpack.c.bf16 %v1843, %v1842
    %v1856 = vpack.c.bf16 %v1845, %v1844
    %v1857 = vpack.c.bf16 %v1847, %v1846
    %v1858 = vpack.c.bf16 %v1849, %v1848
    %v1859 = vpack.c.bf16 %v1851, %v1850
    %v1860 = vld [vmem:[#allocation2 + $0x10] sm:$0xff]
    %v1861 = vld [vmem:[#allocation2 + $0x28] sm:$0xff]
    %v1862 = vld [vmem:[#allocation2 + $0x40] sm:$0xff]
    %v1863 = vld [vmem:[#allocation2 + $0x58] sm:$0xff]
    %v1864 = vld [vmem:[#allocation2 + $0x70] sm:$0xff]
    %v1865 = vld [vmem:[#allocation2 + $0x88] sm:$0xff]
    %v1866 = vld [vmem:[#allocation2 + $0xa0] sm:$0xff]
    %v1867 = vld [vmem:[#allocation2 + $0xb8] sm:$0xff]
    %v1868 = vld [vmem:[#allocation2 + $0xd0] sm:$0xff]
    %v1869 = vld [vmem:[#allocation2 + $0xe8] sm:$0xff]
    %v1870 = vld [vmem:[#allocation2 + $0x100] sm:$0xff]
    %v1871 = vld [vmem:[#allocation2 + $0x118] sm:$0xff]
    %v1872 = vld [vmem:[#allocation2 + $0x130] sm:$0xff]
    %v1873 = vld [vmem:[#allocation2 + $0x148] sm:$0xff]
    %v1874 = vld [vmem:[#allocation2 + $0x160] sm:$0xff]
    %v1875 = vld [vmem:[#allocation2 + $0x178] sm:$0xff]
    %v1876 = vpack.c.bf16 %v1861, %v1860
    %v1877 = vpack.c.bf16 %v1863, %v1862
    %v1878 = vpack.c.bf16 %v1865, %v1864
    %v1879 = vpack.c.bf16 %v1867, %v1866
    %v1880 = vpack.c.bf16 %v1869, %v1868
    %v1881 = vpack.c.bf16 %v1871, %v1870
    %v1882 = vpack.c.bf16 %v1873, %v1872
    %v1883 = vpack.c.bf16 %v1875, %v1874
    %v1884 = vld [vmem:[%s7] sm:$0xff]
    %v1885 = vld [vmem:[%s7 + $0x8] sm:$0xff]
    %v1886 = vld [vmem:[%s7 + $0x10] sm:$0xff]
    %v1887 = vld [vmem:[%s7 + $0x18] sm:$0xff]
    %v1888 = vld [vmem:[%s7 + $0x20] sm:$0xff]
    %v1889 = vld [vmem:[%s7 + $0x28] sm:$0xff]
    %v1890 = vld [vmem:[%s7 + $0x30] sm:$0xff]
    %v1891 = vld [vmem:[%s7 + $0x38] sm:$0xff]
    %v1892 = vld [vmem:[%s7 + $0x40] sm:$0xff]
    %v1893 = vld [vmem:[%s7 + $0x48] sm:$0xff]
    %v1894 = vld [vmem:[%s7 + $0x50] sm:$0xff]
    %v1895 = vld [vmem:[%s7 + $0x58] sm:$0xff]
    %v1896 = vld [vmem:[%s7 + $0x60] sm:$0xff]
    %v1897 = vld [vmem:[%s7 + $0x68] sm:$0xff]
    %v1898 = vld [vmem:[%s7 + $0x70] sm:$0xff]
    %v1899 = vld [vmem:[%s7 + $0x78] sm:$0xff]
    %1908 = vrot.lane.b32.xlu0 %v1828, 112
    %v1909 = vpop.permute.xlu0 %1908
    %1910 = vrot.lane.b32.xlu0 %v1829, 112
    %v1911 = vpop.permute.xlu0 %1910
    %1912 = vrot.lane.b32.xlu0 %v1830, 112
    %v1913 = vpop.permute.xlu0 %1912
    %1914 = vrot.lane.b32.xlu0 %v1831, 112
    %v1915 = vpop.permute.xlu0 %1914
    %1916 = vrot.lane.b32.xlu0 %v1832, 112
    %v1917 = vpop.permute.xlu0 %1916
    %1918 = vrot.lane.b32.xlu0 %v1833, 112
    %v1919 = vpop.permute.xlu0 %1918
    %1920 = vrot.lane.b32.xlu0 %v1834, 112
    %v1921 = vpop.permute.xlu0 %1920
    %1922 = vrot.lane.b32.xlu0 %v1835, 112
    %v1923 = vpop.permute.xlu0 %1922
    %1932 = vrot.lane.b32.xlu0 %v1852, 112
    %v1933 = vpop.permute.xlu0 %1932
    %1934 = vrot.lane.b32.xlu0 %v1853, 112
    %v1935 = vpop.permute.xlu0 %1934
    %1936 = vrot.lane.b32.xlu0 %v1854, 112
    %v1937 = vpop.permute.xlu0 %1936
    %1938 = vrot.lane.b32.xlu0 %v1855, 112
    %v1939 = vpop.permute.xlu0 %1938
    %1940 = vrot.lane.b32.xlu0 %v1856, 112
    %v1941 = vpop.permute.xlu0 %1940
    %1942 = vrot.lane.b32.xlu0 %v1857, 112
    %v1943 = vpop.permute.xlu0 %1942
    %1944 = vrot.lane.b32.xlu0 %v1858, 112
    %v1945 = vpop.permute.xlu0 %1944
    %1946 = vrot.lane.b32.xlu0 %v1859, 112
    %v1947 = vpop.permute.xlu0 %1946
    %v1949 = vsel %vm129, %v1909, 0
    %v1952 = vsel %vm129, %v1911, 0
    %v1955 = vsel %vm129, %v1913, 0
    %v1958 = vsel %vm129, %v1915, 0
    %v1961 = vsel %vm129, %v1917, 0
    %v1964 = vsel %vm129, %v1919, 0
    %v1967 = vsel %vm129, %v1921, 0
    %v1970 = vsel %vm129, %v1923, 0
    %v1973 = vsel %vm129, %v1933, 0
    %v1976 = vsel %vm129, %v1935, 0
    %v1979 = vsel %vm129, %v1937, 0
    %v1982 = vsel %vm129, %v1939, 0
    %v1985 = vsel %vm129, %v1941, 0
    %v1988 = vsel %vm129, %v1943, 0
    %v1991 = vsel %vm129, %v1945, 0
    %v1994 = vsel %vm129, %v1947, 0
    %1996 = vmatprep.subr.bf16.mxu0 0
    %1997 = vmatpush1.bf16.xpose.msra.mxu0 %v1994
    %1998 = vmatprep.subr.bf16.mxu0 0
    %1999 = vmatpush1.bf16.xpose.msra.mxu0 %v1991
    %2000 = vmatprep.subr.bf16.mxu0 0
    %2001 = vmatpush1.bf16.xpose.msra.mxu0 %v1988
    %2002 = vmatprep.subr.bf16.mxu0 0
    %2003 = vmatpush1.bf16.xpose.msra.mxu0 %v1985
    %2004 = vmatprep.subr.bf16.mxu0 0
    %2005 = vmatpush1.bf16.xpose.msra.mxu0 %v1982
    %2006 = vmatprep.subr.bf16.mxu0 0
    %2007 = vmatpush1.bf16.xpose.msra.mxu0 %v1979
    %2008 = vmatprep.subr.bf16.mxu0 0
    %2009 = vmatpush1.bf16.xpose.msra.mxu0 %v1976
    %2010 = vmatprep.subr.bf16.mxu0 0
    %2011 = vmatpush1.bf16.xpose.msra.mxu0 %v1973
    %2012 = vmatprep.subr.bf16.mxu0 0
    %2013 = vmatpush2.bf16.xpose.msra.mxu0 0
    %2014 = vmatprep.subr.bf16.mxu0 0
    %2015 = vmatpush2.bf16.xpose.msra.mxu0 0
    %2016 = vmatprep.subr.bf16.mxu0 0
    %2017 = vmatpush2.bf16.xpose.msra.mxu0 0
    %2018 = vmatprep.subr.bf16.mxu0 0
    %2019 = vmatpush2.bf16.xpose.msra.mxu0 0
    %2020 = vmatprep.subr.bf16.mxu0 0
    %2021 = vmatpush2.bf16.xpose.msra.mxu0 0
    %2022 = vmatprep.subr.bf16.mxu0 0
    %2023 = vmatpush2.bf16.xpose.msra.mxu0 0
    %2024 = vmatprep.subr.bf16.mxu0 0
    %2025 = vmatpush2.bf16.xpose.msra.mxu0 0
    %2026 = vmatprep.subr.bf16.mxu0 0
    %2027 = vmatpush2.bf16.xpose.msra.mxu0 0
    %2028 = vmatprep.mubr.bf16.mxu0 0
    %2029 = vmatmul.mubr.bf16.gmra.mxu0 %v1949
    %v2030 = vpop.f32.mrf.mxu0
    %v2031 = vadd.f32 %v1884, %v2030
    %v2032 = vpop.f32.mrf.mxu0
    %v2033 = vpop.f32.mrf.mxu0
    %v2034 = vadd.f32 %v1885, %v2033
    %v2035 = vpop.f32.mrf.mxu0
    %2036 = vmatprep.mubr.bf16.mxu0 0
    %2037 = vmatmul.mubr.bf16.gmra.mxu0 %v1952
    %v2038 = vpop.f32.mrf.mxu0
    %v2039 = vadd.f32 %v1886, %v2038
    %v2040 = vpop.f32.mrf.mxu0
    %v2041 = vpop.f32.mrf.mxu0
    %v2042 = vadd.f32 %v1887, %v2041
    %v2043 = vpop.f32.mrf.mxu0
    %2044 = vmatprep.mubr.bf16.mxu0 0
    %2045 = vmatmul.mubr.bf16.gmra.mxu0 %v1955
    %v2046 = vpop.f32.mrf.mxu0
    %v2047 = vadd.f32 %v1888, %v2046
    %v2048 = vpop.f32.mrf.mxu0
    %v2049 = vpop.f32.mrf.mxu0
    %v2050 = vadd.f32 %v1889, %v2049
    %v2051 = vpop.f32.mrf.mxu0
    %2052 = vmatprep.mubr.bf16.mxu0 0
    %2053 = vmatmul.mubr.bf16.gmra.mxu0 %v1958
    %v2054 = vpop.f32.mrf.mxu0
    %v2055 = vadd.f32 %v1890, %v2054
    %v2056 = vpop.f32.mrf.mxu0
    %v2057 = vpop.f32.mrf.mxu0
    %v2058 = vadd.f32 %v1891, %v2057
    %v2059 = vpop.f32.mrf.mxu0
    %2060 = vmatprep.mubr.bf16.mxu0 0
    %2061 = vmatmul.mubr.bf16.gmra.mxu0 %v1961
    %v2062 = vpop.f32.mrf.mxu0
    %v2063 = vadd.f32 %v1892, %v2062
    %v2064 = vpop.f32.mrf.mxu0
    %v2065 = vpop.f32.mrf.mxu0
    %v2066 = vadd.f32 %v1893, %v2065
    %v2067 = vpop.f32.mrf.mxu0
    %2068 = vmatprep.mubr.bf16.mxu0 0
    %2069 = vmatmul.mubr.bf16.gmra.mxu0 %v1964
    %v2070 = vpop.f32.mrf.mxu0
    %v2071 = vadd.f32 %v1894, %v2070
    %v2072 = vpop.f32.mrf.mxu0
    %v2073 = vpop.f32.mrf.mxu0
    %v2074 = vadd.f32 %v1895, %v2073
    %v2075 = vpop.f32.mrf.mxu0
    %2076 = vmatprep.mubr.bf16.mxu0 0
    %2077 = vmatmul.mubr.bf16.gmra.mxu0 %v1967
    %v2078 = vpop.f32.mrf.mxu0
    %v2079 = vadd.f32 %v1896, %v2078
    %v2080 = vpop.f32.mrf.mxu0
    %v2081 = vpop.f32.mrf.mxu0
    %v2082 = vadd.f32 %v1897, %v2081
    %v2083 = vpop.f32.mrf.mxu0
    %2084 = vmatprep.mubr.bf16.mxu0 0
    %2085 = vmatmul.mubr.bf16.gmra.mxu0 %v1970
    %v2086 = vpop.f32.mrf.mxu0
    %v2087 = vadd.f32 %v1898, %v2086
    %v2088 = vpop.f32.mrf.mxu0
    %v2089 = vpop.f32.mrf.mxu0
    %v2090 = vadd.f32 %v1899, %v2089
    %v2091 = vpop.f32.mrf.mxu0
    %2092 = vdwg.mxu0
    %2093 = vmax.xlane.f32.xlu0 %v2031
    %v2094 = vpop.xlane.xlu0 %2093
    %2095 = vmax.xlane.f32.xlu0 %v2034
    %v2096 = vpop.xlane.xlu0 %2095
    %2097 = vmax.xlane.f32.xlu0 %v2039
    %v2098 = vpop.xlane.xlu0 %2097
    %2099 = vmax.xlane.f32.xlu0 %v2042
    %v2100 = vpop.xlane.xlu0 %2099
    %2101 = vmax.xlane.f32.xlu0 %v2047
    %v2102 = vpop.xlane.xlu0 %2101
    %2103 = vmax.xlane.f32.xlu0 %v2050
    %v2104 = vpop.xlane.xlu0 %2103
    %2105 = vmax.xlane.f32.xlu0 %v2055
    %v2106 = vpop.xlane.xlu0 %2105
    %2107 = vmax.xlane.f32.xlu0 %v2058
    %v2108 = vpop.xlane.xlu0 %2107
    %2109 = vmax.xlane.f32.xlu0 %v2063
    %v2110 = vpop.xlane.xlu0 %2109
    %2111 = vmax.xlane.f32.xlu0 %v2066
    %v2112 = vpop.xlane.xlu0 %2111
    %2113 = vmax.xlane.f32.xlu0 %v2071
    %v2114 = vpop.xlane.xlu0 %2113
    %2115 = vmax.xlane.f32.xlu0 %v2074
    %v2116 = vpop.xlane.xlu0 %2115
    %2117 = vmax.xlane.f32.xlu0 %v2079
    %v2118 = vpop.xlane.xlu0 %2117
    %2119 = vmax.xlane.f32.xlu0 %v2082
    %v2120 = vpop.xlane.xlu0 %2119
    %2121 = vmax.xlane.f32.xlu0 %v2087
    %v2122 = vpop.xlane.xlu0 %2121
    %2123 = vmax.xlane.f32.xlu0 %v2090
    %v2124 = vpop.xlane.xlu0 %2123
    %v2125 = vsub.f32 %v2031, %v2094
    %v2126 = vsub.f32 %v2034, %v2096
    %v2127 = vsub.f32 %v2039, %v2098
    %v2128 = vsub.f32 %v2042, %v2100
    %v2129 = vsub.f32 %v2047, %v2102
    %v2130 = vsub.f32 %v2050, %v2104
    %v2131 = vsub.f32 %v2055, %v2106
    %v2132 = vsub.f32 %v2058, %v2108
    %v2133 = vsub.f32 %v2063, %v2110
    %v2134 = vsub.f32 %v2066, %v2112
    %v2135 = vsub.f32 %v2071, %v2114
    %v2136 = vsub.f32 %v2074, %v2116
    %v2137 = vsub.f32 %v2079, %v2118
    %v2138 = vsub.f32 %v2082, %v2120
    %v2139 = vsub.f32 %v2087, %v2122
    %v2140 = vsub.f32 %v2090, %v2124
    %v2141 = vmul.f32 %v2125, 1.442695
    %v2142 = vpow.pop %v2141
    %v2143 = vmul.f32 %v2126, 1.442695
    %v2144 = vpow.pop %v2143
    %v2145 = vmul.f32 %v2127, 1.442695
    %v2146 = vpow.pop %v2145
    %v2147 = vmul.f32 %v2128, 1.442695
    %v2148 = vpow.pop %v2147
    %v2149 = vmul.f32 %v2129, 1.442695
    %v2150 = vpow.pop %v2149
    %v2151 = vmul.f32 %v2130, 1.442695
    %v2152 = vpow.pop %v2151
    %v2153 = vmul.f32 %v2131, 1.442695
    %v2154 = vpow.pop %v2153
    %v2155 = vmul.f32 %v2132, 1.442695
    %v2156 = vpow.pop %v2155
    %v2157 = vmul.f32 %v2133, 1.442695
    %v2158 = vpow.pop %v2157
    %v2159 = vmul.f32 %v2134, 1.442695
    %v2160 = vpow.pop %v2159
    %v2161 = vmul.f32 %v2135, 1.442695
    %v2162 = vpow.pop %v2161
    %v2163 = vmul.f32 %v2136, 1.442695
    %v2164 = vpow.pop %v2163
    %v2165 = vmul.f32 %v2137, 1.442695
    %v2166 = vpow.pop %v2165
    %v2167 = vmul.f32 %v2138, 1.442695
    %v2168 = vpow.pop %v2167
    %v2169 = vmul.f32 %v2139, 1.442695
    %v2170 = vpow.pop %v2169
    %v2171 = vmul.f32 %v2140, 1.442695
    %v2172 = vpow.pop %v2171
    %2173 = vadd.xlane.f32.xlu0 %v2142
    %v2174 = vpop.xlane.xlu0 %2173
    %2175 = vadd.xlane.f32.xlu0 %v2144
    %v2176 = vpop.xlane.xlu0 %2175
    %2177 = vadd.xlane.f32.xlu0 %v2146
    %v2178 = vpop.xlane.xlu0 %2177
    %2179 = vadd.xlane.f32.xlu0 %v2148
    %v2180 = vpop.xlane.xlu0 %2179
    %2181 = vadd.xlane.f32.xlu0 %v2150
    %v2182 = vpop.xlane.xlu0 %2181
    %2183 = vadd.xlane.f32.xlu0 %v2152
    %v2184 = vpop.xlane.xlu0 %2183
    %2185 = vadd.xlane.f32.xlu0 %v2154
    %v2186 = vpop.xlane.xlu0 %2185
    %2187 = vadd.xlane.f32.xlu0 %v2156
    %v2188 = vpop.xlane.xlu0 %2187
    %2189 = vadd.xlane.f32.xlu0 %v2158
    %v2190 = vpop.xlane.xlu0 %2189
    %2191 = vadd.xlane.f32.xlu0 %v2160
    %v2192 = vpop.xlane.xlu0 %2191
    %2193 = vadd.xlane.f32.xlu0 %v2162
    %v2194 = vpop.xlane.xlu0 %2193
    %2195 = vadd.xlane.f32.xlu0 %v2164
    %v2196 = vpop.xlane.xlu0 %2195
    %2197 = vadd.xlane.f32.xlu0 %v2166
    %v2198 = vpop.xlane.xlu0 %2197
    %2199 = vadd.xlane.f32.xlu0 %v2168
    %v2200 = vpop.xlane.xlu0 %2199
    %2201 = vadd.xlane.f32.xlu0 %v2170
    %v2202 = vpop.xlane.xlu0 %2201
    %2203 = vadd.xlane.f32.xlu0 %v2172
    %v2204 = vpop.xlane.xlu0 %2203
    %v2205 = vrcp.pop %v2174
    %v2206 = vrcp.pop %v2176
    %v2207 = vrcp.pop %v2178
    %v2208 = vrcp.pop %v2180
    %v2209 = vrcp.pop %v2182
    %v2210 = vrcp.pop %v2184
    %v2211 = vrcp.pop %v2186
    %v2212 = vrcp.pop %v2188
    %v2213 = vrcp.pop %v2190
    %v2214 = vrcp.pop %v2192
    %v2215 = vrcp.pop %v2194
    %v2216 = vrcp.pop %v2196
    %v2217 = vrcp.pop %v2198
    %v2218 = vrcp.pop %v2200
    %v2219 = vrcp.pop %v2202
    %v2220 = vrcp.pop %v2204
    %v2221 = vmul.f32 %v2142, %v2205
    %v2222 = vmul.f32 %v2144, %v2206
    %v2223 = vmul.f32 %v2146, %v2207
    %v2224 = vmul.f32 %v2148, %v2208
    %v2225 = vmul.f32 %v2150, %v2209
    %v2226 = vmul.f32 %v2152, %v2210
    %v2227 = vmul.f32 %v2154, %v2211
    %v2228 = vmul.f32 %v2156, %v2212
    %v2229 = vmul.f32 %v2158, %v2213
    %v2230 = vmul.f32 %v2160, %v2214
    %v2231 = vmul.f32 %v2162, %v2215
    %v2232 = vmul.f32 %v2164, %v2216
    %v2233 = vmul.f32 %v2166, %v2217
    %v2234 = vmul.f32 %v2168, %v2218
    %v2235 = vmul.f32 %v2170, %v2219
    %v2236 = vmul.f32 %v2172, %v2220
    %v2237 = vpack.c.bf16 %v2222, %v2221
    %v2238 = vpack.c.bf16 %v2224, %v2223
    %v2239 = vpack.c.bf16 %v2226, %v2225
    %v2240 = vpack.c.bf16 %v2228, %v2227
    %v2241 = vpack.c.bf16 %v2230, %v2229
    %v2242 = vpack.c.bf16 %v2232, %v2231
    %v2243 = vpack.c.bf16 %v2234, %v2233
    %v2244 = vpack.c.bf16 %v2236, %v2235
    %2253 = vrot.lane.b32.xlu0 %v1876, 112
    %v2254 = vpop.permute.xlu0 %2253
    %2255 = vrot.lane.b32.xlu0 %v1877, 112
    %v2256 = vpop.permute.xlu0 %2255
    %2257 = vrot.lane.b32.xlu0 %v1878, 112
    %v2258 = vpop.permute.xlu0 %2257
    %2259 = vrot.lane.b32.xlu0 %v1879, 112
    %v2260 = vpop.permute.xlu0 %2259
    %2261 = vrot.lane.b32.xlu0 %v1880, 112
    %v2262 = vpop.permute.xlu0 %2261
    %2263 = vrot.lane.b32.xlu0 %v1881, 112
    %v2264 = vpop.permute.xlu0 %2263
    %2265 = vrot.lane.b32.xlu0 %v1882, 112
    %v2266 = vpop.permute.xlu0 %2265
    %2267 = vrot.lane.b32.xlu0 %v1883, 112
    %v2268 = vpop.permute.xlu0 %2267
    %2277 = vmatprep.subr.bf16.mxu0 0
    %2278 = vmatpush1.bf16.msra.mxu0 %v2268
    %2279 = vmatprep.subr.bf16.mxu0 0
    %2280 = vmatpush1.bf16.msra.mxu0 %v2266
    %2281 = vmatprep.subr.bf16.mxu0 0
    %2282 = vmatpush1.bf16.msra.mxu0 %v2264
    %2283 = vmatprep.subr.bf16.mxu0 0
    %2284 = vmatpush1.bf16.msra.mxu0 %v2262
    %2285 = vmatprep.subr.bf16.mxu0 0
    %2286 = vmatpush1.bf16.msra.mxu0 %v2260
    %2287 = vmatprep.subr.bf16.mxu0 0
    %2288 = vmatpush1.bf16.msra.mxu0 %v2258
    %2289 = vmatprep.subr.bf16.mxu0 0
    %2290 = vmatpush1.bf16.msra.mxu0 %v2256
    %2291 = vmatprep.subr.bf16.mxu0 0
    %2292 = vmatpush1.bf16.msra.mxu0 %v2254
    %2293 = vmatprep.subr.bf16.mxu0 0
    %2294 = vmatpush2.bf16.msra.mxu0 0
    %2295 = vmatprep.subr.bf16.mxu0 0
    %2296 = vmatpush2.bf16.msra.mxu0 0
    %2297 = vmatprep.subr.bf16.mxu0 0
    %2298 = vmatpush2.bf16.msra.mxu0 0
    %2299 = vmatprep.subr.bf16.mxu0 0
    %2300 = vmatpush2.bf16.msra.mxu0 0
    %2301 = vmatprep.subr.bf16.mxu0 0
    %2302 = vmatpush2.bf16.msra.mxu0 0
    %2303 = vmatprep.subr.bf16.mxu0 0
    %2304 = vmatpush2.bf16.msra.mxu0 0
    %2305 = vmatprep.subr.bf16.mxu0 0
    %2306 = vmatpush2.bf16.msra.mxu0 0
    %2307 = vmatprep.subr.bf16.mxu0 0
    %2308 = vmatpush2.bf16.msra.mxu0 0
    %2309 = vmatprep.mubr.bf16.mxu0 0
    %2310 = vmatmul.mubr.bf16.gmra.mxu0 %v2237
    %v2311 = vpop.f32.mrf.mxu0
    %v2312 = vadd.f32 0.0, %v2311
    %v2313 = vpop.f32.mrf.mxu0
    %v2314 = vpop.f32.mrf.mxu0
    %v2315 = vadd.f32 0.0, %v2314
    %v2316 = vpop.f32.mrf.mxu0
    %2317 = vmatprep.mubr.bf16.mxu0 0
    %2318 = vmatmul.mubr.bf16.gmra.mxu0 %v2238
    %v2319 = vpop.f32.mrf.mxu0
    %v2320 = vadd.f32 0.0, %v2319
    %v2321 = vpop.f32.mrf.mxu0
    %v2322 = vpop.f32.mrf.mxu0
    %v2323 = vadd.f32 0.0, %v2322
    %v2324 = vpop.f32.mrf.mxu0
    %2325 = vmatprep.mubr.bf16.mxu0 0
    %2326 = vmatmul.mubr.bf16.gmra.mxu0 %v2239
    %v2327 = vpop.f32.mrf.mxu0
    %v2328 = vadd.f32 0.0, %v2327
    %v2329 = vpop.f32.mrf.mxu0
    %v2330 = vpop.f32.mrf.mxu0
    %v2331 = vadd.f32 0.0, %v2330
    %v2332 = vpop.f32.mrf.mxu0
    %2333 = vmatprep.mubr.bf16.mxu0 0
    %2334 = vmatmul.mubr.bf16.gmra.mxu0 %v2240
    %v2335 = vpop.f32.mrf.mxu0
    %v2336 = vadd.f32 0.0, %v2335
    %v2337 = vpop.f32.mrf.mxu0
    %v2338 = vpop.f32.mrf.mxu0
    %v2339 = vadd.f32 0.0, %v2338
    %v2340 = vpop.f32.mrf.mxu0
    %2341 = vmatprep.mubr.bf16.mxu0 0
    %2342 = vmatmul.mubr.bf16.gmra.mxu0 %v2241
    %v2343 = vpop.f32.mrf.mxu0
    %v2344 = vadd.f32 0.0, %v2343
    %v2345 = vpop.f32.mrf.mxu0
    %v2346 = vpop.f32.mrf.mxu0
    %v2347 = vadd.f32 0.0, %v2346
    %v2348 = vpop.f32.mrf.mxu0
    %2349 = vmatprep.mubr.bf16.mxu0 0
    %2350 = vmatmul.mubr.bf16.gmra.mxu0 %v2242
    %v2351 = vpop.f32.mrf.mxu0
    %v2352 = vadd.f32 0.0, %v2351
    %v2353 = vpop.f32.mrf.mxu0
    %v2354 = vpop.f32.mrf.mxu0
    %v2355 = vadd.f32 0.0, %v2354
    %v2356 = vpop.f32.mrf.mxu0
    %2357 = vmatprep.mubr.bf16.mxu0 0
    %2358 = vmatmul.mubr.bf16.gmra.mxu0 %v2243
    %v2359 = vpop.f32.mrf.mxu0
    %v2360 = vadd.f32 0.0, %v2359
    %v2361 = vpop.f32.mrf.mxu0
    %v2362 = vpop.f32.mrf.mxu0
    %v2363 = vadd.f32 0.0, %v2362
    %v2364 = vpop.f32.mrf.mxu0
    %2365 = vmatprep.mubr.bf16.mxu0 0
    %2366 = vmatmul.mubr.bf16.gmra.mxu0 %v2244
    %v2367 = vpop.f32.mrf.mxu0
    %v2368 = vadd.f32 0.0, %v2367
    %v2369 = vpop.f32.mrf.mxu0
    %v2370 = vpop.f32.mrf.mxu0
    %v2371 = vadd.f32 0.0, %v2370
    %v2372 = vpop.f32.mrf.mxu0
    %2373 = vdwg.mxu0
    %2390 = vrot.lane.b32.xlu0 %v2312, 16
    %v2391 = vpop.permute.xlu0 %2390
    %2392 = vrot.lane.b32.xlu0 %v2315, 16
    %v2393 = vpop.permute.xlu0 %2392
    %2394 = vrot.lane.b32.xlu0 %v2320, 16
    %v2395 = vpop.permute.xlu0 %2394
    %2396 = vrot.lane.b32.xlu0 %v2323, 16
    %v2397 = vpop.permute.xlu0 %2396
    %2398 = vrot.lane.b32.xlu0 %v2328, 16
    %v2399 = vpop.permute.xlu0 %2398
    %2400 = vrot.lane.b32.xlu0 %v2331, 16
    %v2401 = vpop.permute.xlu0 %2400
    %2402 = vrot.lane.b32.xlu0 %v2336, 16
    %v2403 = vpop.permute.xlu0 %2402
    %2404 = vrot.lane.b32.xlu0 %v2339, 16
    %v2405 = vpop.permute.xlu0 %2404
    %2406 = vrot.lane.b32.xlu0 %v2344, 16
    %v2407 = vpop.permute.xlu0 %2406
    %2408 = vrot.lane.b32.xlu0 %v2347, 16
    %v2409 = vpop.permute.xlu0 %2408
    %2410 = vrot.lane.b32.xlu0 %v2352, 16
    %v2411 = vpop.permute.xlu0 %2410
    %2412 = vrot.lane.b32.xlu0 %v2355, 16
    %v2413 = vpop.permute.xlu0 %2412
    %2414 = vrot.lane.b32.xlu0 %v2360, 16
    %v2415 = vpop.permute.xlu0 %2414
    %2416 = vrot.lane.b32.xlu0 %v2363, 16
    %v2417 = vpop.permute.xlu0 %2416
    %2418 = vrot.lane.b32.xlu0 %v2368, 16
    %v2419 = vpop.permute.xlu0 %2418
    %2420 = vrot.lane.b32.xlu0 %v2371, 16
    %v2421 = vpop.permute.xlu0 %2420
    %vm2438 = vcmask 261248
    %2439 = vst.msk [vmem:[#allocation3] sm:$0xff] %vm2438, %v2391
    %2440 = vst.msk [vmem:[#allocation3 + $0x8] sm:$0xff] %vm2438, %v2393
    %2441 = vst.msk [vmem:[#allocation3 + $0x10] sm:$0xff] %vm2438, %v2395
    %2442 = vst.msk [vmem:[#allocation3 + $0x18] sm:$0xff] %vm2438, %v2397
    %2443 = vst.msk [vmem:[#allocation3 + $0x20] sm:$0xff] %vm2438, %v2399
    %2444 = vst.msk [vmem:[#allocation3 + $0x28] sm:$0xff] %vm2438, %v2401
    %2445 = vst.msk [vmem:[#allocation3 + $0x30] sm:$0xff] %vm2438, %v2403
    %2446 = vst.msk [vmem:[#allocation3 + $0x38] sm:$0xff] %vm2438, %v2405
    %2447 = vst.msk [vmem:[#allocation3 + $0x40] sm:$0xff] %vm2438, %v2407
    %2448 = vst.msk [vmem:[#allocation3 + $0x48] sm:$0xff] %vm2438, %v2409
    %2449 = vst.msk [vmem:[#allocation3 + $0x50] sm:$0xff] %vm2438, %v2411
    %2450 = vst.msk [vmem:[#allocation3 + $0x58] sm:$0xff] %vm2438, %v2413
    %2451 = vst.msk [vmem:[#allocation3 + $0x60] sm:$0xff] %vm2438, %v2415
    %2452 = vst.msk [vmem:[#allocation3 + $0x68] sm:$0xff] %vm2438, %v2417
    %2453 = vst.msk [vmem:[#allocation3 + $0x70] sm:$0xff] %vm2438, %v2419
    %2454 = vst.msk [vmem:[#allocation3 + $0x78] sm:$0xff] %vm2438, %v2421
    %v2455 = vld [vmem:[#allocation2] sm:$0xff]
    %v2456 = vld [vmem:[#allocation2 + $0x18] sm:$0xff]
    %v2457 = vld [vmem:[#allocation2 + $0x30] sm:$0xff]
    %v2458 = vld [vmem:[#allocation2 + $0x48] sm:$0xff]
    %v2459 = vld [vmem:[#allocation2 + $0x60] sm:$0xff]
    %v2460 = vld [vmem:[#allocation2 + $0x78] sm:$0xff]
    %v2461 = vld [vmem:[#allocation2 + $0x90] sm:$0xff]
    %v2462 = vld [vmem:[#allocation2 + $0xa8] sm:$0xff]
    %v2463 = vld [vmem:[#allocation2 + $0xc0] sm:$0xff]
    %v2464 = vld [vmem:[#allocation2 + $0xd8] sm:$0xff]
    %v2465 = vld [vmem:[#allocation2 + $0xf0] sm:$0xff]
    %v2466 = vld [vmem:[#allocation2 + $0x108] sm:$0xff]
    %v2467 = vld [vmem:[#allocation2 + $0x120] sm:$0xff]
    %v2468 = vld [vmem:[#allocation2 + $0x138] sm:$0xff]
    %v2469 = vld [vmem:[#allocation2 + $0x150] sm:$0xff]
    %v2470 = vld [vmem:[#allocation2 + $0x168] sm:$0xff]
    %v2471 = vpack.c.bf16 %v2456, %v2455
    %v2472 = vpack.c.bf16 %v2458, %v2457
    %v2473 = vpack.c.bf16 %v2460, %v2459
    %v2474 = vpack.c.bf16 %v2462, %v2461
    %v2475 = vpack.c.bf16 %v2464, %v2463
    %v2476 = vpack.c.bf16 %v2466, %v2465
    %v2477 = vpack.c.bf16 %v2468, %v2467
    %v2478 = vpack.c.bf16 %v2470, %v2469
    %v2479 = vld [vmem:[#allocation2 + $0x8] sm:$0xff]
    %v2480 = vld [vmem:[#allocation2 + $0x20] sm:$0xff]
    %v2481 = vld [vmem:[#allocation2 + $0x38] sm:$0xff]
    %v2482 = vld [vmem:[#allocation2 + $0x50] sm:$0xff]
    %v2483 = vld [vmem:[#allocation2 + $0x68] sm:$0xff]
    %v2484 = vld [vmem:[#allocation2 + $0x80] sm:$0xff]
    %v2485 = vld [vmem:[#allocation2 + $0x98] sm:$0xff]
    %v2486 = vld [vmem:[#allocation2 + $0xb0] sm:$0xff]
    %v2487 = vld [vmem:[#allocation2 + $0xc8] sm:$0xff]
    %v2488 = vld [vmem:[#allocation2 + $0xe0] sm:$0xff]
    %v2489 = vld [vmem:[#allocation2 + $0xf8] sm:$0xff]
    %v2490 = vld [vmem:[#allocation2 + $0x110] sm:$0xff]
    %v2491 = vld [vmem:[#allocation2 + $0x128] sm:$0xff]
    %v2492 = vld [vmem:[#allocation2 + $0x140] sm:$0xff]
    %v2493 = vld [vmem:[#allocation2 + $0x158] sm:$0xff]
    %v2494 = vld [vmem:[#allocation2 + $0x170] sm:$0xff]
    %v2495 = vpack.c.bf16 %v2480, %v2479
    %v2496 = vpack.c.bf16 %v2482, %v2481
    %v2497 = vpack.c.bf16 %v2484, %v2483
    %v2498 = vpack.c.bf16 %v2486, %v2485
    %v2499 = vpack.c.bf16 %v2488, %v2487
    %v2500 = vpack.c.bf16 %v2490, %v2489
    %v2501 = vpack.c.bf16 %v2492, %v2491
    %v2502 = vpack.c.bf16 %v2494, %v2493
    %v2503 = vld [vmem:[#allocation2 + $0x10] sm:$0xff]
    %v2504 = vld [vmem:[#allocation2 + $0x28] sm:$0xff]
    %v2505 = vld [vmem:[#allocation2 + $0x40] sm:$0xff]
    %v2506 = vld [vmem:[#allocation2 + $0x58] sm:$0xff]
    %v2507 = vld [vmem:[#allocation2 + $0x70] sm:$0xff]
    %v2508 = vld [vmem:[#allocation2 + $0x88] sm:$0xff]
    %v2509 = vld [vmem:[#allocation2 + $0xa0] sm:$0xff]
    %v2510 = vld [vmem:[#allocation2 + $0xb8] sm:$0xff]
    %v2511 = vld [vmem:[#allocation2 + $0xd0] sm:$0xff]
    %v2512 = vld [vmem:[#allocation2 + $0xe8] sm:$0xff]
    %v2513 = vld [vmem:[#allocation2 + $0x100] sm:$0xff]
    %v2514 = vld [vmem:[#allocation2 + $0x118] sm:$0xff]
    %v2515 = vld [vmem:[#allocation2 + $0x130] sm:$0xff]
    %v2516 = vld [vmem:[#allocation2 + $0x148] sm:$0xff]
    %v2517 = vld [vmem:[#allocation2 + $0x160] sm:$0xff]
    %v2518 = vld [vmem:[#allocation2 + $0x178] sm:$0xff]
    %v2519 = vpack.c.bf16 %v2504, %v2503
    %v2520 = vpack.c.bf16 %v2506, %v2505
    %v2521 = vpack.c.bf16 %v2508, %v2507
    %v2522 = vpack.c.bf16 %v2510, %v2509
    %v2523 = vpack.c.bf16 %v2512, %v2511
    %v2524 = vpack.c.bf16 %v2514, %v2513
    %v2525 = vpack.c.bf16 %v2516, %v2515
    %v2526 = vpack.c.bf16 %v2518, %v2517
    %v2527 = vld [vmem:[%s7] sm:$0xff]
    %v2528 = vld [vmem:[%s7 + $0x8] sm:$0xff]
    %v2529 = vld [vmem:[%s7 + $0x10] sm:$0xff]
    %v2530 = vld [vmem:[%s7 + $0x18] sm:$0xff]
    %v2531 = vld [vmem:[%s7 + $0x20] sm:$0xff]
    %v2532 = vld [vmem:[%s7 + $0x28] sm:$0xff]
    %v2533 = vld [vmem:[%s7 + $0x30] sm:$0xff]
    %v2534 = vld [vmem:[%s7 + $0x38] sm:$0xff]
    %v2535 = vld [vmem:[%s7 + $0x40] sm:$0xff]
    %v2536 = vld [vmem:[%s7 + $0x48] sm:$0xff]
    %v2537 = vld [vmem:[%s7 + $0x50] sm:$0xff]
    %v2538 = vld [vmem:[%s7 + $0x58] sm:$0xff]
    %v2539 = vld [vmem:[%s7 + $0x60] sm:$0xff]
    %v2540 = vld [vmem:[%s7 + $0x68] sm:$0xff]
    %v2541 = vld [vmem:[%s7 + $0x70] sm:$0xff]
    %v2542 = vld [vmem:[%s7 + $0x78] sm:$0xff]
    %2551 = vrot.lane.b32.xlu0 %v2471, 96
    %v2552 = vpop.permute.xlu0 %2551
    %2553 = vrot.lane.b32.xlu0 %v2472, 96
    %v2554 = vpop.permute.xlu0 %2553
    %2555 = vrot.lane.b32.xlu0 %v2473, 96
    %v2556 = vpop.permute.xlu0 %2555
    %2557 = vrot.lane.b32.xlu0 %v2474, 96
    %v2558 = vpop.permute.xlu0 %2557
    %2559 = vrot.lane.b32.xlu0 %v2475, 96
    %v2560 = vpop.permute.xlu0 %2559
    %2561 = vrot.lane.b32.xlu0 %v2476, 96
    %v2562 = vpop.permute.xlu0 %2561
    %2563 = vrot.lane.b32.xlu0 %v2477, 96
    %v2564 = vpop.permute.xlu0 %2563
    %2565 = vrot.lane.b32.xlu0 %v2478, 96
    %v2566 = vpop.permute.xlu0 %2565
    %2575 = vrot.lane.b32.xlu0 %v2495, 96
    %v2576 = vpop.permute.xlu0 %2575
    %2577 = vrot.lane.b32.xlu0 %v2496, 96
    %v2578 = vpop.permute.xlu0 %2577
    %2579 = vrot.lane.b32.xlu0 %v2497, 96
    %v2580 = vpop.permute.xlu0 %2579
    %2581 = vrot.lane.b32.xlu0 %v2498, 96
    %v2582 = vpop.permute.xlu0 %2581
    %2583 = vrot.lane.b32.xlu0 %v2499, 96
    %v2584 = vpop.permute.xlu0 %2583
    %2585 = vrot.lane.b32.xlu0 %v2500, 96
    %v2586 = vpop.permute.xlu0 %2585
    %2587 = vrot.lane.b32.xlu0 %v2501, 96
    %v2588 = vpop.permute.xlu0 %2587
    %2589 = vrot.lane.b32.xlu0 %v2502, 96
    %v2590 = vpop.permute.xlu0 %2589
    %v2592 = vsel %vm129, %v2552, 0
    %v2595 = vsel %vm129, %v2554, 0
    %v2598 = vsel %vm129, %v2556, 0
    %v2601 = vsel %vm129, %v2558, 0
    %v2604 = vsel %vm129, %v2560, 0
    %v2607 = vsel %vm129, %v2562, 0
    %v2610 = vsel %vm129, %v2564, 0
    %v2613 = vsel %vm129, %v2566, 0
    %v2616 = vsel %vm129, %v2576, 0
    %v2619 = vsel %vm129, %v2578, 0
    %v2622 = vsel %vm129, %v2580, 0
    %v2625 = vsel %vm129, %v2582, 0
    %v2628 = vsel %vm129, %v2584, 0
    %v2631 = vsel %vm129, %v2586, 0
    %v2634 = vsel %vm129, %v2588, 0
    %v2637 = vsel %vm129, %v2590, 0
    %2639 = vmatprep.subr.bf16.mxu0 0
    %2640 = vmatpush1.bf16.xpose.msra.mxu0 %v2637
    %2641 = vmatprep.subr.bf16.mxu0 0
    %2642 = vmatpush1.bf16.xpose.msra.mxu0 %v2634
    %2643 = vmatprep.subr.bf16.mxu0 0
    %2644 = vmatpush1.bf16.xpose.msra.mxu0 %v2631
    %2645 = vmatprep.subr.bf16.mxu0 0
    %2646 = vmatpush1.bf16.xpose.msra.mxu0 %v2628
    %2647 = vmatprep.subr.bf16.mxu0 0
    %2648 = vmatpush1.bf16.xpose.msra.mxu0 %v2625
    %2649 = vmatprep.subr.bf16.mxu0 0
    %2650 = vmatpush1.bf16.xpose.msra.mxu0 %v2622
    %2651 = vmatprep.subr.bf16.mxu0 0
    %2652 = vmatpush1.bf16.xpose.msra.mxu0 %v2619
    %2653 = vmatprep.subr.bf16.mxu0 0
    %2654 = vmatpush1.bf16.xpose.msra.mxu0 %v2616
    %2655 = vmatprep.subr.bf16.mxu0 0
    %2656 = vmatpush2.bf16.xpose.msra.mxu0 0
    %2657 = vmatprep.subr.bf16.mxu0 0
    %2658 = vmatpush2.bf16.xpose.msra.mxu0 0
    %2659 = vmatprep.subr.bf16.mxu0 0
    %2660 = vmatpush2.bf16.xpose.msra.mxu0 0
    %2661 = vmatprep.subr.bf16.mxu0 0
    %2662 = vmatpush2.bf16.xpose.msra.mxu0 0
    %2663 = vmatprep.subr.bf16.mxu0 0
    %2664 = vmatpush2.bf16.xpose.msra.mxu0 0
    %2665 = vmatprep.subr.bf16.mxu0 0
    %2666 = vmatpush2.bf16.xpose.msra.mxu0 0
    %2667 = vmatprep.subr.bf16.mxu0 0
    %2668 = vmatpush2.bf16.xpose.msra.mxu0 0
    %2669 = vmatprep.subr.bf16.mxu0 0
    %2670 = vmatpush2.bf16.xpose.msra.mxu0 0
    %2671 = vmatprep.mubr.bf16.mxu0 0
    %2672 = vmatmul.mubr.bf16.gmra.mxu0 %v2592
    %v2673 = vpop.f32.mrf.mxu0
    %v2674 = vadd.f32 %v2527, %v2673
    %v2675 = vpop.f32.mrf.mxu0
    %v2676 = vpop.f32.mrf.mxu0
    %v2677 = vadd.f32 %v2528, %v2676
    %v2678 = vpop.f32.mrf.mxu0
    %2679 = vmatprep.mubr.bf16.mxu0 0
    %2680 = vmatmul.mubr.bf16.gmra.mxu0 %v2595
    %v2681 = vpop.f32.mrf.mxu0
    %v2682 = vadd.f32 %v2529, %v2681
    %v2683 = vpop.f32.mrf.mxu0
    %v2684 = vpop.f32.mrf.mxu0
    %v2685 = vadd.f32 %v2530, %v2684
    %v2686 = vpop.f32.mrf.mxu0
    %2687 = vmatprep.mubr.bf16.mxu0 0
    %2688 = vmatmul.mubr.bf16.gmra.mxu0 %v2598
    %v2689 = vpop.f32.mrf.mxu0
    %v2690 = vadd.f32 %v2531, %v2689
    %v2691 = vpop.f32.mrf.mxu0
    %v2692 = vpop.f32.mrf.mxu0
    %v2693 = vadd.f32 %v2532, %v2692
    %v2694 = vpop.f32.mrf.mxu0
    %2695 = vmatprep.mubr.bf16.mxu0 0
    %2696 = vmatmul.mubr.bf16.gmra.mxu0 %v2601
    %v2697 = vpop.f32.mrf.mxu0
    %v2698 = vadd.f32 %v2533, %v2697
    %v2699 = vpop.f32.mrf.mxu0
    %v2700 = vpop.f32.mrf.mxu0
    %v2701 = vadd.f32 %v2534, %v2700
    %v2702 = vpop.f32.mrf.mxu0
    %2703 = vmatprep.mubr.bf16.mxu0 0
    %2704 = vmatmul.mubr.bf16.gmra.mxu0 %v2604
    %v2705 = vpop.f32.mrf.mxu0
    %v2706 = vadd.f32 %v2535, %v2705
    %v2707 = vpop.f32.mrf.mxu0
    %v2708 = vpop.f32.mrf.mxu0
    %v2709 = vadd.f32 %v2536, %v2708
    %v2710 = vpop.f32.mrf.mxu0
    %2711 = vmatprep.mubr.bf16.mxu0 0
    %2712 = vmatmul.mubr.bf16.gmra.mxu0 %v2607
    %v2713 = vpop.f32.mrf.mxu0
    %v2714 = vadd.f32 %v2537, %v2713
    %v2715 = vpop.f32.mrf.mxu0
    %v2716 = vpop.f32.mrf.mxu0
    %v2717 = vadd.f32 %v2538, %v2716
    %v2718 = vpop.f32.mrf.mxu0
    %2719 = vmatprep.mubr.bf16.mxu0 0
    %2720 = vmatmul.mubr.bf16.gmra.mxu0 %v2610
    %v2721 = vpop.f32.mrf.mxu0
    %v2722 = vadd.f32 %v2539, %v2721
    %v2723 = vpop.f32.mrf.mxu0
    %v2724 = vpop.f32.mrf.mxu0
    %v2725 = vadd.f32 %v2540, %v2724
    %v2726 = vpop.f32.mrf.mxu0
    %2727 = vmatprep.mubr.bf16.mxu0 0
    %2728 = vmatmul.mubr.bf16.gmra.mxu0 %v2613
    %v2729 = vpop.f32.mrf.mxu0
    %v2730 = vadd.f32 %v2541, %v2729
    %v2731 = vpop.f32.mrf.mxu0
    %v2732 = vpop.f32.mrf.mxu0
    %v2733 = vadd.f32 %v2542, %v2732
    %v2734 = vpop.f32.mrf.mxu0
    %2735 = vdwg.mxu0
    %2736 = vmax.xlane.f32.xlu0 %v2674
    %v2737 = vpop.xlane.xlu0 %2736
    %2738 = vmax.xlane.f32.xlu0 %v2677
    %v2739 = vpop.xlane.xlu0 %2738
    %2740 = vmax.xlane.f32.xlu0 %v2682
    %v2741 = vpop.xlane.xlu0 %2740
    %2742 = vmax.xlane.f32.xlu0 %v2685
    %v2743 = vpop.xlane.xlu0 %2742
    %2744 = vmax.xlane.f32.xlu0 %v2690
    %v2745 = vpop.xlane.xlu0 %2744
    %2746 = vmax.xlane.f32.xlu0 %v2693
    %v2747 = vpop.xlane.xlu0 %2746
    %2748 = vmax.xlane.f32.xlu0 %v2698
    %v2749 = vpop.xlane.xlu0 %2748
    %2750 = vmax.xlane.f32.xlu0 %v2701
    %v2751 = vpop.xlane.xlu0 %2750
    %2752 = vmax.xlane.f32.xlu0 %v2706
    %v2753 = vpop.xlane.xlu0 %2752
    %2754 = vmax.xlane.f32.xlu0 %v2709
    %v2755 = vpop.xlane.xlu0 %2754
    %2756 = vmax.xlane.f32.xlu0 %v2714
    %v2757 = vpop.xlane.xlu0 %2756
    %2758 = vmax.xlane.f32.xlu0 %v2717
    %v2759 = vpop.xlane.xlu0 %2758
    %2760 = vmax.xlane.f32.xlu0 %v2722
    %v2761 = vpop.xlane.xlu0 %2760
    %2762 = vmax.xlane.f32.xlu0 %v2725
    %v2763 = vpop.xlane.xlu0 %2762
    %2764 = vmax.xlane.f32.xlu0 %v2730
    %v2765 = vpop.xlane.xlu0 %2764
    %2766 = vmax.xlane.f32.xlu0 %v2733
    %v2767 = vpop.xlane.xlu0 %2766
    %v2768 = vsub.f32 %v2674, %v2737
    %v2769 = vsub.f32 %v2677, %v2739
    %v2770 = vsub.f32 %v2682, %v2741
    %v2771 = vsub.f32 %v2685, %v2743
    %v2772 = vsub.f32 %v2690, %v2745
    %v2773 = vsub.f32 %v2693, %v2747
    %v2774 = vsub.f32 %v2698, %v2749
    %v2775 = vsub.f32 %v2701, %v2751
    %v2776 = vsub.f32 %v2706, %v2753
    %v2777 = vsub.f32 %v2709, %v2755
    %v2778 = vsub.f32 %v2714, %v2757
    %v2779 = vsub.f32 %v2717, %v2759
    %v2780 = vsub.f32 %v2722, %v2761
    %v2781 = vsub.f32 %v2725, %v2763
    %v2782 = vsub.f32 %v2730, %v2765
    %v2783 = vsub.f32 %v2733, %v2767
    %v2784 = vmul.f32 %v2768, 1.442695
    %v2785 = vpow.pop %v2784
    %v2786 = vmul.f32 %v2769, 1.442695
    %v2787 = vpow.pop %v2786
    %v2788 = vmul.f32 %v2770, 1.442695
    %v2789 = vpow.pop %v2788
    %v2790 = vmul.f32 %v2771, 1.442695
    %v2791 = vpow.pop %v2790
    %v2792 = vmul.f32 %v2772, 1.442695
    %v2793 = vpow.pop %v2792
    %v2794 = vmul.f32 %v2773, 1.442695
    %v2795 = vpow.pop %v2794
    %v2796 = vmul.f32 %v2774, 1.442695
    %v2797 = vpow.pop %v2796
    %v2798 = vmul.f32 %v2775, 1.442695
    %v2799 = vpow.pop %v2798
    %v2800 = vmul.f32 %v2776, 1.442695
    %v2801 = vpow.pop %v2800
    %v2802 = vmul.f32 %v2777, 1.442695
    %v2803 = vpow.pop %v2802
    %v2804 = vmul.f32 %v2778, 1.442695
    %v2805 = vpow.pop %v2804
    %v2806 = vmul.f32 %v2779, 1.442695
    %v2807 = vpow.pop %v2806
    %v2808 = vmul.f32 %v2780, 1.442695
    %v2809 = vpow.pop %v2808
    %v2810 = vmul.f32 %v2781, 1.442695
    %v2811 = vpow.pop %v2810
    %v2812 = vmul.f32 %v2782, 1.442695
    %v2813 = vpow.pop %v2812
    %v2814 = vmul.f32 %v2783, 1.442695
    %v2815 = vpow.pop %v2814
    %2816 = vadd.xlane.f32.xlu0 %v2785
    %v2817 = vpop.xlane.xlu0 %2816
    %2818 = vadd.xlane.f32.xlu0 %v2787
    %v2819 = vpop.xlane.xlu0 %2818
    %2820 = vadd.xlane.f32.xlu0 %v2789
    %v2821 = vpop.xlane.xlu0 %2820
    %2822 = vadd.xlane.f32.xlu0 %v2791
    %v2823 = vpop.xlane.xlu0 %2822
    %2824 = vadd.xlane.f32.xlu0 %v2793
    %v2825 = vpop.xlane.xlu0 %2824
    %2826 = vadd.xlane.f32.xlu0 %v2795
    %v2827 = vpop.xlane.xlu0 %2826
    %2828 = vadd.xlane.f32.xlu0 %v2797
    %v2829 = vpop.xlane.xlu0 %2828
    %2830 = vadd.xlane.f32.xlu0 %v2799
    %v2831 = vpop.xlane.xlu0 %2830
    %2832 = vadd.xlane.f32.xlu0 %v2801
    %v2833 = vpop.xlane.xlu0 %2832
    %2834 = vadd.xlane.f32.xlu0 %v2803
    %v2835 = vpop.xlane.xlu0 %2834
    %2836 = vadd.xlane.f32.xlu0 %v2805
    %v2837 = vpop.xlane.xlu0 %2836
    %2838 = vadd.xlane.f32.xlu0 %v2807
    %v2839 = vpop.xlane.xlu0 %2838
    %2840 = vadd.xlane.f32.xlu0 %v2809
    %v2841 = vpop.xlane.xlu0 %2840
    %2842 = vadd.xlane.f32.xlu0 %v2811
    %v2843 = vpop.xlane.xlu0 %2842
    %2844 = vadd.xlane.f32.xlu0 %v2813
    %v2845 = vpop.xlane.xlu0 %2844
    %2846 = vadd.xlane.f32.xlu0 %v2815
    %v2847 = vpop.xlane.xlu0 %2846
    %v2848 = vrcp.pop %v2817
    %v2849 = vrcp.pop %v2819
    %v2850 = vrcp.pop %v2821
    %v2851 = vrcp.pop %v2823
    %v2852 = vrcp.pop %v2825
    %v2853 = vrcp.pop %v2827
    %v2854 = vrcp.pop %v2829
    %v2855 = vrcp.pop %v2831
    %v2856 = vrcp.pop %v2833
    %v2857 = vrcp.pop %v2835
    %v2858 = vrcp.pop %v2837
    %v2859 = vrcp.pop %v2839
    %v2860 = vrcp.pop %v2841
    %v2861 = vrcp.pop %v2843
    %v2862 = vrcp.pop %v2845
    %v2863 = vrcp.pop %v2847
    %v2864 = vmul.f32 %v2785, %v2848
    %v2865 = vmul.f32 %v2787, %v2849
    %v2866 = vmul.f32 %v2789, %v2850
    %v2867 = vmul.f32 %v2791, %v2851
    %v2868 = vmul.f32 %v2793, %v2852
    %v2869 = vmul.f32 %v2795, %v2853
    %v2870 = vmul.f32 %v2797, %v2854
    %v2871 = vmul.f32 %v2799, %v2855
    %v2872 = vmul.f32 %v2801, %v2856
    %v2873 = vmul.f32 %v2803, %v2857
    %v2874 = vmul.f32 %v2805, %v2858
    %v2875 = vmul.f32 %v2807, %v2859
    %v2876 = vmul.f32 %v2809, %v2860
    %v2877 = vmul.f32 %v2811, %v2861
    %v2878 = vmul.f32 %v2813, %v2862
    %v2879 = vmul.f32 %v2815, %v2863
    %v2880 = vpack.c.bf16 %v2865, %v2864
    %v2881 = vpack.c.bf16 %v2867, %v2866
    %v2882 = vpack.c.bf16 %v2869, %v2868
    %v2883 = vpack.c.bf16 %v2871, %v2870
    %v2884 = vpack.c.bf16 %v2873, %v2872
    %v2885 = vpack.c.bf16 %v2875, %v2874
    %v2886 = vpack.c.bf16 %v2877, %v2876
    %v2887 = vpack.c.bf16 %v2879, %v2878
    %2896 = vrot.lane.b32.xlu0 %v2519, 96
    %v2897 = vpop.permute.xlu0 %2896
    %2898 = vrot.lane.b32.xlu0 %v2520, 96
    %v2899 = vpop.permute.xlu0 %2898
    %2900 = vrot.lane.b32.xlu0 %v2521, 96
    %v2901 = vpop.permute.xlu0 %2900
    %2902 = vrot.lane.b32.xlu0 %v2522, 96
    %v2903 = vpop.permute.xlu0 %2902
    %2904 = vrot.lane.b32.xlu0 %v2523, 96
    %v2905 = vpop.permute.xlu0 %2904
    %2906 = vrot.lane.b32.xlu0 %v2524, 96
    %v2907 = vpop.permute.xlu0 %2906
    %2908 = vrot.lane.b32.xlu0 %v2525, 96
    %v2909 = vpop.permute.xlu0 %2908
    %2910 = vrot.lane.b32.xlu0 %v2526, 96
    %v2911 = vpop.permute.xlu0 %2910
    %2920 = vmatprep.subr.bf16.mxu0 0
    %2921 = vmatpush1.bf16.msra.mxu0 %v2911
    %2922 = vmatprep.subr.bf16.mxu0 0
    %2923 = vmatpush1.bf16.msra.mxu0 %v2909
    %2924 = vmatprep.subr.bf16.mxu0 0
    %2925 = vmatpush1.bf16.msra.mxu0 %v2907
    %2926 = vmatprep.subr.bf16.mxu0 0
    %2927 = vmatpush1.bf16.msra.mxu0 %v2905
    %2928 = vmatprep.subr.bf16.mxu0 0
    %2929 = vmatpush1.bf16.msra.mxu0 %v2903
    %2930 = vmatprep.subr.bf16.mxu0 0
    %2931 = vmatpush1.bf16.msra.mxu0 %v2901
    %2932 = vmatprep.subr.bf16.mxu0 0
    %2933 = vmatpush1.bf16.msra.mxu0 %v2899
    %2934 = vmatprep.subr.bf16.mxu0 0
    %2935 = vmatpush1.bf16.msra.mxu0 %v2897
    %2936 = vmatprep.subr.bf16.mxu0 0
    %2937 = vmatpush2.bf16.msra.mxu0 0
    %2938 = vmatprep.subr.bf16.mxu0 0
    %2939 = vmatpush2.bf16.msra.mxu0 0
    %2940 = vmatprep.subr.bf16.mxu0 0
    %2941 = vmatpush2.bf16.msra.mxu0 0
    %2942 = vmatprep.subr.bf16.mxu0 0
    %2943 = vmatpush2.bf16.msra.mxu0 0
    %2944 = vmatprep.subr.bf16.mxu0 0
    %2945 = vmatpush2.bf16.msra.mxu0 0
    %2946 = vmatprep.subr.bf16.mxu0 0
    %2947 = vmatpush2.bf16.msra.mxu0 0
    %2948 = vmatprep.subr.bf16.mxu0 0
    %2949 = vmatpush2.bf16.msra.mxu0 0
    %2950 = vmatprep.subr.bf16.mxu0 0
    %2951 = vmatpush2.bf16.msra.mxu0 0
    %2952 = vmatprep.mubr.bf16.mxu0 0
    %2953 = vmatmul.mubr.bf16.gmra.mxu0 %v2880
    %v2954 = vpop.f32.mrf.mxu0
    %v2955 = vadd.f32 0.0, %v2954
    %v2956 = vpop.f32.mrf.mxu0
    %v2957 = vpop.f32.mrf.mxu0
    %v2958 = vadd.f32 0.0, %v2957
    %v2959 = vpop.f32.mrf.mxu0
    %2960 = vmatprep.mubr.bf16.mxu0 0
    %2961 = vmatmul.mubr.bf16.gmra.mxu0 %v2881
    %v2962 = vpop.f32.mrf.mxu0
    %v2963 = vadd.f32 0.0, %v2962
    %v2964 = vpop.f32.mrf.mxu0
    %v2965 = vpop.f32.mrf.mxu0
    %v2966 = vadd.f32 0.0, %v2965
    %v2967 = vpop.f32.mrf.mxu0
    %2968 = vmatprep.mubr.bf16.mxu0 0
    %2969 = vmatmul.mubr.bf16.gmra.mxu0 %v2882
    %v2970 = vpop.f32.mrf.mxu0
    %v2971 = vadd.f32 0.0, %v2970
    %v2972 = vpop.f32.mrf.mxu0
    %v2973 = vpop.f32.mrf.mxu0
    %v2974 = vadd.f32 0.0, %v2973
    %v2975 = vpop.f32.mrf.mxu0
    %2976 = vmatprep.mubr.bf16.mxu0 0
    %2977 = vmatmul.mubr.bf16.gmra.mxu0 %v2883
    %v2978 = vpop.f32.mrf.mxu0
    %v2979 = vadd.f32 0.0, %v2978
    %v2980 = vpop.f32.mrf.mxu0
    %v2981 = vpop.f32.mrf.mxu0
    %v2982 = vadd.f32 0.0, %v2981
    %v2983 = vpop.f32.mrf.mxu0
    %2984 = vmatprep.mubr.bf16.mxu0 0
    %2985 = vmatmul.mubr.bf16.gmra.mxu0 %v2884
    %v2986 = vpop.f32.mrf.mxu0
    %v2987 = vadd.f32 0.0, %v2986
    %v2988 = vpop.f32.mrf.mxu0
    %v2989 = vpop.f32.mrf.mxu0
    %v2990 = vadd.f32 0.0, %v2989
    %v2991 = vpop.f32.mrf.mxu0
    %2992 = vmatprep.mubr.bf16.mxu0 0
    %2993 = vmatmul.mubr.bf16.gmra.mxu0 %v2885
    %v2994 = vpop.f32.mrf.mxu0
    %v2995 = vadd.f32 0.0, %v2994
    %v2996 = vpop.f32.mrf.mxu0
    %v2997 = vpop.f32.mrf.mxu0
    %v2998 = vadd.f32 0.0, %v2997
    %v2999 = vpop.f32.mrf.mxu0
    %3000 = vmatprep.mubr.bf16.mxu0 0
    %3001 = vmatmul.mubr.bf16.gmra.mxu0 %v2886
    %v3002 = vpop.f32.mrf.mxu0
    %v3003 = vadd.f32 0.0, %v3002
    %v3004 = vpop.f32.mrf.mxu0
    %v3005 = vpop.f32.mrf.mxu0
    %v3006 = vadd.f32 0.0, %v3005
    %v3007 = vpop.f32.mrf.mxu0
    %3008 = vmatprep.mubr.bf16.mxu0 0
    %3009 = vmatmul.mubr.bf16.gmra.mxu0 %v2887
    %v3010 = vpop.f32.mrf.mxu0
    %v3011 = vadd.f32 0.0, %v3010
    %v3012 = vpop.f32.mrf.mxu0
    %v3013 = vpop.f32.mrf.mxu0
    %v3014 = vadd.f32 0.0, %v3013
    %v3015 = vpop.f32.mrf.mxu0
    %3016 = vdwg.mxu0
    %3033 = vrot.lane.b32.xlu0 %v2955, 32
    %v3034 = vpop.permute.xlu0 %3033
    %3035 = vrot.lane.b32.xlu0 %v2958, 32
    %v3036 = vpop.permute.xlu0 %3035
    %3037 = vrot.lane.b32.xlu0 %v2963, 32
    %v3038 = vpop.permute.xlu0 %3037
    %3039 = vrot.lane.b32.xlu0 %v2966, 32
    %v3040 = vpop.permute.xlu0 %3039
    %3041 = vrot.lane.b32.xlu0 %v2971, 32
    %v3042 = vpop.permute.xlu0 %3041
    %3043 = vrot.lane.b32.xlu0 %v2974, 32
    %v3044 = vpop.permute.xlu0 %3043
    %3045 = vrot.lane.b32.xlu0 %v2979, 32
    %v3046 = vpop.permute.xlu0 %3045
    %3047 = vrot.lane.b32.xlu0 %v2982, 32
    %v3048 = vpop.permute.xlu0 %3047
    %3049 = vrot.lane.b32.xlu0 %v2987, 32
    %v3050 = vpop.permute.xlu0 %3049
    %3051 = vrot.lane.b32.xlu0 %v2990, 32
    %v3052 = vpop.permute.xlu0 %3051
    %3053 = vrot.lane.b32.xlu0 %v2995, 32
    %v3054 = vpop.permute.xlu0 %3053
    %3055 = vrot.lane.b32.xlu0 %v2998, 32
    %v3056 = vpop.permute.xlu0 %3055
    %3057 = vrot.lane.b32.xlu0 %v3003, 32
    %v3058 = vpop.permute.xlu0 %3057
    %3059 = vrot.lane.b32.xlu0 %v3006, 32
    %v3060 = vpop.permute.xlu0 %3059
    %3061 = vrot.lane.b32.xlu0 %v3011, 32
    %v3062 = vpop.permute.xlu0 %3061
    %3063 = vrot.lane.b32.xlu0 %v3014, 32
    %v3064 = vpop.permute.xlu0 %3063
    %vm3081 = vcmask 392448
    %3082 = vst.msk [vmem:[#allocation3] sm:$0xff] %vm3081, %v3034
    %3083 = vst.msk [vmem:[#allocation3 + $0x8] sm:$0xff] %vm3081, %v3036
    %3084 = vst.msk [vmem:[#allocation3 + $0x10] sm:$0xff] %vm3081, %v3038
    %3085 = vst.msk [vmem:[#allocation3 + $0x18] sm:$0xff] %vm3081, %v3040
    %3086 = vst.msk [vmem:[#allocation3 + $0x20] sm:$0xff] %vm3081, %v3042
    %3087 = vst.msk [vmem:[#allocation3 + $0x28] sm:$0xff] %vm3081, %v3044
    %3088 = vst.msk [vmem:[#allocation3 + $0x30] sm:$0xff] %vm3081, %v3046
    %3089 = vst.msk [vmem:[#allocation3 + $0x38] sm:$0xff] %vm3081, %v3048
    %3090 = vst.msk [vmem:[#allocation3 + $0x40] sm:$0xff] %vm3081, %v3050
    %3091 = vst.msk [vmem:[#allocation3 + $0x48] sm:$0xff] %vm3081, %v3052
    %3092 = vst.msk [vmem:[#allocation3 + $0x50] sm:$0xff] %vm3081, %v3054
    %3093 = vst.msk [vmem:[#allocation3 + $0x58] sm:$0xff] %vm3081, %v3056
    %3094 = vst.msk [vmem:[#allocation3 + $0x60] sm:$0xff] %vm3081, %v3058
    %3095 = vst.msk [vmem:[#allocation3 + $0x68] sm:$0xff] %vm3081, %v3060
    %3096 = vst.msk [vmem:[#allocation3 + $0x70] sm:$0xff] %vm3081, %v3062
    %3097 = vst.msk [vmem:[#allocation3 + $0x78] sm:$0xff] %vm3081, %v3064
    %v3098 = vld [vmem:[#allocation2] sm:$0xff]
    %v3099 = vld [vmem:[#allocation2 + $0x18] sm:$0xff]
    %v3100 = vld [vmem:[#allocation2 + $0x30] sm:$0xff]
    %v3101 = vld [vmem:[#allocation2 + $0x48] sm:$0xff]
    %v3102 = vld [vmem:[#allocation2 + $0x60] sm:$0xff]
    %v3103 = vld [vmem:[#allocation2 + $0x78] sm:$0xff]
    %v3104 = vld [vmem:[#allocation2 + $0x90] sm:$0xff]
    %v3105 = vld [vmem:[#allocation2 + $0xa8] sm:$0xff]
    %v3106 = vld [vmem:[#allocation2 + $0xc0] sm:$0xff]
    %v3107 = vld [vmem:[#allocation2 + $0xd8] sm:$0xff]
    %v3108 = vld [vmem:[#allocation2 + $0xf0] sm:$0xff]
    %v3109 = vld [vmem:[#allocation2 + $0x108] sm:$0xff]
    %v3110 = vld [vmem:[#allocation2 + $0x120] sm:$0xff]
    %v3111 = vld [vmem:[#allocation2 + $0x138] sm:$0xff]
    %v3112 = vld [vmem:[#allocation2 + $0x150] sm:$0xff]
    %v3113 = vld [vmem:[#allocation2 + $0x168] sm:$0xff]
    %v3114 = vpack.c.bf16 %v3099, %v3098
    %v3115 = vpack.c.bf16 %v3101, %v3100
    %v3116 = vpack.c.bf16 %v3103, %v3102
    %v3117 = vpack.c.bf16 %v3105, %v3104
    %v3118 = vpack.c.bf16 %v3107, %v3106
    %v3119 = vpack.c.bf16 %v3109, %v3108
    %v3120 = vpack.c.bf16 %v3111, %v3110
    %v3121 = vpack.c.bf16 %v3113, %v3112
    %v3122 = vld [vmem:[#allocation2 + $0x8] sm:$0xff]
    %v3123 = vld [vmem:[#allocation2 + $0x20] sm:$0xff]
    %v3124 = vld [vmem:[#allocation2 + $0x38] sm:$0xff]
    %v3125 = vld [vmem:[#allocation2 + $0x50] sm:$0xff]
    %v3126 = vld [vmem:[#allocation2 + $0x68] sm:$0xff]
    %v3127 = vld [vmem:[#allocation2 + $0x80] sm:$0xff]
    %v3128 = vld [vmem:[#allocation2 + $0x98] sm:$0xff]
    %v3129 = vld [vmem:[#allocation2 + $0xb0] sm:$0xff]
    %v3130 = vld [vmem:[#allocation2 + $0xc8] sm:$0xff]
    %v3131 = vld [vmem:[#allocation2 + $0xe0] sm:$0xff]
    %v3132 = vld [vmem:[#allocation2 + $0xf8] sm:$0xff]
    %v3133 = vld [vmem:[#allocation2 + $0x110] sm:$0xff]
    %v3134 = vld [vmem:[#allocation2 + $0x128] sm:$0xff]
    %v3135 = vld [vmem:[#allocation2 + $0x140] sm:$0xff]
    %v3136 = vld [vmem:[#allocation2 + $0x158] sm:$0xff]
    %v3137 = vld [vmem:[#allocation2 + $0x170] sm:$0xff]
    %v3138 = vpack.c.bf16 %v3123, %v3122
    %v3139 = vpack.c.bf16 %v3125, %v3124
    %v3140 = vpack.c.bf16 %v3127, %v3126
    %v3141 = vpack.c.bf16 %v3129, %v3128
    %v3142 = vpack.c.bf16 %v3131, %v3130
    %v3143 = vpack.c.bf16 %v3133, %v3132
    %v3144 = vpack.c.bf16 %v3135, %v3134
    %v3145 = vpack.c.bf16 %v3137, %v3136
    %v3146 = vld [vmem:[#allocation2 + $0x10] sm:$0xff]
    %v3147 = vld [vmem:[#allocation2 + $0x28] sm:$0xff]
    %v3148 = vld [vmem:[#allocation2 + $0x40] sm:$0xff]
    %v3149 = vld [vmem:[#allocation2 + $0x58] sm:$0xff]
    %v3150 = vld [vmem:[#allocation2 + $0x70] sm:$0xff]
    %v3151 = vld [vmem:[#allocation2 + $0x88] sm:$0xff]
    %v3152 = vld [vmem:[#allocation2 + $0xa0] sm:$0xff]
    %v3153 = vld [vmem:[#allocation2 + $0xb8] sm:$0xff]
    %v3154 = vld [vmem:[#allocation2 + $0xd0] sm:$0xff]
    %v3155 = vld [vmem:[#allocation2 + $0xe8] sm:$0xff]
    %v3156 = vld [vmem:[#allocation2 + $0x100] sm:$0xff]
    %v3157 = vld [vmem:[#allocation2 + $0x118] sm:$0xff]
    %v3158 = vld [vmem:[#allocation2 + $0x130] sm:$0xff]
    %v3159 = vld [vmem:[#allocation2 + $0x148] sm:$0xff]
    %v3160 = vld [vmem:[#allocation2 + $0x160] sm:$0xff]
    %v3161 = vld [vmem:[#allocation2 + $0x178] sm:$0xff]
    %v3162 = vpack.c.bf16 %v3147, %v3146
    %v3163 = vpack.c.bf16 %v3149, %v3148
    %v3164 = vpack.c.bf16 %v3151, %v3150
    %v3165 = vpack.c.bf16 %v3153, %v3152
    %v3166 = vpack.c.bf16 %v3155, %v3154
    %v3167 = vpack.c.bf16 %v3157, %v3156
    %v3168 = vpack.c.bf16 %v3159, %v3158
    %v3169 = vpack.c.bf16 %v3161, %v3160
    %v3170 = vld [vmem:[%s7] sm:$0xff]
    %v3171 = vld [vmem:[%s7 + $0x8] sm:$0xff]
    %v3172 = vld [vmem:[%s7 + $0x10] sm:$0xff]
    %v3173 = vld [vmem:[%s7 + $0x18] sm:$0xff]
    %v3174 = vld [vmem:[%s7 + $0x20] sm:$0xff]
    %v3175 = vld [vmem:[%s7 + $0x28] sm:$0xff]
    %v3176 = vld [vmem:[%s7 + $0x30] sm:$0xff]
    %v3177 = vld [vmem:[%s7 + $0x38] sm:$0xff]
    %v3178 = vld [vmem:[%s7 + $0x40] sm:$0xff]
    %v3179 = vld [vmem:[%s7 + $0x48] sm:$0xff]
    %v3180 = vld [vmem:[%s7 + $0x50] sm:$0xff]
    %v3181 = vld [vmem:[%s7 + $0x58] sm:$0xff]
    %v3182 = vld [vmem:[%s7 + $0x60] sm:$0xff]
    %v3183 = vld [vmem:[%s7 + $0x68] sm:$0xff]
    %v3184 = vld [vmem:[%s7 + $0x70] sm:$0xff]
    %v3185 = vld [vmem:[%s7 + $0x78] sm:$0xff]
    %3194 = vrot.lane.b32.xlu0 %v3114, 80
    %v3195 = vpop.permute.xlu0 %3194
    %3196 = vrot.lane.b32.xlu0 %v3115, 80
    %v3197 = vpop.permute.xlu0 %3196
    %3198 = vrot.lane.b32.xlu0 %v3116, 80
    %v3199 = vpop.permute.xlu0 %3198
    %3200 = vrot.lane.b32.xlu0 %v3117, 80
    %v3201 = vpop.permute.xlu0 %3200
    %3202 = vrot.lane.b32.xlu0 %v3118, 80
    %v3203 = vpop.permute.xlu0 %3202
    %3204 = vrot.lane.b32.xlu0 %v3119, 80
    %v3205 = vpop.permute.xlu0 %3204
    %3206 = vrot.lane.b32.xlu0 %v3120, 80
    %v3207 = vpop.permute.xlu0 %3206
    %3208 = vrot.lane.b32.xlu0 %v3121, 80
    %v3209 = vpop.permute.xlu0 %3208
    %3218 = vrot.lane.b32.xlu0 %v3138, 80
    %v3219 = vpop.permute.xlu0 %3218
    %3220 = vrot.lane.b32.xlu0 %v3139, 80
    %v3221 = vpop.permute.xlu0 %3220
    %3222 = vrot.lane.b32.xlu0 %v3140, 80
    %v3223 = vpop.permute.xlu0 %3222
    %3224 = vrot.lane.b32.xlu0 %v3141, 80
    %v3225 = vpop.permute.xlu0 %3224
    %3226 = vrot.lane.b32.xlu0 %v3142, 80
    %v3227 = vpop.permute.xlu0 %3226
    %3228 = vrot.lane.b32.xlu0 %v3143, 80
    %v3229 = vpop.permute.xlu0 %3228
    %3230 = vrot.lane.b32.xlu0 %v3144, 80
    %v3231 = vpop.permute.xlu0 %3230
    %3232 = vrot.lane.b32.xlu0 %v3145, 80
    %v3233 = vpop.permute.xlu0 %3232
    %v3235 = vsel %vm129, %v3195, 0
    %v3238 = vsel %vm129, %v3197, 0
    %v3241 = vsel %vm129, %v3199, 0
    %v3244 = vsel %vm129, %v3201, 0
    %v3247 = vsel %vm129, %v3203, 0
    %v3250 = vsel %vm129, %v3205, 0
    %v3253 = vsel %vm129, %v3207, 0
    %v3256 = vsel %vm129, %v3209, 0
    %v3259 = vsel %vm129, %v3219, 0
    %v3262 = vsel %vm129, %v3221, 0
    %v3265 = vsel %vm129, %v3223, 0
    %v3268 = vsel %vm129, %v3225, 0
    %v3271 = vsel %vm129, %v3227, 0
    %v3274 = vsel %vm129, %v3229, 0
    %v3277 = vsel %vm129, %v3231, 0
    %v3280 = vsel %vm129, %v3233, 0
    %3282 = vmatprep.subr.bf16.mxu0 0
    %3283 = vmatpush1.bf16.xpose.msra.mxu0 %v3280
    %3284 = vmatprep.subr.bf16.mxu0 0
    %3285 = vmatpush1.bf16.xpose.msra.mxu0 %v3277
    %3286 = vmatprep.subr.bf16.mxu0 0
    %3287 = vmatpush1.bf16.xpose.msra.mxu0 %v3274
    %3288 = vmatprep.subr.bf16.mxu0 0
    %3289 = vmatpush1.bf16.xpose.msra.mxu0 %v3271
    %3290 = vmatprep.subr.bf16.mxu0 0
    %3291 = vmatpush1.bf16.xpose.msra.mxu0 %v3268
    %3292 = vmatprep.subr.bf16.mxu0 0
    %3293 = vmatpush1.bf16.xpose.msra.mxu0 %v3265
    %3294 = vmatprep.subr.bf16.mxu0 0
    %3295 = vmatpush1.bf16.xpose.msra.mxu0 %v3262
    %3296 = vmatprep.subr.bf16.mxu0 0
    %3297 = vmatpush1.bf16.xpose.msra.mxu0 %v3259
    %3298 = vmatprep.subr.bf16.mxu0 0
    %3299 = vmatpush2.bf16.xpose.msra.mxu0 0
    %3300 = vmatprep.subr.bf16.mxu0 0
    %3301 = vmatpush2.bf16.xpose.msra.mxu0 0
    %3302 = vmatprep.subr.bf16.mxu0 0
    %3303 = vmatpush2.bf16.xpose.msra.mxu0 0
    %3304 = vmatprep.subr.bf16.mxu0 0
    %3305 = vmatpush2.bf16.xpose.msra.mxu0 0
    %3306 = vmatprep.subr.bf16.mxu0 0
    %3307 = vmatpush2.bf16.xpose.msra.mxu0 0
    %3308 = vmatprep.subr.bf16.mxu0 0
    %3309 = vmatpush2.bf16.xpose.msra.mxu0 0
    %3310 = vmatprep.subr.bf16.mxu0 0
    %3311 = vmatpush2.bf16.xpose.msra.mxu0 0
    %3312 = vmatprep.subr.bf16.mxu0 0
    %3313 = vmatpush2.bf16.xpose.msra.mxu0 0
    %3314 = vmatprep.mubr.bf16.mxu0 0
    %3315 = vmatmul.mubr.bf16.gmra.mxu0 %v3235
    %v3316 = vpop.f32.mrf.mxu0
    %v3317 = vadd.f32 %v3170, %v3316
    %v3318 = vpop.f32.mrf.mxu0
    %v3319 = vpop.f32.mrf.mxu0
    %v3320 = vadd.f32 %v3171, %v3319
    %v3321 = vpop.f32.mrf.mxu0
    %3322 = vmatprep.mubr.bf16.mxu0 0
    %3323 = vmatmul.mubr.bf16.gmra.mxu0 %v3238
    %v3324 = vpop.f32.mrf.mxu0
    %v3325 = vadd.f32 %v3172, %v3324
    %v3326 = vpop.f32.mrf.mxu0
    %v3327 = vpop.f32.mrf.mxu0
    %v3328 = vadd.f32 %v3173, %v3327
    %v3329 = vpop.f32.mrf.mxu0
    %3330 = vmatprep.mubr.bf16.mxu0 0
    %3331 = vmatmul.mubr.bf16.gmra.mxu0 %v3241
    %v3332 = vpop.f32.mrf.mxu0
    %v3333 = vadd.f32 %v3174, %v3332
    %v3334 = vpop.f32.mrf.mxu0
    %v3335 = vpop.f32.mrf.mxu0
    %v3336 = vadd.f32 %v3175, %v3335
    %v3337 = vpop.f32.mrf.mxu0
    %3338 = vmatprep.mubr.bf16.mxu0 0
    %3339 = vmatmul.mubr.bf16.gmra.mxu0 %v3244
    %v3340 = vpop.f32.mrf.mxu0
    %v3341 = vadd.f32 %v3176, %v3340
    %v3342 = vpop.f32.mrf.mxu0
    %v3343 = vpop.f32.mrf.mxu0
    %v3344 = vadd.f32 %v3177, %v3343
    %v3345 = vpop.f32.mrf.mxu0
    %3346 = vmatprep.mubr.bf16.mxu0 0
    %3347 = vmatmul.mubr.bf16.gmra.mxu0 %v3247
    %v3348 = vpop.f32.mrf.mxu0
    %v3349 = vadd.f32 %v3178, %v3348
    %v3350 = vpop.f32.mrf.mxu0
    %v3351 = vpop.f32.mrf.mxu0
    %v3352 = vadd.f32 %v3179, %v3351
    %v3353 = vpop.f32.mrf.mxu0
    %3354 = vmatprep.mubr.bf16.mxu0 0
    %3355 = vmatmul.mubr.bf16.gmra.mxu0 %v3250
    %v3356 = vpop.f32.mrf.mxu0
    %v3357 = vadd.f32 %v3180, %v3356
    %v3358 = vpop.f32.mrf.mxu0
    %v3359 = vpop.f32.mrf.mxu0
    %v3360 = vadd.f32 %v3181, %v3359
    %v3361 = vpop.f32.mrf.mxu0
    %3362 = vmatprep.mubr.bf16.mxu0 0
    %3363 = vmatmul.mubr.bf16.gmra.mxu0 %v3253
    %v3364 = vpop.f32.mrf.mxu0
    %v3365 = vadd.f32 %v3182, %v3364
    %v3366 = vpop.f32.mrf.mxu0
    %v3367 = vpop.f32.mrf.mxu0
    %v3368 = vadd.f32 %v3183, %v3367
    %v3369 = vpop.f32.mrf.mxu0
    %3370 = vmatprep.mubr.bf16.mxu0 0
    %3371 = vmatmul.mubr.bf16.gmra.mxu0 %v3256
    %v3372 = vpop.f32.mrf.mxu0
    %v3373 = vadd.f32 %v3184, %v3372
    %v3374 = vpop.f32.mrf.mxu0
    %v3375 = vpop.f32.mrf.mxu0
    %v3376 = vadd.f32 %v3185, %v3375
    %v3377 = vpop.f32.mrf.mxu0
    %3378 = vdwg.mxu0
    %3379 = vmax.xlane.f32.xlu0 %v3317
    %v3380 = vpop.xlane.xlu0 %3379
    %3381 = vmax.xlane.f32.xlu0 %v3320
    %v3382 = vpop.xlane.xlu0 %3381
    %3383 = vmax.xlane.f32.xlu0 %v3325
    %v3384 = vpop.xlane.xlu0 %3383
    %3385 = vmax.xlane.f32.xlu0 %v3328
    %v3386 = vpop.xlane.xlu0 %3385
    %3387 = vmax.xlane.f32.xlu0 %v3333
    %v3388 = vpop.xlane.xlu0 %3387
    %3389 = vmax.xlane.f32.xlu0 %v3336
    %v3390 = vpop.xlane.xlu0 %3389
    %3391 = vmax.xlane.f32.xlu0 %v3341
    %v3392 = vpop.xlane.xlu0 %3391
    %3393 = vmax.xlane.f32.xlu0 %v3344
    %v3394 = vpop.xlane.xlu0 %3393
    %3395 = vmax.xlane.f32.xlu0 %v3349
    %v3396 = vpop.xlane.xlu0 %3395
    %3397 = vmax.xlane.f32.xlu0 %v3352
    %v3398 = vpop.xlane.xlu0 %3397
    %3399 = vmax.xlane.f32.xlu0 %v3357
    %v3400 = vpop.xlane.xlu0 %3399
    %3401 = vmax.xlane.f32.xlu0 %v3360
    %v3402 = vpop.xlane.xlu0 %3401
    %3403 = vmax.xlane.f32.xlu0 %v3365
    %v3404 = vpop.xlane.xlu0 %3403
    %3405 = vmax.xlane.f32.xlu0 %v3368
    %v3406 = vpop.xlane.xlu0 %3405
    %3407 = vmax.xlane.f32.xlu0 %v3373
    %v3408 = vpop.xlane.xlu0 %3407
    %3409 = vmax.xlane.f32.xlu0 %v3376
    %v3410 = vpop.xlane.xlu0 %3409
    %v3411 = vsub.f32 %v3317, %v3380
    %v3412 = vsub.f32 %v3320, %v3382
    %v3413 = vsub.f32 %v3325, %v3384
    %v3414 = vsub.f32 %v3328, %v3386
    %v3415 = vsub.f32 %v3333, %v3388
    %v3416 = vsub.f32 %v3336, %v3390
    %v3417 = vsub.f32 %v3341, %v3392
    %v3418 = vsub.f32 %v3344, %v3394
    %v3419 = vsub.f32 %v3349, %v3396
    %v3420 = vsub.f32 %v3352, %v3398
    %v3421 = vsub.f32 %v3357, %v3400
    %v3422 = vsub.f32 %v3360, %v3402
    %v3423 = vsub.f32 %v3365, %v3404
    %v3424 = vsub.f32 %v3368, %v3406
    %v3425 = vsub.f32 %v3373, %v3408
    %v3426 = vsub.f32 %v3376, %v3410
    %v3427 = vmul.f32 %v3411, 1.442695
    %v3428 = vpow.pop %v3427
    %v3429 = vmul.f32 %v3412, 1.442695
    %v3430 = vpow.pop %v3429
    %v3431 = vmul.f32 %v3413, 1.442695
    %v3432 = vpow.pop %v3431
    %v3433 = vmul.f32 %v3414, 1.442695
    %v3434 = vpow.pop %v3433
    %v3435 = vmul.f32 %v3415, 1.442695
    %v3436 = vpow.pop %v3435
    %v3437 = vmul.f32 %v3416, 1.442695
    %v3438 = vpow.pop %v3437
    %v3439 = vmul.f32 %v3417, 1.442695
    %v3440 = vpow.pop %v3439
    %v3441 = vmul.f32 %v3418, 1.442695
    %v3442 = vpow.pop %v3441
    %v3443 = vmul.f32 %v3419, 1.442695
    %v3444 = vpow.pop %v3443
    %v3445 = vmul.f32 %v3420, 1.442695
    %v3446 = vpow.pop %v3445
    %v3447 = vmul.f32 %v3421, 1.442695
    %v3448 = vpow.pop %v3447
    %v3449 = vmul.f32 %v3422, 1.442695
    %v3450 = vpow.pop %v3449
    %v3451 = vmul.f32 %v3423, 1.442695
    %v3452 = vpow.pop %v3451
    %v3453 = vmul.f32 %v3424, 1.442695
    %v3454 = vpow.pop %v3453
    %v3455 = vmul.f32 %v3425, 1.442695
    %v3456 = vpow.pop %v3455
    %v3457 = vmul.f32 %v3426, 1.442695
    %v3458 = vpow.pop %v3457
    %3459 = vadd.xlane.f32.xlu0 %v3428
    %v3460 = vpop.xlane.xlu0 %3459
    %3461 = vadd.xlane.f32.xlu0 %v3430
    %v3462 = vpop.xlane.xlu0 %3461
    %3463 = vadd.xlane.f32.xlu0 %v3432
    %v3464 = vpop.xlane.xlu0 %3463
    %3465 = vadd.xlane.f32.xlu0 %v3434
    %v3466 = vpop.xlane.xlu0 %3465
    %3467 = vadd.xlane.f32.xlu0 %v3436
    %v3468 = vpop.xlane.xlu0 %3467
    %3469 = vadd.xlane.f32.xlu0 %v3438
    %v3470 = vpop.xlane.xlu0 %3469
    %3471 = vadd.xlane.f32.xlu0 %v3440
    %v3472 = vpop.xlane.xlu0 %3471
    %3473 = vadd.xlane.f32.xlu0 %v3442
    %v3474 = vpop.xlane.xlu0 %3473
    %3475 = vadd.xlane.f32.xlu0 %v3444
    %v3476 = vpop.xlane.xlu0 %3475
    %3477 = vadd.xlane.f32.xlu0 %v3446
    %v3478 = vpop.xlane.xlu0 %3477
    %3479 = vadd.xlane.f32.xlu0 %v3448
    %v3480 = vpop.xlane.xlu0 %3479
    %3481 = vadd.xlane.f32.xlu0 %v3450
    %v3482 = vpop.xlane.xlu0 %3481
    %3483 = vadd.xlane.f32.xlu0 %v3452
    %v3484 = vpop.xlane.xlu0 %3483
    %3485 = vadd.xlane.f32.xlu0 %v3454
    %v3486 = vpop.xlane.xlu0 %3485
    %3487 = vadd.xlane.f32.xlu0 %v3456
    %v3488 = vpop.xlane.xlu0 %3487
    %3489 = vadd.xlane.f32.xlu0 %v3458
    %v3490 = vpop.xlane.xlu0 %3489
    %v3491 = vrcp.pop %v3460
    %v3492 = vrcp.pop %v3462
    %v3493 = vrcp.pop %v3464
    %v3494 = vrcp.pop %v3466
    %v3495 = vrcp.pop %v3468
    %v3496 = vrcp.pop %v3470
    %v3497 = vrcp.pop %v3472
    %v3498 = vrcp.pop %v3474
    %v3499 = vrcp.pop %v3476
    %v3500 = vrcp.pop %v3478
    %v3501 = vrcp.pop %v3480
    %v3502 = vrcp.pop %v3482
    %v3503 = vrcp.pop %v3484
    %v3504 = vrcp.pop %v3486
    %v3505 = vrcp.pop %v3488
    %v3506 = vrcp.pop %v3490
    %v3507 = vmul.f32 %v3428, %v3491
    %v3508 = vmul.f32 %v3430, %v3492
    %v3509 = vmul.f32 %v3432, %v3493
    %v3510 = vmul.f32 %v3434, %v3494
    %v3511 = vmul.f32 %v3436, %v3495
    %v3512 = vmul.f32 %v3438, %v3496
    %v3513 = vmul.f32 %v3440, %v3497
    %v3514 = vmul.f32 %v3442, %v3498
    %v3515 = vmul.f32 %v3444, %v3499
    %v3516 = vmul.f32 %v3446, %v3500
    %v3517 = vmul.f32 %v3448, %v3501
    %v3518 = vmul.f32 %v3450, %v3502
    %v3519 = vmul.f32 %v3452, %v3503
    %v3520 = vmul.f32 %v3454, %v3504
    %v3521 = vmul.f32 %v3456, %v3505
    %v3522 = vmul.f32 %v3458, %v3506
    %v3523 = vpack.c.bf16 %v3508, %v3507
    %v3524 = vpack.c.bf16 %v3510, %v3509
    %v3525 = vpack.c.bf16 %v3512, %v3511
    %v3526 = vpack.c.bf16 %v3514, %v3513
    %v3527 = vpack.c.bf16 %v3516, %v3515
    %v3528 = vpack.c.bf16 %v3518, %v3517
    %v3529 = vpack.c.bf16 %v3520, %v3519
    %v3530 = vpack.c.bf16 %v3522, %v3521
    %3539 = vrot.lane.b32.xlu0 %v3162, 80
    %v3540 = vpop.permute.xlu0 %3539
    %3541 = vrot.lane.b32.xlu0 %v3163, 80
    %v3542 = vpop.permute.xlu0 %3541
    %3543 = vrot.lane.b32.xlu0 %v3164, 80
    %v3544 = vpop.permute.xlu0 %3543
    %3545 = vrot.lane.b32.xlu0 %v3165, 80
    %v3546 = vpop.permute.xlu0 %3545
    %3547 = vrot.lane.b32.xlu0 %v3166, 80
    %v3548 = vpop.permute.xlu0 %3547
    %3549 = vrot.lane.b32.xlu0 %v3167, 80
    %v3550 = vpop.permute.xlu0 %3549
    %3551 = vrot.lane.b32.xlu0 %v3168, 80
    %v3552 = vpop.permute.xlu0 %3551
    %3553 = vrot.lane.b32.xlu0 %v3169, 80
    %v3554 = vpop.permute.xlu0 %3553
    %3563 = vmatprep.subr.bf16.mxu0 0
    %3564 = vmatpush1.bf16.msra.mxu0 %v3554
    %3565 = vmatprep.subr.bf16.mxu0 0
    %3566 = vmatpush1.bf16.msra.mxu0 %v3552
    %3567 = vmatprep.subr.bf16.mxu0 0
    %3568 = vmatpush1.bf16.msra.mxu0 %v3550
    %3569 = vmatprep.subr.bf16.mxu0 0
    %3570 = vmatpush1.bf16.msra.mxu0 %v3548
    %3571 = vmatprep.subr.bf16.mxu0 0
    %3572 = vmatpush1.bf16.msra.mxu0 %v3546
    %3573 = vmatprep.subr.bf16.mxu0 0
    %3574 = vmatpush1.bf16.msra.mxu0 %v3544
    %3575 = vmatprep.subr.bf16.mxu0 0
    %3576 = vmatpush1.bf16.msra.mxu0 %v3542
    %3577 = vmatprep.subr.bf16.mxu0 0
    %3578 = vmatpush1.bf16.msra.mxu0 %v3540
    %3579 = vmatprep.subr.bf16.mxu0 0
    %3580 = vmatpush2.bf16.msra.mxu0 0
    %3581 = vmatprep.subr.bf16.mxu0 0
    %3582 = vmatpush2.bf16.msra.mxu0 0
    %3583 = vmatprep.subr.bf16.mxu0 0
    %3584 = vmatpush2.bf16.msra.mxu0 0
    %3585 = vmatprep.subr.bf16.mxu0 0
    %3586 = vmatpush2.bf16.msra.mxu0 0
    %3587 = vmatprep.subr.bf16.mxu0 0
    %3588 = vmatpush2.bf16.msra.mxu0 0
    %3589 = vmatprep.subr.bf16.mxu0 0
    %3590 = vmatpush2.bf16.msra.mxu0 0
    %3591 = vmatprep.subr.bf16.mxu0 0
    %3592 = vmatpush2.bf16.msra.mxu0 0
    %3593 = vmatprep.subr.bf16.mxu0 0
    %3594 = vmatpush2.bf16.msra.mxu0 0
    %3595 = vmatprep.mubr.bf16.mxu0 0
    %3596 = vmatmul.mubr.bf16.gmra.mxu0 %v3523
    %v3597 = vpop.f32.mrf.mxu0
    %v3598 = vadd.f32 0.0, %v3597
    %v3599 = vpop.f32.mrf.mxu0
    %v3600 = vpop.f32.mrf.mxu0
    %v3601 = vadd.f32 0.0, %v3600
    %v3602 = vpop.f32.mrf.mxu0
    %3603 = vmatprep.mubr.bf16.mxu0 0
    %3604 = vmatmul.mubr.bf16.gmra.mxu0 %v3524
    %v3605 = vpop.f32.mrf.mxu0
    %v3606 = vadd.f32 0.0, %v3605
    %v3607 = vpop.f32.mrf.mxu0
    %v3608 = vpop.f32.mrf.mxu0
    %v3609 = vadd.f32 0.0, %v3608
    %v3610 = vpop.f32.mrf.mxu0
    %3611 = vmatprep.mubr.bf16.mxu0 0
    %3612 = vmatmul.mubr.bf16.gmra.mxu0 %v3525
    %v3613 = vpop.f32.mrf.mxu0
    %v3614 = vadd.f32 0.0, %v3613
    %v3615 = vpop.f32.mrf.mxu0
    %v3616 = vpop.f32.mrf.mxu0
    %v3617 = vadd.f32 0.0, %v3616
    %v3618 = vpop.f32.mrf.mxu0
    %3619 = vmatprep.mubr.bf16.mxu0 0
    %3620 = vmatmul.mubr.bf16.gmra.mxu0 %v3526
    %v3621 = vpop.f32.mrf.mxu0
    %v3622 = vadd.f32 0.0, %v3621
    %v3623 = vpop.f32.mrf.mxu0
    %v3624 = vpop.f32.mrf.mxu0
    %v3625 = vadd.f32 0.0, %v3624
    %v3626 = vpop.f32.mrf.mxu0
    %3627 = vmatprep.mubr.bf16.mxu0 0
    %3628 = vmatmul.mubr.bf16.gmra.mxu0 %v3527
    %v3629 = vpop.f32.mrf.mxu0
    %v3630 = vadd.f32 0.0, %v3629
    %v3631 = vpop.f32.mrf.mxu0
    %v3632 = vpop.f32.mrf.mxu0
    %v3633 = vadd.f32 0.0, %v3632
    %v3634 = vpop.f32.mrf.mxu0
    %3635 = vmatprep.mubr.bf16.mxu0 0
    %3636 = vmatmul.mubr.bf16.gmra.mxu0 %v3528
    %v3637 = vpop.f32.mrf.mxu0
    %v3638 = vadd.f32 0.0, %v3637
    %v3639 = vpop.f32.mrf.mxu0
    %v3640 = vpop.f32.mrf.mxu0
    %v3641 = vadd.f32 0.0, %v3640
    %v3642 = vpop.f32.mrf.mxu0
    %3643 = vmatprep.mubr.bf16.mxu0 0
    %3644 = vmatmul.mubr.bf16.gmra.mxu0 %v3529
    %v3645 = vpop.f32.mrf.mxu0
    %v3646 = vadd.f32 0.0, %v3645
    %v3647 = vpop.f32.mrf.mxu0
    %v3648 = vpop.f32.mrf.mxu0
    %v3649 = vadd.f32 0.0, %v3648
    %v3650 = vpop.f32.mrf.mxu0
    %3651 = vmatprep.mubr.bf16.mxu0 0
    %3652 = vmatmul.mubr.bf16.gmra.mxu0 %v3530
    %v3653 = vpop.f32.mrf.mxu0
    %v3654 = vadd.f32 0.0, %v3653
    %v3655 = vpop.f32.mrf.mxu0
    %v3656 = vpop.f32.mrf.mxu0
    %v3657 = vadd.f32 0.0, %v3656
    %v3658 = vpop.f32.mrf.mxu0
    %3659 = vdwg.mxu0
    %3676 = vrot.lane.b32.xlu0 %v3598, 48
    %v3677 = vpop.permute.xlu0 %3676
    %3678 = vrot.lane.b32.xlu0 %v3601, 48
    %v3679 = vpop.permute.xlu0 %3678
    %3680 = vrot.lane.b32.xlu0 %v3606, 48
    %v3681 = vpop.permute.xlu0 %3680
    %3682 = vrot.lane.b32.xlu0 %v3609, 48
    %v3683 = vpop.permute.xlu0 %3682
    %3684 = vrot.lane.b32.xlu0 %v3614, 48
    %v3685 = vpop.permute.xlu0 %3684
    %3686 = vrot.lane.b32.xlu0 %v3617, 48
    %v3687 = vpop.permute.xlu0 %3686
    %3688 = vrot.lane.b32.xlu0 %v3622, 48
    %v3689 = vpop.permute.xlu0 %3688
    %3690 = vrot.lane.b32.xlu0 %v3625, 48
    %v3691 = vpop.permute.xlu0 %3690
    %3692 = vrot.lane.b32.xlu0 %v3630, 48
    %v3693 = vpop.permute.xlu0 %3692
    %3694 = vrot.lane.b32.xlu0 %v3633, 48
    %v3695 = vpop.permute.xlu0 %3694
    %3696 = vrot.lane.b32.xlu0 %v3638, 48
    %v3697 = vpop.permute.xlu0 %3696
    %3698 = vrot.lane.b32.xlu0 %v3641, 48
    %v3699 = vpop.permute.xlu0 %3698
    %3700 = vrot.lane.b32.xlu0 %v3646, 48
    %v3701 = vpop.permute.xlu0 %3700
    %3702 = vrot.lane.b32.xlu0 %v3649, 48
    %v3703 = vpop.permute.xlu0 %3702
    %3704 = vrot.lane.b32.xlu0 %v3654, 48
    %v3705 = vpop.permute.xlu0 %3704
    %3706 = vrot.lane.b32.xlu0 %v3657, 48
    %v3707 = vpop.permute.xlu0 %3706
    %vm3724 = vcmask 523648
    %3725 = vst.msk [vmem:[#allocation3] sm:$0xff] %vm3724, %v3677
    %3726 = vst.msk [vmem:[#allocation3 + $0x8] sm:$0xff] %vm3724, %v3679
    %3727 = vst.msk [vmem:[#allocation3 + $0x10] sm:$0xff] %vm3724, %v3681
    %3728 = vst.msk [vmem:[#allocation3 + $0x18] sm:$0xff] %vm3724, %v3683
    %3729 = vst.msk [vmem:[#allocation3 + $0x20] sm:$0xff] %vm3724, %v3685
    %3730 = vst.msk [vmem:[#allocation3 + $0x28] sm:$0xff] %vm3724, %v3687
    %3731 = vst.msk [vmem:[#allocation3 + $0x30] sm:$0xff] %vm3724, %v3689
    %3732 = vst.msk [vmem:[#allocation3 + $0x38] sm:$0xff] %vm3724, %v3691
    %3733 = vst.msk [vmem:[#allocation3 + $0x40] sm:$0xff] %vm3724, %v3693
    %3734 = vst.msk [vmem:[#allocation3 + $0x48] sm:$0xff] %vm3724, %v3695
    %3735 = vst.msk [vmem:[#allocation3 + $0x50] sm:$0xff] %vm3724, %v3697
    %3736 = vst.msk [vmem:[#allocation3 + $0x58] sm:$0xff] %vm3724, %v3699
    %3737 = vst.msk [vmem:[#allocation3 + $0x60] sm:$0xff] %vm3724, %v3701
    %3738 = vst.msk [vmem:[#allocation3 + $0x68] sm:$0xff] %vm3724, %v3703
    %3739 = vst.msk [vmem:[#allocation3 + $0x70] sm:$0xff] %vm3724, %v3705
    %3740 = vst.msk [vmem:[#allocation3 + $0x78] sm:$0xff] %vm3724, %v3707
    %v3741 = vld [vmem:[#allocation2] sm:$0xff]
    %v3742 = vld [vmem:[#allocation2 + $0x18] sm:$0xff]
    %v3743 = vld [vmem:[#allocation2 + $0x30] sm:$0xff]
    %v3744 = vld [vmem:[#allocation2 + $0x48] sm:$0xff]
    %v3745 = vld [vmem:[#allocation2 + $0x60] sm:$0xff]
    %v3746 = vld [vmem:[#allocation2 + $0x78] sm:$0xff]
    %v3747 = vld [vmem:[#allocation2 + $0x90] sm:$0xff]
    %v3748 = vld [vmem:[#allocation2 + $0xa8] sm:$0xff]
    %v3749 = vld [vmem:[#allocation2 + $0xc0] sm:$0xff]
    %v3750 = vld [vmem:[#allocation2 + $0xd8] sm:$0xff]
    %v3751 = vld [vmem:[#allocation2 + $0xf0] sm:$0xff]
    %v3752 = vld [vmem:[#allocation2 + $0x108] sm:$0xff]
    %v3753 = vld [vmem:[#allocation2 + $0x120] sm:$0xff]
    %v3754 = vld [vmem:[#allocation2 + $0x138] sm:$0xff]
    %v3755 = vld [vmem:[#allocation2 + $0x150] sm:$0xff]
    %v3756 = vld [vmem:[#allocation2 + $0x168] sm:$0xff]
    %v3757 = vpack.c.bf16 %v3742, %v3741
    %v3758 = vpack.c.bf16 %v3744, %v3743
    %v3759 = vpack.c.bf16 %v3746, %v3745
    %v3760 = vpack.c.bf16 %v3748, %v3747
    %v3761 = vpack.c.bf16 %v3750, %v3749
    %v3762 = vpack.c.bf16 %v3752, %v3751
    %v3763 = vpack.c.bf16 %v3754, %v3753
    %v3764 = vpack.c.bf16 %v3756, %v3755
    %v3765 = vld [vmem:[#allocation2 + $0x8] sm:$0xff]
    %v3766 = vld [vmem:[#allocation2 + $0x20] sm:$0xff]
    %v3767 = vld [vmem:[#allocation2 + $0x38] sm:$0xff]
    %v3768 = vld [vmem:[#allocation2 + $0x50] sm:$0xff]
    %v3769 = vld [vmem:[#allocation2 + $0x68] sm:$0xff]
    %v3770 = vld [vmem:[#allocation2 + $0x80] sm:$0xff]
    %v3771 = vld [vmem:[#allocation2 + $0x98] sm:$0xff]
    %v3772 = vld [vmem:[#allocation2 + $0xb0] sm:$0xff]
    %v3773 = vld [vmem:[#allocation2 + $0xc8] sm:$0xff]
    %v3774 = vld [vmem:[#allocation2 + $0xe0] sm:$0xff]
    %v3775 = vld [vmem:[#allocation2 + $0xf8] sm:$0xff]
    %v3776 = vld [vmem:[#allocation2 + $0x110] sm:$0xff]
    %v3777 = vld [vmem:[#allocation2 + $0x128] sm:$0xff]
    %v3778 = vld [vmem:[#allocation2 + $0x140] sm:$0xff]
    %v3779 = vld [vmem:[#allocation2 + $0x158] sm:$0xff]
    %v3780 = vld [vmem:[#allocation2 + $0x170] sm:$0xff]
    %v3781 = vpack.c.bf16 %v3766, %v3765
    %v3782 = vpack.c.bf16 %v3768, %v3767
    %v3783 = vpack.c.bf16 %v3770, %v3769
    %v3784 = vpack.c.bf16 %v3772, %v3771
    %v3785 = vpack.c.bf16 %v3774, %v3773
    %v3786 = vpack.c.bf16 %v3776, %v3775
    %v3787 = vpack.c.bf16 %v3778, %v3777
    %v3788 = vpack.c.bf16 %v3780, %v3779
    %v3789 = vld [vmem:[#allocation2 + $0x10] sm:$0xff]
    %v3790 = vld [vmem:[#allocation2 + $0x28] sm:$0xff]
    %v3791 = vld [vmem:[#allocation2 + $0x40] sm:$0xff]
    %v3792 = vld [vmem:[#allocation2 + $0x58] sm:$0xff]
    %v3793 = vld [vmem:[#allocation2 + $0x70] sm:$0xff]
    %v3794 = vld [vmem:[#allocation2 + $0x88] sm:$0xff]
    %v3795 = vld [vmem:[#allocation2 + $0xa0] sm:$0xff]
    %v3796 = vld [vmem:[#allocation2 + $0xb8] sm:$0xff]
    %v3797 = vld [vmem:[#allocation2 + $0xd0] sm:$0xff]
    %v3798 = vld [vmem:[#allocation2 + $0xe8] sm:$0xff]
    %v3799 = vld [vmem:[#allocation2 + $0x100] sm:$0xff]
    %v3800 = vld [vmem:[#allocation2 + $0x118] sm:$0xff]
    %v3801 = vld [vmem:[#allocation2 + $0x130] sm:$0xff]
    %v3802 = vld [vmem:[#allocation2 + $0x148] sm:$0xff]
    %v3803 = vld [vmem:[#allocation2 + $0x160] sm:$0xff]
    %v3804 = vld [vmem:[#allocation2 + $0x178] sm:$0xff]
    %v3805 = vpack.c.bf16 %v3790, %v3789
    %v3806 = vpack.c.bf16 %v3792, %v3791
    %v3807 = vpack.c.bf16 %v3794, %v3793
    %v3808 = vpack.c.bf16 %v3796, %v3795
    %v3809 = vpack.c.bf16 %v3798, %v3797
    %v3810 = vpack.c.bf16 %v3800, %v3799
    %v3811 = vpack.c.bf16 %v3802, %v3801
    %v3812 = vpack.c.bf16 %v3804, %v3803
    %v3813 = vld [vmem:[%s7] sm:$0xff]
    %v3814 = vld [vmem:[%s7 + $0x8] sm:$0xff]
    %v3815 = vld [vmem:[%s7 + $0x10] sm:$0xff]
    %v3816 = vld [vmem:[%s7 + $0x18] sm:$0xff]
    %v3817 = vld [vmem:[%s7 + $0x20] sm:$0xff]
    %v3818 = vld [vmem:[%s7 + $0x28] sm:$0xff]
    %v3819 = vld [vmem:[%s7 + $0x30] sm:$0xff]
    %v3820 = vld [vmem:[%s7 + $0x38] sm:$0xff]
    %v3821 = vld [vmem:[%s7 + $0x40] sm:$0xff]
    %v3822 = vld [vmem:[%s7 + $0x48] sm:$0xff]
    %v3823 = vld [vmem:[%s7 + $0x50] sm:$0xff]
    %v3824 = vld [vmem:[%s7 + $0x58] sm:$0xff]
    %v3825 = vld [vmem:[%s7 + $0x60] sm:$0xff]
    %v3826 = vld [vmem:[%s7 + $0x68] sm:$0xff]
    %v3827 = vld [vmem:[%s7 + $0x70] sm:$0xff]
    %v3828 = vld [vmem:[%s7 + $0x78] sm:$0xff]
    %3837 = vrot.lane.b32.xlu0 %v3757, 64
    %v3838 = vpop.permute.xlu0 %3837
    %3839 = vrot.lane.b32.xlu0 %v3758, 64
    %v3840 = vpop.permute.xlu0 %3839
    %3841 = vrot.lane.b32.xlu0 %v3759, 64
    %v3842 = vpop.permute.xlu0 %3841
    %3843 = vrot.lane.b32.xlu0 %v3760, 64
    %v3844 = vpop.permute.xlu0 %3843
    %3845 = vrot.lane.b32.xlu0 %v3761, 64
    %v3846 = vpop.permute.xlu0 %3845
    %3847 = vrot.lane.b32.xlu0 %v3762, 64
    %v3848 = vpop.permute.xlu0 %3847
    %3849 = vrot.lane.b32.xlu0 %v3763, 64
    %v3850 = vpop.permute.xlu0 %3849
    %3851 = vrot.lane.b32.xlu0 %v3764, 64
    %v3852 = vpop.permute.xlu0 %3851
    %3861 = vrot.lane.b32.xlu0 %v3781, 64
    %v3862 = vpop.permute.xlu0 %3861
    %3863 = vrot.lane.b32.xlu0 %v3782, 64
    %v3864 = vpop.permute.xlu0 %3863
    %3865 = vrot.lane.b32.xlu0 %v3783, 64
    %v3866 = vpop.permute.xlu0 %3865
    %3867 = vrot.lane.b32.xlu0 %v3784, 64
    %v3868 = vpop.permute.xlu0 %3867
    %3869 = vrot.lane.b32.xlu0 %v3785, 64
    %v3870 = vpop.permute.xlu0 %3869
    %3871 = vrot.lane.b32.xlu0 %v3786, 64
    %v3872 = vpop.permute.xlu0 %3871
    %3873 = vrot.lane.b32.xlu0 %v3787, 64
    %v3874 = vpop.permute.xlu0 %3873
    %3875 = vrot.lane.b32.xlu0 %v3788, 64
    %v3876 = vpop.permute.xlu0 %3875
    %v3878 = vsel %vm129, %v3838, 0
    %v3881 = vsel %vm129, %v3840, 0
    %v3884 = vsel %vm129, %v3842, 0
    %v3887 = vsel %vm129, %v3844, 0
    %v3890 = vsel %vm129, %v3846, 0
    %v3893 = vsel %vm129, %v3848, 0
    %v3896 = vsel %vm129, %v3850, 0
    %v3899 = vsel %vm129, %v3852, 0
    %v3902 = vsel %vm129, %v3862, 0
    %v3905 = vsel %vm129, %v3864, 0
    %v3908 = vsel %vm129, %v3866, 0
    %v3911 = vsel %vm129, %v3868, 0
    %v3914 = vsel %vm129, %v3870, 0
    %v3917 = vsel %vm129, %v3872, 0
    %v3920 = vsel %vm129, %v3874, 0
    %v3923 = vsel %vm129, %v3876, 0
    %3925 = vmatprep.subr.bf16.mxu0 0
    %3926 = vmatpush1.bf16.xpose.msra.mxu0 %v3923
    %3927 = vmatprep.subr.bf16.mxu0 0
    %3928 = vmatpush1.bf16.xpose.msra.mxu0 %v3920
    %3929 = vmatprep.subr.bf16.mxu0 0
    %3930 = vmatpush1.bf16.xpose.msra.mxu0 %v3917
    %3931 = vmatprep.subr.bf16.mxu0 0
    %3932 = vmatpush1.bf16.xpose.msra.mxu0 %v3914
    %3933 = vmatprep.subr.bf16.mxu0 0
    %3934 = vmatpush1.bf16.xpose.msra.mxu0 %v3911
    %3935 = vmatprep.subr.bf16.mxu0 0
    %3936 = vmatpush1.bf16.xpose.msra.mxu0 %v3908
    %3937 = vmatprep.subr.bf16.mxu0 0
    %3938 = vmatpush1.bf16.xpose.msra.mxu0 %v3905
    %3939 = vmatprep.subr.bf16.mxu0 0
    %3940 = vmatpush1.bf16.xpose.msra.mxu0 %v3902
    %3941 = vmatprep.subr.bf16.mxu0 0
    %3942 = vmatpush2.bf16.xpose.msra.mxu0 0
    %3943 = vmatprep.subr.bf16.mxu0 0
    %3944 = vmatpush2.bf16.xpose.msra.mxu0 0
    %3945 = vmatprep.subr.bf16.mxu0 0
    %3946 = vmatpush2.bf16.xpose.msra.mxu0 0
    %3947 = vmatprep.subr.bf16.mxu0 0
    %3948 = vmatpush2.bf16.xpose.msra.mxu0 0
    %3949 = vmatprep.subr.bf16.mxu0 0
    %3950 = vmatpush2.bf16.xpose.msra.mxu0 0
    %3951 = vmatprep.subr.bf16.mxu0 0
    %3952 = vmatpush2.bf16.xpose.msra.mxu0 0
    %3953 = vmatprep.subr.bf16.mxu0 0
    %3954 = vmatpush2.bf16.xpose.msra.mxu0 0
    %3955 = vmatprep.subr.bf16.mxu0 0
    %3956 = vmatpush2.bf16.xpose.msra.mxu0 0
    %3957 = vmatprep.mubr.bf16.mxu0 0
    %3958 = vmatmul.mubr.bf16.gmra.mxu0 %v3878
    %v3959 = vpop.f32.mrf.mxu0
    %v3960 = vadd.f32 %v3813, %v3959
    %v3961 = vpop.f32.mrf.mxu0
    %v3962 = vpop.f32.mrf.mxu0
    %v3963 = vadd.f32 %v3814, %v3962
    %v3964 = vpop.f32.mrf.mxu0
    %3965 = vmatprep.mubr.bf16.mxu0 0
    %3966 = vmatmul.mubr.bf16.gmra.mxu0 %v3881
    %v3967 = vpop.f32.mrf.mxu0
    %v3968 = vadd.f32 %v3815, %v3967
    %v3969 = vpop.f32.mrf.mxu0
    %v3970 = vpop.f32.mrf.mxu0
    %v3971 = vadd.f32 %v3816, %v3970
    %v3972 = vpop.f32.mrf.mxu0
    %3973 = vmatprep.mubr.bf16.mxu0 0
    %3974 = vmatmul.mubr.bf16.gmra.mxu0 %v3884
    %v3975 = vpop.f32.mrf.mxu0
    %v3976 = vadd.f32 %v3817, %v3975
    %v3977 = vpop.f32.mrf.mxu0
    %v3978 = vpop.f32.mrf.mxu0
    %v3979 = vadd.f32 %v3818, %v3978
    %v3980 = vpop.f32.mrf.mxu0
    %3981 = vmatprep.mubr.bf16.mxu0 0
    %3982 = vmatmul.mubr.bf16.gmra.mxu0 %v3887
    %v3983 = vpop.f32.mrf.mxu0
    %v3984 = vadd.f32 %v3819, %v3983
    %v3985 = vpop.f32.mrf.mxu0
    %v3986 = vpop.f32.mrf.mxu0
    %v3987 = vadd.f32 %v3820, %v3986
    %v3988 = vpop.f32.mrf.mxu0
    %3989 = vmatprep.mubr.bf16.mxu0 0
    %3990 = vmatmul.mubr.bf16.gmra.mxu0 %v3890
    %v3991 = vpop.f32.mrf.mxu0
    %v3992 = vadd.f32 %v3821, %v3991
    %v3993 = vpop.f32.mrf.mxu0
    %v3994 = vpop.f32.mrf.mxu0
    %v3995 = vadd.f32 %v3822, %v3994
    %v3996 = vpop.f32.mrf.mxu0
    %3997 = vmatprep.mubr.bf16.mxu0 0
    %3998 = vmatmul.mubr.bf16.gmra.mxu0 %v3893
    %v3999 = vpop.f32.mrf.mxu0
    %v4000 = vadd.f32 %v3823, %v3999
    %v4001 = vpop.f32.mrf.mxu0
    %v4002 = vpop.f32.mrf.mxu0
    %v4003 = vadd.f32 %v3824, %v4002
    %v4004 = vpop.f32.mrf.mxu0
    %4005 = vmatprep.mubr.bf16.mxu0 0
    %4006 = vmatmul.mubr.bf16.gmra.mxu0 %v3896
    %v4007 = vpop.f32.mrf.mxu0
    %v4008 = vadd.f32 %v3825, %v4007
    %v4009 = vpop.f32.mrf.mxu0
    %v4010 = vpop.f32.mrf.mxu0
    %v4011 = vadd.f32 %v3826, %v4010
    %v4012 = vpop.f32.mrf.mxu0
    %4013 = vmatprep.mubr.bf16.mxu0 0
    %4014 = vmatmul.mubr.bf16.gmra.mxu0 %v3899
    %v4015 = vpop.f32.mrf.mxu0
    %v4016 = vadd.f32 %v3827, %v4015
    %v4017 = vpop.f32.mrf.mxu0
    %v4018 = vpop.f32.mrf.mxu0
    %v4019 = vadd.f32 %v3828, %v4018
    %v4020 = vpop.f32.mrf.mxu0
    %4021 = vdwg.mxu0
    %4022 = vmax.xlane.f32.xlu0 %v3960
    %v4023 = vpop.xlane.xlu0 %4022
    %4024 = vmax.xlane.f32.xlu0 %v3963
    %v4025 = vpop.xlane.xlu0 %4024
    %4026 = vmax.xlane.f32.xlu0 %v3968
    %v4027 = vpop.xlane.xlu0 %4026
    %4028 = vmax.xlane.f32.xlu0 %v3971
    %v4029 = vpop.xlane.xlu0 %4028
    %4030 = vmax.xlane.f32.xlu0 %v3976
    %v4031 = vpop.xlane.xlu0 %4030
    %4032 = vmax.xlane.f32.xlu0 %v3979
    %v4033 = vpop.xlane.xlu0 %4032
    %4034 = vmax.xlane.f32.xlu0 %v3984
    %v4035 = vpop.xlane.xlu0 %4034
    %4036 = vmax.xlane.f32.xlu0 %v3987
    %v4037 = vpop.xlane.xlu0 %4036
    %4038 = vmax.xlane.f32.xlu0 %v3992
    %v4039 = vpop.xlane.xlu0 %4038
    %4040 = vmax.xlane.f32.xlu0 %v3995
    %v4041 = vpop.xlane.xlu0 %4040
    %4042 = vmax.xlane.f32.xlu0 %v4000
    %v4043 = vpop.xlane.xlu0 %4042
    %4044 = vmax.xlane.f32.xlu0 %v4003
    %v4045 = vpop.xlane.xlu0 %4044
    %4046 = vmax.xlane.f32.xlu0 %v4008
    %v4047 = vpop.xlane.xlu0 %4046
    %4048 = vmax.xlane.f32.xlu0 %v4011
    %v4049 = vpop.xlane.xlu0 %4048
    %4050 = vmax.xlane.f32.xlu0 %v4016
    %v4051 = vpop.xlane.xlu0 %4050
    %4052 = vmax.xlane.f32.xlu0 %v4019
    %v4053 = vpop.xlane.xlu0 %4052
    %v4054 = vsub.f32 %v3960, %v4023
    %v4055 = vsub.f32 %v3963, %v4025
    %v4056 = vsub.f32 %v3968, %v4027
    %v4057 = vsub.f32 %v3971, %v4029
    %v4058 = vsub.f32 %v3976, %v4031
    %v4059 = vsub.f32 %v3979, %v4033
    %v4060 = vsub.f32 %v3984, %v4035
    %v4061 = vsub.f32 %v3987, %v4037
    %v4062 = vsub.f32 %v3992, %v4039
    %v4063 = vsub.f32 %v3995, %v4041
    %v4064 = vsub.f32 %v4000, %v4043
    %v4065 = vsub.f32 %v4003, %v4045
    %v4066 = vsub.f32 %v4008, %v4047
    %v4067 = vsub.f32 %v4011, %v4049
    %v4068 = vsub.f32 %v4016, %v4051
    %v4069 = vsub.f32 %v4019, %v4053
    %v4070 = vmul.f32 %v4054, 1.442695
    %v4071 = vpow.pop %v4070
    %v4072 = vmul.f32 %v4055, 1.442695
    %v4073 = vpow.pop %v4072
    %v4074 = vmul.f32 %v4056, 1.442695
    %v4075 = vpow.pop %v4074
    %v4076 = vmul.f32 %v4057, 1.442695
    %v4077 = vpow.pop %v4076
    %v4078 = vmul.f32 %v4058, 1.442695
    %v4079 = vpow.pop %v4078
    %v4080 = vmul.f32 %v4059, 1.442695
    %v4081 = vpow.pop %v4080
    %v4082 = vmul.f32 %v4060, 1.442695
    %v4083 = vpow.pop %v4082
    %v4084 = vmul.f32 %v4061, 1.442695
    %v4085 = vpow.pop %v4084
    %v4086 = vmul.f32 %v4062, 1.442695
    %v4087 = vpow.pop %v4086
    %v4088 = vmul.f32 %v4063, 1.442695
    %v4089 = vpow.pop %v4088
    %v4090 = vmul.f32 %v4064, 1.442695
    %v4091 = vpow.pop %v4090
    %v4092 = vmul.f32 %v4065, 1.442695
    %v4093 = vpow.pop %v4092
    %v4094 = vmul.f32 %v4066, 1.442695
    %v4095 = vpow.pop %v4094
    %v4096 = vmul.f32 %v4067, 1.442695
    %v4097 = vpow.pop %v4096
    %v4098 = vmul.f32 %v4068, 1.442695
    %v4099 = vpow.pop %v4098
    %v4100 = vmul.f32 %v4069, 1.442695
    %v4101 = vpow.pop %v4100
    %4102 = vadd.xlane.f32.xlu0 %v4071
    %v4103 = vpop.xlane.xlu0 %4102
    %4104 = vadd.xlane.f32.xlu0 %v4073
    %v4105 = vpop.xlane.xlu0 %4104
    %4106 = vadd.xlane.f32.xlu0 %v4075
    %v4107 = vpop.xlane.xlu0 %4106
    %4108 = vadd.xlane.f32.xlu0 %v4077
    %v4109 = vpop.xlane.xlu0 %4108
    %4110 = vadd.xlane.f32.xlu0 %v4079
    %v4111 = vpop.xlane.xlu0 %4110
    %4112 = vadd.xlane.f32.xlu0 %v4081
    %v4113 = vpop.xlane.xlu0 %4112
    %4114 = vadd.xlane.f32.xlu0 %v4083
    %v4115 = vpop.xlane.xlu0 %4114
    %4116 = vadd.xlane.f32.xlu0 %v4085
    %v4117 = vpop.xlane.xlu0 %4116
    %4118 = vadd.xlane.f32.xlu0 %v4087
    %v4119 = vpop.xlane.xlu0 %4118
    %4120 = vadd.xlane.f32.xlu0 %v4089
    %v4121 = vpop.xlane.xlu0 %4120
    %4122 = vadd.xlane.f32.xlu0 %v4091
    %v4123 = vpop.xlane.xlu0 %4122
    %4124 = vadd.xlane.f32.xlu0 %v4093
    %v4125 = vpop.xlane.xlu0 %4124
    %4126 = vadd.xlane.f32.xlu0 %v4095
    %v4127 = vpop.xlane.xlu0 %4126
    %4128 = vadd.xlane.f32.xlu0 %v4097
    %v4129 = vpop.xlane.xlu0 %4128
    %4130 = vadd.xlane.f32.xlu0 %v4099
    %v4131 = vpop.xlane.xlu0 %4130
    %4132 = vadd.xlane.f32.xlu0 %v4101
    %v4133 = vpop.xlane.xlu0 %4132
    %v4134 = vrcp.pop %v4103
    %v4135 = vrcp.pop %v4105
    %v4136 = vrcp.pop %v4107
    %v4137 = vrcp.pop %v4109
    %v4138 = vrcp.pop %v4111
    %v4139 = vrcp.pop %v4113
    %v4140 = vrcp.pop %v4115
    %v4141 = vrcp.pop %v4117
    %v4142 = vrcp.pop %v4119
    %v4143 = vrcp.pop %v4121
    %v4144 = vrcp.pop %v4123
    %v4145 = vrcp.pop %v4125
    %v4146 = vrcp.pop %v4127
    %v4147 = vrcp.pop %v4129
    %v4148 = vrcp.pop %v4131
    %v4149 = vrcp.pop %v4133
    %v4150 = vmul.f32 %v4071, %v4134
    %v4151 = vmul.f32 %v4073, %v4135
    %v4152 = vmul.f32 %v4075, %v4136
    %v4153 = vmul.f32 %v4077, %v4137
    %v4154 = vmul.f32 %v4079, %v4138
    %v4155 = vmul.f32 %v4081, %v4139
    %v4156 = vmul.f32 %v4083, %v4140
    %v4157 = vmul.f32 %v4085, %v4141
    %v4158 = vmul.f32 %v4087, %v4142
    %v4159 = vmul.f32 %v4089, %v4143
    %v4160 = vmul.f32 %v4091, %v4144
    %v4161 = vmul.f32 %v4093, %v4145
    %v4162 = vmul.f32 %v4095, %v4146
    %v4163 = vmul.f32 %v4097, %v4147
    %v4164 = vmul.f32 %v4099, %v4148
    %v4165 = vmul.f32 %v4101, %v4149
    %v4166 = vpack.c.bf16 %v4151, %v4150
    %v4167 = vpack.c.bf16 %v4153, %v4152
    %v4168 = vpack.c.bf16 %v4155, %v4154
    %v4169 = vpack.c.bf16 %v4157, %v4156
    %v4170 = vpack.c.bf16 %v4159, %v4158
    %v4171 = vpack.c.bf16 %v4161, %v4160
    %v4172 = vpack.c.bf16 %v4163, %v4162
    %v4173 = vpack.c.bf16 %v4165, %v4164
    %4182 = vrot.lane.b32.xlu0 %v3805, 64
    %v4183 = vpop.permute.xlu0 %4182
    %4184 = vrot.lane.b32.xlu0 %v3806, 64
    %v4185 = vpop.permute.xlu0 %4184
    %4186 = vrot.lane.b32.xlu0 %v3807, 64
    %v4187 = vpop.permute.xlu0 %4186
    %4188 = vrot.lane.b32.xlu0 %v3808, 64
    %v4189 = vpop.permute.xlu0 %4188
    %4190 = vrot.lane.b32.xlu0 %v3809, 64
    %v4191 = vpop.permute.xlu0 %4190
    %4192 = vrot.lane.b32.xlu0 %v3810, 64
    %v4193 = vpop.permute.xlu0 %4192
    %4194 = vrot.lane.b32.xlu0 %v3811, 64
    %v4195 = vpop.permute.xlu0 %4194
    %4196 = vrot.lane.b32.xlu0 %v3812, 64
    %v4197 = vpop.permute.xlu0 %4196
    %4206 = vmatprep.subr.bf16.mxu0 0
    %4207 = vmatpush1.bf16.msra.mxu0 %v4197
    %4208 = vmatprep.subr.bf16.mxu0 0
    %4209 = vmatpush1.bf16.msra.mxu0 %v4195
    %4210 = vmatprep.subr.bf16.mxu0 0
    %4211 = vmatpush1.bf16.msra.mxu0 %v4193
    %4212 = vmatprep.subr.bf16.mxu0 0
    %4213 = vmatpush1.bf16.msra.mxu0 %v4191
    %4214 = vmatprep.subr.bf16.mxu0 0
    %4215 = vmatpush1.bf16.msra.mxu0 %v4189
    %4216 = vmatprep.subr.bf16.mxu0 0
    %4217 = vmatpush1.bf16.msra.mxu0 %v4187
    %4218 = vmatprep.subr.bf16.mxu0 0
    %4219 = vmatpush1.bf16.msra.mxu0 %v4185
    %4220 = vmatprep.subr.bf16.mxu0 0
    %4221 = vmatpush1.bf16.msra.mxu0 %v4183
    %4222 = vmatprep.subr.bf16.mxu0 0
    %4223 = vmatpush2.bf16.msra.mxu0 0
    %4224 = vmatprep.subr.bf16.mxu0 0
    %4225 = vmatpush2.bf16.msra.mxu0 0
    %4226 = vmatprep.subr.bf16.mxu0 0
    %4227 = vmatpush2.bf16.msra.mxu0 0
    %4228 = vmatprep.subr.bf16.mxu0 0
    %4229 = vmatpush2.bf16.msra.mxu0 0
    %4230 = vmatprep.subr.bf16.mxu0 0
    %4231 = vmatpush2.bf16.msra.mxu0 0
    %4232 = vmatprep.subr.bf16.mxu0 0
    %4233 = vmatpush2.bf16.msra.mxu0 0
    %4234 = vmatprep.subr.bf16.mxu0 0
    %4235 = vmatpush2.bf16.msra.mxu0 0
    %4236 = vmatprep.subr.bf16.mxu0 0
    %4237 = vmatpush2.bf16.msra.mxu0 0
    %4238 = vmatprep.mubr.bf16.mxu0 0
    %4239 = vmatmul.mubr.bf16.gmra.mxu0 %v4166
    %v4240 = vpop.f32.mrf.mxu0
    %v4241 = vadd.f32 0.0, %v4240
    %v4242 = vpop.f32.mrf.mxu0
    %v4243 = vpop.f32.mrf.mxu0
    %v4244 = vadd.f32 0.0, %v4243
    %v4245 = vpop.f32.mrf.mxu0
    %4246 = vmatprep.mubr.bf16.mxu0 0
    %4247 = vmatmul.mubr.bf16.gmra.mxu0 %v4167
    %v4248 = vpop.f32.mrf.mxu0
    %v4249 = vadd.f32 0.0, %v4248
    %v4250 = vpop.f32.mrf.mxu0
    %v4251 = vpop.f32.mrf.mxu0
    %v4252 = vadd.f32 0.0, %v4251
    %v4253 = vpop.f32.mrf.mxu0
    %4254 = vmatprep.mubr.bf16.mxu0 0
    %4255 = vmatmul.mubr.bf16.gmra.mxu0 %v4168
    %v4256 = vpop.f32.mrf.mxu0
    %v4257 = vadd.f32 0.0, %v4256
    %v4258 = vpop.f32.mrf.mxu0
    %v4259 = vpop.f32.mrf.mxu0
    %v4260 = vadd.f32 0.0, %v4259
    %v4261 = vpop.f32.mrf.mxu0
    %4262 = vmatprep.mubr.bf16.mxu0 0
    %4263 = vmatmul.mubr.bf16.gmra.mxu0 %v4169
    %v4264 = vpop.f32.mrf.mxu0
    %v4265 = vadd.f32 0.0, %v4264
    %v4266 = vpop.f32.mrf.mxu0
    %v4267 = vpop.f32.mrf.mxu0
    %v4268 = vadd.f32 0.0, %v4267
    %v4269 = vpop.f32.mrf.mxu0
    %4270 = vmatprep.mubr.bf16.mxu0 0
    %4271 = vmatmul.mubr.bf16.gmra.mxu0 %v4170
    %v4272 = vpop.f32.mrf.mxu0
    %v4273 = vadd.f32 0.0, %v4272
    %v4274 = vpop.f32.mrf.mxu0
    %v4275 = vpop.f32.mrf.mxu0
    %v4276 = vadd.f32 0.0, %v4275
    %v4277 = vpop.f32.mrf.mxu0
    %4278 = vmatprep.mubr.bf16.mxu0 0
    %4279 = vmatmul.mubr.bf16.gmra.mxu0 %v4171
    %v4280 = vpop.f32.mrf.mxu0
    %v4281 = vadd.f32 0.0, %v4280
    %v4282 = vpop.f32.mrf.mxu0
    %v4283 = vpop.f32.mrf.mxu0
    %v4284 = vadd.f32 0.0, %v4283
    %v4285 = vpop.f32.mrf.mxu0
    %4286 = vmatprep.mubr.bf16.mxu0 0
    %4287 = vmatmul.mubr.bf16.gmra.mxu0 %v4172
    %v4288 = vpop.f32.mrf.mxu0
    %v4289 = vadd.f32 0.0, %v4288
    %v4290 = vpop.f32.mrf.mxu0
    %v4291 = vpop.f32.mrf.mxu0
    %v4292 = vadd.f32 0.0, %v4291
    %v4293 = vpop.f32.mrf.mxu0
    %4294 = vmatprep.mubr.bf16.mxu0 0
    %4295 = vmatmul.mubr.bf16.gmra.mxu0 %v4173
    %v4296 = vpop.f32.mrf.mxu0
    %v4297 = vadd.f32 0.0, %v4296
    %v4298 = vpop.f32.mrf.mxu0
    %v4299 = vpop.f32.mrf.mxu0
    %v4300 = vadd.f32 0.0, %v4299
    %v4301 = vpop.f32.mrf.mxu0
    %4302 = vdwg.mxu0
    %4319 = vrot.lane.b32.xlu0 %v4241, 64
    %v4320 = vpop.permute.xlu0 %4319
    %4321 = vrot.lane.b32.xlu0 %v4244, 64
    %v4322 = vpop.permute.xlu0 %4321
    %4323 = vrot.lane.b32.xlu0 %v4249, 64
    %v4324 = vpop.permute.xlu0 %4323
    %4325 = vrot.lane.b32.xlu0 %v4252, 64
    %v4326 = vpop.permute.xlu0 %4325
    %4327 = vrot.lane.b32.xlu0 %v4257, 64
    %v4328 = vpop.permute.xlu0 %4327
    %4329 = vrot.lane.b32.xlu0 %v4260, 64
    %v4330 = vpop.permute.xlu0 %4329
    %4331 = vrot.lane.b32.xlu0 %v4265, 64
    %v4332 = vpop.permute.xlu0 %4331
    %4333 = vrot.lane.b32.xlu0 %v4268, 64
    %v4334 = vpop.permute.xlu0 %4333
    %4335 = vrot.lane.b32.xlu0 %v4273, 64
    %v4336 = vpop.permute.xlu0 %4335
    %4337 = vrot.lane.b32.xlu0 %v4276, 64
    %v4338 = vpop.permute.xlu0 %4337
    %4339 = vrot.lane.b32.xlu0 %v4281, 64
    %v4340 = vpop.permute.xlu0 %4339
    %4341 = vrot.lane.b32.xlu0 %v4284, 64
    %v4342 = vpop.permute.xlu0 %4341
    %4343 = vrot.lane.b32.xlu0 %v4289, 64
    %v4344 = vpop.permute.xlu0 %4343
    %4345 = vrot.lane.b32.xlu0 %v4292, 64
    %v4346 = vpop.permute.xlu0 %4345
    %4347 = vrot.lane.b32.xlu0 %v4297, 64
    %v4348 = vpop.permute.xlu0 %4347
    %4349 = vrot.lane.b32.xlu0 %v4300, 64
    %v4350 = vpop.permute.xlu0 %4349
    %vm4367 = vcmask 654848
    %4368 = vst.msk [vmem:[#allocation3] sm:$0xff] %vm4367, %v4320
    %4369 = vst.msk [vmem:[#allocation3 + $0x8] sm:$0xff] %vm4367, %v4322
    %4370 = vst.msk [vmem:[#allocation3 + $0x10] sm:$0xff] %vm4367, %v4324
    %4371 = vst.msk [vmem:[#allocation3 + $0x18] sm:$0xff] %vm4367, %v4326
    %4372 = vst.msk [vmem:[#allocation3 + $0x20] sm:$0xff] %vm4367, %v4328
    %4373 = vst.msk [vmem:[#allocation3 + $0x28] sm:$0xff] %vm4367, %v4330
    %4374 = vst.msk [vmem:[#allocation3 + $0x30] sm:$0xff] %vm4367, %v4332
    %4375 = vst.msk [vmem:[#allocation3 + $0x38] sm:$0xff] %vm4367, %v4334
    %4376 = vst.msk [vmem:[#allocation3 + $0x40] sm:$0xff] %vm4367, %v4336
    %4377 = vst.msk [vmem:[#allocation3 + $0x48] sm:$0xff] %vm4367, %v4338
    %4378 = vst.msk [vmem:[#allocation3 + $0x50] sm:$0xff] %vm4367, %v4340
    %4379 = vst.msk [vmem:[#allocation3 + $0x58] sm:$0xff] %vm4367, %v4342
    %4380 = vst.msk [vmem:[#allocation3 + $0x60] sm:$0xff] %vm4367, %v4344
    %4381 = vst.msk [vmem:[#allocation3 + $0x68] sm:$0xff] %vm4367, %v4346
    %4382 = vst.msk [vmem:[#allocation3 + $0x70] sm:$0xff] %vm4367, %v4348
    %4383 = vst.msk [vmem:[#allocation3 + $0x78] sm:$0xff] %vm4367, %v4350
    %v4384 = vld [vmem:[#allocation2] sm:$0xff]
    %v4385 = vld [vmem:[#allocation2 + $0x18] sm:$0xff]
    %v4386 = vld [vmem:[#allocation2 + $0x30] sm:$0xff]
    %v4387 = vld [vmem:[#allocation2 + $0x48] sm:$0xff]
    %v4388 = vld [vmem:[#allocation2 + $0x60] sm:$0xff]
    %v4389 = vld [vmem:[#allocation2 + $0x78] sm:$0xff]
    %v4390 = vld [vmem:[#allocation2 + $0x90] sm:$0xff]
    %v4391 = vld [vmem:[#allocation2 + $0xa8] sm:$0xff]
    %v4392 = vld [vmem:[#allocation2 + $0xc0] sm:$0xff]
    %v4393 = vld [vmem:[#allocation2 + $0xd8] sm:$0xff]
    %v4394 = vld [vmem:[#allocation2 + $0xf0] sm:$0xff]
    %v4395 = vld [vmem:[#allocation2 + $0x108] sm:$0xff]
    %v4396 = vld [vmem:[#allocation2 + $0x120] sm:$0xff]
    %v4397 = vld [vmem:[#allocation2 + $0x138] sm:$0xff]
    %v4398 = vld [vmem:[#allocation2 + $0x150] sm:$0xff]
    %v4399 = vld [vmem:[#allocation2 + $0x168] sm:$0xff]
    %v4400 = vpack.c.bf16 %v4385, %v4384
    %v4401 = vpack.c.bf16 %v4387, %v4386
    %v4402 = vpack.c.bf16 %v4389, %v4388
    %v4403 = vpack.c.bf16 %v4391, %v4390
    %v4404 = vpack.c.bf16 %v4393, %v4392
    %v4405 = vpack.c.bf16 %v4395, %v4394
    %v4406 = vpack.c.bf16 %v4397, %v4396
    %v4407 = vpack.c.bf16 %v4399, %v4398
    %v4408 = vld [vmem:[#allocation2 + $0x8] sm:$0xff]
    %v4409 = vld [vmem:[#allocation2 + $0x20] sm:$0xff]
    %v4410 = vld [vmem:[#allocation2 + $0x38] sm:$0xff]
    %v4411 = vld [vmem:[#allocation2 + $0x50] sm:$0xff]
    %v4412 = vld [vmem:[#allocation2 + $0x68] sm:$0xff]
    %v4413 = vld [vmem:[#allocation2 + $0x80] sm:$0xff]
    %v4414 = vld [vmem:[#allocation2 + $0x98] sm:$0xff]
    %v4415 = vld [vmem:[#allocation2 + $0xb0] sm:$0xff]
    %v4416 = vld [vmem:[#allocation2 + $0xc8] sm:$0xff]
    %v4417 = vld [vmem:[#allocation2 + $0xe0] sm:$0xff]
    %v4418 = vld [vmem:[#allocation2 + $0xf8] sm:$0xff]
    %v4419 = vld [vmem:[#allocation2 + $0x110] sm:$0xff]
    %v4420 = vld [vmem:[#allocation2 + $0x128] sm:$0xff]
    %v4421 = vld [vmem:[#allocation2 + $0x140] sm:$0xff]
    %v4422 = vld [vmem:[#allocation2 + $0x158] sm:$0xff]
    %v4423 = vld [vmem:[#allocation2 + $0x170] sm:$0xff]
    %v4424 = vpack.c.bf16 %v4409, %v4408
    %v4425 = vpack.c.bf16 %v4411, %v4410
    %v4426 = vpack.c.bf16 %v4413, %v4412
    %v4427 = vpack.c.bf16 %v4415, %v4414
    %v4428 = vpack.c.bf16 %v4417, %v4416
    %v4429 = vpack.c.bf16 %v4419, %v4418
    %v4430 = vpack.c.bf16 %v4421, %v4420
    %v4431 = vpack.c.bf16 %v4423, %v4422
    %v4432 = vld [vmem:[#allocation2 + $0x10] sm:$0xff]
    %v4433 = vld [vmem:[#allocation2 + $0x28] sm:$0xff]
    %v4434 = vld [vmem:[#allocation2 + $0x40] sm:$0xff]
    %v4435 = vld [vmem:[#allocation2 + $0x58] sm:$0xff]
    %v4436 = vld [vmem:[#allocation2 + $0x70] sm:$0xff]
    %v4437 = vld [vmem:[#allocation2 + $0x88] sm:$0xff]
    %v4438 = vld [vmem:[#allocation2 + $0xa0] sm:$0xff]
    %v4439 = vld [vmem:[#allocation2 + $0xb8] sm:$0xff]
    %v4440 = vld [vmem:[#allocation2 + $0xd0] sm:$0xff]
    %v4441 = vld [vmem:[#allocation2 + $0xe8] sm:$0xff]
    %v4442 = vld [vmem:[#allocation2 + $0x100] sm:$0xff]
    %v4443 = vld [vmem:[#allocation2 + $0x118] sm:$0xff]
    %v4444 = vld [vmem:[#allocation2 + $0x130] sm:$0xff]
    %v4445 = vld [vmem:[#allocation2 + $0x148] sm:$0xff]
    %v4446 = vld [vmem:[#allocation2 + $0x160] sm:$0xff]
    %v4447 = vld [vmem:[#allocation2 + $0x178] sm:$0xff]
    %v4448 = vpack.c.bf16 %v4433, %v4432
    %v4449 = vpack.c.bf16 %v4435, %v4434
    %v4450 = vpack.c.bf16 %v4437, %v4436
    %v4451 = vpack.c.bf16 %v4439, %v4438
    %v4452 = vpack.c.bf16 %v4441, %v4440
    %v4453 = vpack.c.bf16 %v4443, %v4442
    %v4454 = vpack.c.bf16 %v4445, %v4444
    %v4455 = vpack.c.bf16 %v4447, %v4446
    %v4456 = vld [vmem:[%s7] sm:$0xff]
    %v4457 = vld [vmem:[%s7 + $0x8] sm:$0xff]
    %v4458 = vld [vmem:[%s7 + $0x10] sm:$0xff]
    %v4459 = vld [vmem:[%s7 + $0x18] sm:$0xff]
    %v4460 = vld [vmem:[%s7 + $0x20] sm:$0xff]
    %v4461 = vld [vmem:[%s7 + $0x28] sm:$0xff]
    %v4462 = vld [vmem:[%s7 + $0x30] sm:$0xff]
    %v4463 = vld [vmem:[%s7 + $0x38] sm:$0xff]
    %v4464 = vld [vmem:[%s7 + $0x40] sm:$0xff]
    %v4465 = vld [vmem:[%s7 + $0x48] sm:$0xff]
    %v4466 = vld [vmem:[%s7 + $0x50] sm:$0xff]
    %v4467 = vld [vmem:[%s7 + $0x58] sm:$0xff]
    %v4468 = vld [vmem:[%s7 + $0x60] sm:$0xff]
    %v4469 = vld [vmem:[%s7 + $0x68] sm:$0xff]
    %v4470 = vld [vmem:[%s7 + $0x70] sm:$0xff]
    %v4471 = vld [vmem:[%s7 + $0x78] sm:$0xff]
    %4480 = vrot.lane.b32.xlu0 %v4400, 48
    %v4481 = vpop.permute.xlu0 %4480
    %4482 = vrot.lane.b32.xlu0 %v4401, 48
    %v4483 = vpop.permute.xlu0 %4482
    %4484 = vrot.lane.b32.xlu0 %v4402, 48
    %v4485 = vpop.permute.xlu0 %4484
    %4486 = vrot.lane.b32.xlu0 %v4403, 48
    %v4487 = vpop.permute.xlu0 %4486
    %4488 = vrot.lane.b32.xlu0 %v4404, 48
    %v4489 = vpop.permute.xlu0 %4488
    %4490 = vrot.lane.b32.xlu0 %v4405, 48
    %v4491 = vpop.permute.xlu0 %4490
    %4492 = vrot.lane.b32.xlu0 %v4406, 48
    %v4493 = vpop.permute.xlu0 %4492
    %4494 = vrot.lane.b32.xlu0 %v4407, 48
    %v4495 = vpop.permute.xlu0 %4494
    %4504 = vrot.lane.b32.xlu0 %v4424, 48
    %v4505 = vpop.permute.xlu0 %4504
    %4506 = vrot.lane.b32.xlu0 %v4425, 48
    %v4507 = vpop.permute.xlu0 %4506
    %4508 = vrot.lane.b32.xlu0 %v4426, 48
    %v4509 = vpop.permute.xlu0 %4508
    %4510 = vrot.lane.b32.xlu0 %v4427, 48
    %v4511 = vpop.permute.xlu0 %4510
    %4512 = vrot.lane.b32.xlu0 %v4428, 48
    %v4513 = vpop.permute.xlu0 %4512
    %4514 = vrot.lane.b32.xlu0 %v4429, 48
    %v4515 = vpop.permute.xlu0 %4514
    %4516 = vrot.lane.b32.xlu0 %v4430, 48
    %v4517 = vpop.permute.xlu0 %4516
    %4518 = vrot.lane.b32.xlu0 %v4431, 48
    %v4519 = vpop.permute.xlu0 %4518
    %v4521 = vsel %vm129, %v4481, 0
    %v4524 = vsel %vm129, %v4483, 0
    %v4527 = vsel %vm129, %v4485, 0
    %v4530 = vsel %vm129, %v4487, 0
    %v4533 = vsel %vm129, %v4489, 0
    %v4536 = vsel %vm129, %v4491, 0
    %v4539 = vsel %vm129, %v4493, 0
    %v4542 = vsel %vm129, %v4495, 0
    %v4545 = vsel %vm129, %v4505, 0
    %v4548 = vsel %vm129, %v4507, 0
    %v4551 = vsel %vm129, %v4509, 0
    %v4554 = vsel %vm129, %v4511, 0
    %v4557 = vsel %vm129, %v4513, 0
    %v4560 = vsel %vm129, %v4515, 0
    %v4563 = vsel %vm129, %v4517, 0
    %v4566 = vsel %vm129, %v4519, 0
    %4568 = vmatprep.subr.bf16.mxu0 0
    %4569 = vmatpush1.bf16.xpose.msra.mxu0 %v4566
    %4570 = vmatprep.subr.bf16.mxu0 0
    %4571 = vmatpush1.bf16.xpose.msra.mxu0 %v4563
    %4572 = vmatprep.subr.bf16.mxu0 0
    %4573 = vmatpush1.bf16.xpose.msra.mxu0 %v4560
    %4574 = vmatprep.subr.bf16.mxu0 0
    %4575 = vmatpush1.bf16.xpose.msra.mxu0 %v4557
    %4576 = vmatprep.subr.bf16.mxu0 0
    %4577 = vmatpush1.bf16.xpose.msra.mxu0 %v4554
    %4578 = vmatprep.subr.bf16.mxu0 0
    %4579 = vmatpush1.bf16.xpose.msra.mxu0 %v4551
    %4580 = vmatprep.subr.bf16.mxu0 0
    %4581 = vmatpush1.bf16.xpose.msra.mxu0 %v4548
    %4582 = vmatprep.subr.bf16.mxu0 0
    %4583 = vmatpush1.bf16.xpose.msra.mxu0 %v4545
    %4584 = vmatprep.subr.bf16.mxu0 0
    %4585 = vmatpush2.bf16.xpose.msra.mxu0 0
    %4586 = vmatprep.subr.bf16.mxu0 0
    %4587 = vmatpush2.bf16.xpose.msra.mxu0 0
    %4588 = vmatprep.subr.bf16.mxu0 0
    %4589 = vmatpush2.bf16.xpose.msra.mxu0 0
    %4590 = vmatprep.subr.bf16.mxu0 0
    %4591 = vmatpush2.bf16.xpose.msra.mxu0 0
    %4592 = vmatprep.subr.bf16.mxu0 0
    %4593 = vmatpush2.bf16.xpose.msra.mxu0 0
    %4594 = vmatprep.subr.bf16.mxu0 0
    %4595 = vmatpush2.bf16.xpose.msra.mxu0 0
    %4596 = vmatprep.subr.bf16.mxu0 0
    %4597 = vmatpush2.bf16.xpose.msra.mxu0 0
    %4598 = vmatprep.subr.bf16.mxu0 0
    %4599 = vmatpush2.bf16.xpose.msra.mxu0 0
    %4600 = vmatprep.mubr.bf16.mxu0 0
    %4601 = vmatmul.mubr.bf16.gmra.mxu0 %v4521
    %v4602 = vpop.f32.mrf.mxu0
    %v4603 = vadd.f32 %v4456, %v4602
    %v4604 = vpop.f32.mrf.mxu0
    %v4605 = vpop.f32.mrf.mxu0
    %v4606 = vadd.f32 %v4457, %v4605
    %v4607 = vpop.f32.mrf.mxu0
    %4608 = vmatprep.mubr.bf16.mxu0 0
    %4609 = vmatmul.mubr.bf16.gmra.mxu0 %v4524
    %v4610 = vpop.f32.mrf.mxu0
    %v4611 = vadd.f32 %v4458, %v4610
    %v4612 = vpop.f32.mrf.mxu0
    %v4613 = vpop.f32.mrf.mxu0
    %v4614 = vadd.f32 %v4459, %v4613
    %v4615 = vpop.f32.mrf.mxu0
    %4616 = vmatprep.mubr.bf16.mxu0 0
    %4617 = vmatmul.mubr.bf16.gmra.mxu0 %v4527
    %v4618 = vpop.f32.mrf.mxu0
    %v4619 = vadd.f32 %v4460, %v4618
    %v4620 = vpop.f32.mrf.mxu0
    %v4621 = vpop.f32.mrf.mxu0
    %v4622 = vadd.f32 %v4461, %v4621
    %v4623 = vpop.f32.mrf.mxu0
    %4624 = vmatprep.mubr.bf16.mxu0 0
    %4625 = vmatmul.mubr.bf16.gmra.mxu0 %v4530
    %v4626 = vpop.f32.mrf.mxu0
    %v4627 = vadd.f32 %v4462, %v4626
    %v4628 = vpop.f32.mrf.mxu0
    %v4629 = vpop.f32.mrf.mxu0
    %v4630 = vadd.f32 %v4463, %v4629
    %v4631 = vpop.f32.mrf.mxu0
    %4632 = vmatprep.mubr.bf16.mxu0 0
    %4633 = vmatmul.mubr.bf16.gmra.mxu0 %v4533
    %v4634 = vpop.f32.mrf.mxu0
    %v4635 = vadd.f32 %v4464, %v4634
    %v4636 = vpop.f32.mrf.mxu0
    %v4637 = vpop.f32.mrf.mxu0
    %v4638 = vadd.f32 %v4465, %v4637
    %v4639 = vpop.f32.mrf.mxu0
    %4640 = vmatprep.mubr.bf16.mxu0 0
    %4641 = vmatmul.mubr.bf16.gmra.mxu0 %v4536
    %v4642 = vpop.f32.mrf.mxu0
    %v4643 = vadd.f32 %v4466, %v4642
    %v4644 = vpop.f32.mrf.mxu0
    %v4645 = vpop.f32.mrf.mxu0
    %v4646 = vadd.f32 %v4467, %v4645
    %v4647 = vpop.f32.mrf.mxu0
    %4648 = vmatprep.mubr.bf16.mxu0 0
    %4649 = vmatmul.mubr.bf16.gmra.mxu0 %v4539
    %v4650 = vpop.f32.mrf.mxu0
    %v4651 = vadd.f32 %v4468, %v4650
    %v4652 = vpop.f32.mrf.mxu0
    %v4653 = vpop.f32.mrf.mxu0
    %v4654 = vadd.f32 %v4469, %v4653
    %v4655 = vpop.f32.mrf.mxu0
    %4656 = vmatprep.mubr.bf16.mxu0 0
    %4657 = vmatmul.mubr.bf16.gmra.mxu0 %v4542
    %v4658 = vpop.f32.mrf.mxu0
    %v4659 = vadd.f32 %v4470, %v4658
    %v4660 = vpop.f32.mrf.mxu0
    %v4661 = vpop.f32.mrf.mxu0
    %v4662 = vadd.f32 %v4471, %v4661
    %v4663 = vpop.f32.mrf.mxu0
    %4664 = vdwg.mxu0
    %4665 = vmax.xlane.f32.xlu0 %v4603
    %v4666 = vpop.xlane.xlu0 %4665
    %4667 = vmax.xlane.f32.xlu0 %v4606
    %v4668 = vpop.xlane.xlu0 %4667
    %4669 = vmax.xlane.f32.xlu0 %v4611
    %v4670 = vpop.xlane.xlu0 %4669
    %4671 = vmax.xlane.f32.xlu0 %v4614
    %v4672 = vpop.xlane.xlu0 %4671
    %4673 = vmax.xlane.f32.xlu0 %v4619
    %v4674 = vpop.xlane.xlu0 %4673
    %4675 = vmax.xlane.f32.xlu0 %v4622
    %v4676 = vpop.xlane.xlu0 %4675
    %4677 = vmax.xlane.f32.xlu0 %v4627
    %v4678 = vpop.xlane.xlu0 %4677
    %4679 = vmax.xlane.f32.xlu0 %v4630
    %v4680 = vpop.xlane.xlu0 %4679
    %4681 = vmax.xlane.f32.xlu0 %v4635
    %v4682 = vpop.xlane.xlu0 %4681
    %4683 = vmax.xlane.f32.xlu0 %v4638
    %v4684 = vpop.xlane.xlu0 %4683
    %4685 = vmax.xlane.f32.xlu0 %v4643
    %v4686 = vpop.xlane.xlu0 %4685
    %4687 = vmax.xlane.f32.xlu0 %v4646
    %v4688 = vpop.xlane.xlu0 %4687
    %4689 = vmax.xlane.f32.xlu0 %v4651
    %v4690 = vpop.xlane.xlu0 %4689
    %4691 = vmax.xlane.f32.xlu0 %v4654
    %v4692 = vpop.xlane.xlu0 %4691
    %4693 = vmax.xlane.f32.xlu0 %v4659
    %v4694 = vpop.xlane.xlu0 %4693
    %4695 = vmax.xlane.f32.xlu0 %v4662
    %v4696 = vpop.xlane.xlu0 %4695
    %v4697 = vsub.f32 %v4603, %v4666
    %v4698 = vsub.f32 %v4606, %v4668
    %v4699 = vsub.f32 %v4611, %v4670
    %v4700 = vsub.f32 %v4614, %v4672
    %v4701 = vsub.f32 %v4619, %v4674
    %v4702 = vsub.f32 %v4622, %v4676
    %v4703 = vsub.f32 %v4627, %v4678
    %v4704 = vsub.f32 %v4630, %v4680
    %v4705 = vsub.f32 %v4635, %v4682
    %v4706 = vsub.f32 %v4638, %v4684
    %v4707 = vsub.f32 %v4643, %v4686
    %v4708 = vsub.f32 %v4646, %v4688
    %v4709 = vsub.f32 %v4651, %v4690
    %v4710 = vsub.f32 %v4654, %v4692
    %v4711 = vsub.f32 %v4659, %v4694
    %v4712 = vsub.f32 %v4662, %v4696
    %v4713 = vmul.f32 %v4697, 1.442695
    %v4714 = vpow.pop %v4713
    %v4715 = vmul.f32 %v4698, 1.442695
    %v4716 = vpow.pop %v4715
    %v4717 = vmul.f32 %v4699, 1.442695
    %v4718 = vpow.pop %v4717
    %v4719 = vmul.f32 %v4700, 1.442695
    %v4720 = vpow.pop %v4719
    %v4721 = vmul.f32 %v4701, 1.442695
    %v4722 = vpow.pop %v4721
    %v4723 = vmul.f32 %v4702, 1.442695
    %v4724 = vpow.pop %v4723
    %v4725 = vmul.f32 %v4703, 1.442695
    %v4726 = vpow.pop %v4725
    %v4727 = vmul.f32 %v4704, 1.442695
    %v4728 = vpow.pop %v4727
    %v4729 = vmul.f32 %v4705, 1.442695
    %v4730 = vpow.pop %v4729
    %v4731 = vmul.f32 %v4706, 1.442695
    %v4732 = vpow.pop %v4731
    %v4733 = vmul.f32 %v4707, 1.442695
    %v4734 = vpow.pop %v4733
    %v4735 = vmul.f32 %v4708, 1.442695
    %v4736 = vpow.pop %v4735
    %v4737 = vmul.f32 %v4709, 1.442695
    %v4738 = vpow.pop %v4737
    %v4739 = vmul.f32 %v4710, 1.442695
    %v4740 = vpow.pop %v4739
    %v4741 = vmul.f32 %v4711, 1.442695
    %v4742 = vpow.pop %v4741
    %v4743 = vmul.f32 %v4712, 1.442695
    %v4744 = vpow.pop %v4743
    %4745 = vadd.xlane.f32.xlu0 %v4714
    %v4746 = vpop.xlane.xlu0 %4745
    %4747 = vadd.xlane.f32.xlu0 %v4716
    %v4748 = vpop.xlane.xlu0 %4747
    %4749 = vadd.xlane.f32.xlu0 %v4718
    %v4750 = vpop.xlane.xlu0 %4749
    %4751 = vadd.xlane.f32.xlu0 %v4720
    %v4752 = vpop.xlane.xlu0 %4751
    %4753 = vadd.xlane.f32.xlu0 %v4722
    %v4754 = vpop.xlane.xlu0 %4753
    %4755 = vadd.xlane.f32.xlu0 %v4724
    %v4756 = vpop.xlane.xlu0 %4755
    %4757 = vadd.xlane.f32.xlu0 %v4726
    %v4758 = vpop.xlane.xlu0 %4757
    %4759 = vadd.xlane.f32.xlu0 %v4728
    %v4760 = vpop.xlane.xlu0 %4759
    %4761 = vadd.xlane.f32.xlu0 %v4730
    %v4762 = vpop.xlane.xlu0 %4761
    %4763 = vadd.xlane.f32.xlu0 %v4732
    %v4764 = vpop.xlane.xlu0 %4763
    %4765 = vadd.xlane.f32.xlu0 %v4734
    %v4766 = vpop.xlane.xlu0 %4765
    %4767 = vadd.xlane.f32.xlu0 %v4736
    %v4768 = vpop.xlane.xlu0 %4767
    %4769 = vadd.xlane.f32.xlu0 %v4738
    %v4770 = vpop.xlane.xlu0 %4769
    %4771 = vadd.xlane.f32.xlu0 %v4740
    %v4772 = vpop.xlane.xlu0 %4771
    %4773 = vadd.xlane.f32.xlu0 %v4742
    %v4774 = vpop.xlane.xlu0 %4773
    %4775 = vadd.xlane.f32.xlu0 %v4744
    %v4776 = vpop.xlane.xlu0 %4775
    %v4777 = vrcp.pop %v4746
    %v4778 = vrcp.pop %v4748
    %v4779 = vrcp.pop %v4750
    %v4780 = vrcp.pop %v4752
    %v4781 = vrcp.pop %v4754
    %v4782 = vrcp.pop %v4756
    %v4783 = vrcp.pop %v4758
    %v4784 = vrcp.pop %v4760
    %v4785 = vrcp.pop %v4762
    %v4786 = vrcp.pop %v4764
    %v4787 = vrcp.pop %v4766
    %v4788 = vrcp.pop %v4768
    %v4789 = vrcp.pop %v4770
    %v4790 = vrcp.pop %v4772
    %v4791 = vrcp.pop %v4774
    %v4792 = vrcp.pop %v4776
    %v4793 = vmul.f32 %v4714, %v4777
    %v4794 = vmul.f32 %v4716, %v4778
    %v4795 = vmul.f32 %v4718, %v4779
    %v4796 = vmul.f32 %v4720, %v4780
    %v4797 = vmul.f32 %v4722, %v4781
    %v4798 = vmul.f32 %v4724, %v4782
    %v4799 = vmul.f32 %v4726, %v4783
    %v4800 = vmul.f32 %v4728, %v4784
    %v4801 = vmul.f32 %v4730, %v4785
    %v4802 = vmul.f32 %v4732, %v4786
    %v4803 = vmul.f32 %v4734, %v4787
    %v4804 = vmul.f32 %v4736, %v4788
    %v4805 = vmul.f32 %v4738, %v4789
    %v4806 = vmul.f32 %v4740, %v4790
    %v4807 = vmul.f32 %v4742, %v4791
    %v4808 = vmul.f32 %v4744, %v4792
    %v4809 = vpack.c.bf16 %v4794, %v4793
    %v4810 = vpack.c.bf16 %v4796, %v4795
    %v4811 = vpack.c.bf16 %v4798, %v4797
    %v4812 = vpack.c.bf16 %v4800, %v4799
    %v4813 = vpack.c.bf16 %v4802, %v4801
    %v4814 = vpack.c.bf16 %v4804, %v4803
    %v4815 = vpack.c.bf16 %v4806, %v4805
    %v4816 = vpack.c.bf16 %v4808, %v4807
    %4825 = vrot.lane.b32.xlu0 %v4448, 48
    %v4826 = vpop.permute.xlu0 %4825
    %4827 = vrot.lane.b32.xlu0 %v4449, 48
    %v4828 = vpop.permute.xlu0 %4827
    %4829 = vrot.lane.b32.xlu0 %v4450, 48
    %v4830 = vpop.permute.xlu0 %4829
    %4831 = vrot.lane.b32.xlu0 %v4451, 48
    %v4832 = vpop.permute.xlu0 %4831
    %4833 = vrot.lane.b32.xlu0 %v4452, 48
    %v4834 = vpop.permute.xlu0 %4833
    %4835 = vrot.lane.b32.xlu0 %v4453, 48
    %v4836 = vpop.permute.xlu0 %4835
    %4837 = vrot.lane.b32.xlu0 %v4454, 48
    %v4838 = vpop.permute.xlu0 %4837
    %4839 = vrot.lane.b32.xlu0 %v4455, 48
    %v4840 = vpop.permute.xlu0 %4839
    %4849 = vmatprep.subr.bf16.mxu0 0
    %4850 = vmatpush1.bf16.msra.mxu0 %v4840
    %4851 = vmatprep.subr.bf16.mxu0 0
    %4852 = vmatpush1.bf16.msra.mxu0 %v4838
    %4853 = vmatprep.subr.bf16.mxu0 0
    %4854 = vmatpush1.bf16.msra.mxu0 %v4836
    %4855 = vmatprep.subr.bf16.mxu0 0
    %4856 = vmatpush1.bf16.msra.mxu0 %v4834
    %4857 = vmatprep.subr.bf16.mxu0 0
    %4858 = vmatpush1.bf16.msra.mxu0 %v4832
    %4859 = vmatprep.subr.bf16.mxu0 0
    %4860 = vmatpush1.bf16.msra.mxu0 %v4830
    %4861 = vmatprep.subr.bf16.mxu0 0
    %4862 = vmatpush1.bf16.msra.mxu0 %v4828
    %4863 = vmatprep.subr.bf16.mxu0 0
    %4864 = vmatpush1.bf16.msra.mxu0 %v4826
    %4865 = vmatprep.subr.bf16.mxu0 0
    %4866 = vmatpush2.bf16.msra.mxu0 0
    %4867 = vmatprep.subr.bf16.mxu0 0
    %4868 = vmatpush2.bf16.msra.mxu0 0
    %4869 = vmatprep.subr.bf16.mxu0 0
    %4870 = vmatpush2.bf16.msra.mxu0 0
    %4871 = vmatprep.subr.bf16.mxu0 0
    %4872 = vmatpush2.bf16.msra.mxu0 0
    %4873 = vmatprep.subr.bf16.mxu0 0
    %4874 = vmatpush2.bf16.msra.mxu0 0
    %4875 = vmatprep.subr.bf16.mxu0 0
    %4876 = vmatpush2.bf16.msra.mxu0 0
    %4877 = vmatprep.subr.bf16.mxu0 0
    %4878 = vmatpush2.bf16.msra.mxu0 0
    %4879 = vmatprep.subr.bf16.mxu0 0
    %4880 = vmatpush2.bf16.msra.mxu0 0
    %4881 = vmatprep.mubr.bf16.mxu0 0
    %4882 = vmatmul.mubr.bf16.gmra.mxu0 %v4809
    %v4883 = vpop.f32.mrf.mxu0
    %v4884 = vadd.f32 0.0, %v4883
    %v4885 = vpop.f32.mrf.mxu0
    %v4886 = vpop.f32.mrf.mxu0
    %v4887 = vadd.f32 0.0, %v4886
    %v4888 = vpop.f32.mrf.mxu0
    %4889 = vmatprep.mubr.bf16.mxu0 0
    %4890 = vmatmul.mubr.bf16.gmra.mxu0 %v4810
    %v4891 = vpop.f32.mrf.mxu0
    %v4892 = vadd.f32 0.0, %v4891
    %v4893 = vpop.f32.mrf.mxu0
    %v4894 = vpop.f32.mrf.mxu0
    %v4895 = vadd.f32 0.0, %v4894
    %v4896 = vpop.f32.mrf.mxu0
    %4897 = vmatprep.mubr.bf16.mxu0 0
    %4898 = vmatmul.mubr.bf16.gmra.mxu0 %v4811
    %v4899 = vpop.f32.mrf.mxu0
    %v4900 = vadd.f32 0.0, %v4899
    %v4901 = vpop.f32.mrf.mxu0
    %v4902 = vpop.f32.mrf.mxu0
    %v4903 = vadd.f32 0.0, %v4902
    %v4904 = vpop.f32.mrf.mxu0
    %4905 = vmatprep.mubr.bf16.mxu0 0
    %4906 = vmatmul.mubr.bf16.gmra.mxu0 %v4812
    %v4907 = vpop.f32.mrf.mxu0
    %v4908 = vadd.f32 0.0, %v4907
    %v4909 = vpop.f32.mrf.mxu0
    %v4910 = vpop.f32.mrf.mxu0
    %v4911 = vadd.f32 0.0, %v4910
    %v4912 = vpop.f32.mrf.mxu0
    %4913 = vmatprep.mubr.bf16.mxu0 0
    %4914 = vmatmul.mubr.bf16.gmra.mxu0 %v4813
    %v4915 = vpop.f32.mrf.mxu0
    %v4916 = vadd.f32 0.0, %v4915
    %v4917 = vpop.f32.mrf.mxu0
    %v4918 = vpop.f32.mrf.mxu0
    %v4919 = vadd.f32 0.0, %v4918
    %v4920 = vpop.f32.mrf.mxu0
    %4921 = vmatprep.mubr.bf16.mxu0 0
    %4922 = vmatmul.mubr.bf16.gmra.mxu0 %v4814
    %v4923 = vpop.f32.mrf.mxu0
    %v4924 = vadd.f32 0.0, %v4923
    %v4925 = vpop.f32.mrf.mxu0
    %v4926 = vpop.f32.mrf.mxu0
    %v4927 = vadd.f32 0.0, %v4926
    %v4928 = vpop.f32.mrf.mxu0
    %4929 = vmatprep.mubr.bf16.mxu0 0
    %4930 = vmatmul.mubr.bf16.gmra.mxu0 %v4815
    %v4931 = vpop.f32.mrf.mxu0
    %v4932 = vadd.f32 0.0, %v4931
    %v4933 = vpop.f32.mrf.mxu0
    %v4934 = vpop.f32.mrf.mxu0
    %v4935 = vadd.f32 0.0, %v4934
    %v4936 = vpop.f32.mrf.mxu0
    %4937 = vmatprep.mubr.bf16.mxu0 0
    %4938 = vmatmul.mubr.bf16.gmra.mxu0 %v4816
    %v4939 = vpop.f32.mrf.mxu0
    %v4940 = vadd.f32 0.0, %v4939
    %v4941 = vpop.f32.mrf.mxu0
    %v4942 = vpop.f32.mrf.mxu0
    %v4943 = vadd.f32 0.0, %v4942
    %v4944 = vpop.f32.mrf.mxu0
    %4945 = vdwg.mxu0
    %4962 = vrot.lane.b32.xlu0 %v4884, 80
    %v4963 = vpop.permute.xlu0 %4962
    %4964 = vrot.lane.b32.xlu0 %v4887, 80
    %v4965 = vpop.permute.xlu0 %4964
    %4966 = vrot.lane.b32.xlu0 %v4892, 80
    %v4967 = vpop.permute.xlu0 %4966
    %4968 = vrot.lane.b32.xlu0 %v4895, 80
    %v4969 = vpop.permute.xlu0 %4968
    %4970 = vrot.lane.b32.xlu0 %v4900, 80
    %v4971 = vpop.permute.xlu0 %4970
    %4972 = vrot.lane.b32.xlu0 %v4903, 80
    %v4973 = vpop.permute.xlu0 %4972
    %4974 = vrot.lane.b32.xlu0 %v4908, 80
    %v4975 = vpop.permute.xlu0 %4974
    %4976 = vrot.lane.b32.xlu0 %v4911, 80
    %v4977 = vpop.permute.xlu0 %4976
    %4978 = vrot.lane.b32.xlu0 %v4916, 80
    %v4979 = vpop.permute.xlu0 %4978
    %4980 = vrot.lane.b32.xlu0 %v4919, 80
    %v4981 = vpop.permute.xlu0 %4980
    %4982 = vrot.lane.b32.xlu0 %v4924, 80
    %v4983 = vpop.permute.xlu0 %4982
    %4984 = vrot.lane.b32.xlu0 %v4927, 80
    %v4985 = vpop.permute.xlu0 %4984
    %4986 = vrot.lane.b32.xlu0 %v4932, 80
    %v4987 = vpop.permute.xlu0 %4986
    %4988 = vrot.lane.b32.xlu0 %v4935, 80
    %v4989 = vpop.permute.xlu0 %4988
    %4990 = vrot.lane.b32.xlu0 %v4940, 80
    %v4991 = vpop.permute.xlu0 %4990
    %4992 = vrot.lane.b32.xlu0 %v4943, 80
    %v4993 = vpop.permute.xlu0 %4992
    %vm5010 = vcmask 786048
    %5011 = vst.msk [vmem:[#allocation3] sm:$0xff] %vm5010, %v4963
    %5012 = vst.msk [vmem:[#allocation3 + $0x8] sm:$0xff] %vm5010, %v4965
    %5013 = vst.msk [vmem:[#allocation3 + $0x10] sm:$0xff] %vm5010, %v4967
    %5014 = vst.msk [vmem:[#allocation3 + $0x18] sm:$0xff] %vm5010, %v4969
    %5015 = vst.msk [vmem:[#allocation3 + $0x20] sm:$0xff] %vm5010, %v4971
    %5016 = vst.msk [vmem:[#allocation3 + $0x28] sm:$0xff] %vm5010, %v4973
    %5017 = vst.msk [vmem:[#allocation3 + $0x30] sm:$0xff] %vm5010, %v4975
    %5018 = vst.msk [vmem:[#allocation3 + $0x38] sm:$0xff] %vm5010, %v4977
    %5019 = vst.msk [vmem:[#allocation3 + $0x40] sm:$0xff] %vm5010, %v4979
    %5020 = vst.msk [vmem:[#allocation3 + $0x48] sm:$0xff] %vm5010, %v4981
    %5021 = vst.msk [vmem:[#allocation3 + $0x50] sm:$0xff] %vm5010, %v4983
    %5022 = vst.msk [vmem:[#allocation3 + $0x58] sm:$0xff] %vm5010, %v4985
    %5023 = vst.msk [vmem:[#allocation3 + $0x60] sm:$0xff] %vm5010, %v4987
    %5024 = vst.msk [vmem:[#allocation3 + $0x68] sm:$0xff] %vm5010, %v4989
    %5025 = vst.msk [vmem:[#allocation3 + $0x70] sm:$0xff] %vm5010, %v4991
    %5026 = vst.msk [vmem:[#allocation3 + $0x78] sm:$0xff] %vm5010, %v4993
    %v5027 = vld [vmem:[#allocation2] sm:$0xff]
    %v5028 = vld [vmem:[#allocation2 + $0x18] sm:$0xff]
    %v5029 = vld [vmem:[#allocation2 + $0x30] sm:$0xff]
    %v5030 = vld [vmem:[#allocation2 + $0x48] sm:$0xff]
    %v5031 = vld [vmem:[#allocation2 + $0x60] sm:$0xff]
    %v5032 = vld [vmem:[#allocation2 + $0x78] sm:$0xff]
    %v5033 = vld [vmem:[#allocation2 + $0x90] sm:$0xff]
    %v5034 = vld [vmem:[#allocation2 + $0xa8] sm:$0xff]
    %v5035 = vld [vmem:[#allocation2 + $0xc0] sm:$0xff]
    %v5036 = vld [vmem:[#allocation2 + $0xd8] sm:$0xff]
    %v5037 = vld [vmem:[#allocation2 + $0xf0] sm:$0xff]
    %v5038 = vld [vmem:[#allocation2 + $0x108] sm:$0xff]
    %v5039 = vld [vmem:[#allocation2 + $0x120] sm:$0xff]
    %v5040 = vld [vmem:[#allocation2 + $0x138] sm:$0xff]
    %v5041 = vld [vmem:[#allocation2 + $0x150] sm:$0xff]
    %v5042 = vld [vmem:[#allocation2 + $0x168] sm:$0xff]
    %v5043 = vpack.c.bf16 %v5028, %v5027
    %v5044 = vpack.c.bf16 %v5030, %v5029
    %v5045 = vpack.c.bf16 %v5032, %v5031
    %v5046 = vpack.c.bf16 %v5034, %v5033
    %v5047 = vpack.c.bf16 %v5036, %v5035
    %v5048 = vpack.c.bf16 %v5038, %v5037
    %v5049 = vpack.c.bf16 %v5040, %v5039
    %v5050 = vpack.c.bf16 %v5042, %v5041
    %v5051 = vld [vmem:[#allocation2 + $0x8] sm:$0xff]
    %v5052 = vld [vmem:[#allocation2 + $0x20] sm:$0xff]
    %v5053 = vld [vmem:[#allocation2 + $0x38] sm:$0xff]
    %v5054 = vld [vmem:[#allocation2 + $0x50] sm:$0xff]
    %v5055 = vld [vmem:[#allocation2 + $0x68] sm:$0xff]
    %v5056 = vld [vmem:[#allocation2 + $0x80] sm:$0xff]
    %v5057 = vld [vmem:[#allocation2 + $0x98] sm:$0xff]
    %v5058 = vld [vmem:[#allocation2 + $0xb0] sm:$0xff]
    %v5059 = vld [vmem:[#allocation2 + $0xc8] sm:$0xff]
    %v5060 = vld [vmem:[#allocation2 + $0xe0] sm:$0xff]
    %v5061 = vld [vmem:[#allocation2 + $0xf8] sm:$0xff]
    %v5062 = vld [vmem:[#allocation2 + $0x110] sm:$0xff]
    %v5063 = vld [vmem:[#allocation2 + $0x128] sm:$0xff]
    %v5064 = vld [vmem:[#allocation2 + $0x140] sm:$0xff]
    %v5065 = vld [vmem:[#allocation2 + $0x158] sm:$0xff]
    %v5066 = vld [vmem:[#allocation2 + $0x170] sm:$0xff]
    %v5067 = vpack.c.bf16 %v5052, %v5051
    %v5068 = vpack.c.bf16 %v5054, %v5053
    %v5069 = vpack.c.bf16 %v5056, %v5055
    %v5070 = vpack.c.bf16 %v5058, %v5057
    %v5071 = vpack.c.bf16 %v5060, %v5059
    %v5072 = vpack.c.bf16 %v5062, %v5061
    %v5073 = vpack.c.bf16 %v5064, %v5063
    %v5074 = vpack.c.bf16 %v5066, %v5065
    %v5075 = vld [vmem:[#allocation2 + $0x10] sm:$0xff]
    %v5076 = vld [vmem:[#allocation2 + $0x28] sm:$0xff]
    %v5077 = vld [vmem:[#allocation2 + $0x40] sm:$0xff]
    %v5078 = vld [vmem:[#allocation2 + $0x58] sm:$0xff]
    %v5079 = vld [vmem:[#allocation2 + $0x70] sm:$0xff]
    %v5080 = vld [vmem:[#allocation2 + $0x88] sm:$0xff]
    %v5081 = vld [vmem:[#allocation2 + $0xa0] sm:$0xff]
    %v5082 = vld [vmem:[#allocation2 + $0xb8] sm:$0xff]
    %v5083 = vld [vmem:[#allocation2 + $0xd0] sm:$0xff]
    %v5084 = vld [vmem:[#allocation2 + $0xe8] sm:$0xff]
    %v5085 = vld [vmem:[#allocation2 + $0x100] sm:$0xff]
    %v5086 = vld [vmem:[#allocation2 + $0x118] sm:$0xff]
    %v5087 = vld [vmem:[#allocation2 + $0x130] sm:$0xff]
    %v5088 = vld [vmem:[#allocation2 + $0x148] sm:$0xff]
    %v5089 = vld [vmem:[#allocation2 + $0x160] sm:$0xff]
    %v5090 = vld [vmem:[#allocation2 + $0x178] sm:$0xff]
    %v5091 = vpack.c.bf16 %v5076, %v5075
    %v5092 = vpack.c.bf16 %v5078, %v5077
    %v5093 = vpack.c.bf16 %v5080, %v5079
    %v5094 = vpack.c.bf16 %v5082, %v5081
    %v5095 = vpack.c.bf16 %v5084, %v5083
    %v5096 = vpack.c.bf16 %v5086, %v5085
    %v5097 = vpack.c.bf16 %v5088, %v5087
    %v5098 = vpack.c.bf16 %v5090, %v5089
    %v5099 = vld [vmem:[%s7] sm:$0xff]
    %v5100 = vld [vmem:[%s7 + $0x8] sm:$0xff]
    %v5101 = vld [vmem:[%s7 + $0x10] sm:$0xff]
    %v5102 = vld [vmem:[%s7 + $0x18] sm:$0xff]
    %v5103 = vld [vmem:[%s7 + $0x20] sm:$0xff]
    %v5104 = vld [vmem:[%s7 + $0x28] sm:$0xff]
    %v5105 = vld [vmem:[%s7 + $0x30] sm:$0xff]
    %v5106 = vld [vmem:[%s7 + $0x38] sm:$0xff]
    %v5107 = vld [vmem:[%s7 + $0x40] sm:$0xff]
    %v5108 = vld [vmem:[%s7 + $0x48] sm:$0xff]
    %v5109 = vld [vmem:[%s7 + $0x50] sm:$0xff]
    %v5110 = vld [vmem:[%s7 + $0x58] sm:$0xff]
    %v5111 = vld [vmem:[%s7 + $0x60] sm:$0xff]
    %v5112 = vld [vmem:[%s7 + $0x68] sm:$0xff]
    %v5113 = vld [vmem:[%s7 + $0x70] sm:$0xff]
    %v5114 = vld [vmem:[%s7 + $0x78] sm:$0xff]
    %5123 = vrot.lane.b32.xlu0 %v5043, 32
    %v5124 = vpop.permute.xlu0 %5123
    %5125 = vrot.lane.b32.xlu0 %v5044, 32
    %v5126 = vpop.permute.xlu0 %5125
    %5127 = vrot.lane.b32.xlu0 %v5045, 32
    %v5128 = vpop.permute.xlu0 %5127
    %5129 = vrot.lane.b32.xlu0 %v5046, 32
    %v5130 = vpop.permute.xlu0 %5129
    %5131 = vrot.lane.b32.xlu0 %v5047, 32
    %v5132 = vpop.permute.xlu0 %5131
    %5133 = vrot.lane.b32.xlu0 %v5048, 32
    %v5134 = vpop.permute.xlu0 %5133
    %5135 = vrot.lane.b32.xlu0 %v5049, 32
    %v5136 = vpop.permute.xlu0 %5135
    %5137 = vrot.lane.b32.xlu0 %v5050, 32
    %v5138 = vpop.permute.xlu0 %5137
    %5147 = vrot.lane.b32.xlu0 %v5067, 32
    %v5148 = vpop.permute.xlu0 %5147
    %5149 = vrot.lane.b32.xlu0 %v5068, 32
    %v5150 = vpop.permute.xlu0 %5149
    %5151 = vrot.lane.b32.xlu0 %v5069, 32
    %v5152 = vpop.permute.xlu0 %5151
    %5153 = vrot.lane.b32.xlu0 %v5070, 32
    %v5154 = vpop.permute.xlu0 %5153
    %5155 = vrot.lane.b32.xlu0 %v5071, 32
    %v5156 = vpop.permute.xlu0 %5155
    %5157 = vrot.lane.b32.xlu0 %v5072, 32
    %v5158 = vpop.permute.xlu0 %5157
    %5159 = vrot.lane.b32.xlu0 %v5073, 32
    %v5160 = vpop.permute.xlu0 %5159
    %5161 = vrot.lane.b32.xlu0 %v5074, 32
    %v5162 = vpop.permute.xlu0 %5161
    %v5164 = vsel %vm129, %v5124, 0
    %v5167 = vsel %vm129, %v5126, 0
    %v5170 = vsel %vm129, %v5128, 0
    %v5173 = vsel %vm129, %v5130, 0
    %v5176 = vsel %vm129, %v5132, 0
    %v5179 = vsel %vm129, %v5134, 0
    %v5182 = vsel %vm129, %v5136, 0
    %v5185 = vsel %vm129, %v5138, 0
    %v5188 = vsel %vm129, %v5148, 0
    %v5191 = vsel %vm129, %v5150, 0
    %v5194 = vsel %vm129, %v5152, 0
    %v5197 = vsel %vm129, %v5154, 0
    %v5200 = vsel %vm129, %v5156, 0
    %v5203 = vsel %vm129, %v5158, 0
    %v5206 = vsel %vm129, %v5160, 0
    %v5209 = vsel %vm129, %v5162, 0
    %5211 = vmatprep.subr.bf16.mxu0 0
    %5212 = vmatpush1.bf16.xpose.msra.mxu0 %v5209
    %5213 = vmatprep.subr.bf16.mxu0 0
    %5214 = vmatpush1.bf16.xpose.msra.mxu0 %v5206
    %5215 = vmatprep.subr.bf16.mxu0 0
    %5216 = vmatpush1.bf16.xpose.msra.mxu0 %v5203
    %5217 = vmatprep.subr.bf16.mxu0 0
    %5218 = vmatpush1.bf16.xpose.msra.mxu0 %v5200
    %5219 = vmatprep.subr.bf16.mxu0 0
    %5220 = vmatpush1.bf16.xpose.msra.mxu0 %v5197
    %5221 = vmatprep.subr.bf16.mxu0 0
    %5222 = vmatpush1.bf16.xpose.msra.mxu0 %v5194
    %5223 = vmatprep.subr.bf16.mxu0 0
    %5224 = vmatpush1.bf16.xpose.msra.mxu0 %v5191
    %5225 = vmatprep.subr.bf16.mxu0 0
    %5226 = vmatpush1.bf16.xpose.msra.mxu0 %v5188
    %5227 = vmatprep.subr.bf16.mxu0 0
    %5228 = vmatpush2.bf16.xpose.msra.mxu0 0
    %5229 = vmatprep.subr.bf16.mxu0 0
    %5230 = vmatpush2.bf16.xpose.msra.mxu0 0
    %5231 = vmatprep.subr.bf16.mxu0 0
    %5232 = vmatpush2.bf16.xpose.msra.mxu0 0
    %5233 = vmatprep.subr.bf16.mxu0 0
    %5234 = vmatpush2.bf16.xpose.msra.mxu0 0
    %5235 = vmatprep.subr.bf16.mxu0 0
    %5236 = vmatpush2.bf16.xpose.msra.mxu0 0
    %5237 = vmatprep.subr.bf16.mxu0 0
    %5238 = vmatpush2.bf16.xpose.msra.mxu0 0
    %5239 = vmatprep.subr.bf16.mxu0 0
    %5240 = vmatpush2.bf16.xpose.msra.mxu0 0
    %5241 = vmatprep.subr.bf16.mxu0 0
    %5242 = vmatpush2.bf16.xpose.msra.mxu0 0
    %5243 = vmatprep.mubr.bf16.mxu0 0
    %5244 = vmatmul.mubr.bf16.gmra.mxu0 %v5164
    %v5245 = vpop.f32.mrf.mxu0
    %v5246 = vadd.f32 %v5099, %v5245
    %v5247 = vpop.f32.mrf.mxu0
    %v5248 = vpop.f32.mrf.mxu0
    %v5249 = vadd.f32 %v5100, %v5248
    %v5250 = vpop.f32.mrf.mxu0
    %5251 = vmatprep.mubr.bf16.mxu0 0
    %5252 = vmatmul.mubr.bf16.gmra.mxu0 %v5167
    %v5253 = vpop.f32.mrf.mxu0
    %v5254 = vadd.f32 %v5101, %v5253
    %v5255 = vpop.f32.mrf.mxu0
    %v5256 = vpop.f32.mrf.mxu0
    %v5257 = vadd.f32 %v5102, %v5256
    %v5258 = vpop.f32.mrf.mxu0
    %5259 = vmatprep.mubr.bf16.mxu0 0
    %5260 = vmatmul.mubr.bf16.gmra.mxu0 %v5170
    %v5261 = vpop.f32.mrf.mxu0
    %v5262 = vadd.f32 %v5103, %v5261
    %v5263 = vpop.f32.mrf.mxu0
    %v5264 = vpop.f32.mrf.mxu0
    %v5265 = vadd.f32 %v5104, %v5264
    %v5266 = vpop.f32.mrf.mxu0
    %5267 = vmatprep.mubr.bf16.mxu0 0
    %5268 = vmatmul.mubr.bf16.gmra.mxu0 %v5173
    %v5269 = vpop.f32.mrf.mxu0
    %v5270 = vadd.f32 %v5105, %v5269
    %v5271 = vpop.f32.mrf.mxu0
    %v5272 = vpop.f32.mrf.mxu0
    %v5273 = vadd.f32 %v5106, %v5272
    %v5274 = vpop.f32.mrf.mxu0
    %5275 = vmatprep.mubr.bf16.mxu0 0
    %5276 = vmatmul.mubr.bf16.gmra.mxu0 %v5176
    %v5277 = vpop.f32.mrf.mxu0
    %v5278 = vadd.f32 %v5107, %v5277
    %v5279 = vpop.f32.mrf.mxu0
    %v5280 = vpop.f32.mrf.mxu0
    %v5281 = vadd.f32 %v5108, %v5280
    %v5282 = vpop.f32.mrf.mxu0
    %5283 = vmatprep.mubr.bf16.mxu0 0
    %5284 = vmatmul.mubr.bf16.gmra.mxu0 %v5179
    %v5285 = vpop.f32.mrf.mxu0
    %v5286 = vadd.f32 %v5109, %v5285
    %v5287 = vpop.f32.mrf.mxu0
    %v5288 = vpop.f32.mrf.mxu0
    %v5289 = vadd.f32 %v5110, %v5288
    %v5290 = vpop.f32.mrf.mxu0
    %5291 = vmatprep.mubr.bf16.mxu0 0
    %5292 = vmatmul.mubr.bf16.gmra.mxu0 %v5182
    %v5293 = vpop.f32.mrf.mxu0
    %v5294 = vadd.f32 %v5111, %v5293
    %v5295 = vpop.f32.mrf.mxu0
    %v5296 = vpop.f32.mrf.mxu0
    %v5297 = vadd.f32 %v5112, %v5296
    %v5298 = vpop.f32.mrf.mxu0
    %5299 = vmatprep.mubr.bf16.mxu0 0
    %5300 = vmatmul.mubr.bf16.gmra.mxu0 %v5185
    %v5301 = vpop.f32.mrf.mxu0
    %v5302 = vadd.f32 %v5113, %v5301
    %v5303 = vpop.f32.mrf.mxu0
    %v5304 = vpop.f32.mrf.mxu0
    %v5305 = vadd.f32 %v5114, %v5304
    %v5306 = vpop.f32.mrf.mxu0
    %5307 = vdwg.mxu0
    %5308 = vmax.xlane.f32.xlu0 %v5246
    %v5309 = vpop.xlane.xlu0 %5308
    %5310 = vmax.xlane.f32.xlu0 %v5249
    %v5311 = vpop.xlane.xlu0 %5310
    %5312 = vmax.xlane.f32.xlu0 %v5254
    %v5313 = vpop.xlane.xlu0 %5312
    %5314 = vmax.xlane.f32.xlu0 %v5257
    %v5315 = vpop.xlane.xlu0 %5314
    %5316 = vmax.xlane.f32.xlu0 %v5262
    %v5317 = vpop.xlane.xlu0 %5316
    %5318 = vmax.xlane.f32.xlu0 %v5265
    %v5319 = vpop.xlane.xlu0 %5318
    %5320 = vmax.xlane.f32.xlu0 %v5270
    %v5321 = vpop.xlane.xlu0 %5320
    %5322 = vmax.xlane.f32.xlu0 %v5273
    %v5323 = vpop.xlane.xlu0 %5322
    %5324 = vmax.xlane.f32.xlu0 %v5278
    %v5325 = vpop.xlane.xlu0 %5324
    %5326 = vmax.xlane.f32.xlu0 %v5281
    %v5327 = vpop.xlane.xlu0 %5326
    %5328 = vmax.xlane.f32.xlu0 %v5286
    %v5329 = vpop.xlane.xlu0 %5328
    %5330 = vmax.xlane.f32.xlu0 %v5289
    %v5331 = vpop.xlane.xlu0 %5330
    %5332 = vmax.xlane.f32.xlu0 %v5294
    %v5333 = vpop.xlane.xlu0 %5332
    %5334 = vmax.xlane.f32.xlu0 %v5297
    %v5335 = vpop.xlane.xlu0 %5334
    %5336 = vmax.xlane.f32.xlu0 %v5302
    %v5337 = vpop.xlane.xlu0 %5336
    %5338 = vmax.xlane.f32.xlu0 %v5305
    %v5339 = vpop.xlane.xlu0 %5338
    %v5340 = vsub.f32 %v5246, %v5309
    %v5341 = vsub.f32 %v5249, %v5311
    %v5342 = vsub.f32 %v5254, %v5313
    %v5343 = vsub.f32 %v5257, %v5315
    %v5344 = vsub.f32 %v5262, %v5317
    %v5345 = vsub.f32 %v5265, %v5319
    %v5346 = vsub.f32 %v5270, %v5321
    %v5347 = vsub.f32 %v5273, %v5323
    %v5348 = vsub.f32 %v5278, %v5325
    %v5349 = vsub.f32 %v5281, %v5327
    %v5350 = vsub.f32 %v5286, %v5329
    %v5351 = vsub.f32 %v5289, %v5331
    %v5352 = vsub.f32 %v5294, %v5333
    %v5353 = vsub.f32 %v5297, %v5335
    %v5354 = vsub.f32 %v5302, %v5337
    %v5355 = vsub.f32 %v5305, %v5339
    %v5356 = vmul.f32 %v5340, 1.442695
    %v5357 = vpow.pop %v5356
    %v5358 = vmul.f32 %v5341, 1.442695
    %v5359 = vpow.pop %v5358
    %v5360 = vmul.f32 %v5342, 1.442695
    %v5361 = vpow.pop %v5360
    %v5362 = vmul.f32 %v5343, 1.442695
    %v5363 = vpow.pop %v5362
    %v5364 = vmul.f32 %v5344, 1.442695
    %v5365 = vpow.pop %v5364
    %v5366 = vmul.f32 %v5345, 1.442695
    %v5367 = vpow.pop %v5366
    %v5368 = vmul.f32 %v5346, 1.442695
    %v5369 = vpow.pop %v5368
    %v5370 = vmul.f32 %v5347, 1.442695
    %v5371 = vpow.pop %v5370
    %v5372 = vmul.f32 %v5348, 1.442695
    %v5373 = vpow.pop %v5372
    %v5374 = vmul.f32 %v5349, 1.442695
    %v5375 = vpow.pop %v5374
    %v5376 = vmul.f32 %v5350, 1.442695
    %v5377 = vpow.pop %v5376
    %v5378 = vmul.f32 %v5351, 1.442695
    %v5379 = vpow.pop %v5378
    %v5380 = vmul.f32 %v5352, 1.442695
    %v5381 = vpow.pop %v5380
    %v5382 = vmul.f32 %v5353, 1.442695
    %v5383 = vpow.pop %v5382
    %v5384 = vmul.f32 %v5354, 1.442695
    %v5385 = vpow.pop %v5384
    %v5386 = vmul.f32 %v5355, 1.442695
    %v5387 = vpow.pop %v5386
    %5388 = vadd.xlane.f32.xlu0 %v5357
    %v5389 = vpop.xlane.xlu0 %5388
    %5390 = vadd.xlane.f32.xlu0 %v5359
    %v5391 = vpop.xlane.xlu0 %5390
    %5392 = vadd.xlane.f32.xlu0 %v5361
    %v5393 = vpop.xlane.xlu0 %5392
    %5394 = vadd.xlane.f32.xlu0 %v5363
    %v5395 = vpop.xlane.xlu0 %5394
    %5396 = vadd.xlane.f32.xlu0 %v5365
    %v5397 = vpop.xlane.xlu0 %5396
    %5398 = vadd.xlane.f32.xlu0 %v5367
    %v5399 = vpop.xlane.xlu0 %5398
    %5400 = vadd.xlane.f32.xlu0 %v5369
    %v5401 = vpop.xlane.xlu0 %5400
    %5402 = vadd.xlane.f32.xlu0 %v5371
    %v5403 = vpop.xlane.xlu0 %5402
    %5404 = vadd.xlane.f32.xlu0 %v5373
    %v5405 = vpop.xlane.xlu0 %5404
    %5406 = vadd.xlane.f32.xlu0 %v5375
    %v5407 = vpop.xlane.xlu0 %5406
    %5408 = vadd.xlane.f32.xlu0 %v5377
    %v5409 = vpop.xlane.xlu0 %5408
    %5410 = vadd.xlane.f32.xlu0 %v5379
    %v5411 = vpop.xlane.xlu0 %5410
    %5412 = vadd.xlane.f32.xlu0 %v5381
    %v5413 = vpop.xlane.xlu0 %5412
    %5414 = vadd.xlane.f32.xlu0 %v5383
    %v5415 = vpop.xlane.xlu0 %5414
    %5416 = vadd.xlane.f32.xlu0 %v5385
    %v5417 = vpop.xlane.xlu0 %5416
    %5418 = vadd.xlane.f32.xlu0 %v5387
    %v5419 = vpop.xlane.xlu0 %5418
    %v5420 = vrcp.pop %v5389
    %v5421 = vrcp.pop %v5391
    %v5422 = vrcp.pop %v5393
    %v5423 = vrcp.pop %v5395
    %v5424 = vrcp.pop %v5397
    %v5425 = vrcp.pop %v5399
    %v5426 = vrcp.pop %v5401
    %v5427 = vrcp.pop %v5403
    %v5428 = vrcp.pop %v5405
    %v5429 = vrcp.pop %v5407
    %v5430 = vrcp.pop %v5409
    %v5431 = vrcp.pop %v5411
    %v5432 = vrcp.pop %v5413
    %v5433 = vrcp.pop %v5415
    %v5434 = vrcp.pop %v5417
    %v5435 = vrcp.pop %v5419
    %v5436 = vmul.f32 %v5357, %v5420
    %v5437 = vmul.f32 %v5359, %v5421
    %v5438 = vmul.f32 %v5361, %v5422
    %v5439 = vmul.f32 %v5363, %v5423
    %v5440 = vmul.f32 %v5365, %v5424
    %v5441 = vmul.f32 %v5367, %v5425
    %v5442 = vmul.f32 %v5369, %v5426
    %v5443 = vmul.f32 %v5371, %v5427
    %v5444 = vmul.f32 %v5373, %v5428
    %v5445 = vmul.f32 %v5375, %v5429
    %v5446 = vmul.f32 %v5377, %v5430
    %v5447 = vmul.f32 %v5379, %v5431
    %v5448 = vmul.f32 %v5381, %v5432
    %v5449 = vmul.f32 %v5383, %v5433
    %v5450 = vmul.f32 %v5385, %v5434
    %v5451 = vmul.f32 %v5387, %v5435
    %v5452 = vpack.c.bf16 %v5437, %v5436
    %v5453 = vpack.c.bf16 %v5439, %v5438
    %v5454 = vpack.c.bf16 %v5441, %v5440
    %v5455 = vpack.c.bf16 %v5443, %v5442
    %v5456 = vpack.c.bf16 %v5445, %v5444
    %v5457 = vpack.c.bf16 %v5447, %v5446
    %v5458 = vpack.c.bf16 %v5449, %v5448
    %v5459 = vpack.c.bf16 %v5451, %v5450
    %5468 = vrot.lane.b32.xlu0 %v5091, 32
    %v5469 = vpop.permute.xlu0 %5468
    %5470 = vrot.lane.b32.xlu0 %v5092, 32
    %v5471 = vpop.permute.xlu0 %5470
    %5472 = vrot.lane.b32.xlu0 %v5093, 32
    %v5473 = vpop.permute.xlu0 %5472
    %5474 = vrot.lane.b32.xlu0 %v5094, 32
    %v5475 = vpop.permute.xlu0 %5474
    %5476 = vrot.lane.b32.xlu0 %v5095, 32
    %v5477 = vpop.permute.xlu0 %5476
    %5478 = vrot.lane.b32.xlu0 %v5096, 32
    %v5479 = vpop.permute.xlu0 %5478
    %5480 = vrot.lane.b32.xlu0 %v5097, 32
    %v5481 = vpop.permute.xlu0 %5480
    %5482 = vrot.lane.b32.xlu0 %v5098, 32
    %v5483 = vpop.permute.xlu0 %5482
    %5492 = vmatprep.subr.bf16.mxu0 0
    %5493 = vmatpush1.bf16.msra.mxu0 %v5483
    %5494 = vmatprep.subr.bf16.mxu0 0
    %5495 = vmatpush1.bf16.msra.mxu0 %v5481
    %5496 = vmatprep.subr.bf16.mxu0 0
    %5497 = vmatpush1.bf16.msra.mxu0 %v5479
    %5498 = vmatprep.subr.bf16.mxu0 0
    %5499 = vmatpush1.bf16.msra.mxu0 %v5477
    %5500 = vmatprep.subr.bf16.mxu0 0
    %5501 = vmatpush1.bf16.msra.mxu0 %v5475
    %5502 = vmatprep.subr.bf16.mxu0 0
    %5503 = vmatpush1.bf16.msra.mxu0 %v5473
    %5504 = vmatprep.subr.bf16.mxu0 0
    %5505 = vmatpush1.bf16.msra.mxu0 %v5471
    %5506 = vmatprep.subr.bf16.mxu0 0
    %5507 = vmatpush1.bf16.msra.mxu0 %v5469
    %5508 = vmatprep.subr.bf16.mxu0 0
    %5509 = vmatpush2.bf16.msra.mxu0 0
    %5510 = vmatprep.subr.bf16.mxu0 0
    %5511 = vmatpush2.bf16.msra.mxu0 0
    %5512 = vmatprep.subr.bf16.mxu0 0
    %5513 = vmatpush2.bf16.msra.mxu0 0
    %5514 = vmatprep.subr.bf16.mxu0 0
    %5515 = vmatpush2.bf16.msra.mxu0 0
    %5516 = vmatprep.subr.bf16.mxu0 0
    %5517 = vmatpush2.bf16.msra.mxu0 0
    %5518 = vmatprep.subr.bf16.mxu0 0
    %5519 = vmatpush2.bf16.msra.mxu0 0
    %5520 = vmatprep.subr.bf16.mxu0 0
    %5521 = vmatpush2.bf16.msra.mxu0 0
    %5522 = vmatprep.subr.bf16.mxu0 0
    %5523 = vmatpush2.bf16.msra.mxu0 0
    %5524 = vmatprep.mubr.bf16.mxu0 0
    %5525 = vmatmul.mubr.bf16.gmra.mxu0 %v5452
    %v5526 = vpop.f32.mrf.mxu0
    %v5527 = vadd.f32 0.0, %v5526
    %v5528 = vpop.f32.mrf.mxu0
    %v5529 = vpop.f32.mrf.mxu0
    %v5530 = vadd.f32 0.0, %v5529
    %v5531 = vpop.f32.mrf.mxu0
    %5532 = vmatprep.mubr.bf16.mxu0 0
    %5533 = vmatmul.mubr.bf16.gmra.mxu0 %v5453
    %v5534 = vpop.f32.mrf.mxu0
    %v5535 = vadd.f32 0.0, %v5534
    %v5536 = vpop.f32.mrf.mxu0
    %v5537 = vpop.f32.mrf.mxu0
    %v5538 = vadd.f32 0.0, %v5537
    %v5539 = vpop.f32.mrf.mxu0
    %5540 = vmatprep.mubr.bf16.mxu0 0
    %5541 = vmatmul.mubr.bf16.gmra.mxu0 %v5454
    %v5542 = vpop.f32.mrf.mxu0
    %v5543 = vadd.f32 0.0, %v5542
    %v5544 = vpop.f32.mrf.mxu0
    %v5545 = vpop.f32.mrf.mxu0
    %v5546 = vadd.f32 0.0, %v5545
    %v5547 = vpop.f32.mrf.mxu0
    %5548 = vmatprep.mubr.bf16.mxu0 0
    %5549 = vmatmul.mubr.bf16.gmra.mxu0 %v5455
    %v5550 = vpop.f32.mrf.mxu0
    %v5551 = vadd.f32 0.0, %v5550
    %v5552 = vpop.f32.mrf.mxu0
    %v5553 = vpop.f32.mrf.mxu0
    %v5554 = vadd.f32 0.0, %v5553
    %v5555 = vpop.f32.mrf.mxu0
    %5556 = vmatprep.mubr.bf16.mxu0 0
    %5557 = vmatmul.mubr.bf16.gmra.mxu0 %v5456
    %v5558 = vpop.f32.mrf.mxu0
    %v5559 = vadd.f32 0.0, %v5558
    %v5560 = vpop.f32.mrf.mxu0
    %v5561 = vpop.f32.mrf.mxu0
    %v5562 = vadd.f32 0.0, %v5561
    %v5563 = vpop.f32.mrf.mxu0
    %5564 = vmatprep.mubr.bf16.mxu0 0
    %5565 = vmatmul.mubr.bf16.gmra.mxu0 %v5457
    %v5566 = vpop.f32.mrf.mxu0
    %v5567 = vadd.f32 0.0, %v5566
    %v5568 = vpop.f32.mrf.mxu0
    %v5569 = vpop.f32.mrf.mxu0
    %v5570 = vadd.f32 0.0, %v5569
    %v5571 = vpop.f32.mrf.mxu0
    %5572 = vmatprep.mubr.bf16.mxu0 0
    %5573 = vmatmul.mubr.bf16.gmra.mxu0 %v5458
    %v5574 = vpop.f32.mrf.mxu0
    %v5575 = vadd.f32 0.0, %v5574
    %v5576 = vpop.f32.mrf.mxu0
    %v5577 = vpop.f32.mrf.mxu0
    %v5578 = vadd.f32 0.0, %v5577
    %v5579 = vpop.f32.mrf.mxu0
    %5580 = vmatprep.mubr.bf16.mxu0 0
    %5581 = vmatmul.mubr.bf16.gmra.mxu0 %v5459
    %v5582 = vpop.f32.mrf.mxu0
    %v5583 = vadd.f32 0.0, %v5582
    %v5584 = vpop.f32.mrf.mxu0
    %v5585 = vpop.f32.mrf.mxu0
    %v5586 = vadd.f32 0.0, %v5585
    %v5587 = vpop.f32.mrf.mxu0
    %5588 = vdwg.mxu0
    %5605 = vrot.lane.b32.xlu0 %v5527, 96
    %v5606 = vpop.permute.xlu0 %5605
    %5607 = vrot.lane.b32.xlu0 %v5530, 96
    %v5608 = vpop.permute.xlu0 %5607
    %5609 = vrot.lane.b32.xlu0 %v5535, 96
    %v5610 = vpop.permute.xlu0 %5609
    %5611 = vrot.lane.b32.xlu0 %v5538, 96
    %v5612 = vpop.permute.xlu0 %5611
    %5613 = vrot.lane.b32.xlu0 %v5543, 96
    %v5614 = vpop.permute.xlu0 %5613
    %5615 = vrot.lane.b32.xlu0 %v5546, 96
    %v5616 = vpop.permute.xlu0 %5615
    %5617 = vrot.lane.b32.xlu0 %v5551, 96
    %v5618 = vpop.permute.xlu0 %5617
    %5619 = vrot.lane.b32.xlu0 %v5554, 96
    %v5620 = vpop.permute.xlu0 %5619
    %5621 = vrot.lane.b32.xlu0 %v5559, 96
    %v5622 = vpop.permute.xlu0 %5621
    %5623 = vrot.lane.b32.xlu0 %v5562, 96
    %v5624 = vpop.permute.xlu0 %5623
    %5625 = vrot.lane.b32.xlu0 %v5567, 96
    %v5626 = vpop.permute.xlu0 %5625
    %5627 = vrot.lane.b32.xlu0 %v5570, 96
    %v5628 = vpop.permute.xlu0 %5627
    %5629 = vrot.lane.b32.xlu0 %v5575, 96
    %v5630 = vpop.permute.xlu0 %5629
    %5631 = vrot.lane.b32.xlu0 %v5578, 96
    %v5632 = vpop.permute.xlu0 %5631
    %5633 = vrot.lane.b32.xlu0 %v5583, 96
    %v5634 = vpop.permute.xlu0 %5633
    %5635 = vrot.lane.b32.xlu0 %v5586, 96
    %v5636 = vpop.permute.xlu0 %5635
    %vm5653 = vcmask 917248
    %5654 = vst.msk [vmem:[#allocation3] sm:$0xff] %vm5653, %v5606
    %5655 = vst.msk [vmem:[#allocation3 + $0x8] sm:$0xff] %vm5653, %v5608
    %5656 = vst.msk [vmem:[#allocation3 + $0x10] sm:$0xff] %vm5653, %v5610
    %5657 = vst.msk [vmem:[#allocation3 + $0x18] sm:$0xff] %vm5653, %v5612
    %5658 = vst.msk [vmem:[#allocation3 + $0x20] sm:$0xff] %vm5653, %v5614
    %5659 = vst.msk [vmem:[#allocation3 + $0x28] sm:$0xff] %vm5653, %v5616
    %5660 = vst.msk [vmem:[#allocation3 + $0x30] sm:$0xff] %vm5653, %v5618
    %5661 = vst.msk [vmem:[#allocation3 + $0x38] sm:$0xff] %vm5653, %v5620
    %5662 = vst.msk [vmem:[#allocation3 + $0x40] sm:$0xff] %vm5653, %v5622
    %5663 = vst.msk [vmem:[#allocation3 + $0x48] sm:$0xff] %vm5653, %v5624
    %5664 = vst.msk [vmem:[#allocation3 + $0x50] sm:$0xff] %vm5653, %v5626
    %5665 = vst.msk [vmem:[#allocation3 + $0x58] sm:$0xff] %vm5653, %v5628
    %5666 = vst.msk [vmem:[#allocation3 + $0x60] sm:$0xff] %vm5653, %v5630
    %5667 = vst.msk [vmem:[#allocation3 + $0x68] sm:$0xff] %vm5653, %v5632
    %5668 = vst.msk [vmem:[#allocation3 + $0x70] sm:$0xff] %vm5653, %v5634
    %5669 = vst.msk [vmem:[#allocation3 + $0x78] sm:$0xff] %vm5653, %v5636
    %v5670 = vld [vmem:[#allocation2] sm:$0xff]
    %v5671 = vld [vmem:[#allocation2 + $0x18] sm:$0xff]
    %v5672 = vld [vmem:[#allocation2 + $0x30] sm:$0xff]
    %v5673 = vld [vmem:[#allocation2 + $0x48] sm:$0xff]
    %v5674 = vld [vmem:[#allocation2 + $0x60] sm:$0xff]
    %v5675 = vld [vmem:[#allocation2 + $0x78] sm:$0xff]
    %v5676 = vld [vmem:[#allocation2 + $0x90] sm:$0xff]
    %v5677 = vld [vmem:[#allocation2 + $0xa8] sm:$0xff]
    %v5678 = vld [vmem:[#allocation2 + $0xc0] sm:$0xff]
    %v5679 = vld [vmem:[#allocation2 + $0xd8] sm:$0xff]
    %v5680 = vld [vmem:[#allocation2 + $0xf0] sm:$0xff]
    %v5681 = vld [vmem:[#allocation2 + $0x108] sm:$0xff]
    %v5682 = vld [vmem:[#allocation2 + $0x120] sm:$0xff]
    %v5683 = vld [vmem:[#allocation2 + $0x138] sm:$0xff]
    %v5684 = vld [vmem:[#allocation2 + $0x150] sm:$0xff]
    %v5685 = vld [vmem:[#allocation2 + $0x168] sm:$0xff]
    %v5686 = vpack.c.bf16 %v5671, %v5670
    %v5687 = vpack.c.bf16 %v5673, %v5672
    %v5688 = vpack.c.bf16 %v5675, %v5674
    %v5689 = vpack.c.bf16 %v5677, %v5676
    %v5690 = vpack.c.bf16 %v5679, %v5678
    %v5691 = vpack.c.bf16 %v5681, %v5680
    %v5692 = vpack.c.bf16 %v5683, %v5682
    %v5693 = vpack.c.bf16 %v5685, %v5684
    %v5694 = vld [vmem:[#allocation2 + $0x8] sm:$0xff]
    %v5695 = vld [vmem:[#allocation2 + $0x20] sm:$0xff]
    %v5696 = vld [vmem:[#allocation2 + $0x38] sm:$0xff]
    %v5697 = vld [vmem:[#allocation2 + $0x50] sm:$0xff]
    %v5698 = vld [vmem:[#allocation2 + $0x68] sm:$0xff]
    %v5699 = vld [vmem:[#allocation2 + $0x80] sm:$0xff]
    %v5700 = vld [vmem:[#allocation2 + $0x98] sm:$0xff]
    %v5701 = vld [vmem:[#allocation2 + $0xb0] sm:$0xff]
    %v5702 = vld [vmem:[#allocation2 + $0xc8] sm:$0xff]
    %v5703 = vld [vmem:[#allocation2 + $0xe0] sm:$0xff]
    %v5704 = vld [vmem:[#allocation2 + $0xf8] sm:$0xff]
    %v5705 = vld [vmem:[#allocation2 + $0x110] sm:$0xff]
    %v5706 = vld [vmem:[#allocation2 + $0x128] sm:$0xff]
    %v5707 = vld [vmem:[#allocation2 + $0x140] sm:$0xff]
    %v5708 = vld [vmem:[#allocation2 + $0x158] sm:$0xff]
    %v5709 = vld [vmem:[#allocation2 + $0x170] sm:$0xff]
    %v5710 = vpack.c.bf16 %v5695, %v5694
    %v5711 = vpack.c.bf16 %v5697, %v5696
    %v5712 = vpack.c.bf16 %v5699, %v5698
    %v5713 = vpack.c.bf16 %v5701, %v5700
    %v5714 = vpack.c.bf16 %v5703, %v5702
    %v5715 = vpack.c.bf16 %v5705, %v5704
    %v5716 = vpack.c.bf16 %v5707, %v5706
    %v5717 = vpack.c.bf16 %v5709, %v5708
    %v5718 = vld [vmem:[#allocation2 + $0x10] sm:$0xff]
    %v5719 = vld [vmem:[#allocation2 + $0x28] sm:$0xff]
    %v5720 = vld [vmem:[#allocation2 + $0x40] sm:$0xff]
    %v5721 = vld [vmem:[#allocation2 + $0x58] sm:$0xff]
    %v5722 = vld [vmem:[#allocation2 + $0x70] sm:$0xff]
    %v5723 = vld [vmem:[#allocation2 + $0x88] sm:$0xff]
    %v5724 = vld [vmem:[#allocation2 + $0xa0] sm:$0xff]
    %v5725 = vld [vmem:[#allocation2 + $0xb8] sm:$0xff]
    %v5726 = vld [vmem:[#allocation2 + $0xd0] sm:$0xff]
    %v5727 = vld [vmem:[#allocation2 + $0xe8] sm:$0xff]
    %v5728 = vld [vmem:[#allocation2 + $0x100] sm:$0xff]
    %v5729 = vld [vmem:[#allocation2 + $0x118] sm:$0xff]
    %v5730 = vld [vmem:[#allocation2 + $0x130] sm:$0xff]
    %v5731 = vld [vmem:[#allocation2 + $0x148] sm:$0xff]
    %v5732 = vld [vmem:[#allocation2 + $0x160] sm:$0xff]
    %v5733 = vld [vmem:[#allocation2 + $0x178] sm:$0xff]
    %v5734 = vpack.c.bf16 %v5719, %v5718
    %v5735 = vpack.c.bf16 %v5721, %v5720
    %v5736 = vpack.c.bf16 %v5723, %v5722
    %v5737 = vpack.c.bf16 %v5725, %v5724
    %v5738 = vpack.c.bf16 %v5727, %v5726
    %v5739 = vpack.c.bf16 %v5729, %v5728
    %v5740 = vpack.c.bf16 %v5731, %v5730
    %v5741 = vpack.c.bf16 %v5733, %v5732
    %v5742 = vld [vmem:[%s7] sm:$0xff]
    %v5743 = vld [vmem:[%s7 + $0x8] sm:$0xff]
    %v5744 = vld [vmem:[%s7 + $0x10] sm:$0xff]
    %v5745 = vld [vmem:[%s7 + $0x18] sm:$0xff]
    %v5746 = vld [vmem:[%s7 + $0x20] sm:$0xff]
    %v5747 = vld [vmem:[%s7 + $0x28] sm:$0xff]
    %v5748 = vld [vmem:[%s7 + $0x30] sm:$0xff]
    %v5749 = vld [vmem:[%s7 + $0x38] sm:$0xff]
    %v5750 = vld [vmem:[%s7 + $0x40] sm:$0xff]
    %v5751 = vld [vmem:[%s7 + $0x48] sm:$0xff]
    %v5752 = vld [vmem:[%s7 + $0x50] sm:$0xff]
    %v5753 = vld [vmem:[%s7 + $0x58] sm:$0xff]
    %v5754 = vld [vmem:[%s7 + $0x60] sm:$0xff]
    %v5755 = vld [vmem:[%s7 + $0x68] sm:$0xff]
    %v5756 = vld [vmem:[%s7 + $0x70] sm:$0xff]
    %v5757 = vld [vmem:[%s7 + $0x78] sm:$0xff]
    %5766 = vrot.lane.b32.xlu0 %v5686, 16
    %v5767 = vpop.permute.xlu0 %5766
    %5768 = vrot.lane.b32.xlu0 %v5687, 16
    %v5769 = vpop.permute.xlu0 %5768
    %5770 = vrot.lane.b32.xlu0 %v5688, 16
    %v5771 = vpop.permute.xlu0 %5770
    %5772 = vrot.lane.b32.xlu0 %v5689, 16
    %v5773 = vpop.permute.xlu0 %5772
    %5774 = vrot.lane.b32.xlu0 %v5690, 16
    %v5775 = vpop.permute.xlu0 %5774
    %5776 = vrot.lane.b32.xlu0 %v5691, 16
    %v5777 = vpop.permute.xlu0 %5776
    %5778 = vrot.lane.b32.xlu0 %v5692, 16
    %v5779 = vpop.permute.xlu0 %5778
    %5780 = vrot.lane.b32.xlu0 %v5693, 16
    %v5781 = vpop.permute.xlu0 %5780
    %5790 = vrot.lane.b32.xlu0 %v5710, 16
    %v5791 = vpop.permute.xlu0 %5790
    %5792 = vrot.lane.b32.xlu0 %v5711, 16
    %v5793 = vpop.permute.xlu0 %5792
    %5794 = vrot.lane.b32.xlu0 %v5712, 16
    %v5795 = vpop.permute.xlu0 %5794
    %5796 = vrot.lane.b32.xlu0 %v5713, 16
    %v5797 = vpop.permute.xlu0 %5796
    %5798 = vrot.lane.b32.xlu0 %v5714, 16
    %v5799 = vpop.permute.xlu0 %5798
    %5800 = vrot.lane.b32.xlu0 %v5715, 16
    %v5801 = vpop.permute.xlu0 %5800
    %5802 = vrot.lane.b32.xlu0 %v5716, 16
    %v5803 = vpop.permute.xlu0 %5802
    %5804 = vrot.lane.b32.xlu0 %v5717, 16
    %v5805 = vpop.permute.xlu0 %5804
    %v5807 = vsel %vm129, %v5767, 0
    %v5810 = vsel %vm129, %v5769, 0
    %v5813 = vsel %vm129, %v5771, 0
    %v5816 = vsel %vm129, %v5773, 0
    %v5819 = vsel %vm129, %v5775, 0
    %v5822 = vsel %vm129, %v5777, 0
    %v5825 = vsel %vm129, %v5779, 0
    %v5828 = vsel %vm129, %v5781, 0
    %v5831 = vsel %vm129, %v5791, 0
    %v5834 = vsel %vm129, %v5793, 0
    %v5837 = vsel %vm129, %v5795, 0
    %v5840 = vsel %vm129, %v5797, 0
    %v5843 = vsel %vm129, %v5799, 0
    %v5846 = vsel %vm129, %v5801, 0
    %v5849 = vsel %vm129, %v5803, 0
    %v5852 = vsel %vm129, %v5805, 0
    %5854 = vmatprep.subr.bf16.mxu0 0
    %5855 = vmatpush1.bf16.xpose.msra.mxu0 %v5852
    %5856 = vmatprep.subr.bf16.mxu0 0
    %5857 = vmatpush1.bf16.xpose.msra.mxu0 %v5849
    %5858 = vmatprep.subr.bf16.mxu0 0
    %5859 = vmatpush1.bf16.xpose.msra.mxu0 %v5846
    %5860 = vmatprep.subr.bf16.mxu0 0
    %5861 = vmatpush1.bf16.xpose.msra.mxu0 %v5843
    %5862 = vmatprep.subr.bf16.mxu0 0
    %5863 = vmatpush1.bf16.xpose.msra.mxu0 %v5840
    %5864 = vmatprep.subr.bf16.mxu0 0
    %5865 = vmatpush1.bf16.xpose.msra.mxu0 %v5837
    %5866 = vmatprep.subr.bf16.mxu0 0
    %5867 = vmatpush1.bf16.xpose.msra.mxu0 %v5834
    %5868 = vmatprep.subr.bf16.mxu0 0
    %5869 = vmatpush1.bf16.xpose.msra.mxu0 %v5831
    %5870 = vmatprep.subr.bf16.mxu0 0
    %5871 = vmatpush2.bf16.xpose.msra.mxu0 0
    %5872 = vmatprep.subr.bf16.mxu0 0
    %5873 = vmatpush2.bf16.xpose.msra.mxu0 0
    %5874 = vmatprep.subr.bf16.mxu0 0
    %5875 = vmatpush2.bf16.xpose.msra.mxu0 0
    %5876 = vmatprep.subr.bf16.mxu0 0
    %5877 = vmatpush2.bf16.xpose.msra.mxu0 0
    %5878 = vmatprep.subr.bf16.mxu0 0
    %5879 = vmatpush2.bf16.xpose.msra.mxu0 0
    %5880 = vmatprep.subr.bf16.mxu0 0
    %5881 = vmatpush2.bf16.xpose.msra.mxu0 0
    %5882 = vmatprep.subr.bf16.mxu0 0
    %5883 = vmatpush2.bf16.xpose.msra.mxu0 0
    %5884 = vmatprep.subr.bf16.mxu0 0
    %5885 = vmatpush2.bf16.xpose.msra.mxu0 0
    %5886 = vmatprep.mubr.bf16.mxu0 0
    %5887 = vmatmul.mubr.bf16.gmra.mxu0 %v5807
    %v5888 = vpop.f32.mrf.mxu0
    %v5889 = vadd.f32 %v5742, %v5888
    %v5890 = vpop.f32.mrf.mxu0
    %v5891 = vpop.f32.mrf.mxu0
    %v5892 = vadd.f32 %v5743, %v5891
    %v5893 = vpop.f32.mrf.mxu0
    %5894 = vmatprep.mubr.bf16.mxu0 0
    %5895 = vmatmul.mubr.bf16.gmra.mxu0 %v5810
    %v5896 = vpop.f32.mrf.mxu0
    %v5897 = vadd.f32 %v5744, %v5896
    %v5898 = vpop.f32.mrf.mxu0
    %v5899 = vpop.f32.mrf.mxu0
    %v5900 = vadd.f32 %v5745, %v5899
    %v5901 = vpop.f32.mrf.mxu0
    %5902 = vmatprep.mubr.bf16.mxu0 0
    %5903 = vmatmul.mubr.bf16.gmra.mxu0 %v5813
    %v5904 = vpop.f32.mrf.mxu0
    %v5905 = vadd.f32 %v5746, %v5904
    %v5906 = vpop.f32.mrf.mxu0
    %v5907 = vpop.f32.mrf.mxu0
    %v5908 = vadd.f32 %v5747, %v5907
    %v5909 = vpop.f32.mrf.mxu0
    %5910 = vmatprep.mubr.bf16.mxu0 0
    %5911 = vmatmul.mubr.bf16.gmra.mxu0 %v5816
    %v5912 = vpop.f32.mrf.mxu0
    %v5913 = vadd.f32 %v5748, %v5912
    %v5914 = vpop.f32.mrf.mxu0
    %v5915 = vpop.f32.mrf.mxu0
    %v5916 = vadd.f32 %v5749, %v5915
    %v5917 = vpop.f32.mrf.mxu0
    %5918 = vmatprep.mubr.bf16.mxu0 0
    %5919 = vmatmul.mubr.bf16.gmra.mxu0 %v5819
    %v5920 = vpop.f32.mrf.mxu0
    %v5921 = vadd.f32 %v5750, %v5920
    %v5922 = vpop.f32.mrf.mxu0
    %v5923 = vpop.f32.mrf.mxu0
    %v5924 = vadd.f32 %v5751, %v5923
    %v5925 = vpop.f32.mrf.mxu0
    %5926 = vmatprep.mubr.bf16.mxu0 0
    %5927 = vmatmul.mubr.bf16.gmra.mxu0 %v5822
    %v5928 = vpop.f32.mrf.mxu0
    %v5929 = vadd.f32 %v5752, %v5928
    %v5930 = vpop.f32.mrf.mxu0
    %v5931 = vpop.f32.mrf.mxu0
    %v5932 = vadd.f32 %v5753, %v5931
    %v5933 = vpop.f32.mrf.mxu0
    %5934 = vmatprep.mubr.bf16.mxu0 0
    %5935 = vmatmul.mubr.bf16.gmra.mxu0 %v5825
    %v5936 = vpop.f32.mrf.mxu0
    %v5937 = vadd.f32 %v5754, %v5936
    %v5938 = vpop.f32.mrf.mxu0
    %v5939 = vpop.f32.mrf.mxu0
    %v5940 = vadd.f32 %v5755, %v5939
    %v5941 = vpop.f32.mrf.mxu0
    %5942 = vmatprep.mubr.bf16.mxu0 0
    %5943 = vmatmul.mubr.bf16.gmra.mxu0 %v5828
    %v5944 = vpop.f32.mrf.mxu0
    %v5945 = vadd.f32 %v5756, %v5944
    %v5946 = vpop.f32.mrf.mxu0
    %v5947 = vpop.f32.mrf.mxu0
    %v5948 = vadd.f32 %v5757, %v5947
    %v5949 = vpop.f32.mrf.mxu0
    %5950 = vdwg.mxu0
    %5951 = vmax.xlane.f32.xlu0 %v5889
    %v5952 = vpop.xlane.xlu0 %5951
    %5953 = vmax.xlane.f32.xlu0 %v5892
    %v5954 = vpop.xlane.xlu0 %5953
    %5955 = vmax.xlane.f32.xlu0 %v5897
    %v5956 = vpop.xlane.xlu0 %5955
    %5957 = vmax.xlane.f32.xlu0 %v5900
    %v5958 = vpop.xlane.xlu0 %5957
    %5959 = vmax.xlane.f32.xlu0 %v5905
    %v5960 = vpop.xlane.xlu0 %5959
    %5961 = vmax.xlane.f32.xlu0 %v5908
    %v5962 = vpop.xlane.xlu0 %5961
    %5963 = vmax.xlane.f32.xlu0 %v5913
    %v5964 = vpop.xlane.xlu0 %5963
    %5965 = vmax.xlane.f32.xlu0 %v5916
    %v5966 = vpop.xlane.xlu0 %5965
    %5967 = vmax.xlane.f32.xlu0 %v5921
    %v5968 = vpop.xlane.xlu0 %5967
    %5969 = vmax.xlane.f32.xlu0 %v5924
    %v5970 = vpop.xlane.xlu0 %5969
    %5971 = vmax.xlane.f32.xlu0 %v5929
    %v5972 = vpop.xlane.xlu0 %5971
    %5973 = vmax.xlane.f32.xlu0 %v5932
    %v5974 = vpop.xlane.xlu0 %5973
    %5975 = vmax.xlane.f32.xlu0 %v5937
    %v5976 = vpop.xlane.xlu0 %5975
    %5977 = vmax.xlane.f32.xlu0 %v5940
    %v5978 = vpop.xlane.xlu0 %5977
    %5979 = vmax.xlane.f32.xlu0 %v5945
    %v5980 = vpop.xlane.xlu0 %5979
    %5981 = vmax.xlane.f32.xlu0 %v5948
    %v5982 = vpop.xlane.xlu0 %5981
    %v5983 = vsub.f32 %v5889, %v5952
    %v5984 = vsub.f32 %v5892, %v5954
    %v5985 = vsub.f32 %v5897, %v5956
    %v5986 = vsub.f32 %v5900, %v5958
    %v5987 = vsub.f32 %v5905, %v5960
    %v5988 = vsub.f32 %v5908, %v5962
    %v5989 = vsub.f32 %v5913, %v5964
    %v5990 = vsub.f32 %v5916, %v5966
    %v5991 = vsub.f32 %v5921, %v5968
    %v5992 = vsub.f32 %v5924, %v5970
    %v5993 = vsub.f32 %v5929, %v5972
    %v5994 = vsub.f32 %v5932, %v5974
    %v5995 = vsub.f32 %v5937, %v5976
    %v5996 = vsub.f32 %v5940, %v5978
    %v5997 = vsub.f32 %v5945, %v5980
    %v5998 = vsub.f32 %v5948, %v5982
    %v5999 = vmul.f32 %v5983, 1.442695
    %v6000 = vpow.pop %v5999
    %v6001 = vmul.f32 %v5984, 1.442695
    %v6002 = vpow.pop %v6001
    %v6003 = vmul.f32 %v5985, 1.442695
    %v6004 = vpow.pop %v6003
    %v6005 = vmul.f32 %v5986, 1.442695
    %v6006 = vpow.pop %v6005
    %v6007 = vmul.f32 %v5987, 1.442695
    %v6008 = vpow.pop %v6007
    %v6009 = vmul.f32 %v5988, 1.442695
    %v6010 = vpow.pop %v6009
    %v6011 = vmul.f32 %v5989, 1.442695
    %v6012 = vpow.pop %v6011
    %v6013 = vmul.f32 %v5990, 1.442695
    %v6014 = vpow.pop %v6013
    %v6015 = vmul.f32 %v5991, 1.442695
    %v6016 = vpow.pop %v6015
    %v6017 = vmul.f32 %v5992, 1.442695
    %v6018 = vpow.pop %v6017
    %v6019 = vmul.f32 %v5993, 1.442695
    %v6020 = vpow.pop %v6019
    %v6021 = vmul.f32 %v5994, 1.442695
    %v6022 = vpow.pop %v6021
    %v6023 = vmul.f32 %v5995, 1.442695
    %v6024 = vpow.pop %v6023
    %v6025 = vmul.f32 %v5996, 1.442695
    %v6026 = vpow.pop %v6025
    %v6027 = vmul.f32 %v5997, 1.442695
    %v6028 = vpow.pop %v6027
    %v6029 = vmul.f32 %v5998, 1.442695
    %v6030 = vpow.pop %v6029
    %6031 = vadd.xlane.f32.xlu0 %v6000
    %v6032 = vpop.xlane.xlu0 %6031
    %6033 = vadd.xlane.f32.xlu0 %v6002
    %v6034 = vpop.xlane.xlu0 %6033
    %6035 = vadd.xlane.f32.xlu0 %v6004
    %v6036 = vpop.xlane.xlu0 %6035
    %6037 = vadd.xlane.f32.xlu0 %v6006
    %v6038 = vpop.xlane.xlu0 %6037
    %6039 = vadd.xlane.f32.xlu0 %v6008
    %v6040 = vpop.xlane.xlu0 %6039
    %6041 = vadd.xlane.f32.xlu0 %v6010
    %v6042 = vpop.xlane.xlu0 %6041
    %6043 = vadd.xlane.f32.xlu0 %v6012
    %v6044 = vpop.xlane.xlu0 %6043
    %6045 = vadd.xlane.f32.xlu0 %v6014
    %v6046 = vpop.xlane.xlu0 %6045
    %6047 = vadd.xlane.f32.xlu0 %v6016
    %v6048 = vpop.xlane.xlu0 %6047
    %6049 = vadd.xlane.f32.xlu0 %v6018
    %v6050 = vpop.xlane.xlu0 %6049
    %6051 = vadd.xlane.f32.xlu0 %v6020
    %v6052 = vpop.xlane.xlu0 %6051
    %6053 = vadd.xlane.f32.xlu0 %v6022
    %v6054 = vpop.xlane.xlu0 %6053
    %6055 = vadd.xlane.f32.xlu0 %v6024
    %v6056 = vpop.xlane.xlu0 %6055
    %6057 = vadd.xlane.f32.xlu0 %v6026
    %v6058 = vpop.xlane.xlu0 %6057
    %6059 = vadd.xlane.f32.xlu0 %v6028
    %v6060 = vpop.xlane.xlu0 %6059
    %6061 = vadd.xlane.f32.xlu0 %v6030
    %v6062 = vpop.xlane.xlu0 %6061
    %v6063 = vrcp.pop %v6032
    %v6064 = vrcp.pop %v6034
    %v6065 = vrcp.pop %v6036
    %v6066 = vrcp.pop %v6038
    %v6067 = vrcp.pop %v6040
    %v6068 = vrcp.pop %v6042
    %v6069 = vrcp.pop %v6044
    %v6070 = vrcp.pop %v6046
    %v6071 = vrcp.pop %v6048
    %v6072 = vrcp.pop %v6050
    %v6073 = vrcp.pop %v6052
    %v6074 = vrcp.pop %v6054
    %v6075 = vrcp.pop %v6056
    %v6076 = vrcp.pop %v6058
    %v6077 = vrcp.pop %v6060
    %v6078 = vrcp.pop %v6062
    %v6079 = vmul.f32 %v6000, %v6063
    %v6080 = vmul.f32 %v6002, %v6064
    %v6081 = vmul.f32 %v6004, %v6065
    %v6082 = vmul.f32 %v6006, %v6066
    %v6083 = vmul.f32 %v6008, %v6067
    %v6084 = vmul.f32 %v6010, %v6068
    %v6085 = vmul.f32 %v6012, %v6069
    %v6086 = vmul.f32 %v6014, %v6070
    %v6087 = vmul.f32 %v6016, %v6071
    %v6088 = vmul.f32 %v6018, %v6072
    %v6089 = vmul.f32 %v6020, %v6073
    %v6090 = vmul.f32 %v6022, %v6074
    %v6091 = vmul.f32 %v6024, %v6075
    %v6092 = vmul.f32 %v6026, %v6076
    %v6093 = vmul.f32 %v6028, %v6077
    %v6094 = vmul.f32 %v6030, %v6078
    %v6095 = vpack.c.bf16 %v6080, %v6079
    %v6096 = vpack.c.bf16 %v6082, %v6081
    %v6097 = vpack.c.bf16 %v6084, %v6083
    %v6098 = vpack.c.bf16 %v6086, %v6085
    %v6099 = vpack.c.bf16 %v6088, %v6087
    %v6100 = vpack.c.bf16 %v6090, %v6089
    %v6101 = vpack.c.bf16 %v6092, %v6091
    %v6102 = vpack.c.bf16 %v6094, %v6093
    %6111 = vrot.lane.b32.xlu0 %v5734, 16
    %v6112 = vpop.permute.xlu0 %6111
    %6113 = vrot.lane.b32.xlu0 %v5735, 16
    %v6114 = vpop.permute.xlu0 %6113
    %6115 = vrot.lane.b32.xlu0 %v5736, 16
    %v6116 = vpop.permute.xlu0 %6115
    %6117 = vrot.lane.b32.xlu0 %v5737, 16
    %v6118 = vpop.permute.xlu0 %6117
    %6119 = vrot.lane.b32.xlu0 %v5738, 16
    %v6120 = vpop.permute.xlu0 %6119
    %6121 = vrot.lane.b32.xlu0 %v5739, 16
    %v6122 = vpop.permute.xlu0 %6121
    %6123 = vrot.lane.b32.xlu0 %v5740, 16
    %v6124 = vpop.permute.xlu0 %6123
    %6125 = vrot.lane.b32.xlu0 %v5741, 16
    %v6126 = vpop.permute.xlu0 %6125
    %6135 = vmatprep.subr.bf16.mxu0 0
    %6136 = vmatpush1.bf16.msra.mxu0 %v6126
    %6137 = vmatprep.subr.bf16.mxu0 0
    %6138 = vmatpush1.bf16.msra.mxu0 %v6124
    %6139 = vmatprep.subr.bf16.mxu0 0
    %6140 = vmatpush1.bf16.msra.mxu0 %v6122
    %6141 = vmatprep.subr.bf16.mxu0 0
    %6142 = vmatpush1.bf16.msra.mxu0 %v6120
    %6143 = vmatprep.subr.bf16.mxu0 0
    %6144 = vmatpush1.bf16.msra.mxu0 %v6118
    %6145 = vmatprep.subr.bf16.mxu0 0
    %6146 = vmatpush1.bf16.msra.mxu0 %v6116
    %6147 = vmatprep.subr.bf16.mxu0 0
    %6148 = vmatpush1.bf16.msra.mxu0 %v6114
    %6149 = vmatprep.subr.bf16.mxu0 0
    %6150 = vmatpush1.bf16.msra.mxu0 %v6112
    %6151 = vmatprep.subr.bf16.mxu0 0
    %6152 = vmatpush2.bf16.msra.mxu0 0
    %6153 = vmatprep.subr.bf16.mxu0 0
    %6154 = vmatpush2.bf16.msra.mxu0 0
    %6155 = vmatprep.subr.bf16.mxu0 0
    %6156 = vmatpush2.bf16.msra.mxu0 0
    %6157 = vmatprep.subr.bf16.mxu0 0
    %6158 = vmatpush2.bf16.msra.mxu0 0
    %6159 = vmatprep.subr.bf16.mxu0 0
    %6160 = vmatpush2.bf16.msra.mxu0 0
    %6161 = vmatprep.subr.bf16.mxu0 0
    %6162 = vmatpush2.bf16.msra.mxu0 0
    %6163 = vmatprep.subr.bf16.mxu0 0
    %6164 = vmatpush2.bf16.msra.mxu0 0
    %6165 = vmatprep.subr.bf16.mxu0 0
    %6166 = vmatpush2.bf16.msra.mxu0 0
    %6167 = vmatprep.mubr.bf16.mxu0 0
    %6168 = vmatmul.mubr.bf16.gmra.mxu0 %v6095
    %v6169 = vpop.f32.mrf.mxu0
    %v6170 = vadd.f32 0.0, %v6169
    %v6171 = vpop.f32.mrf.mxu0
    %v6172 = vpop.f32.mrf.mxu0
    %v6173 = vadd.f32 0.0, %v6172
    %v6174 = vpop.f32.mrf.mxu0
    %6175 = vmatprep.mubr.bf16.mxu0 0
    %6176 = vmatmul.mubr.bf16.gmra.mxu0 %v6096
    %v6177 = vpop.f32.mrf.mxu0
    %v6178 = vadd.f32 0.0, %v6177
    %v6179 = vpop.f32.mrf.mxu0
    %v6180 = vpop.f32.mrf.mxu0
    %v6181 = vadd.f32 0.0, %v6180
    %v6182 = vpop.f32.mrf.mxu0
    %6183 = vmatprep.mubr.bf16.mxu0 0
    %6184 = vmatmul.mubr.bf16.gmra.mxu0 %v6097
    %v6185 = vpop.f32.mrf.mxu0
    %v6186 = vadd.f32 0.0, %v6185
    %v6187 = vpop.f32.mrf.mxu0
    %v6188 = vpop.f32.mrf.mxu0
    %v6189 = vadd.f32 0.0, %v6188
    %v6190 = vpop.f32.mrf.mxu0
    %6191 = vmatprep.mubr.bf16.mxu0 0
    %6192 = vmatmul.mubr.bf16.gmra.mxu0 %v6098
    %v6193 = vpop.f32.mrf.mxu0
    %v6194 = vadd.f32 0.0, %v6193
    %v6195 = vpop.f32.mrf.mxu0
    %v6196 = vpop.f32.mrf.mxu0
    %v6197 = vadd.f32 0.0, %v6196
    %v6198 = vpop.f32.mrf.mxu0
    %6199 = vmatprep.mubr.bf16.mxu0 0
    %6200 = vmatmul.mubr.bf16.gmra.mxu0 %v6099
    %v6201 = vpop.f32.mrf.mxu0
    %v6202 = vadd.f32 0.0, %v6201
    %v6203 = vpop.f32.mrf.mxu0
    %v6204 = vpop.f32.mrf.mxu0
    %v6205 = vadd.f32 0.0, %v6204
    %v6206 = vpop.f32.mrf.mxu0
    %6207 = vmatprep.mubr.bf16.mxu0 0
    %6208 = vmatmul.mubr.bf16.gmra.mxu0 %v6100
    %v6209 = vpop.f32.mrf.mxu0
    %v6210 = vadd.f32 0.0, %v6209
    %v6211 = vpop.f32.mrf.mxu0
    %v6212 = vpop.f32.mrf.mxu0
    %v6213 = vadd.f32 0.0, %v6212
    %v6214 = vpop.f32.mrf.mxu0
    %6215 = vmatprep.mubr.bf16.mxu0 0
    %6216 = vmatmul.mubr.bf16.gmra.mxu0 %v6101
    %v6217 = vpop.f32.mrf.mxu0
    %v6218 = vadd.f32 0.0, %v6217
    %v6219 = vpop.f32.mrf.mxu0
    %v6220 = vpop.f32.mrf.mxu0
    %v6221 = vadd.f32 0.0, %v6220
    %v6222 = vpop.f32.mrf.mxu0
    %6223 = vmatprep.mubr.bf16.mxu0 0
    %6224 = vmatmul.mubr.bf16.gmra.mxu0 %v6102
    %v6225 = vpop.f32.mrf.mxu0
    %v6226 = vadd.f32 0.0, %v6225
    %v6227 = vpop.f32.mrf.mxu0
    %v6228 = vpop.f32.mrf.mxu0
    %v6229 = vadd.f32 0.0, %v6228
    %v6230 = vpop.f32.mrf.mxu0
    %6231 = vdwg.mxu0
    %6248 = vrot.lane.b32.xlu0 %v6170, 112
    %v6249 = vpop.permute.xlu0 %6248
    %6250 = vrot.lane.b32.xlu0 %v6173, 112
    %v6251 = vpop.permute.xlu0 %6250
    %6252 = vrot.lane.b32.xlu0 %v6178, 112
    %v6253 = vpop.permute.xlu0 %6252
    %6254 = vrot.lane.b32.xlu0 %v6181, 112
    %v6255 = vpop.permute.xlu0 %6254
    %6256 = vrot.lane.b32.xlu0 %v6186, 112
    %v6257 = vpop.permute.xlu0 %6256
    %6258 = vrot.lane.b32.xlu0 %v6189, 112
    %v6259 = vpop.permute.xlu0 %6258
    %6260 = vrot.lane.b32.xlu0 %v6194, 112
    %v6261 = vpop.permute.xlu0 %6260
    %6262 = vrot.lane.b32.xlu0 %v6197, 112
    %v6263 = vpop.permute.xlu0 %6262
    %6264 = vrot.lane.b32.xlu0 %v6202, 112
    %v6265 = vpop.permute.xlu0 %6264
    %6266 = vrot.lane.b32.xlu0 %v6205, 112
    %v6267 = vpop.permute.xlu0 %6266
    %6268 = vrot.lane.b32.xlu0 %v6210, 112
    %v6269 = vpop.permute.xlu0 %6268
    %6270 = vrot.lane.b32.xlu0 %v6213, 112
    %v6271 = vpop.permute.xlu0 %6270
    %6272 = vrot.lane.b32.xlu0 %v6218, 112
    %v6273 = vpop.permute.xlu0 %6272
    %6274 = vrot.lane.b32.xlu0 %v6221, 112
    %v6275 = vpop.permute.xlu0 %6274
    %6276 = vrot.lane.b32.xlu0 %v6226, 112
    %v6277 = vpop.permute.xlu0 %6276
    %6278 = vrot.lane.b32.xlu0 %v6229, 112
    %v6279 = vpop.permute.xlu0 %6278
    %vm6296 = vcmask 1048448
    %6297 = vst.msk [vmem:[#allocation3] sm:$0xff] %vm6296, %v6249
    %6298 = vst.msk [vmem:[#allocation3 + $0x8] sm:$0xff] %vm6296, %v6251
    %6299 = vst.msk [vmem:[#allocation3 + $0x10] sm:$0xff] %vm6296, %v6253
    %6300 = vst.msk [vmem:[#allocation3 + $0x18] sm:$0xff] %vm6296, %v6255
    %6301 = vst.msk [vmem:[#allocation3 + $0x20] sm:$0xff] %vm6296, %v6257
    %6302 = vst.msk [vmem:[#allocation3 + $0x28] sm:$0xff] %vm6296, %v6259
    %6303 = vst.msk [vmem:[#allocation3 + $0x30] sm:$0xff] %vm6296, %v6261
    %6304 = vst.msk [vmem:[#allocation3 + $0x38] sm:$0xff] %vm6296, %v6263
    %6305 = vst.msk [vmem:[#allocation3 + $0x40] sm:$0xff] %vm6296, %v6265
    %6306 = vst.msk [vmem:[#allocation3 + $0x48] sm:$0xff] %vm6296, %v6267
    %6307 = vst.msk [vmem:[#allocation3 + $0x50] sm:$0xff] %vm6296, %v6269
    %6308 = vst.msk [vmem:[#allocation3 + $0x58] sm:$0xff] %vm6296, %v6271
    %6309 = vst.msk [vmem:[#allocation3 + $0x60] sm:$0xff] %vm6296, %v6273
    %6310 = vst.msk [vmem:[#allocation3 + $0x68] sm:$0xff] %vm6296, %v6275
    %6311 = vst.msk [vmem:[#allocation3 + $0x70] sm:$0xff] %vm6296, %v6277
    %6312 = vst.msk [vmem:[#allocation3 + $0x78] sm:$0xff] %vm6296, %v6279
    %v6313 = vld [vmem:[#allocation3] sm:$0xff]
    %v6314 = vld [vmem:[#allocation3 + $0x8] sm:$0xff]
    %v6315 = vld [vmem:[#allocation3 + $0x10] sm:$0xff]
    %v6316 = vld [vmem:[#allocation3 + $0x18] sm:$0xff]
    %v6317 = vld [vmem:[#allocation3 + $0x20] sm:$0xff]
    %v6318 = vld [vmem:[#allocation3 + $0x28] sm:$0xff]
    %v6319 = vld [vmem:[#allocation3 + $0x30] sm:$0xff]
    %v6320 = vld [vmem:[#allocation3 + $0x38] sm:$0xff]
    %v6321 = vld [vmem:[#allocation3 + $0x40] sm:$0xff]
    %v6322 = vld [vmem:[#allocation3 + $0x48] sm:$0xff]
    %v6323 = vld [vmem:[#allocation3 + $0x50] sm:$0xff]
    %v6324 = vld [vmem:[#allocation3 + $0x58] sm:$0xff]
    %v6325 = vld [vmem:[#allocation3 + $0x60] sm:$0xff]
    %v6326 = vld [vmem:[#allocation3 + $0x68] sm:$0xff]
    %v6327 = vld [vmem:[#allocation3 + $0x70] sm:$0xff]
    %v6328 = vld [vmem:[#allocation3 + $0x78] sm:$0xff]
    %v6329 = vpack.c.bf16 %v6314, %v6313
    %v6330 = vpack.c.bf16 %v6316, %v6315
    %v6331 = vpack.c.bf16 %v6318, %v6317
    %v6332 = vpack.c.bf16 %v6320, %v6319
    %v6333 = vpack.c.bf16 %v6322, %v6321
    %v6334 = vpack.c.bf16 %v6324, %v6323
    %v6335 = vpack.c.bf16 %v6326, %v6325
    %v6336 = vpack.c.bf16 %v6328, %v6327
    %v6337 = vld [vmem:[%s8] sm:$0xf]
    %v6338 = vld [vmem:[%s8 + $0x4] sm:$0xf]
    %v6339 = vld [vmem:[%s8 + $0x8] sm:$0xf]
    %v6340 = vld [vmem:[%s8 + $0xc] sm:$0xf]
    %v6341 = vld [vmem:[%s8 + $0x10] sm:$0xf]
    %v6342 = vld [vmem:[%s8 + $0x14] sm:$0xf]
    %v6343 = vld [vmem:[%s8 + $0x18] sm:$0xf]
    %v6344 = vld [vmem:[%s8 + $0x1c] sm:$0xf]
    %v6345 = vld [vmem:[%s8 + $0x20] sm:$0xf]
    %v6346 = vld [vmem:[%s8 + $0x24] sm:$0xf]
    %v6347 = vld [vmem:[%s8 + $0x28] sm:$0xf]
    %v6348 = vld [vmem:[%s8 + $0x2c] sm:$0xf]
    %v6349 = vld [vmem:[%s8 + $0x30] sm:$0xf]
    %v6350 = vld [vmem:[%s8 + $0x34] sm:$0xf]
    %v6351 = vld [vmem:[%s8 + $0x38] sm:$0xf]
    %v6352 = vld [vmem:[%s8 + $0x3c] sm:$0xf]
    %v6353 = vld [vmem:[%s9] sm:$0x1]
    %v6355 = vlaneseq
    %v6356 = vshrl.u32 %v6355, 7
    %v6357 = vsub.s32 0, %v6356
    %v6358 = vrot.slane %v6353, %v6357
    %v6376 = vunpack.c.l.b16 %v6337
    %v6377 = vunpack.c.l.b16 %v6338
    %v6378 = vunpack.c.l.b16 %v6339
    %v6379 = vunpack.c.l.b16 %v6340
    %v6380 = vunpack.c.l.b16 %v6341
    %v6381 = vunpack.c.l.b16 %v6342
    %v6382 = vunpack.c.l.b16 %v6343
    %v6383 = vunpack.c.l.b16 %v6344
    %v6384 = vunpack.c.l.b16 %v6345
    %v6385 = vunpack.c.l.b16 %v6346
    %v6386 = vunpack.c.l.b16 %v6347
    %v6387 = vunpack.c.l.b16 %v6348
    %v6388 = vunpack.c.l.b16 %v6349
    %v6389 = vunpack.c.l.b16 %v6350
    %v6390 = vunpack.c.l.b16 %v6351
    %v6391 = vunpack.c.l.b16 %v6352
    %v6392 = vpack.c.b16 %v6377, %v6376
    %v6393 = vpack.c.b16 %v6379, %v6378
    %v6394 = vpack.c.b16 %v6381, %v6380
    %v6395 = vpack.c.b16 %v6383, %v6382
    %v6396 = vpack.c.b16 %v6385, %v6384
    %v6397 = vpack.c.b16 %v6387, %v6386
    %v6398 = vpack.c.b16 %v6389, %v6388
    %v6399 = vpack.c.b16 %v6391, %v6390
    %6408 = vmatprep.subr.bf16.mxu0 0
    %6409 = vmatpush1.bf16.msra.mxu0 %v6399
    %6410 = vmatprep.subr.bf16.mxu0 0
    %6411 = vmatpush1.bf16.msra.mxu0 %v6398
    %6412 = vmatprep.subr.bf16.mxu0 0
    %6413 = vmatpush1.bf16.msra.mxu0 %v6397
    %6414 = vmatprep.subr.bf16.mxu0 0
    %6415 = vmatpush1.bf16.msra.mxu0 %v6396
    %6416 = vmatprep.subr.bf16.mxu0 0
    %6417 = vmatpush1.bf16.msra.mxu0 %v6395
    %6418 = vmatprep.subr.bf16.mxu0 0
    %6419 = vmatpush1.bf16.msra.mxu0 %v6394
    %6420 = vmatprep.subr.bf16.mxu0 0
    %6421 = vmatpush1.bf16.msra.mxu0 %v6393
    %6422 = vmatprep.subr.bf16.mxu0 0
    %6423 = vmatpush1.bf16.msra.mxu0 %v6392
    %6424 = vmatprep.subr.bf16.mxu0 0
    %6425 = vmatpush2.bf16.msra.mxu0 0
    %6426 = vmatprep.subr.bf16.mxu0 0
    %6427 = vmatpush2.bf16.msra.mxu0 0
    %6428 = vmatprep.subr.bf16.mxu0 0
    %6429 = vmatpush2.bf16.msra.mxu0 0
    %6430 = vmatprep.subr.bf16.mxu0 0
    %6431 = vmatpush2.bf16.msra.mxu0 0
    %6432 = vmatprep.subr.bf16.mxu0 0
    %6433 = vmatpush2.bf16.msra.mxu0 0
    %6434 = vmatprep.subr.bf16.mxu0 0
    %6435 = vmatpush2.bf16.msra.mxu0 0
    %6436 = vmatprep.subr.bf16.mxu0 0
    %6437 = vmatpush2.bf16.msra.mxu0 0
    %6438 = vmatprep.subr.bf16.mxu0 0
    %6439 = vmatpush2.bf16.msra.mxu0 0
    %6440 = vmatprep.mubr.bf16.mxu0 0
    %6441 = vmatmul.mubr.bf16.gmra.mxu0 %v6329
    %v6442 = vpop.f32.mrf.mxu0
    %v6443 = vadd.f32 %v6358, %v6442
    %v6444 = vpop.f32.mrf.mxu0
    %v6445 = vpop.f32.mrf.mxu0
    %v6446 = vadd.f32 %v6358, %v6445
    %v6447 = vpop.f32.mrf.mxu0
    %6448 = vmatprep.mubr.bf16.mxu0 0
    %6449 = vmatmul.mubr.bf16.gmra.mxu0 %v6330
    %v6450 = vpop.f32.mrf.mxu0
    %v6451 = vadd.f32 %v6358, %v6450
    %v6452 = vpop.f32.mrf.mxu0
    %v6453 = vpop.f32.mrf.mxu0
    %v6454 = vadd.f32 %v6358, %v6453
    %v6455 = vpop.f32.mrf.mxu0
    %6456 = vmatprep.mubr.bf16.mxu0 0
    %6457 = vmatmul.mubr.bf16.gmra.mxu0 %v6331
    %v6458 = vpop.f32.mrf.mxu0
    %v6459 = vadd.f32 %v6358, %v6458
    %v6460 = vpop.f32.mrf.mxu0
    %v6461 = vpop.f32.mrf.mxu0
    %v6462 = vadd.f32 %v6358, %v6461
    %v6463 = vpop.f32.mrf.mxu0
    %6464 = vmatprep.mubr.bf16.mxu0 0
    %6465 = vmatmul.mubr.bf16.gmra.mxu0 %v6332
    %v6466 = vpop.f32.mrf.mxu0
    %v6467 = vadd.f32 %v6358, %v6466
    %v6468 = vpop.f32.mrf.mxu0
    %v6469 = vpop.f32.mrf.mxu0
    %v6470 = vadd.f32 %v6358, %v6469
    %v6471 = vpop.f32.mrf.mxu0
    %6472 = vmatprep.mubr.bf16.mxu0 0
    %6473 = vmatmul.mubr.bf16.gmra.mxu0 %v6333
    %v6474 = vpop.f32.mrf.mxu0
    %v6475 = vadd.f32 %v6358, %v6474
    %v6476 = vpop.f32.mrf.mxu0
    %v6477 = vpop.f32.mrf.mxu0
    %v6478 = vadd.f32 %v6358, %v6477
    %v6479 = vpop.f32.mrf.mxu0
    %6480 = vmatprep.mubr.bf16.mxu0 0
    %6481 = vmatmul.mubr.bf16.gmra.mxu0 %v6334
    %v6482 = vpop.f32.mrf.mxu0
    %v6483 = vadd.f32 %v6358, %v6482
    %v6484 = vpop.f32.mrf.mxu0
    %v6485 = vpop.f32.mrf.mxu0
    %v6486 = vadd.f32 %v6358, %v6485
    %v6487 = vpop.f32.mrf.mxu0
    %6488 = vmatprep.mubr.bf16.mxu0 0
    %6489 = vmatmul.mubr.bf16.gmra.mxu0 %v6335
    %v6490 = vpop.f32.mrf.mxu0
    %v6491 = vadd.f32 %v6358, %v6490
    %v6492 = vpop.f32.mrf.mxu0
    %v6493 = vpop.f32.mrf.mxu0
    %v6494 = vadd.f32 %v6358, %v6493
    %v6495 = vpop.f32.mrf.mxu0
    %6496 = vmatprep.mubr.bf16.mxu0 0
    %6497 = vmatmul.mubr.bf16.gmra.mxu0 %v6336
    %v6498 = vpop.f32.mrf.mxu0
    %v6499 = vadd.f32 %v6358, %v6498
    %v6500 = vpop.f32.mrf.mxu0
    %v6501 = vpop.f32.mrf.mxu0
    %v6502 = vadd.f32 %v6358, %v6501
    %v6503 = vpop.f32.mrf.mxu0
    %6504 = vdwg.mxu0
    %v6505 = vld [vmem:[%s1] sm:$0xf]
    %v6506 = vld [vmem:[%s1 + $0x4] sm:$0xf]
    %v6507 = vld [vmem:[%s1 + $0x8] sm:$0xf]
    %v6508 = vld [vmem:[%s1 + $0xc] sm:$0xf]
    %v6509 = vld [vmem:[%s10] sm:$0xf]
    %v6510 = vld [vmem:[%s10 + $0x4] sm:$0xf]
    %v6511 = vld [vmem:[%s10 + $0x8] sm:$0xf]
    %v6512 = vld [vmem:[%s10 + $0xc] sm:$0xf]
    %v6513 = vld [vmem:[%s11] sm:$0x1]
    %v6515 = vlaneseq
    %v6516 = vshrl.u32 %v6515, 7
    %v6517 = vsub.s32 0, %v6516
    %v6518 = vrot.slane %v6513, %v6517
    %v6524 = vunpack.c.l.b16 %v6505
    %v6525 = vunpack.c.l.b16 %v6506
    %v6526 = vunpack.c.l.b16 %v6507
    %v6527 = vunpack.c.l.b16 %v6508
    %v6528 = vpack.c.b16 %v6525, %v6524
    %v6529 = vpack.c.b16 %v6527, %v6526
    %v6534 = vunpack.c.l.b16 %v6509
    %v6535 = vunpack.c.l.b16 %v6510
    %v6536 = vunpack.c.l.b16 %v6511
    %v6537 = vunpack.c.l.b16 %v6512
    %v6538 = vpack.c.b16 %v6535, %v6534
    %v6539 = vpack.c.b16 %v6537, %v6536
    %vm6542 = vcmask 261120
    %v6544 = vsel %vm6542, %v6528, 0
    %v6547 = vsel %vm6542, %v6529, 0
    %6549 = vmatprep.subr.bf16.mxu0 0
    %6550 = vmatpush1.bf16.msra.mxu0 0
    %6551 = vmatprep.subr.bf16.mxu0 0
    %6552 = vmatpush1.bf16.msra.mxu0 0
    %6553 = vmatprep.subr.bf16.mxu0 0
    %6554 = vmatpush1.bf16.msra.mxu0 0
    %6555 = vmatprep.subr.bf16.mxu0 0
    %6556 = vmatpush1.bf16.msra.mxu0 0
    %6557 = vmatprep.subr.bf16.mxu0 0
    %6558 = vmatpush1.bf16.msra.mxu0 0
    %6559 = vmatprep.subr.bf16.mxu0 0
    %6560 = vmatpush1.bf16.msra.mxu0 0
    %6561 = vmatprep.subr.bf16.mxu0 0
    %6562 = vmatpush1.bf16.msra.mxu0 %v6539
    %6563 = vmatprep.subr.bf16.mxu0 0
    %6564 = vmatpush1.bf16.msra.mxu0 %v6538
    %6565 = vmatprep.subr.bf16.mxu0 0
    %6566 = vmatpush2.bf16.msra.mxu0 0
    %6567 = vmatprep.subr.bf16.mxu0 0
    %6568 = vmatpush2.bf16.msra.mxu0 0
    %6569 = vmatprep.subr.bf16.mxu0 0
    %6570 = vmatpush2.bf16.msra.mxu0 0
    %6571 = vmatprep.subr.bf16.mxu0 0
    %6572 = vmatpush2.bf16.msra.mxu0 0
    %6573 = vmatprep.subr.bf16.mxu0 0
    %6574 = vmatpush2.bf16.msra.mxu0 0
    %6575 = vmatprep.subr.bf16.mxu0 0
    %6576 = vmatpush2.bf16.msra.mxu0 0
    %6577 = vmatprep.subr.bf16.mxu0 0
    %6578 = vmatpush2.bf16.msra.mxu0 0
    %6579 = vmatprep.subr.bf16.mxu0 0
    %6580 = vmatpush2.bf16.msra.mxu0 0
    %6581 = vmatprep.mubr.bf16.mxu0 0
    %6582 = vmatmul.mubr.bf16.gmra.mxu0 %v6544
    %v6583 = vpop.f32.mrf.mxu0
    %v6584 = vadd.f32 %v6518, %v6583
    %v6585 = vpop.f32.mrf.mxu0
    %v6586 = vpop.f32.mrf.mxu0
    %v6587 = vadd.f32 %v6518, %v6586
    %v6588 = vpop.f32.mrf.mxu0
    %6589 = vmatprep.mubr.bf16.mxu0 0
    %6590 = vmatmul.mubr.bf16.gmra.mxu0 %v6547
    %v6591 = vpop.f32.mrf.mxu0
    %v6592 = vadd.f32 %v6518, %v6591
    %v6593 = vpop.f32.mrf.mxu0
    %v6594 = vpop.f32.mrf.mxu0
    %v6595 = vadd.f32 %v6518, %v6594
    %v6596 = vpop.f32.mrf.mxu0
    %6597 = vdwg.mxu0
    %v6598 = vxor.u32 %v6584, 2147483648
    %v6599 = vxor.u32 %v6587, 2147483648
    %v6600 = vxor.u32 %v6592, 2147483648
    %v6601 = vxor.u32 %v6595, 2147483648
    %v6602 = vmul.f32 %v6598, 1.442695
    %v6603 = vpow.pop %v6602
    %v6604 = vmul.f32 %v6599, 1.442695
    %v6605 = vpow.pop %v6604
    %v6606 = vmul.f32 %v6600, 1.442695
    %v6607 = vpow.pop %v6606
    %v6608 = vmul.f32 %v6601, 1.442695
    %v6609 = vpow.pop %v6608
    %v6610 = vadd.f32 %v6603, 1.0
    %v6611 = vadd.f32 %v6605, 1.0
    %v6612 = vadd.f32 %v6607, 1.0
    %v6613 = vadd.f32 %v6609, 1.0
    %v6614 = vrcp.pop %v6610
    %v6615 = vmul.f32 1.0, %v6614
    %v6616 = vrcp.pop %v6611
    %v6617 = vmul.f32 1.0, %v6616
    %v6618 = vrcp.pop %v6612
    %v6619 = vmul.f32 1.0, %v6618
    %v6620 = vrcp.pop %v6613
    %v6621 = vmul.f32 1.0, %v6620
    %v6622 = vmul.f32 %v6584, %v6615
    %v6623 = vmul.f32 %v6587, %v6617
    %v6624 = vmul.f32 %v6592, %v6619
    %v6625 = vmul.f32 %v6595, %v6621
    %v6626 = vadd.f32 %v6622, %v6623
    %v6627 = vrot.slane %v6626, 4
    %v6628 = vadd.f32 %v6626, %v6627
    %v6629 = vrot.slane %v6628, 2
    %v6630 = vadd.f32 %v6628, %v6629
    %v6631 = vrot.slane %v6630, 1
    %v6632 = vadd.f32 %v6630, %v6631
    %v6633 = vrcp.pop 16.0
    %v6634 = vmul.f32 %v6632, %v6633
    %v6635 = vmul.f32 %v6634, %v6634
    %6636 = vadd.xlane.f32.xlu0 %v6635
    %v6637 = vpop.xlane.xlu0 %6636
    %v6638 = vmul.f32 %v6443, %v6634
    %v6639 = vmul.f32 %v6446, %v6634
    %v6640 = vmul.f32 %v6451, %v6634
    %v6641 = vmul.f32 %v6454, %v6634
    %v6642 = vmul.f32 %v6459, %v6634
    %v6643 = vmul.f32 %v6462, %v6634
    %v6644 = vmul.f32 %v6467, %v6634
    %v6645 = vmul.f32 %v6470, %v6634
    %6646 = vadd.xlane.f32.xlu0 %v6638
    %v6647 = vpop.xlane.xlu0 %6646
    %6648 = vadd.xlane.f32.xlu0 %v6639
    %v6649 = vpop.xlane.xlu0 %6648
    %6650 = vadd.xlane.f32.xlu0 %v6640
    %v6651 = vpop.xlane.xlu0 %6650
    %6652 = vadd.xlane.f32.xlu0 %v6641
    %v6653 = vpop.xlane.xlu0 %6652
    %6654 = vadd.xlane.f32.xlu0 %v6642
    %v6655 = vpop.xlane.xlu0 %6654
    %6656 = vadd.xlane.f32.xlu0 %v6643
    %v6657 = vpop.xlane.xlu0 %6656
    %6658 = vadd.xlane.f32.xlu0 %v6644
    %v6659 = vpop.xlane.xlu0 %6658
    %6660 = vadd.xlane.f32.xlu0 %v6645
    %v6661 = vpop.xlane.xlu0 %6660
    %v6662 = vadd.f32 %v6637, 1e-12
    %v6663 = vrcp.pop %v6662
    %v6664 = vmul.f32 %v6647, %v6663
    %v6665 = vmul.f32 %v6649, %v6663
    %v6666 = vmul.f32 %v6651, %v6663
    %v6667 = vmul.f32 %v6653, %v6663
    %v6668 = vmul.f32 %v6655, %v6663
    %v6669 = vmul.f32 %v6657, %v6663
    %v6670 = vmul.f32 %v6659, %v6663
    %v6671 = vmul.f32 %v6661, %v6663
    %v6672 = vmul.f32 %v6664, %v6634
    %v6673 = vmul.f32 %v6665, %v6634
    %v6674 = vmul.f32 %v6666, %v6634
    %v6675 = vmul.f32 %v6667, %v6634
    %v6676 = vmul.f32 %v6668, %v6634
    %v6677 = vmul.f32 %v6669, %v6634
    %v6678 = vmul.f32 %v6670, %v6634
    %v6679 = vmul.f32 %v6671, %v6634
    %v6680 = vsub.f32 %v6443, %v6672
    %v6681 = vsub.f32 %v6446, %v6673
    %v6682 = vsub.f32 %v6451, %v6674
    %v6683 = vsub.f32 %v6454, %v6675
    %v6684 = vsub.f32 %v6459, %v6676
    %v6685 = vsub.f32 %v6462, %v6677
    %v6686 = vsub.f32 %v6467, %v6678
    %v6687 = vsub.f32 %v6470, %v6679
    %v6688 = vadd.f32 %v6680, %v6681
    %v6689 = vadd.f32 %v6688, %v6682
    %v6690 = vadd.f32 %v6689, %v6683
    %v6691 = vadd.f32 %v6690, %v6684
    %v6692 = vadd.f32 %v6691, %v6685
    %v6693 = vadd.f32 %v6692, %v6686
    %v6694 = vadd.f32 %v6693, %v6687
    %v6695 = vrot.slane %v6694, 4
    %v6696 = vadd.f32 %v6694, %v6695
    %v6697 = vrot.slane %v6696, 2
    %v6698 = vadd.f32 %v6696, %v6697
    %v6699 = vrot.slane %v6698, 1
    %v6700 = vadd.f32 %v6698, %v6699
    %v6701 = vrcp.pop 64.0
    %v6702 = vmul.f32 %v6700, %v6701
    %v6703 = vadd.f32 %v6624, %v6625
    %v6704 = vrot.slane %v6703, 4
    %v6705 = vadd.f32 %v6703, %v6704
    %v6706 = vrot.slane %v6705, 2
    %v6707 = vadd.f32 %v6705, %v6706
    %v6708 = vrot.slane %v6707, 1
    %v6709 = vadd.f32 %v6707, %v6708
    %v6710 = vmul.f32 %v6709, %v6633
    %v6711 = vmul.f32 %v6710, %v6710
    %6712 = vadd.xlane.f32.xlu0 %v6711
    %v6713 = vpop.xlane.xlu0 %6712
    %v6714 = vmul.f32 %v6475, %v6710
    %v6715 = vmul.f32 %v6478, %v6710
    %v6716 = vmul.f32 %v6483, %v6710
    %v6717 = vmul.f32 %v6486, %v6710
    %v6718 = vmul.f32 %v6491, %v6710
    %v6719 = vmul.f32 %v6494, %v6710
    %v6720 = vmul.f32 %v6499, %v6710
    %v6721 = vmul.f32 %v6502, %v6710
    %6722 = vadd.xlane.f32.xlu0 %v6714
    %v6723 = vpop.xlane.xlu0 %6722
    %6724 = vadd.xlane.f32.xlu0 %v6715
    %v6725 = vpop.xlane.xlu0 %6724
    %6726 = vadd.xlane.f32.xlu0 %v6716
    %v6727 = vpop.xlane.xlu0 %6726
    %6728 = vadd.xlane.f32.xlu0 %v6717
    %v6729 = vpop.xlane.xlu0 %6728
    %6730 = vadd.xlane.f32.xlu0 %v6718
    %v6731 = vpop.xlane.xlu0 %6730
    %6732 = vadd.xlane.f32.xlu0 %v6719
    %v6733 = vpop.xlane.xlu0 %6732
    %6734 = vadd.xlane.f32.xlu0 %v6720
    %v6735 = vpop.xlane.xlu0 %6734
    %6736 = vadd.xlane.f32.xlu0 %v6721
    %v6737 = vpop.xlane.xlu0 %6736
    %v6738 = vadd.f32 %v6713, 1e-12
    %v6739 = vrcp.pop %v6738
    %v6740 = vmul.f32 %v6723, %v6739
    %v6741 = vmul.f32 %v6725, %v6739
    %v6742 = vmul.f32 %v6727, %v6739
    %v6743 = vmul.f32 %v6729, %v6739
    %v6744 = vmul.f32 %v6731, %v6739
    %v6745 = vmul.f32 %v6733, %v6739
    %v6746 = vmul.f32 %v6735, %v6739
    %v6747 = vmul.f32 %v6737, %v6739
    %v6748 = vmul.f32 %v6740, %v6710
    %v6749 = vmul.f32 %v6741, %v6710
    %v6750 = vmul.f32 %v6742, %v6710
    %v6751 = vmul.f32 %v6743, %v6710
    %v6752 = vmul.f32 %v6744, %v6710
    %v6753 = vmul.f32 %v6745, %v6710
    %v6754 = vmul.f32 %v6746, %v6710
    %v6755 = vmul.f32 %v6747, %v6710
    %v6756 = vsub.f32 %v6475, %v6748
    %v6757 = vsub.f32 %v6478, %v6749
    %v6758 = vsub.f32 %v6483, %v6750
    %v6759 = vsub.f32 %v6486, %v6751
    %v6760 = vsub.f32 %v6491, %v6752
    %v6761 = vsub.f32 %v6494, %v6753
    %v6762 = vsub.f32 %v6499, %v6754
    %v6763 = vsub.f32 %v6502, %v6755
    %v6764 = vadd.f32 %v6756, %v6757
    %v6765 = vadd.f32 %v6764, %v6758
    %v6766 = vadd.f32 %v6765, %v6759
    %v6767 = vadd.f32 %v6766, %v6760
    %v6768 = vadd.f32 %v6767, %v6761
    %v6769 = vadd.f32 %v6768, %v6762
    %v6770 = vadd.f32 %v6769, %v6763
    %v6771 = vrot.slane %v6770, 4
    %v6772 = vadd.f32 %v6770, %v6771
    %v6773 = vrot.slane %v6772, 2
    %v6774 = vadd.f32 %v6772, %v6773
    %v6775 = vrot.slane %v6774, 1
    %v6776 = vadd.f32 %v6774, %v6775
    %v6777 = vmul.f32 %v6776, %v6701
    %vm6778 = vcmask 1040384
    %v6779 = vsel %vm6778, %v6634, %v6710
    %v6780 = vsel %vm6778, %v6702, %v6777
    %v6781 = vpack.c.bf16 %v6779, %v6779
    %v6782 = vld [vmem:[%s12] sm:$0xf]
    %v6783 = vld [vmem:[%s12 + $0x4] sm:$0xf]
    %v6784 = vld [vmem:[%s12 + $0x8] sm:$0xf]
    %v6785 = vld [vmem:[%s12 + $0xc] sm:$0xf]
    %v6786 = vld [vmem:[%s12 + $0x10] sm:$0xf]
    %v6787 = vld [vmem:[%s12 + $0x14] sm:$0xf]
    %v6788 = vld [vmem:[%s12 + $0x18] sm:$0xf]
    %v6789 = vld [vmem:[%s12 + $0x1c] sm:$0xf]
    %v6790 = vld [vmem:[%s12 + $0x20] sm:$0xf]
    %v6791 = vld [vmem:[%s12 + $0x24] sm:$0xf]
    %v6792 = vld [vmem:[%s12 + $0x28] sm:$0xf]
    %v6793 = vld [vmem:[%s12 + $0x2c] sm:$0xf]
    %v6794 = vld [vmem:[%s12 + $0x30] sm:$0xf]
    %v6795 = vld [vmem:[%s12 + $0x34] sm:$0xf]
    %v6796 = vld [vmem:[%s12 + $0x38] sm:$0xf]
    %v6797 = vld [vmem:[%s12 + $0x3c] sm:$0xf]
    %v6798 = vpack.c.bf16 %v6780, %v6780
    %v6799 = vld [vmem:[%s13] sm:$0xf]
    %v6800 = vld [vmem:[%s13 + $0x4] sm:$0xf]
    %v6801 = vld [vmem:[%s13 + $0x8] sm:$0xf]
    %v6802 = vld [vmem:[%s13 + $0xc] sm:$0xf]
    %v6803 = vld [vmem:[%s13 + $0x10] sm:$0xf]
    %v6804 = vld [vmem:[%s13 + $0x14] sm:$0xf]
    %v6805 = vld [vmem:[%s13 + $0x18] sm:$0xf]
    %v6806 = vld [vmem:[%s13 + $0x1c] sm:$0xf]
    %v6807 = vld [vmem:[%s13 + $0x20] sm:$0xf]
    %v6808 = vld [vmem:[%s13 + $0x24] sm:$0xf]
    %v6809 = vld [vmem:[%s13 + $0x28] sm:$0xf]
    %v6810 = vld [vmem:[%s13 + $0x2c] sm:$0xf]
    %v6811 = vld [vmem:[%s13 + $0x30] sm:$0xf]
    %v6812 = vld [vmem:[%s13 + $0x34] sm:$0xf]
    %v6813 = vld [vmem:[%s13 + $0x38] sm:$0xf]
    %v6814 = vld [vmem:[%s13 + $0x3c] sm:$0xf]
    %v6831 = vunpack.c.l.b16 %v6799
    %v6832 = vunpack.c.l.b16 %v6800
    %v6833 = vunpack.c.l.b16 %v6801
    %v6834 = vunpack.c.l.b16 %v6802
    %v6835 = vunpack.c.l.b16 %v6803
    %v6836 = vunpack.c.l.b16 %v6804
    %v6837 = vunpack.c.l.b16 %v6805
    %v6838 = vunpack.c.l.b16 %v6806
    %v6839 = vunpack.c.l.b16 %v6807
    %v6840 = vunpack.c.l.b16 %v6808
    %v6841 = vunpack.c.l.b16 %v6809
    %v6842 = vunpack.c.l.b16 %v6810
    %v6843 = vunpack.c.l.b16 %v6811
    %v6844 = vunpack.c.l.b16 %v6812
    %v6845 = vunpack.c.l.b16 %v6813
    %v6846 = vunpack.c.l.b16 %v6814
    %v6847 = vpack.c.b16 %v6832, %v6831
    %v6848 = vpack.c.b16 %v6834, %v6833
    %v6849 = vpack.c.b16 %v6836, %v6835
    %v6850 = vpack.c.b16 %v6838, %v6837
    %v6851 = vpack.c.b16 %v6840, %v6839
    %v6852 = vpack.c.b16 %v6842, %v6841
    %v6853 = vpack.c.b16 %v6844, %v6843
    %v6854 = vpack.c.b16 %v6846, %v6845
    %6863 = vmatprep.subr.bf16.mxu0 0
    %6864 = vmatpush1.bf16.msra.mxu0 %v6854
    %6865 = vmatprep.subr.bf16.mxu0 0
    %6866 = vmatpush1.bf16.msra.mxu0 %v6853
    %6867 = vmatprep.subr.bf16.mxu0 0
    %6868 = vmatpush1.bf16.msra.mxu0 %v6852
    %6869 = vmatprep.subr.bf16.mxu0 0
    %6870 = vmatpush1.bf16.msra.mxu0 %v6851
    %6871 = vmatprep.subr.bf16.mxu0 0
    %6872 = vmatpush1.bf16.msra.mxu0 %v6850
    %6873 = vmatprep.subr.bf16.mxu0 0
    %6874 = vmatpush1.bf16.msra.mxu0 %v6849
    %6875 = vmatprep.subr.bf16.mxu0 0
    %6876 = vmatpush1.bf16.msra.mxu0 %v6848
    %6877 = vmatprep.subr.bf16.mxu0 0
    %6878 = vmatpush1.bf16.msra.mxu0 %v6847
    %6879 = vmatprep.subr.bf16.mxu0 0
    %6880 = vmatpush2.bf16.msra.mxu0 0
    %6881 = vmatprep.subr.bf16.mxu0 0
    %6882 = vmatpush2.bf16.msra.mxu0 0
    %6883 = vmatprep.subr.bf16.mxu0 0
    %6884 = vmatpush2.bf16.msra.mxu0 0
    %6885 = vmatprep.subr.bf16.mxu0 0
    %6886 = vmatpush2.bf16.msra.mxu0 0
    %6887 = vmatprep.subr.bf16.mxu0 0
    %6888 = vmatpush2.bf16.msra.mxu0 0
    %6889 = vmatprep.subr.bf16.mxu0 0
    %6890 = vmatpush2.bf16.msra.mxu0 0
    %6891 = vmatprep.subr.bf16.mxu0 0
    %6892 = vmatpush2.bf16.msra.mxu0 0
    %6893 = vmatprep.subr.bf16.mxu0 0
    %6894 = vmatpush2.bf16.msra.mxu0 0
    %6895 = vmatprep.mubr.bf16.mxu0 0
    %6896 = vmatmul.mubr.bf16.gmra.mxu0 %v6798
    %v6897 = vpop.f32.mrf.mxu0
    %v6898 = vadd.f32 0.0, %v6897
    %v6899 = vpop.f32.mrf.mxu0
    %v6900 = vpop.f32.mrf.mxu0
    %v6901 = vpop.f32.mrf.mxu0
    %6902 = vdwg.mxu0
    %v6919 = vunpack.c.l.b16 %v6782
    %v6920 = vunpack.c.l.b16 %v6783
    %v6921 = vunpack.c.l.b16 %v6784
    %v6922 = vunpack.c.l.b16 %v6785
    %v6923 = vunpack.c.l.b16 %v6786
    %v6924 = vunpack.c.l.b16 %v6787
    %v6925 = vunpack.c.l.b16 %v6788
    %v6926 = vunpack.c.l.b16 %v6789
    %v6927 = vunpack.c.l.b16 %v6790
    %v6928 = vunpack.c.l.b16 %v6791
    %v6929 = vunpack.c.l.b16 %v6792
    %v6930 = vunpack.c.l.b16 %v6793
    %v6931 = vunpack.c.l.b16 %v6794
    %v6932 = vunpack.c.l.b16 %v6795
    %v6933 = vunpack.c.l.b16 %v6796
    %v6934 = vunpack.c.l.b16 %v6797
    %v6935 = vpack.c.b16 %v6920, %v6919
    %v6936 = vpack.c.b16 %v6922, %v6921
    %v6937 = vpack.c.b16 %v6924, %v6923
    %v6938 = vpack.c.b16 %v6926, %v6925
    %v6939 = vpack.c.b16 %v6928, %v6927
    %v6940 = vpack.c.b16 %v6930, %v6929
    %v6941 = vpack.c.b16 %v6932, %v6931
    %v6942 = vpack.c.b16 %v6934, %v6933
    %6951 = vmatprep.subr.bf16.mxu0 0
    %6952 = vmatpush1.bf16.msra.mxu0 %v6942
    %6953 = vmatprep.subr.bf16.mxu0 0
    %6954 = vmatpush1.bf16.msra.mxu0 %v6941
    %6955 = vmatprep.subr.bf16.mxu0 0
    %6956 = vmatpush1.bf16.msra.mxu0 %v6940
    %6957 = vmatprep.subr.bf16.mxu0 0
    %6958 = vmatpush1.bf16.msra.mxu0 %v6939
    %6959 = vmatprep.subr.bf16.mxu0 0
    %6960 = vmatpush1.bf16.msra.mxu0 %v6938
    %6961 = vmatprep.subr.bf16.mxu0 0
    %6962 = vmatpush1.bf16.msra.mxu0 %v6937
    %6963 = vmatprep.subr.bf16.mxu0 0
    %6964 = vmatpush1.bf16.msra.mxu0 %v6936
    %6965 = vmatprep.subr.bf16.mxu0 0
    %6966 = vmatpush1.bf16.msra.mxu0 %v6935
    %6967 = vmatprep.subr.bf16.mxu0 0
    %6968 = vmatpush2.bf16.msra.mxu0 0
    %6969 = vmatprep.subr.bf16.mxu0 0
    %6970 = vmatpush2.bf16.msra.mxu0 0
    %6971 = vmatprep.subr.bf16.mxu0 0
    %6972 = vmatpush2.bf16.msra.mxu0 0
    %6973 = vmatprep.subr.bf16.mxu0 0
    %6974 = vmatpush2.bf16.msra.mxu0 0
    %6975 = vmatprep.subr.bf16.mxu0 0
    %6976 = vmatpush2.bf16.msra.mxu0 0
    %6977 = vmatprep.subr.bf16.mxu0 0
    %6978 = vmatpush2.bf16.msra.mxu0 0
    %6979 = vmatprep.subr.bf16.mxu0 0
    %6980 = vmatpush2.bf16.msra.mxu0 0
    %6981 = vmatprep.subr.bf16.mxu0 0
    %6982 = vmatpush2.bf16.msra.mxu0 0
    %6983 = vmatprep.mubr.bf16.mxu0 0
    %6984 = vmatmul.mubr.bf16.gmra.mxu0 %v6781
    %v6985 = vpop.f32.mrf.mxu0
    %v6986 = vadd.f32 %v6898, %v6985
    %v6987 = vpop.f32.mrf.mxu0
    %v6988 = vpop.f32.mrf.mxu0
    %v6989 = vpop.f32.mrf.mxu0
    %6990 = vdwg.mxu0
    %v6991 = vld [vmem:[%s14] sm:$0x1]
    %v6993 = vlaneseq
    %v6994 = vshrl.u32 %v6993, 7
    %v6995 = vsub.s32 0, %v6994
    %v6996 = vrot.slane %v6991, %v6995
    %v6998 = vadd.f32 %v6986, %v6996
    %v6999 = vpack.c.bf16 %v6998, %v6998
    %v7000 = vld [vmem:[%s15] sm:$0xf]
    %v7001 = vld [vmem:[%s15 + $0x4] sm:$0xf]
    %v7002 = vld [vmem:[%s15 + $0x8] sm:$0xf]
    %v7003 = vld [vmem:[%s15 + $0xc] sm:$0xf]
    %v7004 = vld [vmem:[%s16] sm:$0x1]
    %v7006 = vlaneseq
    %v7007 = vshrl.u32 %v7006, 7
    %v7008 = vsub.s32 0, %v7007
    %v7009 = vrot.slane %v7004, %v7008
    %v7015 = vunpack.c.l.b16 %v7000
    %v7016 = vunpack.c.l.b16 %v7001
    %v7017 = vunpack.c.l.b16 %v7002
    %v7018 = vunpack.c.l.b16 %v7003
    %v7019 = vpack.c.b16 %v7016, %v7015
    %v7020 = vpack.c.b16 %v7018, %v7017
    %v7024 = vsel %vm6542, %v6999, 0
    %7026 = vmatprep.subr.bf16.mxu0 0
    %7027 = vmatpush1.bf16.msra.mxu0 0
    %7028 = vmatprep.subr.bf16.mxu0 0
    %7029 = vmatpush1.bf16.msra.mxu0 0
    %7030 = vmatprep.subr.bf16.mxu0 0
    %7031 = vmatpush1.bf16.msra.mxu0 0
    %7032 = vmatprep.subr.bf16.mxu0 0
    %7033 = vmatpush1.bf16.msra.mxu0 0
    %7034 = vmatprep.subr.bf16.mxu0 0
    %7035 = vmatpush1.bf16.msra.mxu0 0
    %7036 = vmatprep.subr.bf16.mxu0 0
    %7037 = vmatpush1.bf16.msra.mxu0 0
    %7038 = vmatprep.subr.bf16.mxu0 0
    %7039 = vmatpush1.bf16.msra.mxu0 %v7020
    %7040 = vmatprep.subr.bf16.mxu0 0
    %7041 = vmatpush1.bf16.msra.mxu0 %v7019
    %7042 = vmatprep.subr.bf16.mxu0 0
    %7043 = vmatpush2.bf16.msra.mxu0 0
    %7044 = vmatprep.subr.bf16.mxu0 0
    %7045 = vmatpush2.bf16.msra.mxu0 0
    %7046 = vmatprep.subr.bf16.mxu0 0
    %7047 = vmatpush2.bf16.msra.mxu0 0
    %7048 = vmatprep.subr.bf16.mxu0 0
    %7049 = vmatpush2.bf16.msra.mxu0 0
    %7050 = vmatprep.subr.bf16.mxu0 0
    %7051 = vmatpush2.bf16.msra.mxu0 0
    %7052 = vmatprep.subr.bf16.mxu0 0
    %7053 = vmatpush2.bf16.msra.mxu0 0
    %7054 = vmatprep.subr.bf16.mxu0 0
    %7055 = vmatpush2.bf16.msra.mxu0 0
    %7056 = vmatprep.subr.bf16.mxu0 0
    %7057 = vmatpush2.bf16.msra.mxu0 0
    %7058 = vmatprep.mubr.bf16.mxu0 0
    %7059 = vmatmul.mubr.bf16.gmra.mxu0 %v7024
    %v7060 = vpop.f32.mrf.mxu0
    %v7061 = vadd.f32 %v7009, %v7060
    %v7062 = vpop.f32.mrf.mxu0
    %v7063 = vpop.f32.mrf.mxu0
    %v7064 = vpop.f32.mrf.mxu0
    %7065 = vdwg.mxu0
    %vm7066 = vcmask 254976
    %7067 = vst.msk [vmem:[#allocation4] sm:$0x3] %vm7066, %v7061
    // Predicated region
    $region70: #{hoam_v2_forward.1} parent=1 // pred_check
      _
    $region71: #{hoam_v2_forward.1} parent=1 // pred_check_branch
      %7069 = sbr.rel (0) target = $region73
    $region72: #{hoam_v2_forward.1} parent=1 // pred_region
      %s7071 = ssub.s32 32, 32
      %7072 = vsyncadd [#allocation5], %s7071
      %s7074 = sshll.u32 [#allocation4], 4
      %s7075 = int_to_ptr.vmem [resolvable:$true] %s7074
      %7077 = dma.vmem_to_hbm [thread:$0]  %s7075, 32, %s17, [#allocation5]
    $region73: #{hoam_v2_forward.1} parent=1 // pred_fallthru
      _
    // Predicated region
    $region74: #{hoam_v2_forward.1} parent=1 // pred_check
      _
    $region75: #{hoam_v2_forward.1} parent=1 // pred_check_branch
      %7079 = sbr.rel (0) target = $region77
    $region76: #{hoam_v2_forward.1} parent=1 // pred_region
      %7080 = dma.done [#allocation5], 32
    $region77: #{hoam_v2_forward.1} parent=1 // pred_fallthru
      _
    %7081 = vsyncpa [#allocation5], 1

</llo_original>
